<compile_context>
chip_gen: v7x
topology: tpu7x:2x2x1
jax: 0.10.0
libtpu: 0.0.40
codegen_flags: <defaults>
</compile_context>

<pallas_src>
import jax
import jax.numpy as jnp
import numpy as np
from jax.experimental import pallas as pl
from jax.experimental.pallas import tpu as pltpu

# ----------------------------- model sizes ---------------------------------
BATCH = 2           # batch_size
SEQ = 8             # seq_len
CIN = 3             # image channels
IMG = 16            # spatial H = W (small synthetic images)
C1 = 32             # surrogate conv channels
FEAT = 512          # backbone.num_features (InceptionResnetV1 embedding dim)
HID = 256           # lstm_hidden_size (module default)
KP = CIN * 9        # im2col patch size for a 3x3 conv
FC_PAD = 128        # final FC output lane-padded to one full vreg lane width


# ----------------------------- glue: im2col --------------------------------
def im2col_3x3(x):
    """x: (N, C, H, W) -> patches (N, H*W, C*9) for a stride-1 SAME 3x3 conv."""
    n, c, h, w = x.shape
    xp = jnp.pad(x, ((0, 0), (0, 0), (1, 1), (1, 1)))
    cols = []
    for di in range(3):
        for dj in range(3):
            cols.append(xp[:, :, di:di + h, dj:dj + w])
    p = jnp.stack(cols, axis=2)                       # (N, C, 9, H, W)
    p = p.reshape(n, c * 9, h * w)                    # (N, C*9, H*W)
    return jnp.transpose(p, (0, 2, 1))                # (N, H*W, C*9)


# ------------------- fused Pallas kernel: backbone+LSTM+FC ------------------
def fused_kernel(patches_ref, seg_ref, wc_ref, bc_ref, wp_ref, bp_ref,
                 wih_ref, whh_ref, bl_ref, wfc_ref, bfc_ref, o_ref):
    b = o_ref.shape[0]
    hid = whh_ref.shape[0]
    n_frames = seg_ref.shape[0]
    seq = n_frames // b

    # ---- backbone: im2col conv (MXU) -> ReLU -> GAP (MXU) -> linear (MXU) --
    conv = jnp.dot(patches_ref[...], wc_ref[...],
                   preferred_element_type=jnp.float32) + bc_ref[...]
    conv = jnp.maximum(conv, 0.0)                      # (N*HW, C1), f32
    pooled = jnp.dot(seg_ref[...], conv.astype(jnp.bfloat16),
                     preferred_element_type=jnp.float32)        # (N, C1)
    feats = jnp.dot(pooled.astype(jnp.bfloat16), wp_ref[...],
                    preferred_element_type=jnp.float32) + bp_ref[...]  # (N,FEAT)

    # ---- hoisted LSTM input projection for all T steps at once -------------
    gates_x = jnp.dot(feats.astype(jnp.bfloat16), wih_ref[...],
                      preferred_element_type=jnp.float32) + bl_ref[...]  # (T*B,4H)

    # ---- serial recurrence in f32, fully unrolled (straight-line) ----------
    whh = whh_ref[...]                                 # (HID, 4H), loaded once
    h = jnp.zeros((b, hid), jnp.float32)
    c = jnp.zeros((b, hid), jnp.float32)
    for t in range(seq):
        gates = (gates_x[t * b:(t + 1) * b, :]
                 + jnp.dot(h, whh, preferred_element_type=jnp.float32))
        i_g = jax.nn.sigmoid(gates[:, 0 * hid:1 * hid])
        f_g = jax.nn.sigmoid(gates[:, 1 * hid:2 * hid])
        g_g = jnp.tanh(gates[:, 2 * hid:3 * hid])
        o_g = jax.nn.sigmoid(gates[:, 3 * hid:4 * hid])
        c = f_g * c + i_g * g_g
        h = o_g * jnp.tanh(c)

    # ---- final FC on the last hidden state only (lane-padded to 128) -------
    o_ref[...] = (jnp.dot(h, wfc_ref[...], preferred_element_type=jnp.float32)
                  + bfc_ref[...])


def mos_fused_pallas(params, patches, seg, batch):
    n_rows, kp = patches.shape
    n_frames = seg.shape[0]
    out = pl.pallas_call(
        fused_kernel,
        out_shape=jax.ShapeDtypeStruct((batch, FC_PAD), jnp.float32),
        grid=(1,),
        in_specs=[
            pl.BlockSpec((n_rows, kp), lambda i: (0, 0)),          # patches
            pl.BlockSpec((n_frames, n_rows), lambda i: (0, 0)),    # seg mean
            pl.BlockSpec((kp, C1), lambda i: (0, 0)),              # w_conv
            pl.BlockSpec((1, C1), lambda i: (0, 0)),               # b_conv
            pl.BlockSpec((C1, FEAT), lambda i: (0, 0)),            # w_proj
            pl.BlockSpec((1, FEAT), lambda i: (0, 0)),             # b_proj
            pl.BlockSpec((FEAT, 4 * HID), lambda i: (0, 0)),       # w_ih_t
            pl.BlockSpec((HID, 4 * HID), lambda i: (0, 0)),        # w_hh_t
            pl.BlockSpec((1, 4 * HID), lambda i: (0, 0)),          # b_lstm
            pl.BlockSpec((HID, FC_PAD), lambda i: (0, 0)),         # w_fc_t
            pl.BlockSpec((1, FC_PAD), lambda i: (0, 0)),           # b_fc
        ],
        out_specs=pl.BlockSpec((batch, FC_PAD), lambda i: (0, 0)),
        compiler_params=pltpu.CompilerParams(
            dimension_semantics=("arbitrary",),
            vmem_limit_bytes=32 * 1024 * 1024),
    )(patches, seg, params["w_conv"], params["b_conv"], params["w_proj"],
      params["b_proj"], params["w_ih_t"], params["w_hh_t"], params["b_lstm"],
      params["w_fc_t"], params["b_fc"])
    return out[:, 0]                                    # (B,)


# --------------------------- full forward pass ------------------------------
@jax.jit
def mos_forward(params, x):
    b, t, c, h, w = x.shape
    hw = h * w
    n = t * b
    # Time-major frame packing (frame = time*b + batch) so each LSTM step
    # consumes a contiguous row block of the hoisted input projection.
    xf = jnp.transpose(x, (1, 0, 2, 3, 4)).reshape(n, c, h, w)
    patches = im2col_3x3(xf).reshape(n * hw, c * 9).astype(jnp.bfloat16)
    # Block-diagonal segment-mean matrix: pooled = seg @ relu(conv).
    frame_of_row = jnp.arange(n * hw, dtype=jnp.int32) // hw
    mask = frame_of_row[None, :] == jnp.arange(n, dtype=jnp.int32)[:, None]
    seg = jnp.where(mask, 1.0 / hw, 0.0).astype(jnp.bfloat16)   # 1/256 exact
    return mos_fused_pallas(params, patches, seg, b)


# ---------------------------- pure-JAX reference ----------------------------
def reference_forward(params, x):
    b, t, c, h, w = x.shape
    xf = x.reshape(b * t, c, h, w)
    patches = im2col_3x3(xf)                                     # f32
    wc = params["w_conv"].astype(jnp.float32)
    conv = jnp.maximum(
        jnp.einsum("npk,kc->npc", patches, wc) + params["b_conv"], 0.0)
    pooled = conv.mean(axis=1)
    feats = pooled @ params["w_proj"].astype(jnp.float32) + params["b_proj"]
    feats = feats.reshape(b, t, FEAT)
    wih = params["w_ih_t"].astype(jnp.float32)
    hh = jnp.zeros((b, HID), jnp.float32)
    cc = jnp.zeros((b, HID), jnp.float32)
    for k in range(t):
        gates = (feats[:, k] @ wih + hh @ params["w_hh_t"] + params["b_lstm"])
        i_g = jax.nn.sigmoid(gates[:, 0 * HID:1 * HID])
        f_g = jax.nn.sigmoid(gates[:, 1 * HID:2 * HID])
        g_g = jnp.tanh(gates[:, 2 * HID:3 * HID])
        o_g = jax.nn.sigmoid(gates[:, 3 * HID:4 * HID])
        cc = f_g * cc + i_g * g_g
        hh = o_g * jnp.tanh(cc)
    out = hh @ params["w_fc_t"] + params["b_fc"]                  # (B, FC_PAD)
    return out[:, 0]


# --------------------------------- params -----------------------------------
def init_params(key):
    ks = jax.random.split(key, 9)
    # PyTorch nn.LSTM stores W_ih:(4H,F), W_hh:(4H,H) with gate order
    # [i, f, g, o]; we keep them pre-transposed, LSTM biases summed.
    w_fc = 0.1 * jax.random.normal(ks[7], (HID, 1), jnp.float32)
    b_fc = 0.1 * jax.random.normal(ks[8], (1, 1), jnp.float32)
    return {
        "w_conv": (0.1 * jax.random.normal(ks[0], (KP, C1), jnp.float32)
                   ).astype(jnp.bfloat16),
        "b_conv": 0.1 * jax.random.normal(ks[1], (1, C1), jnp.float32),
        "w_proj": (0.05 * jax.random.normal(ks[2], (C1, FEAT), jnp.float32)
                   ).astype(jnp.bfloat16),
        "b_proj": 0.05 * jax.random.normal(ks[3], (1, FEAT), jnp.float32),
        "w_ih_t": (0.05 * jax.random.normal(ks[4], (FEAT, 4 * HID), jnp.float32)
                   ).astype(jnp.bfloat16),
        "w_hh_t": 0.05 * jax.random.normal(ks[5], (HID, 4 * HID), jnp.float32),
        "b_lstm": 0.05 * jax.random.normal(ks[6], (1, 4 * HID), jnp.float32),
        # Final FC lane-padded to 128 lanes; only column 0 is meaningful.
        "w_fc_t": jnp.pad(w_fc, ((0, 0), (0, FC_PAD - 1))),
        "b_fc": jnp.pad(b_fc, ((0, 0), (0, FC_PAD - 1))),
    }


# --------------------------------- main -------------------------------------
if __name__ == "__main__":
    key = jax.random.PRNGKey(0)
    pkey, xkey = jax.random.split(key)
    params = init_params(pkey)
    x = jax.random.normal(xkey, (BATCH, SEQ, CIN, IMG, IMG), jnp.float32)

    y = jax.block_until_ready(mos_forward(params, x))
    y_ref = reference_forward(params, x)

    assert y.shape == (BATCH,)
    np.testing.assert_allclose(np.asarray(y), np.asarray(y_ref),
                               rtol=1e-2, atol=1e-2)
    print("KERNEL_OK")
</pallas_src>

<mosaic_0001>
module attributes {stable_mosaic.version = 11 : i64} {
  func.func @fused_kernel(%arg0: i32, %arg1: memref<4096x27xbf16, #tpu.memory_space<vmem>>, %arg2: memref<16x4096xbf16, #tpu.memory_space<vmem>>, %arg3: memref<27x32xbf16, #tpu.memory_space<vmem>>, %arg4: memref<1x32xf32, #tpu.memory_space<vmem>>, %arg5: memref<32x512xbf16, #tpu.memory_space<vmem>>, %arg6: memref<1x512xf32, #tpu.memory_space<vmem>>, %arg7: memref<512x1024xbf16, #tpu.memory_space<vmem>>, %arg8: memref<256x1024xf32, #tpu.memory_space<vmem>>, %arg9: memref<1x1024xf32, #tpu.memory_space<vmem>>, %arg10: memref<256x128xf32, #tpu.memory_space<vmem>>, %arg11: memref<1x128xf32, #tpu.memory_space<vmem>>, %arg12: memref<2x128xf32, #tpu.memory_space<vmem>>) attributes {dimension_semantics = [#tpu.dimension_semantics<arbitrary>], iteration_bounds = array<i64: 1>, scalar_prefetch = 0 : i64, scratch_operands = 0 : i64, tpu.core_type = #tpu.core_type<tc>, window_params = [{pipeline_mode = #tpu.pipeline_mode<synchronous>, transform_indices = @transform_0, window_bounds = array<i64: 4096, 27>}, {pipeline_mode = #tpu.pipeline_mode<synchronous>, transform_indices = @transform_1, window_bounds = array<i64: 16, 4096>}, {pipeline_mode = #tpu.pipeline_mode<synchronous>, transform_indices = @transform_2, window_bounds = array<i64: 27, 32>}, {pipeline_mode = #tpu.pipeline_mode<synchronous>, transform_indices = @transform_3, window_bounds = array<i64: 1, 32>}, {pipeline_mode = #tpu.pipeline_mode<synchronous>, transform_indices = @transform_4, window_bounds = array<i64: 32, 512>}, {pipeline_mode = #tpu.pipeline_mode<synchronous>, transform_indices = @transform_5, window_bounds = array<i64: 1, 512>}, {pipeline_mode = #tpu.pipeline_mode<synchronous>, transform_indices = @transform_6, window_bounds = array<i64: 512, 1024>}, {pipeline_mode = #tpu.pipeline_mode<synchronous>, transform_indices = @transform_7, window_bounds = array<i64: 256, 1024>}, {pipeline_mode = #tpu.pipeline_mode<synchronous>, transform_indices = @transform_8, window_bounds = array<i64: 1, 1024>}, {pipeline_mode = #tpu.pipeline_mode<synchronous>, transform_indices = @transform_9, window_bounds = array<i64: 256, 128>}, {pipeline_mode = #tpu.pipeline_mode<synchronous>, transform_indices = @transform_10, window_bounds = array<i64: 1, 128>}, {pipeline_mode = #tpu.pipeline_mode<synchronous>, transform_indices = @transform_11, window_bounds = array<i64: 2, 128>}]} {
    %c0 = arith.constant 0 : index
    %c0_0 = arith.constant 0 : index
    %0 = vector.load %arg1[%c0, %c0_0] : memref<4096x27xbf16, #tpu.memory_space<vmem>>, vector<4096x27xbf16>
    %c0_1 = arith.constant 0 : index
    %c0_2 = arith.constant 0 : index
    %1 = vector.load %arg3[%c0_1, %c0_2] : memref<27x32xbf16, #tpu.memory_space<vmem>>, vector<27x32xbf16>
    %cst = arith.constant dense<0.000000e+00> : vector<4096x32xf32>
    %2 = tpu.matmul %0, %1, %cst {dimension_numbers = #tpu.dot_dimension_numbers<[1], [0], [0], [1], [0, 0, 1, 1], [], []>} : vector<4096x27xbf16>, vector<27x32xbf16>, vector<4096x32xf32> -> vector<4096x32xf32>
    %c0_3 = arith.constant 0 : index
    %c0_4 = arith.constant 0 : index
    %3 = vector.load %arg4[%c0_3, %c0_4] : memref<1x32xf32, #tpu.memory_space<vmem>>, vector<1x32xf32>
    %4 = vector.broadcast %3 : vector<1x32xf32> to vector<4096x32xf32>
    %5 = arith.addf %2, %4 : vector<4096x32xf32>
    %cst_5 = arith.constant 0.000000e+00 : f32
    %6 = vector.broadcast %cst_5 : f32 to vector<4096x32xf32>
    %7 = arith.maximumf %5, %6 : vector<4096x32xf32>
    %c0_6 = arith.constant 0 : index
    %c0_7 = arith.constant 0 : index
    %8 = vector.load %arg2[%c0_6, %c0_7] : memref<16x4096xbf16, #tpu.memory_space<vmem>>, vector<16x4096xbf16>
    %9 = arith.truncf %7 : vector<4096x32xf32> to vector<4096x32xbf16>
    %cst_8 = arith.constant dense<0.000000e+00> : vector<16x32xf32>
    %10 = tpu.matmul %8, %9, %cst_8 {dimension_numbers = #tpu.dot_dimension_numbers<[1], [0], [0], [1], [0, 0, 1, 1], [], []>} : vector<16x4096xbf16>, vector<4096x32xbf16>, vector<16x32xf32> -> vector<16x32xf32>
    %11 = arith.truncf %10 : vector<16x32xf32> to vector<16x32xbf16>
    %c0_9 = arith.constant 0 : index
    %c0_10 = arith.constant 0 : index
    %12 = vector.load %arg5[%c0_9, %c0_10] : memref<32x512xbf16, #tpu.memory_space<vmem>>, vector<32x512xbf16>
    %cst_11 = arith.constant dense<0.000000e+00> : vector<16x512xf32>
    %13 = tpu.matmul %11, %12, %cst_11 {dimension_numbers = #tpu.dot_dimension_numbers<[1], [0], [0], [1], [0, 0, 1, 1], [], []>} : vector<16x32xbf16>, vector<32x512xbf16>, vector<16x512xf32> -> vector<16x512xf32>
    %c0_12 = arith.constant 0 : index
    %c0_13 = arith.constant 0 : index
    %14 = vector.load %arg6[%c0_12, %c0_13] : memref<1x512xf32, #tpu.memory_space<vmem>>, vector<1x512xf32>
    %15 = vector.broadcast %14 : vector<1x512xf32> to vector<16x512xf32>
    %16 = arith.addf %13, %15 : vector<16x512xf32>
    %17 = arith.truncf %16 : vector<16x512xf32> to vector<16x512xbf16>
    %c0_14 = arith.constant 0 : index
    %c0_15 = arith.constant 0 : index
    %18 = vector.load %arg7[%c0_14, %c0_15] : memref<512x1024xbf16, #tpu.memory_space<vmem>>, vector<512x1024xbf16>
    %cst_16 = arith.constant dense<0.000000e+00> : vector<16x1024xf32>
    %19 = tpu.matmul %17, %18, %cst_16 {dimension_numbers = #tpu.dot_dimension_numbers<[1], [0], [0], [1], [0, 0, 1, 1], [], []>} : vector<16x512xbf16>, vector<512x1024xbf16>, vector<16x1024xf32> -> vector<16x1024xf32>
    %c0_17 = arith.constant 0 : index
    %c0_18 = arith.constant 0 : index
    %20 = vector.load %arg9[%c0_17, %c0_18] : memref<1x1024xf32, #tpu.memory_space<vmem>>, vector<1x1024xf32>
    %21 = vector.broadcast %20 : vector<1x1024xf32> to vector<16x1024xf32>
    %22 = arith.addf %19, %21 : vector<16x1024xf32>
    %c0_19 = arith.constant 0 : index
    %c0_20 = arith.constant 0 : index
    %23 = vector.load %arg8[%c0_19, %c0_20] : memref<256x1024xf32, #tpu.memory_space<vmem>>, vector<256x1024xf32>
    %cst_21 = arith.constant 0.000000e+00 : f32
    %24 = vector.broadcast %cst_21 : f32 to vector<2x256xf32>
    %cst_22 = arith.constant 0.000000e+00 : f32
    %25 = vector.broadcast %cst_22 : f32 to vector<2x256xf32>
    %26 = vector.extract_strided_slice %22 {offsets = [0, 0], sizes = [2, 1024], strides = [1, 1]} : vector<16x1024xf32> to vector<2x1024xf32>
    %cst_23 = arith.constant dense<0.000000e+00> : vector<2x1024xf32>
    %27 = tpu.matmul %24, %23, %cst_23 {dimension_numbers = #tpu.dot_dimension_numbers<[1], [0], [0], [1], [0, 0, 1, 1], [], []>} : vector<2x256xf32>, vector<256x1024xf32>, vector<2x1024xf32> -> vector<2x1024xf32>
    %28 = arith.addf %26, %27 : vector<2x1024xf32>
    %29 = vector.extract_strided_slice %28 {offsets = [0, 0], sizes = [2, 256], strides = [1, 1]} : vector<2x1024xf32> to vector<2x256xf32>
    %30 = arith.negf %29 : vector<2x256xf32>
    %31 = math.exp %30 : vector<2x256xf32>
    %cst_24 = arith.constant 1.000000e+00 : f32
    %32 = vector.broadcast %cst_24 : f32 to vector<2x256xf32>
    %33 = arith.addf %32, %31 : vector<2x256xf32>
    %34 = arith.divf %32, %33 : vector<2x256xf32>
    %35 = vector.extract_strided_slice %28 {offsets = [0, 256], sizes = [2, 256], strides = [1, 1]} : vector<2x1024xf32> to vector<2x256xf32>
    %36 = arith.negf %35 : vector<2x256xf32>
    %37 = math.exp %36 : vector<2x256xf32>
    %cst_25 = arith.constant 1.000000e+00 : f32
    %38 = vector.broadcast %cst_25 : f32 to vector<2x256xf32>
    %39 = arith.addf %38, %37 : vector<2x256xf32>
    %40 = arith.divf %38, %39 : vector<2x256xf32>
    %41 = vector.extract_strided_slice %28 {offsets = [0, 512], sizes = [2, 256], strides = [1, 1]} : vector<2x1024xf32> to vector<2x256xf32>
    %42 = math.tanh %41 : vector<2x256xf32>
    %43 = vector.extract_strided_slice %28 {offsets = [0, 768], sizes = [2, 256], strides = [1, 1]} : vector<2x1024xf32> to vector<2x256xf32>
    %44 = arith.negf %43 : vector<2x256xf32>
    %45 = math.exp %44 : vector<2x256xf32>
    %cst_26 = arith.constant 1.000000e+00 : f32
    %46 = vector.broadcast %cst_26 : f32 to vector<2x256xf32>
    %47 = arith.addf %46, %45 : vector<2x256xf32>
    %48 = arith.divf %46, %47 : vector<2x256xf32>
    %49 = arith.mulf %40, %25 : vector<2x256xf32>
    %50 = arith.mulf %34, %42 : vector<2x256xf32>
    %51 = arith.addf %49, %50 : vector<2x256xf32>
    %52 = math.tanh %51 : vector<2x256xf32>
    %53 = arith.mulf %48, %52 : vector<2x256xf32>
    %54 = vector.extract_strided_slice %22 {offsets = [2, 0], sizes = [2, 1024], strides = [1, 1]} : vector<16x1024xf32> to vector<2x1024xf32>
    %cst_27 = arith.constant dense<0.000000e+00> : vector<2x1024xf32>
    %55 = tpu.matmul %53, %23, %cst_27 {dimension_numbers = #tpu.dot_dimension_numbers<[1], [0], [0], [1], [0, 0, 1, 1], [], []>} : vector<2x256xf32>, vector<256x1024xf32>, vector<2x1024xf32> -> vector<2x1024xf32>
    %56 = arith.addf %54, %55 : vector<2x1024xf32>
    %57 = vector.extract_strided_slice %56 {offsets = [0, 0], sizes = [2, 256], strides = [1, 1]} : vector<2x1024xf32> to vector<2x256xf32>
    %58 = arith.negf %57 : vector<2x256xf32>
    %59 = math.exp %58 : vector<2x256xf32>
    %cst_28 = arith.constant 1.000000e+00 : f32
    %60 = vector.broadcast %cst_28 : f32 to vector<2x256xf32>
    %61 = arith.addf %60, %59 : vector<2x256xf32>
    %62 = arith.divf %60, %61 : vector<2x256xf32>
    %63 = vector.extract_strided_slice %56 {offsets = [0, 256], sizes = [2, 256], strides = [1, 1]} : vector<2x1024xf32> to vector<2x256xf32>
    %64 = arith.negf %63 : vector<2x256xf32>
    %65 = math.exp %64 : vector<2x256xf32>
    %cst_29 = arith.constant 1.000000e+00 : f32
    %66 = vector.broadcast %cst_29 : f32 to vector<2x256xf32>
    %67 = arith.addf %66, %65 : vector<2x256xf32>
    %68 = arith.divf %66, %67 : vector<2x256xf32>
    %69 = vector.extract_strided_slice %56 {offsets = [0, 512], sizes = [2, 256], strides = [1, 1]} : vector<2x1024xf32> to vector<2x256xf32>
    %70 = math.tanh %69 : vector<2x256xf32>
    %71 = vector.extract_strided_slice %56 {offsets = [0, 768], sizes = [2, 256], strides = [1, 1]} : vector<2x1024xf32> to vector<2x256xf32>
    %72 = arith.negf %71 : vector<2x256xf32>
    %73 = math.exp %72 : vector<2x256xf32>
    %cst_30 = arith.constant 1.000000e+00 : f32
    %74 = vector.broadcast %cst_30 : f32 to vector<2x256xf32>
    %75 = arith.addf %74, %73 : vector<2x256xf32>
    %76 = arith.divf %74, %75 : vector<2x256xf32>
    %77 = arith.mulf %68, %51 : vector<2x256xf32>
    %78 = arith.mulf %62, %70 : vector<2x256xf32>
    %79 = arith.addf %77, %78 : vector<2x256xf32>
    %80 = math.tanh %79 : vector<2x256xf32>
    %81 = arith.mulf %76, %80 : vector<2x256xf32>
    %82 = vector.extract_strided_slice %22 {offsets = [4, 0], sizes = [2, 1024], strides = [1, 1]} : vector<16x1024xf32> to vector<2x1024xf32>
    %cst_31 = arith.constant dense<0.000000e+00> : vector<2x1024xf32>
    %83 = tpu.matmul %81, %23, %cst_31 {dimension_numbers = #tpu.dot_dimension_numbers<[1], [0], [0], [1], [0, 0, 1, 1], [], []>} : vector<2x256xf32>, vector<256x1024xf32>, vector<2x1024xf32> -> vector<2x1024xf32>
    %84 = arith.addf %82, %83 : vector<2x1024xf32>
    %85 = vector.extract_strided_slice %84 {offsets = [0, 0], sizes = [2, 256], strides = [1, 1]} : vector<2x1024xf32> to vector<2x256xf32>
    %86 = arith.negf %85 : vector<2x256xf32>
    %87 = math.exp %86 : vector<2x256xf32>
    %cst_32 = arith.constant 1.000000e+00 : f32
    %88 = vector.broadcast %cst_32 : f32 to vector<2x256xf32>
    %89 = arith.addf %88, %87 : vector<2x256xf32>
    %90 = arith.divf %88, %89 : vector<2x256xf32>
    %91 = vector.extract_strided_slice %84 {offsets = [0, 256], sizes = [2, 256], strides = [1, 1]} : vector<2x1024xf32> to vector<2x256xf32>
    %92 = arith.negf %91 : vector<2x256xf32>
    %93 = math.exp %92 : vector<2x256xf32>
    %cst_33 = arith.constant 1.000000e+00 : f32
    %94 = vector.broadcast %cst_33 : f32 to vector<2x256xf32>
    %95 = arith.addf %94, %93 : vector<2x256xf32>
    %96 = arith.divf %94, %95 : vector<2x256xf32>
    %97 = vector.extract_strided_slice %84 {offsets = [0, 512], sizes = [2, 256], strides = [1, 1]} : vector<2x1024xf32> to vector<2x256xf32>
    %98 = math.tanh %97 : vector<2x256xf32>
    %99 = vector.extract_strided_slice %84 {offsets = [0, 768], sizes = [2, 256], strides = [1, 1]} : vector<2x1024xf32> to vector<2x256xf32>
    %100 = arith.negf %99 : vector<2x256xf32>
    %101 = math.exp %100 : vector<2x256xf32>
    %cst_34 = arith.constant 1.000000e+00 : f32
    %102 = vector.broadcast %cst_34 : f32 to vector<2x256xf32>
    %103 = arith.addf %102, %101 : vector<2x256xf32>
    %104 = arith.divf %102, %103 : vector<2x256xf32>
    %105 = arith.mulf %96, %79 : vector<2x256xf32>
    %106 = arith.mulf %90, %98 : vector<2x256xf32>
    %107 = arith.addf %105, %106 : vector<2x256xf32>
    %108 = math.tanh %107 : vector<2x256xf32>
    %109 = arith.mulf %104, %108 : vector<2x256xf32>
    %110 = vector.extract_strided_slice %22 {offsets = [6, 0], sizes = [2, 1024], strides = [1, 1]} : vector<16x1024xf32> to vector<2x1024xf32>
    %cst_35 = arith.constant dense<0.000000e+00> : vector<2x1024xf32>
    %111 = tpu.matmul %109, %23, %cst_35 {dimension_numbers = #tpu.dot_dimension_numbers<[1], [0], [0], [1], [0, 0, 1, 1], [], []>} : vector<2x256xf32>, vector<256x1024xf32>, vector<2x1024xf32> -> vector<2x1024xf32>
    %112 = arith.addf %110, %111 : vector<2x1024xf32>
    %113 = vector.extract_strided_slice %112 {offsets = [0, 0], sizes = [2, 256], strides = [1, 1]} : vector<2x1024xf32> to vector<2x256xf32>
    %114 = arith.negf %113 : vector<2x256xf32>
    %115 = math.exp %114 : vector<2x256xf32>
    %cst_36 = arith.constant 1.000000e+00 : f32
    %116 = vector.broadcast %cst_36 : f32 to vector<2x256xf32>
    %117 = arith.addf %116, %115 : vector<2x256xf32>
    %118 = arith.divf %116, %117 : vector<2x256xf32>
    %119 = vector.extract_strided_slice %112 {offsets = [0, 256], sizes = [2, 256], strides = [1, 1]} : vector<2x1024xf32> to vector<2x256xf32>
    %120 = arith.negf %119 : vector<2x256xf32>
    %121 = math.exp %120 : vector<2x256xf32>
    %cst_37 = arith.constant 1.000000e+00 : f32
    %122 = vector.broadcast %cst_37 : f32 to vector<2x256xf32>
    %123 = arith.addf %122, %121 : vector<2x256xf32>
    %124 = arith.divf %122, %123 : vector<2x256xf32>
    %125 = vector.extract_strided_slice %112 {offsets = [0, 512], sizes = [2, 256], strides = [1, 1]} : vector<2x1024xf32> to vector<2x256xf32>
    %126 = math.tanh %125 : vector<2x256xf32>
    %127 = vector.extract_strided_slice %112 {offsets = [0, 768], sizes = [2, 256], strides = [1, 1]} : vector<2x1024xf32> to vector<2x256xf32>
    %128 = arith.negf %127 : vector<2x256xf32>
    %129 = math.exp %128 : vector<2x256xf32>
    %cst_38 = arith.constant 1.000000e+00 : f32
    %130 = vector.broadcast %cst_38 : f32 to vector<2x256xf32>
    %131 = arith.addf %130, %129 : vector<2x256xf32>
    %132 = arith.divf %130, %131 : vector<2x256xf32>
    %133 = arith.mulf %124, %107 : vector<2x256xf32>
    %134 = arith.mulf %118, %126 : vector<2x256xf32>
    %135 = arith.addf %133, %134 : vector<2x256xf32>
    %136 = math.tanh %135 : vector<2x256xf32>
    %137 = arith.mulf %132, %136 : vector<2x256xf32>
    %138 = vector.extract_strided_slice %22 {offsets = [8, 0], sizes = [2, 1024], strides = [1, 1]} : vector<16x1024xf32> to vector<2x1024xf32>
    %cst_39 = arith.constant dense<0.000000e+00> : vector<2x1024xf32>
    %139 = tpu.matmul %137, %23, %cst_39 {dimension_numbers = #tpu.dot_dimension_numbers<[1], [0], [0], [1], [0, 0, 1, 1], [], []>} : vector<2x256xf32>, vector<256x1024xf32>, vector<2x1024xf32> -> vector<2x1024xf32>
    %140 = arith.addf %138, %139 : vector<2x1024xf32>
    %141 = vector.extract_strided_slice %140 {offsets = [0, 0], sizes = [2, 256], strides = [1, 1]} : vector<2x1024xf32> to vector<2x256xf32>
    %142 = arith.negf %141 : vector<2x256xf32>
    %143 = math.exp %142 : vector<2x256xf32>
    %cst_40 = arith.constant 1.000000e+00 : f32
    %144 = vector.broadcast %cst_40 : f32 to vector<2x256xf32>
    %145 = arith.addf %144, %143 : vector<2x256xf32>
    %146 = arith.divf %144, %145 : vector<2x256xf32>
    %147 = vector.extract_strided_slice %140 {offsets = [0, 256], sizes = [2, 256], strides = [1, 1]} : vector<2x1024xf32> to vector<2x256xf32>
    %148 = arith.negf %147 : vector<2x256xf32>
    %149 = math.exp %148 : vector<2x256xf32>
    %cst_41 = arith.constant 1.000000e+00 : f32
    %150 = vector.broadcast %cst_41 : f32 to vector<2x256xf32>
    %151 = arith.addf %150, %149 : vector<2x256xf32>
    %152 = arith.divf %150, %151 : vector<2x256xf32>
    %153 = vector.extract_strided_slice %140 {offsets = [0, 512], sizes = [2, 256], strides = [1, 1]} : vector<2x1024xf32> to vector<2x256xf32>
    %154 = math.tanh %153 : vector<2x256xf32>
    %155 = vector.extract_strided_slice %140 {offsets = [0, 768], sizes = [2, 256], strides = [1, 1]} : vector<2x1024xf32> to vector<2x256xf32>
    %156 = arith.negf %155 : vector<2x256xf32>
    %157 = math.exp %156 : vector<2x256xf32>
    %cst_42 = arith.constant 1.000000e+00 : f32
    %158 = vector.broadcast %cst_42 : f32 to vector<2x256xf32>
    %159 = arith.addf %158, %157 : vector<2x256xf32>
    %160 = arith.divf %158, %159 : vector<2x256xf32>
    %161 = arith.mulf %152, %135 : vector<2x256xf32>
    %162 = arith.mulf %146, %154 : vector<2x256xf32>
    %163 = arith.addf %161, %162 : vector<2x256xf32>
    %164 = math.tanh %163 : vector<2x256xf32>
    %165 = arith.mulf %160, %164 : vector<2x256xf32>
    %166 = vector.extract_strided_slice %22 {offsets = [10, 0], sizes = [2, 1024], strides = [1, 1]} : vector<16x1024xf32> to vector<2x1024xf32>
    %cst_43 = arith.constant dense<0.000000e+00> : vector<2x1024xf32>
    %167 = tpu.matmul %165, %23, %cst_43 {dimension_numbers = #tpu.dot_dimension_numbers<[1], [0], [0], [1], [0, 0, 1, 1], [], []>} : vector<2x256xf32>, vector<256x1024xf32>, vector<2x1024xf32> -> vector<2x1024xf32>
    %168 = arith.addf %166, %167 : vector<2x1024xf32>
    %169 = vector.extract_strided_slice %168 {offsets = [0, 0], sizes = [2, 256], strides = [1, 1]} : vector<2x1024xf32> to vector<2x256xf32>
    %170 = arith.negf %169 : vector<2x256xf32>
    %171 = math.exp %170 : vector<2x256xf32>
    %cst_44 = arith.constant 1.000000e+00 : f32
    %172 = vector.broadcast %cst_44 : f32 to vector<2x256xf32>
    %173 = arith.addf %172, %171 : vector<2x256xf32>
    %174 = arith.divf %172, %173 : vector<2x256xf32>
    %175 = vector.extract_strided_slice %168 {offsets = [0, 256], sizes = [2, 256], strides = [1, 1]} : vector<2x1024xf32> to vector<2x256xf32>
    %176 = arith.negf %175 : vector<2x256xf32>
    %177 = math.exp %176 : vector<2x256xf32>
    %cst_45 = arith.constant 1.000000e+00 : f32
    %178 = vector.broadcast %cst_45 : f32 to vector<2x256xf32>
    %179 = arith.addf %178, %177 : vector<2x256xf32>
    %180 = arith.divf %178, %179 : vector<2x256xf32>
    %181 = vector.extract_strided_slice %168 {offsets = [0, 512], sizes = [2, 256], strides = [1, 1]} : vector<2x1024xf32> to vector<2x256xf32>
    %182 = math.tanh %181 : vector<2x256xf32>
    %183 = vector.extract_strided_slice %168 {offsets = [0, 768], sizes = [2, 256], strides = [1, 1]} : vector<2x1024xf32> to vector<2x256xf32>
    %184 = arith.negf %183 : vector<2x256xf32>
    %185 = math.exp %184 : vector<2x256xf32>
    %cst_46 = arith.constant 1.000000e+00 : f32
    %186 = vector.broadcast %cst_46 : f32 to vector<2x256xf32>
    %187 = arith.addf %186, %185 : vector<2x256xf32>
    %188 = arith.divf %186, %187 : vector<2x256xf32>
    %189 = arith.mulf %180, %163 : vector<2x256xf32>
    %190 = arith.mulf %174, %182 : vector<2x256xf32>
    %191 = arith.addf %189, %190 : vector<2x256xf32>
    %192 = math.tanh %191 : vector<2x256xf32>
    %193 = arith.mulf %188, %192 : vector<2x256xf32>
    %194 = vector.extract_strided_slice %22 {offsets = [12, 0], sizes = [2, 1024], strides = [1, 1]} : vector<16x1024xf32> to vector<2x1024xf32>
    %cst_47 = arith.constant dense<0.000000e+00> : vector<2x1024xf32>
    %195 = tpu.matmul %193, %23, %cst_47 {dimension_numbers = #tpu.dot_dimension_numbers<[1], [0], [0], [1], [0, 0, 1, 1], [], []>} : vector<2x256xf32>, vector<256x1024xf32>, vector<2x1024xf32> -> vector<2x1024xf32>
    %196 = arith.addf %194, %195 : vector<2x1024xf32>
    %197 = vector.extract_strided_slice %196 {offsets = [0, 0], sizes = [2, 256], strides = [1, 1]} : vector<2x1024xf32> to vector<2x256xf32>
    %198 = arith.negf %197 : vector<2x256xf32>
    %199 = math.exp %198 : vector<2x256xf32>
    %cst_48 = arith.constant 1.000000e+00 : f32
    %200 = vector.broadcast %cst_48 : f32 to vector<2x256xf32>
    %201 = arith.addf %200, %199 : vector<2x256xf32>
    %202 = arith.divf %200, %201 : vector<2x256xf32>
    %203 = vector.extract_strided_slice %196 {offsets = [0, 256], sizes = [2, 256], strides = [1, 1]} : vector<2x1024xf32> to vector<2x256xf32>
    %204 = arith.negf %203 : vector<2x256xf32>
    %205 = math.exp %204 : vector<2x256xf32>
    %cst_49 = arith.constant 1.000000e+00 : f32
    %206 = vector.broadcast %cst_49 : f32 to vector<2x256xf32>
    %207 = arith.addf %206, %205 : vector<2x256xf32>
    %208 = arith.divf %206, %207 : vector<2x256xf32>
    %209 = vector.extract_strided_slice %196 {offsets = [0, 512], sizes = [2, 256], strides = [1, 1]} : vector<2x1024xf32> to vector<2x256xf32>
    %210 = math.tanh %209 : vector<2x256xf32>
    %211 = vector.extract_strided_slice %196 {offsets = [0, 768], sizes = [2, 256], strides = [1, 1]} : vector<2x1024xf32> to vector<2x256xf32>
    %212 = arith.negf %211 : vector<2x256xf32>
    %213 = math.exp %212 : vector<2x256xf32>
    %cst_50 = arith.constant 1.000000e+00 : f32
    %214 = vector.broadcast %cst_50 : f32 to vector<2x256xf32>
    %215 = arith.addf %214, %213 : vector<2x256xf32>
    %216 = arith.divf %214, %215 : vector<2x256xf32>
    %217 = arith.mulf %208, %191 : vector<2x256xf32>
    %218 = arith.mulf %202, %210 : vector<2x256xf32>
    %219 = arith.addf %217, %218 : vector<2x256xf32>
    %220 = math.tanh %219 : vector<2x256xf32>
    %221 = arith.mulf %216, %220 : vector<2x256xf32>
    %222 = vector.extract_strided_slice %22 {offsets = [14, 0], sizes = [2, 1024], strides = [1, 1]} : vector<16x1024xf32> to vector<2x1024xf32>
    %cst_51 = arith.constant dense<0.000000e+00> : vector<2x1024xf32>
    %223 = tpu.matmul %221, %23, %cst_51 {dimension_numbers = #tpu.dot_dimension_numbers<[1], [0], [0], [1], [0, 0, 1, 1], [], []>} : vector<2x256xf32>, vector<256x1024xf32>, vector<2x1024xf32> -> vector<2x1024xf32>
    %224 = arith.addf %222, %223 : vector<2x1024xf32>
    %225 = vector.extract_strided_slice %224 {offsets = [0, 0], sizes = [2, 256], strides = [1, 1]} : vector<2x1024xf32> to vector<2x256xf32>
    %226 = arith.negf %225 : vector<2x256xf32>
    %227 = math.exp %226 : vector<2x256xf32>
    %cst_52 = arith.constant 1.000000e+00 : f32
    %228 = vector.broadcast %cst_52 : f32 to vector<2x256xf32>
    %229 = arith.addf %228, %227 : vector<2x256xf32>
    %230 = arith.divf %228, %229 : vector<2x256xf32>
    %231 = vector.extract_strided_slice %224 {offsets = [0, 256], sizes = [2, 256], strides = [1, 1]} : vector<2x1024xf32> to vector<2x256xf32>
    %232 = arith.negf %231 : vector<2x256xf32>
    %233 = math.exp %232 : vector<2x256xf32>
    %cst_53 = arith.constant 1.000000e+00 : f32
    %234 = vector.broadcast %cst_53 : f32 to vector<2x256xf32>
    %235 = arith.addf %234, %233 : vector<2x256xf32>
    %236 = arith.divf %234, %235 : vector<2x256xf32>
    %237 = vector.extract_strided_slice %224 {offsets = [0, 512], sizes = [2, 256], strides = [1, 1]} : vector<2x1024xf32> to vector<2x256xf32>
    %238 = math.tanh %237 : vector<2x256xf32>
    %239 = vector.extract_strided_slice %224 {offsets = [0, 768], sizes = [2, 256], strides = [1, 1]} : vector<2x1024xf32> to vector<2x256xf32>
    %240 = arith.negf %239 : vector<2x256xf32>
    %241 = math.exp %240 : vector<2x256xf32>
    %cst_54 = arith.constant 1.000000e+00 : f32
    %242 = vector.broadcast %cst_54 : f32 to vector<2x256xf32>
    %243 = arith.addf %242, %241 : vector<2x256xf32>
    %244 = arith.divf %242, %243 : vector<2x256xf32>
    %245 = arith.mulf %236, %219 : vector<2x256xf32>
    %246 = arith.mulf %230, %238 : vector<2x256xf32>
    %247 = arith.addf %245, %246 : vector<2x256xf32>
    %248 = math.tanh %247 : vector<2x256xf32>
    %249 = arith.mulf %244, %248 : vector<2x256xf32>
    %c0_55 = arith.constant 0 : index
    %c0_56 = arith.constant 0 : index
    %250 = vector.load %arg10[%c0_55, %c0_56] : memref<256x128xf32, #tpu.memory_space<vmem>>, vector<256x128xf32>
    %cst_57 = arith.constant dense<0.000000e+00> : vector<2x128xf32>
    %251 = tpu.matmul %249, %250, %cst_57 {dimension_numbers = #tpu.dot_dimension_numbers<[1], [0], [0], [1], [0, 0, 1, 1], [], []>} : vector<2x256xf32>, vector<256x128xf32>, vector<2x128xf32> -> vector<2x128xf32>
    %c0_58 = arith.constant 0 : index
    %c0_59 = arith.constant 0 : index
    %252 = vector.load %arg11[%c0_58, %c0_59] : memref<1x128xf32, #tpu.memory_space<vmem>>, vector<1x128xf32>
    %253 = vector.broadcast %252 : vector<1x128xf32> to vector<2x128xf32>
    %254 = arith.addf %251, %253 : vector<2x128xf32>
    %c0_60 = arith.constant 0 : index
    %c0_61 = arith.constant 0 : index
    %255 = vector.load %arg12[%c0_60, %c0_61] : memref<2x128xf32, #tpu.memory_space<vmem>>, vector<2x128xf32>
    tpu.vector_store %arg12[%c0_60, %c0_61], %254 {strides = array<i32>} : memref<2x128xf32, #tpu.memory_space<vmem>>, vector<2x128xf32>,
    return
  }
  func.func @transform_0(%arg0: i32) -> (i32, i32) {
    %c0_i32 = arith.constant 0 : i32
    %c0_i32_0 = arith.constant 0 : i32
    %c0_i32_1 = arith.constant 0 : i32
    return %c0_i32, %c0_i32_0 : i32, i32
  }
  func.func @transform_1(%arg0: i32) -> (i32, i32) {
    %c0_i32 = arith.constant 0 : i32
    %c0_i32_0 = arith.constant 0 : i32
    %c0_i32_1 = arith.constant 0 : i32
    return %c0_i32, %c0_i32_0 : i32, i32
  }
  func.func @transform_2(%arg0: i32) -> (i32, i32) {
    %c0_i32 = arith.constant 0 : i32
    %c0_i32_0 = arith.constant 0 : i32
    %c0_i32_1 = arith.constant 0 : i32
    return %c0_i32, %c0_i32_0 : i32, i32
  }
  func.func @transform_3(%arg0: i32) -> (i32, i32) {
    %c0_i32 = arith.constant 0 : i32
    %c0_i32_0 = arith.constant 0 : i32
    %c0_i32_1 = arith.constant 0 : i32
    return %c0_i32, %c0_i32_0 : i32, i32
  }
  func.func @transform_4(%arg0: i32) -> (i32, i32) {
    %c0_i32 = arith.constant 0 : i32
    %c0_i32_0 = arith.constant 0 : i32
    %c0_i32_1 = arith.constant 0 : i32
    return %c0_i32, %c0_i32_0 : i32, i32
  }
  func.func @transform_5(%arg0: i32) -> (i32, i32) {
    %c0_i32 = arith.constant 0 : i32
    %c0_i32_0 = arith.constant 0 : i32
    %c0_i32_1 = arith.constant 0 : i32
    return %c0_i32, %c0_i32_0 : i32, i32
  }
  func.func @transform_6(%arg0: i32) -> (i32, i32) {
    %c0_i32 = arith.constant 0 : i32
    %c0_i32_0 = arith.constant 0 : i32
    %c0_i32_1 = arith.constant 0 : i32
    return %c0_i32, %c0_i32_0 : i32, i32
  }
  func.func @transform_7(%arg0: i32) -> (i32, i32) {
    %c0_i32 = arith.constant 0 : i32
    %c0_i32_0 = arith.constant 0 : i32
    %c0_i32_1 = arith.constant 0 : i32
    return %c0_i32, %c0_i32_0 : i32, i32
  }
  func.func @transform_8(%arg0: i32) -> (i32, i32) {
    %c0_i32 = arith.constant 0 : i32
    %c0_i32_0 = arith.constant 0 : i32
    %c0_i32_1 = arith.constant 0 : i32
    return %c0_i32, %c0_i32_0 : i32, i32
  }
  func.func @transform_9(%arg0: i32) -> (i32, i32) {
    %c0_i32 = arith.constant 0 : i32
    %c0_i32_0 = arith.constant 0 : i32
    %c0_i32_1 = arith.constant 0 : i32
    return %c0_i32, %c0_i32_0 : i32, i32
  }
  func.func @transform_10(%arg0: i32) -> (i32, i32) {
    %c0_i32 = arith.constant 0 : i32
    %c0_i32_0 = arith.constant 0 : i32
    %c0_i32_1 = arith.constant 0 : i32
    return %c0_i32, %c0_i32_0 : i32, i32
  }
  func.func @transform_11(%arg0: i32) -> (i32, i32) {
    %c0_i32 = arith.constant 0 : i32
    %c0_i32_0 = arith.constant 0 : i32
    %c0_i32_1 = arith.constant 0 : i32
    return %c0_i32, %c0_i32_0 : i32, i32
  }
}

</mosaic_0001>

<llo_original>
// kernel: mos_forward.1
$region0: #{mos_forward.1}
  #allocation0 [shape = 'u32[]', space=smem, size = 0x4, offset = 0x4, fixed_abs, tag = 'smem constant byte address 0x4 - core index']
  #allocation1 [shape = 'u32[144,128]{1,0:T(1,128)}', space=vmem, size = 0x12000, scoped, tag = 'internal scratch']
  %s0 = inlined_call_operand.vmem [shape: bf16[4096,27], index: 0, kind: input, shape index: {}]
  %s1 = inlined_call_operand.vmem [shape: bf16[16,4096], index: 1, kind: input, shape index: {}]
  %s2 = inlined_call_operand.vmem [shape: bf16[27,32], index: 2, kind: input, shape index: {}]
  %s3 = inlined_call_operand.vmem [shape: f32[1,32], index: 3, kind: input, shape index: {}]
  %s4 = inlined_call_operand.vmem [shape: bf16[32,512], index: 4, kind: input, shape index: {}]
  %s5 = inlined_call_operand.vmem [shape: f32[1,512], index: 5, kind: input, shape index: {}]
  %s6 = inlined_call_operand.vmem [shape: bf16[512,1024], index: 6, kind: input, shape index: {}]
  %s7 = inlined_call_operand.vmem [shape: f32[256,1024], index: 7, kind: input, shape index: {}]
  %s8 = inlined_call_operand.vmem [shape: f32[1,1024], index: 8, kind: input, shape index: {}]
  %s9 = inlined_call_operand.vmem [shape: f32[256,128], index: 9, kind: input, shape index: {}]
  %s10 = inlined_call_operand.vmem [shape: f32[1,128], index: 10, kind: input, shape index: {}]
  %s11 = inlined_call_operand.vmem [shape: f32[2,128], index: 11, kind: output, shape index: {}]
  %s12 = sld [smem:[#allocation0]]
  $region54: #{mos_forward.1} parent=0
    _
  %s14 = ssub.s32 1, %s12
  %s15 = scalar_select 0, %s14, %s12
  // Predicated region
  $region2: #{mos_forward.1} parent=0 // pred_check
    _
  $region3: #{mos_forward.1} parent=0 // pred_check_branch
    %17 = sbr.rel (0) target = $region5
  $region4: #{mos_forward.1} parent=0 // pred_region
    _
  $region5: #{mos_forward.1} parent=0 // pred_fallthru
    _
  // Predicated region
  $region6: #{mos_forward.1} parent=0 // pred_check
    _
  $region7: #{mos_forward.1} parent=0 // pred_check_branch
    %19 = sbr.rel (0) target = $region9
  $region8: #{mos_forward.1} parent=0 // pred_region
    _
  $region9: #{mos_forward.1} parent=0 // pred_fallthru
    _
  // Predicated region
  $region10: #{mos_forward.1} parent=0 // pred_check
    _
  $region11: #{mos_forward.1} parent=0 // pred_check_branch
    %21 = sbr.rel (0) target = $region13
  $region12: #{mos_forward.1} parent=0 // pred_region
    _
  $region13: #{mos_forward.1} parent=0 // pred_fallthru
    _
  // Predicated region
  $region14: #{mos_forward.1} parent=0 // pred_check
    _
  $region15: #{mos_forward.1} parent=0 // pred_check_branch
    %23 = sbr.rel (0) target = $region17
  $region16: #{mos_forward.1} parent=0 // pred_region
    _
  $region17: #{mos_forward.1} parent=0 // pred_fallthru
    _
  // Predicated region
  $region18: #{mos_forward.1} parent=0 // pred_check
    _
  $region19: #{mos_forward.1} parent=0 // pred_check_branch
    %25 = sbr.rel (0) target = $region21
  $region20: #{mos_forward.1} parent=0 // pred_region
    _
  $region21: #{mos_forward.1} parent=0 // pred_fallthru
    _
  // Predicated region
  $region22: #{mos_forward.1} parent=0 // pred_check
    _
  $region23: #{mos_forward.1} parent=0 // pred_check_branch
    %27 = sbr.rel (0) target = $region25
  $region24: #{mos_forward.1} parent=0 // pred_region
    _
  $region25: #{mos_forward.1} parent=0 // pred_fallthru
    _
  // Predicated region
  $region26: #{mos_forward.1} parent=0 // pred_check
    _
  $region27: #{mos_forward.1} parent=0 // pred_check_branch
    %29 = sbr.rel (0) target = $region29
  $region28: #{mos_forward.1} parent=0 // pred_region
    _
  $region29: #{mos_forward.1} parent=0 // pred_fallthru
    _
  // Predicated region
  $region30: #{mos_forward.1} parent=0 // pred_check
    _
  $region31: #{mos_forward.1} parent=0 // pred_check_branch
    %31 = sbr.rel (0) target = $region33
  $region32: #{mos_forward.1} parent=0 // pred_region
    _
  $region33: #{mos_forward.1} parent=0 // pred_fallthru
    _
  // Predicated region
  $region34: #{mos_forward.1} parent=0 // pred_check
    _
  $region35: #{mos_forward.1} parent=0 // pred_check_branch
    %33 = sbr.rel (0) target = $region37
  $region36: #{mos_forward.1} parent=0 // pred_region
    _
  $region37: #{mos_forward.1} parent=0 // pred_fallthru
    _
  // Predicated region
  $region38: #{mos_forward.1} parent=0 // pred_check
    _
  $region39: #{mos_forward.1} parent=0 // pred_check_branch
    %35 = sbr.rel (0) target = $region41
  $region40: #{mos_forward.1} parent=0 // pred_region
    _
  $region41: #{mos_forward.1} parent=0 // pred_fallthru
    _
  // Predicated region
  $region42: #{mos_forward.1} parent=0 // pred_check
    _
  $region43: #{mos_forward.1} parent=0 // pred_check_branch
    %37 = sbr.rel (0) target = $region45
  $region44: #{mos_forward.1} parent=0 // pred_region
    _
  $region45: #{mos_forward.1} parent=0 // pred_fallthru
    _
  %v39 = vld [vmem:[%s0] sm:$0xf]
  %v40 = vld [vmem:[%s0 + $0x4] sm:$0xf]
  %v41 = vld [vmem:[%s0 + $0x8] sm:$0xf]
  %v42 = vld [vmem:[%s0 + $0xc] sm:$0xf]
  %v43 = vld [vmem:[%s0 + $0x10] sm:$0xf]
  %v44 = vld [vmem:[%s0 + $0x14] sm:$0xf]
  %v45 = vld [vmem:[%s0 + $0x18] sm:$0xf]
  %v46 = vld [vmem:[%s0 + $0x1c] sm:$0xf]
  %v47 = vld [vmem:[%s0 + $0x20] sm:$0xf]
  %v48 = vld [vmem:[%s0 + $0x24] sm:$0xf]
  %v49 = vld [vmem:[%s0 + $0x28] sm:$0xf]
  %v50 = vld [vmem:[%s0 + $0x2c] sm:$0xf]
  %v51 = vld [vmem:[%s0 + $0x30] sm:$0xf]
  %v52 = vld [vmem:[%s0 + $0x34] sm:$0xf]
  %v53 = vld [vmem:[%s0 + $0x38] sm:$0xf]
  %v54 = vld [vmem:[%s0 + $0x3c] sm:$0xf]
  %v55 = vld [vmem:[%s0 + $0x40] sm:$0xf]
  %v56 = vld [vmem:[%s0 + $0x44] sm:$0xf]
  %v57 = vld [vmem:[%s0 + $0x48] sm:$0xf]
  %v58 = vld [vmem:[%s0 + $0x4c] sm:$0xf]
  %v59 = vld [vmem:[%s0 + $0x50] sm:$0xf]
  %v60 = vld [vmem:[%s0 + $0x54] sm:$0xf]
  %v61 = vld [vmem:[%s0 + $0x58] sm:$0xf]
  %v62 = vld [vmem:[%s0 + $0x5c] sm:$0xf]
  %v63 = vld [vmem:[%s0 + $0x60] sm:$0xf]
  %v64 = vld [vmem:[%s0 + $0x64] sm:$0xf]
  %v65 = vld [vmem:[%s0 + $0x68] sm:$0xf]
  %v66 = vld [vmem:[%s0 + $0x6c] sm:$0xf]
  %v67 = vld [vmem:[%s0 + $0x70] sm:$0xf]
  %v68 = vld [vmem:[%s0 + $0x74] sm:$0xf]
  %v69 = vld [vmem:[%s0 + $0x78] sm:$0xf]
  %v70 = vld [vmem:[%s0 + $0x7c] sm:$0xf]
  %v71 = vld [vmem:[%s0 + $0x80] sm:$0xf]
  %v72 = vld [vmem:[%s0 + $0x84] sm:$0xf]
  %v73 = vld [vmem:[%s0 + $0x88] sm:$0xf]
  %v74 = vld [vmem:[%s0 + $0x8c] sm:$0xf]
  %v75 = vld [vmem:[%s0 + $0x90] sm:$0xf]
  %v76 = vld [vmem:[%s0 + $0x94] sm:$0xf]
  %v77 = vld [vmem:[%s0 + $0x98] sm:$0xf]
  %v78 = vld [vmem:[%s0 + $0x9c] sm:$0xf]
  %v79 = vld [vmem:[%s0 + $0xa0] sm:$0xf]
  %v80 = vld [vmem:[%s0 + $0xa4] sm:$0xf]
  %v81 = vld [vmem:[%s0 + $0xa8] sm:$0xf]
  %v82 = vld [vmem:[%s0 + $0xac] sm:$0xf]
  %v83 = vld [vmem:[%s0 + $0xb0] sm:$0xf]
  %v84 = vld [vmem:[%s0 + $0xb4] sm:$0xf]
  %v85 = vld [vmem:[%s0 + $0xb8] sm:$0xf]
  %v86 = vld [vmem:[%s0 + $0xbc] sm:$0xf]
  %v87 = vld [vmem:[%s0 + $0xc0] sm:$0xf]
  %v88 = vld [vmem:[%s0 + $0xc4] sm:$0xf]
  %v89 = vld [vmem:[%s0 + $0xc8] sm:$0xf]
  %v90 = vld [vmem:[%s0 + $0xcc] sm:$0xf]
  %v91 = vld [vmem:[%s0 + $0xd0] sm:$0xf]
  %v92 = vld [vmem:[%s0 + $0xd4] sm:$0xf]
  %v93 = vld [vmem:[%s0 + $0xd8] sm:$0xf]
  %v94 = vld [vmem:[%s0 + $0xdc] sm:$0xf]
  %v95 = vld [vmem:[%s0 + $0xe0] sm:$0xf]
  %v96 = vld [vmem:[%s0 + $0xe4] sm:$0xf]
  %v97 = vld [vmem:[%s0 + $0xe8] sm:$0xf]
  %v98 = vld [vmem:[%s0 + $0xec] sm:$0xf]
  %v99 = vld [vmem:[%s0 + $0xf0] sm:$0xf]
  %v100 = vld [vmem:[%s0 + $0xf4] sm:$0xf]
  %v101 = vld [vmem:[%s0 + $0xf8] sm:$0xf]
  %v102 = vld [vmem:[%s0 + $0xfc] sm:$0xf]
  %v103 = vld [vmem:[%s0 + $0x100] sm:$0xf]
  %v104 = vld [vmem:[%s0 + $0x104] sm:$0xf]
  %v105 = vld [vmem:[%s0 + $0x108] sm:$0xf]
  %v106 = vld [vmem:[%s0 + $0x10c] sm:$0xf]
  %v107 = vld [vmem:[%s0 + $0x110] sm:$0xf]
  %v108 = vld [vmem:[%s0 + $0x114] sm:$0xf]
  %v109 = vld [vmem:[%s0 + $0x118] sm:$0xf]
  %v110 = vld [vmem:[%s0 + $0x11c] sm:$0xf]
  %v111 = vld [vmem:[%s0 + $0x120] sm:$0xf]
  %v112 = vld [vmem:[%s0 + $0x124] sm:$0xf]
  %v113 = vld [vmem:[%s0 + $0x128] sm:$0xf]
  %v114 = vld [vmem:[%s0 + $0x12c] sm:$0xf]
  %v115 = vld [vmem:[%s0 + $0x130] sm:$0xf]
  %v116 = vld [vmem:[%s0 + $0x134] sm:$0xf]
  %v117 = vld [vmem:[%s0 + $0x138] sm:$0xf]
  %v118 = vld [vmem:[%s0 + $0x13c] sm:$0xf]
  %v119 = vld [vmem:[%s0 + $0x140] sm:$0xf]
  %v120 = vld [vmem:[%s0 + $0x144] sm:$0xf]
  %v121 = vld [vmem:[%s0 + $0x148] sm:$0xf]
  %v122 = vld [vmem:[%s0 + $0x14c] sm:$0xf]
  %v123 = vld [vmem:[%s0 + $0x150] sm:$0xf]
  %v124 = vld [vmem:[%s0 + $0x154] sm:$0xf]
  %v125 = vld [vmem:[%s0 + $0x158] sm:$0xf]
  %v126 = vld [vmem:[%s0 + $0x15c] sm:$0xf]
  %v127 = vld [vmem:[%s0 + $0x160] sm:$0xf]
  %v128 = vld [vmem:[%s0 + $0x164] sm:$0xf]
  %v129 = vld [vmem:[%s0 + $0x168] sm:$0xf]
  %v130 = vld [vmem:[%s0 + $0x16c] sm:$0xf]
  %v131 = vld [vmem:[%s0 + $0x170] sm:$0xf]
  %v132 = vld [vmem:[%s0 + $0x174] sm:$0xf]
  %v133 = vld [vmem:[%s0 + $0x178] sm:$0xf]
  %v134 = vld [vmem:[%s0 + $0x17c] sm:$0xf]
  %v135 = vld [vmem:[%s0 + $0x180] sm:$0xf]
  %v136 = vld [vmem:[%s0 + $0x184] sm:$0xf]
  %v137 = vld [vmem:[%s0 + $0x188] sm:$0xf]
  %v138 = vld [vmem:[%s0 + $0x18c] sm:$0xf]
  %v139 = vld [vmem:[%s0 + $0x190] sm:$0xf]
  %v140 = vld [vmem:[%s0 + $0x194] sm:$0xf]
  %v141 = vld [vmem:[%s0 + $0x198] sm:$0xf]
  %v142 = vld [vmem:[%s0 + $0x19c] sm:$0xf]
  %v143 = vld [vmem:[%s0 + $0x1a0] sm:$0xf]
  %v144 = vld [vmem:[%s0 + $0x1a4] sm:$0xf]
  %v145 = vld [vmem:[%s0 + $0x1a8] sm:$0xf]
  %v146 = vld [vmem:[%s0 + $0x1ac] sm:$0xf]
  %v147 = vld [vmem:[%s0 + $0x1b0] sm:$0xf]
  %v148 = vld [vmem:[%s0 + $0x1b4] sm:$0xf]
  %v149 = vld [vmem:[%s0 + $0x1b8] sm:$0xf]
  %v150 = vld [vmem:[%s0 + $0x1bc] sm:$0xf]
  %v151 = vld [vmem:[%s0 + $0x1c0] sm:$0xf]
  %v152 = vld [vmem:[%s0 + $0x1c4] sm:$0xf]
  %v153 = vld [vmem:[%s0 + $0x1c8] sm:$0xf]
  %v154 = vld [vmem:[%s0 + $0x1cc] sm:$0xf]
  %v155 = vld [vmem:[%s0 + $0x1d0] sm:$0xf]
  %v156 = vld [vmem:[%s0 + $0x1d4] sm:$0xf]
  %v157 = vld [vmem:[%s0 + $0x1d8] sm:$0xf]
  %v158 = vld [vmem:[%s0 + $0x1dc] sm:$0xf]
  %v159 = vld [vmem:[%s0 + $0x1e0] sm:$0xf]
  %v160 = vld [vmem:[%s0 + $0x1e4] sm:$0xf]
  %v161 = vld [vmem:[%s0 + $0x1e8] sm:$0xf]
  %v162 = vld [vmem:[%s0 + $0x1ec] sm:$0xf]
  %v163 = vld [vmem:[%s0 + $0x1f0] sm:$0xf]
  %v164 = vld [vmem:[%s0 + $0x1f4] sm:$0xf]
  %v165 = vld [vmem:[%s0 + $0x1f8] sm:$0xf]
  %v166 = vld [vmem:[%s0 + $0x1fc] sm:$0xf]
  %v167 = vld [vmem:[%s0 + $0x200] sm:$0xf]
  %v168 = vld [vmem:[%s0 + $0x204] sm:$0xf]
  %v169 = vld [vmem:[%s0 + $0x208] sm:$0xf]
  %v170 = vld [vmem:[%s0 + $0x20c] sm:$0xf]
  %v171 = vld [vmem:[%s0 + $0x210] sm:$0xf]
  %v172 = vld [vmem:[%s0 + $0x214] sm:$0xf]
  %v173 = vld [vmem:[%s0 + $0x218] sm:$0xf]
  %v174 = vld [vmem:[%s0 + $0x21c] sm:$0xf]
  %v175 = vld [vmem:[%s0 + $0x220] sm:$0xf]
  %v176 = vld [vmem:[%s0 + $0x224] sm:$0xf]
  %v177 = vld [vmem:[%s0 + $0x228] sm:$0xf]
  %v178 = vld [vmem:[%s0 + $0x22c] sm:$0xf]
  %v179 = vld [vmem:[%s0 + $0x230] sm:$0xf]
  %v180 = vld [vmem:[%s0 + $0x234] sm:$0xf]
  %v181 = vld [vmem:[%s0 + $0x238] sm:$0xf]
  %v182 = vld [vmem:[%s0 + $0x23c] sm:$0xf]
  %v183 = vld [vmem:[%s0 + $0x240] sm:$0xf]
  %v184 = vld [vmem:[%s0 + $0x244] sm:$0xf]
  %v185 = vld [vmem:[%s0 + $0x248] sm:$0xf]
  %v186 = vld [vmem:[%s0 + $0x24c] sm:$0xf]
  %v187 = vld [vmem:[%s0 + $0x250] sm:$0xf]
  %v188 = vld [vmem:[%s0 + $0x254] sm:$0xf]
  %v189 = vld [vmem:[%s0 + $0x258] sm:$0xf]
  %v190 = vld [vmem:[%s0 + $0x25c] sm:$0xf]
  %v191 = vld [vmem:[%s0 + $0x260] sm:$0xf]
  %v192 = vld [vmem:[%s0 + $0x264] sm:$0xf]
  %v193 = vld [vmem:[%s0 + $0x268] sm:$0xf]
  %v194 = vld [vmem:[%s0 + $0x26c] sm:$0xf]
  %v195 = vld [vmem:[%s0 + $0x270] sm:$0xf]
  %v196 = vld [vmem:[%s0 + $0x274] sm:$0xf]
  %v197 = vld [vmem:[%s0 + $0x278] sm:$0xf]
  %v198 = vld [vmem:[%s0 + $0x27c] sm:$0xf]
  %v199 = vld [vmem:[%s0 + $0x280] sm:$0xf]
  %v200 = vld [vmem:[%s0 + $0x284] sm:$0xf]
  %v201 = vld [vmem:[%s0 + $0x288] sm:$0xf]
  %v202 = vld [vmem:[%s0 + $0x28c] sm:$0xf]
  %v203 = vld [vmem:[%s0 + $0x290] sm:$0xf]
  %v204 = vld [vmem:[%s0 + $0x294] sm:$0xf]
  %v205 = vld [vmem:[%s0 + $0x298] sm:$0xf]
  %v206 = vld [vmem:[%s0 + $0x29c] sm:$0xf]
  %v207 = vld [vmem:[%s0 + $0x2a0] sm:$0xf]
  %v208 = vld [vmem:[%s0 + $0x2a4] sm:$0xf]
  %v209 = vld [vmem:[%s0 + $0x2a8] sm:$0xf]
  %v210 = vld [vmem:[%s0 + $0x2ac] sm:$0xf]
  %v211 = vld [vmem:[%s0 + $0x2b0] sm:$0xf]
  %v212 = vld [vmem:[%s0 + $0x2b4] sm:$0xf]
  %v213 = vld [vmem:[%s0 + $0x2b8] sm:$0xf]
  %v214 = vld [vmem:[%s0 + $0x2bc] sm:$0xf]
  %v215 = vld [vmem:[%s0 + $0x2c0] sm:$0xf]
  %v216 = vld [vmem:[%s0 + $0x2c4] sm:$0xf]
  %v217 = vld [vmem:[%s0 + $0x2c8] sm:$0xf]
  %v218 = vld [vmem:[%s0 + $0x2cc] sm:$0xf]
  %v219 = vld [vmem:[%s0 + $0x2d0] sm:$0xf]
  %v220 = vld [vmem:[%s0 + $0x2d4] sm:$0xf]
  %v221 = vld [vmem:[%s0 + $0x2d8] sm:$0xf]
  %v222 = vld [vmem:[%s0 + $0x2dc] sm:$0xf]
  %v223 = vld [vmem:[%s0 + $0x2e0] sm:$0xf]
  %v224 = vld [vmem:[%s0 + $0x2e4] sm:$0xf]
  %v225 = vld [vmem:[%s0 + $0x2e8] sm:$0xf]
  %v226 = vld [vmem:[%s0 + $0x2ec] sm:$0xf]
  %v227 = vld [vmem:[%s0 + $0x2f0] sm:$0xf]
  %v228 = vld [vmem:[%s0 + $0x2f4] sm:$0xf]
  %v229 = vld [vmem:[%s0 + $0x2f8] sm:$0xf]
  %v230 = vld [vmem:[%s0 + $0x2fc] sm:$0xf]
  %v231 = vld [vmem:[%s0 + $0x300] sm:$0xf]
  %v232 = vld [vmem:[%s0 + $0x304] sm:$0xf]
  %v233 = vld [vmem:[%s0 + $0x308] sm:$0xf]
  %v234 = vld [vmem:[%s0 + $0x30c] sm:$0xf]
  %v235 = vld [vmem:[%s0 + $0x310] sm:$0xf]
  %v236 = vld [vmem:[%s0 + $0x314] sm:$0xf]
  %v237 = vld [vmem:[%s0 + $0x318] sm:$0xf]
  %v238 = vld [vmem:[%s0 + $0x31c] sm:$0xf]
  %v239 = vld [vmem:[%s0 + $0x320] sm:$0xf]
  %v240 = vld [vmem:[%s0 + $0x324] sm:$0xf]
  %v241 = vld [vmem:[%s0 + $0x328] sm:$0xf]
  %v242 = vld [vmem:[%s0 + $0x32c] sm:$0xf]
  %v243 = vld [vmem:[%s0 + $0x330] sm:$0xf]
  %v244 = vld [vmem:[%s0 + $0x334] sm:$0xf]
  %v245 = vld [vmem:[%s0 + $0x338] sm:$0xf]
  %v246 = vld [vmem:[%s0 + $0x33c] sm:$0xf]
  %v247 = vld [vmem:[%s0 + $0x340] sm:$0xf]
  %v248 = vld [vmem:[%s0 + $0x344] sm:$0xf]
  %v249 = vld [vmem:[%s0 + $0x348] sm:$0xf]
  %v250 = vld [vmem:[%s0 + $0x34c] sm:$0xf]
  %v251 = vld [vmem:[%s0 + $0x350] sm:$0xf]
  %v252 = vld [vmem:[%s0 + $0x354] sm:$0xf]
  %v253 = vld [vmem:[%s0 + $0x358] sm:$0xf]
  %v254 = vld [vmem:[%s0 + $0x35c] sm:$0xf]
  %v255 = vld [vmem:[%s0 + $0x360] sm:$0xf]
  %v256 = vld [vmem:[%s0 + $0x364] sm:$0xf]
  %v257 = vld [vmem:[%s0 + $0x368] sm:$0xf]
  %v258 = vld [vmem:[%s0 + $0x36c] sm:$0xf]
  %v259 = vld [vmem:[%s0 + $0x370] sm:$0xf]
  %v260 = vld [vmem:[%s0 + $0x374] sm:$0xf]
  %v261 = vld [vmem:[%s0 + $0x378] sm:$0xf]
  %v262 = vld [vmem:[%s0 + $0x37c] sm:$0xf]
  %v263 = vld [vmem:[%s0 + $0x380] sm:$0xf]
  %v264 = vld [vmem:[%s0 + $0x384] sm:$0xf]
  %v265 = vld [vmem:[%s0 + $0x388] sm:$0xf]
  %v266 = vld [vmem:[%s0 + $0x38c] sm:$0xf]
  %v267 = vld [vmem:[%s0 + $0x390] sm:$0xf]
  %v268 = vld [vmem:[%s0 + $0x394] sm:$0xf]
  %v269 = vld [vmem:[%s0 + $0x398] sm:$0xf]
  %v270 = vld [vmem:[%s0 + $0x39c] sm:$0xf]
  %v271 = vld [vmem:[%s0 + $0x3a0] sm:$0xf]
  %v272 = vld [vmem:[%s0 + $0x3a4] sm:$0xf]
  %v273 = vld [vmem:[%s0 + $0x3a8] sm:$0xf]
  %v274 = vld [vmem:[%s0 + $0x3ac] sm:$0xf]
  %v275 = vld [vmem:[%s0 + $0x3b0] sm:$0xf]
  %v276 = vld [vmem:[%s0 + $0x3b4] sm:$0xf]
  %v277 = vld [vmem:[%s0 + $0x3b8] sm:$0xf]
  %v278 = vld [vmem:[%s0 + $0x3bc] sm:$0xf]
  %v279 = vld [vmem:[%s0 + $0x3c0] sm:$0xf]
  %v280 = vld [vmem:[%s0 + $0x3c4] sm:$0xf]
  %v281 = vld [vmem:[%s0 + $0x3c8] sm:$0xf]
  %v282 = vld [vmem:[%s0 + $0x3cc] sm:$0xf]
  %v283 = vld [vmem:[%s0 + $0x3d0] sm:$0xf]
  %v284 = vld [vmem:[%s0 + $0x3d4] sm:$0xf]
  %v285 = vld [vmem:[%s0 + $0x3d8] sm:$0xf]
  %v286 = vld [vmem:[%s0 + $0x3dc] sm:$0xf]
  %v287 = vld [vmem:[%s0 + $0x3e0] sm:$0xf]
  %v288 = vld [vmem:[%s0 + $0x3e4] sm:$0xf]
  %v289 = vld [vmem:[%s0 + $0x3e8] sm:$0xf]
  %v290 = vld [vmem:[%s0 + $0x3ec] sm:$0xf]
  %v291 = vld [vmem:[%s0 + $0x3f0] sm:$0xf]
  %v292 = vld [vmem:[%s0 + $0x3f4] sm:$0xf]
  %v293 = vld [vmem:[%s0 + $0x3f8] sm:$0xf]
  %v294 = vld [vmem:[%s0 + $0x3fc] sm:$0xf]
  %v295 = vld [vmem:[%s0 + $0x400] sm:$0xf]
  %v296 = vld [vmem:[%s0 + $0x404] sm:$0xf]
  %v297 = vld [vmem:[%s0 + $0x408] sm:$0xf]
  %v298 = vld [vmem:[%s0 + $0x40c] sm:$0xf]
  %v299 = vld [vmem:[%s0 + $0x410] sm:$0xf]
  %v300 = vld [vmem:[%s0 + $0x414] sm:$0xf]
  %v301 = vld [vmem:[%s0 + $0x418] sm:$0xf]
  %v302 = vld [vmem:[%s0 + $0x41c] sm:$0xf]
  %v303 = vld [vmem:[%s0 + $0x420] sm:$0xf]
  %v304 = vld [vmem:[%s0 + $0x424] sm:$0xf]
  %v305 = vld [vmem:[%s0 + $0x428] sm:$0xf]
  %v306 = vld [vmem:[%s0 + $0x42c] sm:$0xf]
  %v307 = vld [vmem:[%s0 + $0x430] sm:$0xf]
  %v308 = vld [vmem:[%s0 + $0x434] sm:$0xf]
  %v309 = vld [vmem:[%s0 + $0x438] sm:$0xf]
  %v310 = vld [vmem:[%s0 + $0x43c] sm:$0xf]
  %v311 = vld [vmem:[%s0 + $0x440] sm:$0xf]
  %v312 = vld [vmem:[%s0 + $0x444] sm:$0xf]
  %v313 = vld [vmem:[%s0 + $0x448] sm:$0xf]
  %v314 = vld [vmem:[%s0 + $0x44c] sm:$0xf]
  %v315 = vld [vmem:[%s0 + $0x450] sm:$0xf]
  %v316 = vld [vmem:[%s0 + $0x454] sm:$0xf]
  %v317 = vld [vmem:[%s0 + $0x458] sm:$0xf]
  %v318 = vld [vmem:[%s0 + $0x45c] sm:$0xf]
  %v319 = vld [vmem:[%s0 + $0x460] sm:$0xf]
  %v320 = vld [vmem:[%s0 + $0x464] sm:$0xf]
  %v321 = vld [vmem:[%s0 + $0x468] sm:$0xf]
  %v322 = vld [vmem:[%s0 + $0x46c] sm:$0xf]
  %v323 = vld [vmem:[%s0 + $0x470] sm:$0xf]
  %v324 = vld [vmem:[%s0 + $0x474] sm:$0xf]
  %v325 = vld [vmem:[%s0 + $0x478] sm:$0xf]
  %v326 = vld [vmem:[%s0 + $0x47c] sm:$0xf]
  %v327 = vld [vmem:[%s0 + $0x480] sm:$0xf]
  %v328 = vld [vmem:[%s0 + $0x484] sm:$0xf]
  %v329 = vld [vmem:[%s0 + $0x488] sm:$0xf]
  %v330 = vld [vmem:[%s0 + $0x48c] sm:$0xf]
  %v331 = vld [vmem:[%s0 + $0x490] sm:$0xf]
  %v332 = vld [vmem:[%s0 + $0x494] sm:$0xf]
  %v333 = vld [vmem:[%s0 + $0x498] sm:$0xf]
  %v334 = vld [vmem:[%s0 + $0x49c] sm:$0xf]
  %v335 = vld [vmem:[%s0 + $0x4a0] sm:$0xf]
  %v336 = vld [vmem:[%s0 + $0x4a4] sm:$0xf]
  %v337 = vld [vmem:[%s0 + $0x4a8] sm:$0xf]
  %v338 = vld [vmem:[%s0 + $0x4ac] sm:$0xf]
  %v339 = vld [vmem:[%s0 + $0x4b0] sm:$0xf]
  %v340 = vld [vmem:[%s0 + $0x4b4] sm:$0xf]
  %v341 = vld [vmem:[%s0 + $0x4b8] sm:$0xf]
  %v342 = vld [vmem:[%s0 + $0x4bc] sm:$0xf]
  %v343 = vld [vmem:[%s0 + $0x4c0] sm:$0xf]
  %v344 = vld [vmem:[%s0 + $0x4c4] sm:$0xf]
  %v345 = vld [vmem:[%s0 + $0x4c8] sm:$0xf]
  %v346 = vld [vmem:[%s0 + $0x4cc] sm:$0xf]
  %v347 = vld [vmem:[%s0 + $0x4d0] sm:$0xf]
  %v348 = vld [vmem:[%s0 + $0x4d4] sm:$0xf]
  %v349 = vld [vmem:[%s0 + $0x4d8] sm:$0xf]
  %v350 = vld [vmem:[%s0 + $0x4dc] sm:$0xf]
  %v351 = vld [vmem:[%s0 + $0x4e0] sm:$0xf]
  %v352 = vld [vmem:[%s0 + $0x4e4] sm:$0xf]
  %v353 = vld [vmem:[%s0 + $0x4e8] sm:$0xf]
  %v354 = vld [vmem:[%s0 + $0x4ec] sm:$0xf]
  %v355 = vld [vmem:[%s0 + $0x4f0] sm:$0xf]
  %v356 = vld [vmem:[%s0 + $0x4f4] sm:$0xf]
  %v357 = vld [vmem:[%s0 + $0x4f8] sm:$0xf]
  %v358 = vld [vmem:[%s0 + $0x4fc] sm:$0xf]
  %v359 = vld [vmem:[%s0 + $0x500] sm:$0xf]
  %v360 = vld [vmem:[%s0 + $0x504] sm:$0xf]
  %v361 = vld [vmem:[%s0 + $0x508] sm:$0xf]
  %v362 = vld [vmem:[%s0 + $0x50c] sm:$0xf]
  %v363 = vld [vmem:[%s0 + $0x510] sm:$0xf]
  %v364 = vld [vmem:[%s0 + $0x514] sm:$0xf]
  %v365 = vld [vmem:[%s0 + $0x518] sm:$0xf]
  %v366 = vld [vmem:[%s0 + $0x51c] sm:$0xf]
  %v367 = vld [vmem:[%s0 + $0x520] sm:$0xf]
  %v368 = vld [vmem:[%s0 + $0x524] sm:$0xf]
  %v369 = vld [vmem:[%s0 + $0x528] sm:$0xf]
  %v370 = vld [vmem:[%s0 + $0x52c] sm:$0xf]
  %v371 = vld [vmem:[%s0 + $0x530] sm:$0xf]
  %v372 = vld [vmem:[%s0 + $0x534] sm:$0xf]
  %v373 = vld [vmem:[%s0 + $0x538] sm:$0xf]
  %v374 = vld [vmem:[%s0 + $0x53c] sm:$0xf]
  %v375 = vld [vmem:[%s0 + $0x540] sm:$0xf]
  %v376 = vld [vmem:[%s0 + $0x544] sm:$0xf]
  %v377 = vld [vmem:[%s0 + $0x548] sm:$0xf]
  %v378 = vld [vmem:[%s0 + $0x54c] sm:$0xf]
  %v379 = vld [vmem:[%s0 + $0x550] sm:$0xf]
  %v380 = vld [vmem:[%s0 + $0x554] sm:$0xf]
  %v381 = vld [vmem:[%s0 + $0x558] sm:$0xf]
  %v382 = vld [vmem:[%s0 + $0x55c] sm:$0xf]
  %v383 = vld [vmem:[%s0 + $0x560] sm:$0xf]
  %v384 = vld [vmem:[%s0 + $0x564] sm:$0xf]
  %v385 = vld [vmem:[%s0 + $0x568] sm:$0xf]
  %v386 = vld [vmem:[%s0 + $0x56c] sm:$0xf]
  %v387 = vld [vmem:[%s0 + $0x570] sm:$0xf]
  %v388 = vld [vmem:[%s0 + $0x574] sm:$0xf]
  %v389 = vld [vmem:[%s0 + $0x578] sm:$0xf]
  %v390 = vld [vmem:[%s0 + $0x57c] sm:$0xf]
  %v391 = vld [vmem:[%s0 + $0x580] sm:$0xf]
  %v392 = vld [vmem:[%s0 + $0x584] sm:$0xf]
  %v393 = vld [vmem:[%s0 + $0x588] sm:$0xf]
  %v394 = vld [vmem:[%s0 + $0x58c] sm:$0xf]
  %v395 = vld [vmem:[%s0 + $0x590] sm:$0xf]
  %v396 = vld [vmem:[%s0 + $0x594] sm:$0xf]
  %v397 = vld [vmem:[%s0 + $0x598] sm:$0xf]
  %v398 = vld [vmem:[%s0 + $0x59c] sm:$0xf]
  %v399 = vld [vmem:[%s0 + $0x5a0] sm:$0xf]
  %v400 = vld [vmem:[%s0 + $0x5a4] sm:$0xf]
  %v401 = vld [vmem:[%s0 + $0x5a8] sm:$0xf]
  %v402 = vld [vmem:[%s0 + $0x5ac] sm:$0xf]
  %v403 = vld [vmem:[%s0 + $0x5b0] sm:$0xf]
  %v404 = vld [vmem:[%s0 + $0x5b4] sm:$0xf]
  %v405 = vld [vmem:[%s0 + $0x5b8] sm:$0xf]
  %v406 = vld [vmem:[%s0 + $0x5bc] sm:$0xf]
  %v407 = vld [vmem:[%s0 + $0x5c0] sm:$0xf]
  %v408 = vld [vmem:[%s0 + $0x5c4] sm:$0xf]
  %v409 = vld [vmem:[%s0 + $0x5c8] sm:$0xf]
  %v410 = vld [vmem:[%s0 + $0x5cc] sm:$0xf]
  %v411 = vld [vmem:[%s0 + $0x5d0] sm:$0xf]
  %v412 = vld [vmem:[%s0 + $0x5d4] sm:$0xf]
  %v413 = vld [vmem:[%s0 + $0x5d8] sm:$0xf]
  %v414 = vld [vmem:[%s0 + $0x5dc] sm:$0xf]
  %v415 = vld [vmem:[%s0 + $0x5e0] sm:$0xf]
  %v416 = vld [vmem:[%s0 + $0x5e4] sm:$0xf]
  %v417 = vld [vmem:[%s0 + $0x5e8] sm:$0xf]
  %v418 = vld [vmem:[%s0 + $0x5ec] sm:$0xf]
  %v419 = vld [vmem:[%s0 + $0x5f0] sm:$0xf]
  %v420 = vld [vmem:[%s0 + $0x5f4] sm:$0xf]
  %v421 = vld [vmem:[%s0 + $0x5f8] sm:$0xf]
  %v422 = vld [vmem:[%s0 + $0x5fc] sm:$0xf]
  %v423 = vld [vmem:[%s0 + $0x600] sm:$0xf]
  %v424 = vld [vmem:[%s0 + $0x604] sm:$0xf]
  %v425 = vld [vmem:[%s0 + $0x608] sm:$0xf]
  %v426 = vld [vmem:[%s0 + $0x60c] sm:$0xf]
  %v427 = vld [vmem:[%s0 + $0x610] sm:$0xf]
  %v428 = vld [vmem:[%s0 + $0x614] sm:$0xf]
  %v429 = vld [vmem:[%s0 + $0x618] sm:$0xf]
  %v430 = vld [vmem:[%s0 + $0x61c] sm:$0xf]
  %v431 = vld [vmem:[%s0 + $0x620] sm:$0xf]
  %v432 = vld [vmem:[%s0 + $0x624] sm:$0xf]
  %v433 = vld [vmem:[%s0 + $0x628] sm:$0xf]
  %v434 = vld [vmem:[%s0 + $0x62c] sm:$0xf]
  %v435 = vld [vmem:[%s0 + $0x630] sm:$0xf]
  %v436 = vld [vmem:[%s0 + $0x634] sm:$0xf]
  %v437 = vld [vmem:[%s0 + $0x638] sm:$0xf]
  %v438 = vld [vmem:[%s0 + $0x63c] sm:$0xf]
  %v439 = vld [vmem:[%s0 + $0x640] sm:$0xf]
  %v440 = vld [vmem:[%s0 + $0x644] sm:$0xf]
  %v441 = vld [vmem:[%s0 + $0x648] sm:$0xf]
  %v442 = vld [vmem:[%s0 + $0x64c] sm:$0xf]
  %v443 = vld [vmem:[%s0 + $0x650] sm:$0xf]
  %v444 = vld [vmem:[%s0 + $0x654] sm:$0xf]
  %v445 = vld [vmem:[%s0 + $0x658] sm:$0xf]
  %v446 = vld [vmem:[%s0 + $0x65c] sm:$0xf]
  %v447 = vld [vmem:[%s0 + $0x660] sm:$0xf]
  %v448 = vld [vmem:[%s0 + $0x664] sm:$0xf]
  %v449 = vld [vmem:[%s0 + $0x668] sm:$0xf]
  %v450 = vld [vmem:[%s0 + $0x66c] sm:$0xf]
  %v451 = vld [vmem:[%s0 + $0x670] sm:$0xf]
  %v452 = vld [vmem:[%s0 + $0x674] sm:$0xf]
  %v453 = vld [vmem:[%s0 + $0x678] sm:$0xf]
  %v454 = vld [vmem:[%s0 + $0x67c] sm:$0xf]
  %v455 = vld [vmem:[%s0 + $0x680] sm:$0xf]
  %v456 = vld [vmem:[%s0 + $0x684] sm:$0xf]
  %v457 = vld [vmem:[%s0 + $0x688] sm:$0xf]
  %v458 = vld [vmem:[%s0 + $0x68c] sm:$0xf]
  %v459 = vld [vmem:[%s0 + $0x690] sm:$0xf]
  %v460 = vld [vmem:[%s0 + $0x694] sm:$0xf]
  %v461 = vld [vmem:[%s0 + $0x698] sm:$0xf]
  %v462 = vld [vmem:[%s0 + $0x69c] sm:$0xf]
  %v463 = vld [vmem:[%s0 + $0x6a0] sm:$0xf]
  %v464 = vld [vmem:[%s0 + $0x6a4] sm:$0xf]
  %v465 = vld [vmem:[%s0 + $0x6a8] sm:$0xf]
  %v466 = vld [vmem:[%s0 + $0x6ac] sm:$0xf]
  %v467 = vld [vmem:[%s0 + $0x6b0] sm:$0xf]
  %v468 = vld [vmem:[%s0 + $0x6b4] sm:$0xf]
  %v469 = vld [vmem:[%s0 + $0x6b8] sm:$0xf]
  %v470 = vld [vmem:[%s0 + $0x6bc] sm:$0xf]
  %v471 = vld [vmem:[%s0 + $0x6c0] sm:$0xf]
  %v472 = vld [vmem:[%s0 + $0x6c4] sm:$0xf]
  %v473 = vld [vmem:[%s0 + $0x6c8] sm:$0xf]
  %v474 = vld [vmem:[%s0 + $0x6cc] sm:$0xf]
  %v475 = vld [vmem:[%s0 + $0x6d0] sm:$0xf]
  %v476 = vld [vmem:[%s0 + $0x6d4] sm:$0xf]
  %v477 = vld [vmem:[%s0 + $0x6d8] sm:$0xf]
  %v478 = vld [vmem:[%s0 + $0x6dc] sm:$0xf]
  %v479 = vld [vmem:[%s0 + $0x6e0] sm:$0xf]
  %v480 = vld [vmem:[%s0 + $0x6e4] sm:$0xf]
  %v481 = vld [vmem:[%s0 + $0x6e8] sm:$0xf]
  %v482 = vld [vmem:[%s0 + $0x6ec] sm:$0xf]
  %v483 = vld [vmem:[%s0 + $0x6f0] sm:$0xf]
  %v484 = vld [vmem:[%s0 + $0x6f4] sm:$0xf]
  %v485 = vld [vmem:[%s0 + $0x6f8] sm:$0xf]
  %v486 = vld [vmem:[%s0 + $0x6fc] sm:$0xf]
  %v487 = vld [vmem:[%s0 + $0x700] sm:$0xf]
  %v488 = vld [vmem:[%s0 + $0x704] sm:$0xf]
  %v489 = vld [vmem:[%s0 + $0x708] sm:$0xf]
  %v490 = vld [vmem:[%s0 + $0x70c] sm:$0xf]
  %v491 = vld [vmem:[%s0 + $0x710] sm:$0xf]
  %v492 = vld [vmem:[%s0 + $0x714] sm:$0xf]
  %v493 = vld [vmem:[%s0 + $0x718] sm:$0xf]
  %v494 = vld [vmem:[%s0 + $0x71c] sm:$0xf]
  %v495 = vld [vmem:[%s0 + $0x720] sm:$0xf]
  %v496 = vld [vmem:[%s0 + $0x724] sm:$0xf]
  %v497 = vld [vmem:[%s0 + $0x728] sm:$0xf]
  %v498 = vld [vmem:[%s0 + $0x72c] sm:$0xf]
  %v499 = vld [vmem:[%s0 + $0x730] sm:$0xf]
  %v500 = vld [vmem:[%s0 + $0x734] sm:$0xf]
  %v501 = vld [vmem:[%s0 + $0x738] sm:$0xf]
  %v502 = vld [vmem:[%s0 + $0x73c] sm:$0xf]
  %v503 = vld [vmem:[%s0 + $0x740] sm:$0xf]
  %v504 = vld [vmem:[%s0 + $0x744] sm:$0xf]
  %v505 = vld [vmem:[%s0 + $0x748] sm:$0xf]
  %v506 = vld [vmem:[%s0 + $0x74c] sm:$0xf]
  %v507 = vld [vmem:[%s0 + $0x750] sm:$0xf]
  %v508 = vld [vmem:[%s0 + $0x754] sm:$0xf]
  %v509 = vld [vmem:[%s0 + $0x758] sm:$0xf]
  %v510 = vld [vmem:[%s0 + $0x75c] sm:$0xf]
  %v511 = vld [vmem:[%s0 + $0x760] sm:$0xf]
  %v512 = vld [vmem:[%s0 + $0x764] sm:$0xf]
  %v513 = vld [vmem:[%s0 + $0x768] sm:$0xf]
  %v514 = vld [vmem:[%s0 + $0x76c] sm:$0xf]
  %v515 = vld [vmem:[%s0 + $0x770] sm:$0xf]
  %v516 = vld [vmem:[%s0 + $0x774] sm:$0xf]
  %v517 = vld [vmem:[%s0 + $0x778] sm:$0xf]
  %v518 = vld [vmem:[%s0 + $0x77c] sm:$0xf]
  %v519 = vld [vmem:[%s0 + $0x780] sm:$0xf]
  %v520 = vld [vmem:[%s0 + $0x784] sm:$0xf]
  %v521 = vld [vmem:[%s0 + $0x788] sm:$0xf]
  %v522 = vld [vmem:[%s0 + $0x78c] sm:$0xf]
  %v523 = vld [vmem:[%s0 + $0x790] sm:$0xf]
  %v524 = vld [vmem:[%s0 + $0x794] sm:$0xf]
  %v525 = vld [vmem:[%s0 + $0x798] sm:$0xf]
  %v526 = vld [vmem:[%s0 + $0x79c] sm:$0xf]
  %v527 = vld [vmem:[%s0 + $0x7a0] sm:$0xf]
  %v528 = vld [vmem:[%s0 + $0x7a4] sm:$0xf]
  %v529 = vld [vmem:[%s0 + $0x7a8] sm:$0xf]
  %v530 = vld [vmem:[%s0 + $0x7ac] sm:$0xf]
  %v531 = vld [vmem:[%s0 + $0x7b0] sm:$0xf]
  %v532 = vld [vmem:[%s0 + $0x7b4] sm:$0xf]
  %v533 = vld [vmem:[%s0 + $0x7b8] sm:$0xf]
  %v534 = vld [vmem:[%s0 + $0x7bc] sm:$0xf]
  %v535 = vld [vmem:[%s0 + $0x7c0] sm:$0xf]
  %v536 = vld [vmem:[%s0 + $0x7c4] sm:$0xf]
  %v537 = vld [vmem:[%s0 + $0x7c8] sm:$0xf]
  %v538 = vld [vmem:[%s0 + $0x7cc] sm:$0xf]
  %v539 = vld [vmem:[%s0 + $0x7d0] sm:$0xf]
  %v540 = vld [vmem:[%s0 + $0x7d4] sm:$0xf]
  %v541 = vld [vmem:[%s0 + $0x7d8] sm:$0xf]
  %v542 = vld [vmem:[%s0 + $0x7dc] sm:$0xf]
  %v543 = vld [vmem:[%s0 + $0x7e0] sm:$0xf]
  %v544 = vld [vmem:[%s0 + $0x7e4] sm:$0xf]
  %v545 = vld [vmem:[%s0 + $0x7e8] sm:$0xf]
  %v546 = vld [vmem:[%s0 + $0x7ec] sm:$0xf]
  %v547 = vld [vmem:[%s0 + $0x7f0] sm:$0xf]
  %v548 = vld [vmem:[%s0 + $0x7f4] sm:$0xf]
  %v549 = vld [vmem:[%s0 + $0x7f8] sm:$0xf]
  %v550 = vld [vmem:[%s0 + $0x7fc] sm:$0xf]
  %v551 = vld [vmem:[%s2] sm:$0xf]
  %v552 = vld [vmem:[%s2 + $0x4] sm:$0xf]
  %v553 = vld [vmem:[%s2 + $0x8] sm:$0xf]
  %v554 = vld [vmem:[%s2 + $0xc] sm:$0x3]
  %v555 = vld [vmem:[%s3] sm:$0x1]
  %v557 = vlaneseq
  %v558 = vshrl.u32 %v557, 7
  %v559 = vsub.s32 0, %v558
  %v560 = vrot.slane %v555, %v559
  %v1074 = vunpack.c.l.b16 %v39
  %v1075 = vunpack.c.l.b16 %v40
  %v1076 = vunpack.c.l.b16 %v41
  %v1077 = vunpack.c.l.b16 %v42
  %v1078 = vunpack.c.l.b16 %v43
  %v1079 = vunpack.c.l.b16 %v44
  %v1080 = vunpack.c.l.b16 %v45
  %v1081 = vunpack.c.l.b16 %v46
  %v1082 = vunpack.c.l.b16 %v47
  %v1083 = vunpack.c.l.b16 %v48
  %v1084 = vunpack.c.l.b16 %v49
  %v1085 = vunpack.c.l.b16 %v50
  %v1086 = vunpack.c.l.b16 %v51
  %v1087 = vunpack.c.l.b16 %v52
  %v1088 = vunpack.c.l.b16 %v53
  %v1089 = vunpack.c.l.b16 %v54
  %v1090 = vunpack.c.l.b16 %v55
  %v1091 = vunpack.c.l.b16 %v56
  %v1092 = vunpack.c.l.b16 %v57
  %v1093 = vunpack.c.l.b16 %v58
  %v1094 = vunpack.c.l.b16 %v59
  %v1095 = vunpack.c.l.b16 %v60
  %v1096 = vunpack.c.l.b16 %v61
  %v1097 = vunpack.c.l.b16 %v62
  %v1098 = vunpack.c.l.b16 %v63
  %v1099 = vunpack.c.l.b16 %v64
  %v1100 = vunpack.c.l.b16 %v65
  %v1101 = vunpack.c.l.b16 %v66
  %v1102 = vunpack.c.l.b16 %v67
  %v1103 = vunpack.c.l.b16 %v68
  %v1104 = vunpack.c.l.b16 %v69
  %v1105 = vunpack.c.l.b16 %v70
  %v1106 = vunpack.c.l.b16 %v71
  %v1107 = vunpack.c.l.b16 %v72
  %v1108 = vunpack.c.l.b16 %v73
  %v1109 = vunpack.c.l.b16 %v74
  %v1110 = vunpack.c.l.b16 %v75
  %v1111 = vunpack.c.l.b16 %v76
  %v1112 = vunpack.c.l.b16 %v77
  %v1113 = vunpack.c.l.b16 %v78
  %v1114 = vunpack.c.l.b16 %v79
  %v1115 = vunpack.c.l.b16 %v80
  %v1116 = vunpack.c.l.b16 %v81
  %v1117 = vunpack.c.l.b16 %v82
  %v1118 = vunpack.c.l.b16 %v83
  %v1119 = vunpack.c.l.b16 %v84
  %v1120 = vunpack.c.l.b16 %v85
  %v1121 = vunpack.c.l.b16 %v86
  %v1122 = vunpack.c.l.b16 %v87
  %v1123 = vunpack.c.l.b16 %v88
  %v1124 = vunpack.c.l.b16 %v89
  %v1125 = vunpack.c.l.b16 %v90
  %v1126 = vunpack.c.l.b16 %v91
  %v1127 = vunpack.c.l.b16 %v92
  %v1128 = vunpack.c.l.b16 %v93
  %v1129 = vunpack.c.l.b16 %v94
  %v1130 = vunpack.c.l.b16 %v95
  %v1131 = vunpack.c.l.b16 %v96
  %v1132 = vunpack.c.l.b16 %v97
  %v1133 = vunpack.c.l.b16 %v98
  %v1134 = vunpack.c.l.b16 %v99
  %v1135 = vunpack.c.l.b16 %v100
  %v1136 = vunpack.c.l.b16 %v101
  %v1137 = vunpack.c.l.b16 %v102
  %v1138 = vunpack.c.l.b16 %v103
  %v1139 = vunpack.c.l.b16 %v104
  %v1140 = vunpack.c.l.b16 %v105
  %v1141 = vunpack.c.l.b16 %v106
  %v1142 = vunpack.c.l.b16 %v107
  %v1143 = vunpack.c.l.b16 %v108
  %v1144 = vunpack.c.l.b16 %v109
  %v1145 = vunpack.c.l.b16 %v110
  %v1146 = vunpack.c.l.b16 %v111
  %v1147 = vunpack.c.l.b16 %v112
  %v1148 = vunpack.c.l.b16 %v113
  %v1149 = vunpack.c.l.b16 %v114
  %v1150 = vunpack.c.l.b16 %v115
  %v1151 = vunpack.c.l.b16 %v116
  %v1152 = vunpack.c.l.b16 %v117
  %v1153 = vunpack.c.l.b16 %v118
  %v1154 = vunpack.c.l.b16 %v119
  %v1155 = vunpack.c.l.b16 %v120
  %v1156 = vunpack.c.l.b16 %v121
  %v1157 = vunpack.c.l.b16 %v122
  %v1158 = vunpack.c.l.b16 %v123
  %v1159 = vunpack.c.l.b16 %v124
  %v1160 = vunpack.c.l.b16 %v125
  %v1161 = vunpack.c.l.b16 %v126
  %v1162 = vunpack.c.l.b16 %v127
  %v1163 = vunpack.c.l.b16 %v128
  %v1164 = vunpack.c.l.b16 %v129
  %v1165 = vunpack.c.l.b16 %v130
  %v1166 = vunpack.c.l.b16 %v131
  %v1167 = vunpack.c.l.b16 %v132
  %v1168 = vunpack.c.l.b16 %v133
  %v1169 = vunpack.c.l.b16 %v134
  %v1170 = vunpack.c.l.b16 %v135
  %v1171 = vunpack.c.l.b16 %v136
  %v1172 = vunpack.c.l.b16 %v137
  %v1173 = vunpack.c.l.b16 %v138
  %v1174 = vunpack.c.l.b16 %v139
  %v1175 = vunpack.c.l.b16 %v140
  %v1176 = vunpack.c.l.b16 %v141
  %v1177 = vunpack.c.l.b16 %v142
  %v1178 = vunpack.c.l.b16 %v143
  %v1179 = vunpack.c.l.b16 %v144
  %v1180 = vunpack.c.l.b16 %v145
  %v1181 = vunpack.c.l.b16 %v146
  %v1182 = vunpack.c.l.b16 %v147
  %v1183 = vunpack.c.l.b16 %v148
  %v1184 = vunpack.c.l.b16 %v149
  %v1185 = vunpack.c.l.b16 %v150
  %v1186 = vunpack.c.l.b16 %v151
  %v1187 = vunpack.c.l.b16 %v152
  %v1188 = vunpack.c.l.b16 %v153
  %v1189 = vunpack.c.l.b16 %v154
  %v1190 = vunpack.c.l.b16 %v155
  %v1191 = vunpack.c.l.b16 %v156
  %v1192 = vunpack.c.l.b16 %v157
  %v1193 = vunpack.c.l.b16 %v158
  %v1194 = vunpack.c.l.b16 %v159
  %v1195 = vunpack.c.l.b16 %v160
  %v1196 = vunpack.c.l.b16 %v161
  %v1197 = vunpack.c.l.b16 %v162
  %v1198 = vunpack.c.l.b16 %v163
  %v1199 = vunpack.c.l.b16 %v164
  %v1200 = vunpack.c.l.b16 %v165
  %v1201 = vunpack.c.l.b16 %v166
  %v1202 = vunpack.c.l.b16 %v167
  %v1203 = vunpack.c.l.b16 %v168
  %v1204 = vunpack.c.l.b16 %v169
  %v1205 = vunpack.c.l.b16 %v170
  %v1206 = vunpack.c.l.b16 %v171
  %v1207 = vunpack.c.l.b16 %v172
  %v1208 = vunpack.c.l.b16 %v173
  %v1209 = vunpack.c.l.b16 %v174
  %v1210 = vunpack.c.l.b16 %v175
  %v1211 = vunpack.c.l.b16 %v176
  %v1212 = vunpack.c.l.b16 %v177
  %v1213 = vunpack.c.l.b16 %v178
  %v1214 = vunpack.c.l.b16 %v179
  %v1215 = vunpack.c.l.b16 %v180
  %v1216 = vunpack.c.l.b16 %v181
  %v1217 = vunpack.c.l.b16 %v182
  %v1218 = vunpack.c.l.b16 %v183
  %v1219 = vunpack.c.l.b16 %v184
  %v1220 = vunpack.c.l.b16 %v185
  %v1221 = vunpack.c.l.b16 %v186
  %v1222 = vunpack.c.l.b16 %v187
  %v1223 = vunpack.c.l.b16 %v188
  %v1224 = vunpack.c.l.b16 %v189
  %v1225 = vunpack.c.l.b16 %v190
  %v1226 = vunpack.c.l.b16 %v191
  %v1227 = vunpack.c.l.b16 %v192
  %v1228 = vunpack.c.l.b16 %v193
  %v1229 = vunpack.c.l.b16 %v194
  %v1230 = vunpack.c.l.b16 %v195
  %v1231 = vunpack.c.l.b16 %v196
  %v1232 = vunpack.c.l.b16 %v197
  %v1233 = vunpack.c.l.b16 %v198
  %v1234 = vunpack.c.l.b16 %v199
  %v1235 = vunpack.c.l.b16 %v200
  %v1236 = vunpack.c.l.b16 %v201
  %v1237 = vunpack.c.l.b16 %v202
  %v1238 = vunpack.c.l.b16 %v203
  %v1239 = vunpack.c.l.b16 %v204
  %v1240 = vunpack.c.l.b16 %v205
  %v1241 = vunpack.c.l.b16 %v206
  %v1242 = vunpack.c.l.b16 %v207
  %v1243 = vunpack.c.l.b16 %v208
  %v1244 = vunpack.c.l.b16 %v209
  %v1245 = vunpack.c.l.b16 %v210
  %v1246 = vunpack.c.l.b16 %v211
  %v1247 = vunpack.c.l.b16 %v212
  %v1248 = vunpack.c.l.b16 %v213
  %v1249 = vunpack.c.l.b16 %v214
  %v1250 = vunpack.c.l.b16 %v215
  %v1251 = vunpack.c.l.b16 %v216
  %v1252 = vunpack.c.l.b16 %v217
  %v1253 = vunpack.c.l.b16 %v218
  %v1254 = vunpack.c.l.b16 %v219
  %v1255 = vunpack.c.l.b16 %v220
  %v1256 = vunpack.c.l.b16 %v221
  %v1257 = vunpack.c.l.b16 %v222
  %v1258 = vunpack.c.l.b16 %v223
  %v1259 = vunpack.c.l.b16 %v224
  %v1260 = vunpack.c.l.b16 %v225
  %v1261 = vunpack.c.l.b16 %v226
  %v1262 = vunpack.c.l.b16 %v227
  %v1263 = vunpack.c.l.b16 %v228
  %v1264 = vunpack.c.l.b16 %v229
  %v1265 = vunpack.c.l.b16 %v230
  %v1266 = vunpack.c.l.b16 %v231
  %v1267 = vunpack.c.l.b16 %v232
  %v1268 = vunpack.c.l.b16 %v233
  %v1269 = vunpack.c.l.b16 %v234
  %v1270 = vunpack.c.l.b16 %v235
  %v1271 = vunpack.c.l.b16 %v236
  %v1272 = vunpack.c.l.b16 %v237
  %v1273 = vunpack.c.l.b16 %v238
  %v1274 = vunpack.c.l.b16 %v239
  %v1275 = vunpack.c.l.b16 %v240
  %v1276 = vunpack.c.l.b16 %v241
  %v1277 = vunpack.c.l.b16 %v242
  %v1278 = vunpack.c.l.b16 %v243
  %v1279 = vunpack.c.l.b16 %v244
  %v1280 = vunpack.c.l.b16 %v245
  %v1281 = vunpack.c.l.b16 %v246
  %v1282 = vunpack.c.l.b16 %v247
  %v1283 = vunpack.c.l.b16 %v248
  %v1284 = vunpack.c.l.b16 %v249
  %v1285 = vunpack.c.l.b16 %v250
  %v1286 = vunpack.c.l.b16 %v251
  %v1287 = vunpack.c.l.b16 %v252
  %v1288 = vunpack.c.l.b16 %v253
  %v1289 = vunpack.c.l.b16 %v254
  %v1290 = vunpack.c.l.b16 %v255
  %v1291 = vunpack.c.l.b16 %v256
  %v1292 = vunpack.c.l.b16 %v257
  %v1293 = vunpack.c.l.b16 %v258
  %v1294 = vunpack.c.l.b16 %v259
  %v1295 = vunpack.c.l.b16 %v260
  %v1296 = vunpack.c.l.b16 %v261
  %v1297 = vunpack.c.l.b16 %v262
  %v1298 = vunpack.c.l.b16 %v263
  %v1299 = vunpack.c.l.b16 %v264
  %v1300 = vunpack.c.l.b16 %v265
  %v1301 = vunpack.c.l.b16 %v266
  %v1302 = vunpack.c.l.b16 %v267
  %v1303 = vunpack.c.l.b16 %v268
  %v1304 = vunpack.c.l.b16 %v269
  %v1305 = vunpack.c.l.b16 %v270
  %v1306 = vunpack.c.l.b16 %v271
  %v1307 = vunpack.c.l.b16 %v272
  %v1308 = vunpack.c.l.b16 %v273
  %v1309 = vunpack.c.l.b16 %v274
  %v1310 = vunpack.c.l.b16 %v275
  %v1311 = vunpack.c.l.b16 %v276
  %v1312 = vunpack.c.l.b16 %v277
  %v1313 = vunpack.c.l.b16 %v278
  %v1314 = vunpack.c.l.b16 %v279
  %v1315 = vunpack.c.l.b16 %v280
  %v1316 = vunpack.c.l.b16 %v281
  %v1317 = vunpack.c.l.b16 %v282
  %v1318 = vunpack.c.l.b16 %v283
  %v1319 = vunpack.c.l.b16 %v284
  %v1320 = vunpack.c.l.b16 %v285
  %v1321 = vunpack.c.l.b16 %v286
  %v1322 = vunpack.c.l.b16 %v287
  %v1323 = vunpack.c.l.b16 %v288
  %v1324 = vunpack.c.l.b16 %v289
  %v1325 = vunpack.c.l.b16 %v290
  %v1326 = vunpack.c.l.b16 %v291
  %v1327 = vunpack.c.l.b16 %v292
  %v1328 = vunpack.c.l.b16 %v293
  %v1329 = vunpack.c.l.b16 %v294
  %v1330 = vunpack.c.l.b16 %v295
  %v1331 = vunpack.c.l.b16 %v296
  %v1332 = vunpack.c.l.b16 %v297
  %v1333 = vunpack.c.l.b16 %v298
  %v1334 = vunpack.c.l.b16 %v299
  %v1335 = vunpack.c.l.b16 %v300
  %v1336 = vunpack.c.l.b16 %v301
  %v1337 = vunpack.c.l.b16 %v302
  %v1338 = vunpack.c.l.b16 %v303
  %v1339 = vunpack.c.l.b16 %v304
  %v1340 = vunpack.c.l.b16 %v305
  %v1341 = vunpack.c.l.b16 %v306
  %v1342 = vunpack.c.l.b16 %v307
  %v1343 = vunpack.c.l.b16 %v308
  %v1344 = vunpack.c.l.b16 %v309
  %v1345 = vunpack.c.l.b16 %v310
  %v1346 = vunpack.c.l.b16 %v311
  %v1347 = vunpack.c.l.b16 %v312
  %v1348 = vunpack.c.l.b16 %v313
  %v1349 = vunpack.c.l.b16 %v314
  %v1350 = vunpack.c.l.b16 %v315
  %v1351 = vunpack.c.l.b16 %v316
  %v1352 = vunpack.c.l.b16 %v317
  %v1353 = vunpack.c.l.b16 %v318
  %v1354 = vunpack.c.l.b16 %v319
  %v1355 = vunpack.c.l.b16 %v320
  %v1356 = vunpack.c.l.b16 %v321
  %v1357 = vunpack.c.l.b16 %v322
  %v1358 = vunpack.c.l.b16 %v323
  %v1359 = vunpack.c.l.b16 %v324
  %v1360 = vunpack.c.l.b16 %v325
  %v1361 = vunpack.c.l.b16 %v326
  %v1362 = vunpack.c.l.b16 %v327
  %v1363 = vunpack.c.l.b16 %v328
  %v1364 = vunpack.c.l.b16 %v329
  %v1365 = vunpack.c.l.b16 %v330
  %v1366 = vunpack.c.l.b16 %v331
  %v1367 = vunpack.c.l.b16 %v332
  %v1368 = vunpack.c.l.b16 %v333
  %v1369 = vunpack.c.l.b16 %v334
  %v1370 = vunpack.c.l.b16 %v335
  %v1371 = vunpack.c.l.b16 %v336
  %v1372 = vunpack.c.l.b16 %v337
  %v1373 = vunpack.c.l.b16 %v338
  %v1374 = vunpack.c.l.b16 %v339
  %v1375 = vunpack.c.l.b16 %v340
  %v1376 = vunpack.c.l.b16 %v341
  %v1377 = vunpack.c.l.b16 %v342
  %v1378 = vunpack.c.l.b16 %v343
  %v1379 = vunpack.c.l.b16 %v344
  %v1380 = vunpack.c.l.b16 %v345
  %v1381 = vunpack.c.l.b16 %v346
  %v1382 = vunpack.c.l.b16 %v347
  %v1383 = vunpack.c.l.b16 %v348
  %v1384 = vunpack.c.l.b16 %v349
  %v1385 = vunpack.c.l.b16 %v350
  %v1386 = vunpack.c.l.b16 %v351
  %v1387 = vunpack.c.l.b16 %v352
  %v1388 = vunpack.c.l.b16 %v353
  %v1389 = vunpack.c.l.b16 %v354
  %v1390 = vunpack.c.l.b16 %v355
  %v1391 = vunpack.c.l.b16 %v356
  %v1392 = vunpack.c.l.b16 %v357
  %v1393 = vunpack.c.l.b16 %v358
  %v1394 = vunpack.c.l.b16 %v359
  %v1395 = vunpack.c.l.b16 %v360
  %v1396 = vunpack.c.l.b16 %v361
  %v1397 = vunpack.c.l.b16 %v362
  %v1398 = vunpack.c.l.b16 %v363
  %v1399 = vunpack.c.l.b16 %v364
  %v1400 = vunpack.c.l.b16 %v365
  %v1401 = vunpack.c.l.b16 %v366
  %v1402 = vunpack.c.l.b16 %v367
  %v1403 = vunpack.c.l.b16 %v368
  %v1404 = vunpack.c.l.b16 %v369
  %v1405 = vunpack.c.l.b16 %v370
  %v1406 = vunpack.c.l.b16 %v371
  %v1407 = vunpack.c.l.b16 %v372
  %v1408 = vunpack.c.l.b16 %v373
  %v1409 = vunpack.c.l.b16 %v374
  %v1410 = vunpack.c.l.b16 %v375
  %v1411 = vunpack.c.l.b16 %v376
  %v1412 = vunpack.c.l.b16 %v377
  %v1413 = vunpack.c.l.b16 %v378
  %v1414 = vunpack.c.l.b16 %v379
  %v1415 = vunpack.c.l.b16 %v380
  %v1416 = vunpack.c.l.b16 %v381
  %v1417 = vunpack.c.l.b16 %v382
  %v1418 = vunpack.c.l.b16 %v383
  %v1419 = vunpack.c.l.b16 %v384
  %v1420 = vunpack.c.l.b16 %v385
  %v1421 = vunpack.c.l.b16 %v386
  %v1422 = vunpack.c.l.b16 %v387
  %v1423 = vunpack.c.l.b16 %v388
  %v1424 = vunpack.c.l.b16 %v389
  %v1425 = vunpack.c.l.b16 %v390
  %v1426 = vunpack.c.l.b16 %v391
  %v1427 = vunpack.c.l.b16 %v392
  %v1428 = vunpack.c.l.b16 %v393
  %v1429 = vunpack.c.l.b16 %v394
  %v1430 = vunpack.c.l.b16 %v395
  %v1431 = vunpack.c.l.b16 %v396
  %v1432 = vunpack.c.l.b16 %v397
  %v1433 = vunpack.c.l.b16 %v398
  %v1434 = vunpack.c.l.b16 %v399
  %v1435 = vunpack.c.l.b16 %v400
  %v1436 = vunpack.c.l.b16 %v401
  %v1437 = vunpack.c.l.b16 %v402
  %v1438 = vunpack.c.l.b16 %v403
  %v1439 = vunpack.c.l.b16 %v404
  %v1440 = vunpack.c.l.b16 %v405
  %v1441 = vunpack.c.l.b16 %v406
  %v1442 = vunpack.c.l.b16 %v407
  %v1443 = vunpack.c.l.b16 %v408
  %v1444 = vunpack.c.l.b16 %v409
  %v1445 = vunpack.c.l.b16 %v410
  %v1446 = vunpack.c.l.b16 %v411
  %v1447 = vunpack.c.l.b16 %v412
  %v1448 = vunpack.c.l.b16 %v413
  %v1449 = vunpack.c.l.b16 %v414
  %v1450 = vunpack.c.l.b16 %v415
  %v1451 = vunpack.c.l.b16 %v416
  %v1452 = vunpack.c.l.b16 %v417
  %v1453 = vunpack.c.l.b16 %v418
  %v1454 = vunpack.c.l.b16 %v419
  %v1455 = vunpack.c.l.b16 %v420
  %v1456 = vunpack.c.l.b16 %v421
  %v1457 = vunpack.c.l.b16 %v422
  %v1458 = vunpack.c.l.b16 %v423
  %v1459 = vunpack.c.l.b16 %v424
  %v1460 = vunpack.c.l.b16 %v425
  %v1461 = vunpack.c.l.b16 %v426
  %v1462 = vunpack.c.l.b16 %v427
  %v1463 = vunpack.c.l.b16 %v428
  %v1464 = vunpack.c.l.b16 %v429
  %v1465 = vunpack.c.l.b16 %v430
  %v1466 = vunpack.c.l.b16 %v431
  %v1467 = vunpack.c.l.b16 %v432
  %v1468 = vunpack.c.l.b16 %v433
  %v1469 = vunpack.c.l.b16 %v434
  %v1470 = vunpack.c.l.b16 %v435
  %v1471 = vunpack.c.l.b16 %v436
  %v1472 = vunpack.c.l.b16 %v437
  %v1473 = vunpack.c.l.b16 %v438
  %v1474 = vunpack.c.l.b16 %v439
  %v1475 = vunpack.c.l.b16 %v440
  %v1476 = vunpack.c.l.b16 %v441
  %v1477 = vunpack.c.l.b16 %v442
  %v1478 = vunpack.c.l.b16 %v443
  %v1479 = vunpack.c.l.b16 %v444
  %v1480 = vunpack.c.l.b16 %v445
  %v1481 = vunpack.c.l.b16 %v446
  %v1482 = vunpack.c.l.b16 %v447
  %v1483 = vunpack.c.l.b16 %v448
  %v1484 = vunpack.c.l.b16 %v449
  %v1485 = vunpack.c.l.b16 %v450
  %v1486 = vunpack.c.l.b16 %v451
  %v1487 = vunpack.c.l.b16 %v452
  %v1488 = vunpack.c.l.b16 %v453
  %v1489 = vunpack.c.l.b16 %v454
  %v1490 = vunpack.c.l.b16 %v455
  %v1491 = vunpack.c.l.b16 %v456
  %v1492 = vunpack.c.l.b16 %v457
  %v1493 = vunpack.c.l.b16 %v458
  %v1494 = vunpack.c.l.b16 %v459
  %v1495 = vunpack.c.l.b16 %v460
  %v1496 = vunpack.c.l.b16 %v461
  %v1497 = vunpack.c.l.b16 %v462
  %v1498 = vunpack.c.l.b16 %v463
  %v1499 = vunpack.c.l.b16 %v464
  %v1500 = vunpack.c.l.b16 %v465
  %v1501 = vunpack.c.l.b16 %v466
  %v1502 = vunpack.c.l.b16 %v467
  %v1503 = vunpack.c.l.b16 %v468
  %v1504 = vunpack.c.l.b16 %v469
  %v1505 = vunpack.c.l.b16 %v470
  %v1506 = vunpack.c.l.b16 %v471
  %v1507 = vunpack.c.l.b16 %v472
  %v1508 = vunpack.c.l.b16 %v473
  %v1509 = vunpack.c.l.b16 %v474
  %v1510 = vunpack.c.l.b16 %v475
  %v1511 = vunpack.c.l.b16 %v476
  %v1512 = vunpack.c.l.b16 %v477
  %v1513 = vunpack.c.l.b16 %v478
  %v1514 = vunpack.c.l.b16 %v479
  %v1515 = vunpack.c.l.b16 %v480
  %v1516 = vunpack.c.l.b16 %v481
  %v1517 = vunpack.c.l.b16 %v482
  %v1518 = vunpack.c.l.b16 %v483
  %v1519 = vunpack.c.l.b16 %v484
  %v1520 = vunpack.c.l.b16 %v485
  %v1521 = vunpack.c.l.b16 %v486
  %v1522 = vunpack.c.l.b16 %v487
  %v1523 = vunpack.c.l.b16 %v488
  %v1524 = vunpack.c.l.b16 %v489
  %v1525 = vunpack.c.l.b16 %v490
  %v1526 = vunpack.c.l.b16 %v491
  %v1527 = vunpack.c.l.b16 %v492
  %v1528 = vunpack.c.l.b16 %v493
  %v1529 = vunpack.c.l.b16 %v494
  %v1530 = vunpack.c.l.b16 %v495
  %v1531 = vunpack.c.l.b16 %v496
  %v1532 = vunpack.c.l.b16 %v497
  %v1533 = vunpack.c.l.b16 %v498
  %v1534 = vunpack.c.l.b16 %v499
  %v1535 = vunpack.c.l.b16 %v500
  %v1536 = vunpack.c.l.b16 %v501
  %v1537 = vunpack.c.l.b16 %v502
  %v1538 = vunpack.c.l.b16 %v503
  %v1539 = vunpack.c.l.b16 %v504
  %v1540 = vunpack.c.l.b16 %v505
  %v1541 = vunpack.c.l.b16 %v506
  %v1542 = vunpack.c.l.b16 %v507
  %v1543 = vunpack.c.l.b16 %v508
  %v1544 = vunpack.c.l.b16 %v509
  %v1545 = vunpack.c.l.b16 %v510
  %v1546 = vunpack.c.l.b16 %v511
  %v1547 = vunpack.c.l.b16 %v512
  %v1548 = vunpack.c.l.b16 %v513
  %v1549 = vunpack.c.l.b16 %v514
  %v1550 = vunpack.c.l.b16 %v515
  %v1551 = vunpack.c.l.b16 %v516
  %v1552 = vunpack.c.l.b16 %v517
  %v1553 = vunpack.c.l.b16 %v518
  %v1554 = vunpack.c.l.b16 %v519
  %v1555 = vunpack.c.l.b16 %v520
  %v1556 = vunpack.c.l.b16 %v521
  %v1557 = vunpack.c.l.b16 %v522
  %v1558 = vunpack.c.l.b16 %v523
  %v1559 = vunpack.c.l.b16 %v524
  %v1560 = vunpack.c.l.b16 %v525
  %v1561 = vunpack.c.l.b16 %v526
  %v1562 = vunpack.c.l.b16 %v527
  %v1563 = vunpack.c.l.b16 %v528
  %v1564 = vunpack.c.l.b16 %v529
  %v1565 = vunpack.c.l.b16 %v530
  %v1566 = vunpack.c.l.b16 %v531
  %v1567 = vunpack.c.l.b16 %v532
  %v1568 = vunpack.c.l.b16 %v533
  %v1569 = vunpack.c.l.b16 %v534
  %v1570 = vunpack.c.l.b16 %v535
  %v1571 = vunpack.c.l.b16 %v536
  %v1572 = vunpack.c.l.b16 %v537
  %v1573 = vunpack.c.l.b16 %v538
  %v1574 = vunpack.c.l.b16 %v539
  %v1575 = vunpack.c.l.b16 %v540
  %v1576 = vunpack.c.l.b16 %v541
  %v1577 = vunpack.c.l.b16 %v542
  %v1578 = vunpack.c.l.b16 %v543
  %v1579 = vunpack.c.l.b16 %v544
  %v1580 = vunpack.c.l.b16 %v545
  %v1581 = vunpack.c.l.b16 %v546
  %v1582 = vunpack.c.l.b16 %v547
  %v1583 = vunpack.c.l.b16 %v548
  %v1584 = vunpack.c.l.b16 %v549
  %v1585 = vunpack.c.l.b16 %v550
  %v1586 = vpack.c.b16 %v1075, %v1074
  %v1587 = vpack.c.b16 %v1077, %v1076
  %v1588 = vpack.c.b16 %v1079, %v1078
  %v1589 = vpack.c.b16 %v1081, %v1080
  %v1590 = vpack.c.b16 %v1083, %v1082
  %v1591 = vpack.c.b16 %v1085, %v1084
  %v1592 = vpack.c.b16 %v1087, %v1086
  %v1593 = vpack.c.b16 %v1089, %v1088
  %v1594 = vpack.c.b16 %v1091, %v1090
  %v1595 = vpack.c.b16 %v1093, %v1092
  %v1596 = vpack.c.b16 %v1095, %v1094
  %v1597 = vpack.c.b16 %v1097, %v1096
  %v1598 = vpack.c.b16 %v1099, %v1098
  %v1599 = vpack.c.b16 %v1101, %v1100
  %v1600 = vpack.c.b16 %v1103, %v1102
  %v1601 = vpack.c.b16 %v1105, %v1104
  %v1602 = vpack.c.b16 %v1107, %v1106
  %v1603 = vpack.c.b16 %v1109, %v1108
  %v1604 = vpack.c.b16 %v1111, %v1110
  %v1605 = vpack.c.b16 %v1113, %v1112
  %v1606 = vpack.c.b16 %v1115, %v1114
  %v1607 = vpack.c.b16 %v1117, %v1116
  %v1608 = vpack.c.b16 %v1119, %v1118
  %v1609 = vpack.c.b16 %v1121, %v1120
  %v1610 = vpack.c.b16 %v1123, %v1122
  %v1611 = vpack.c.b16 %v1125, %v1124
  %v1612 = vpack.c.b16 %v1127, %v1126
  %v1613 = vpack.c.b16 %v1129, %v1128
  %v1614 = vpack.c.b16 %v1131, %v1130
  %v1615 = vpack.c.b16 %v1133, %v1132
  %v1616 = vpack.c.b16 %v1135, %v1134
  %v1617 = vpack.c.b16 %v1137, %v1136
  %v1618 = vpack.c.b16 %v1139, %v1138
  %v1619 = vpack.c.b16 %v1141, %v1140
  %v1620 = vpack.c.b16 %v1143, %v1142
  %v1621 = vpack.c.b16 %v1145, %v1144
  %v1622 = vpack.c.b16 %v1147, %v1146
  %v1623 = vpack.c.b16 %v1149, %v1148
  %v1624 = vpack.c.b16 %v1151, %v1150
  %v1625 = vpack.c.b16 %v1153, %v1152
  %v1626 = vpack.c.b16 %v1155, %v1154
  %v1627 = vpack.c.b16 %v1157, %v1156
  %v1628 = vpack.c.b16 %v1159, %v1158
  %v1629 = vpack.c.b16 %v1161, %v1160
  %v1630 = vpack.c.b16 %v1163, %v1162
  %v1631 = vpack.c.b16 %v1165, %v1164
  %v1632 = vpack.c.b16 %v1167, %v1166
  %v1633 = vpack.c.b16 %v1169, %v1168
  %v1634 = vpack.c.b16 %v1171, %v1170
  %v1635 = vpack.c.b16 %v1173, %v1172
  %v1636 = vpack.c.b16 %v1175, %v1174
  %v1637 = vpack.c.b16 %v1177, %v1176
  %v1638 = vpack.c.b16 %v1179, %v1178
  %v1639 = vpack.c.b16 %v1181, %v1180
  %v1640 = vpack.c.b16 %v1183, %v1182
  %v1641 = vpack.c.b16 %v1185, %v1184
  %v1642 = vpack.c.b16 %v1187, %v1186
  %v1643 = vpack.c.b16 %v1189, %v1188
  %v1644 = vpack.c.b16 %v1191, %v1190
  %v1645 = vpack.c.b16 %v1193, %v1192
  %v1646 = vpack.c.b16 %v1195, %v1194
  %v1647 = vpack.c.b16 %v1197, %v1196
  %v1648 = vpack.c.b16 %v1199, %v1198
  %v1649 = vpack.c.b16 %v1201, %v1200
  %v1650 = vpack.c.b16 %v1203, %v1202
  %v1651 = vpack.c.b16 %v1205, %v1204
  %v1652 = vpack.c.b16 %v1207, %v1206
  %v1653 = vpack.c.b16 %v1209, %v1208
  %v1654 = vpack.c.b16 %v1211, %v1210
  %v1655 = vpack.c.b16 %v1213, %v1212
  %v1656 = vpack.c.b16 %v1215, %v1214
  %v1657 = vpack.c.b16 %v1217, %v1216
  %v1658 = vpack.c.b16 %v1219, %v1218
  %v1659 = vpack.c.b16 %v1221, %v1220
  %v1660 = vpack.c.b16 %v1223, %v1222
  %v1661 = vpack.c.b16 %v1225, %v1224
  %v1662 = vpack.c.b16 %v1227, %v1226
  %v1663 = vpack.c.b16 %v1229, %v1228
  %v1664 = vpack.c.b16 %v1231, %v1230
  %v1665 = vpack.c.b16 %v1233, %v1232
  %v1666 = vpack.c.b16 %v1235, %v1234
  %v1667 = vpack.c.b16 %v1237, %v1236
  %v1668 = vpack.c.b16 %v1239, %v1238
  %v1669 = vpack.c.b16 %v1241, %v1240
  %v1670 = vpack.c.b16 %v1243, %v1242
  %v1671 = vpack.c.b16 %v1245, %v1244
  %v1672 = vpack.c.b16 %v1247, %v1246
  %v1673 = vpack.c.b16 %v1249, %v1248
  %v1674 = vpack.c.b16 %v1251, %v1250
  %v1675 = vpack.c.b16 %v1253, %v1252
  %v1676 = vpack.c.b16 %v1255, %v1254
  %v1677 = vpack.c.b16 %v1257, %v1256
  %v1678 = vpack.c.b16 %v1259, %v1258
  %v1679 = vpack.c.b16 %v1261, %v1260
  %v1680 = vpack.c.b16 %v1263, %v1262
  %v1681 = vpack.c.b16 %v1265, %v1264
  %v1682 = vpack.c.b16 %v1267, %v1266
  %v1683 = vpack.c.b16 %v1269, %v1268
  %v1684 = vpack.c.b16 %v1271, %v1270
  %v1685 = vpack.c.b16 %v1273, %v1272
  %v1686 = vpack.c.b16 %v1275, %v1274
  %v1687 = vpack.c.b16 %v1277, %v1276
  %v1688 = vpack.c.b16 %v1279, %v1278
  %v1689 = vpack.c.b16 %v1281, %v1280
  %v1690 = vpack.c.b16 %v1283, %v1282
  %v1691 = vpack.c.b16 %v1285, %v1284
  %v1692 = vpack.c.b16 %v1287, %v1286
  %v1693 = vpack.c.b16 %v1289, %v1288
  %v1694 = vpack.c.b16 %v1291, %v1290
  %v1695 = vpack.c.b16 %v1293, %v1292
  %v1696 = vpack.c.b16 %v1295, %v1294
  %v1697 = vpack.c.b16 %v1297, %v1296
  %v1698 = vpack.c.b16 %v1299, %v1298
  %v1699 = vpack.c.b16 %v1301, %v1300
  %v1700 = vpack.c.b16 %v1303, %v1302
  %v1701 = vpack.c.b16 %v1305, %v1304
  %v1702 = vpack.c.b16 %v1307, %v1306
  %v1703 = vpack.c.b16 %v1309, %v1308
  %v1704 = vpack.c.b16 %v1311, %v1310
  %v1705 = vpack.c.b16 %v1313, %v1312
  %v1706 = vpack.c.b16 %v1315, %v1314
  %v1707 = vpack.c.b16 %v1317, %v1316
  %v1708 = vpack.c.b16 %v1319, %v1318
  %v1709 = vpack.c.b16 %v1321, %v1320
  %v1710 = vpack.c.b16 %v1323, %v1322
  %v1711 = vpack.c.b16 %v1325, %v1324
  %v1712 = vpack.c.b16 %v1327, %v1326
  %v1713 = vpack.c.b16 %v1329, %v1328
  %v1714 = vpack.c.b16 %v1331, %v1330
  %v1715 = vpack.c.b16 %v1333, %v1332
  %v1716 = vpack.c.b16 %v1335, %v1334
  %v1717 = vpack.c.b16 %v1337, %v1336
  %v1718 = vpack.c.b16 %v1339, %v1338
  %v1719 = vpack.c.b16 %v1341, %v1340
  %v1720 = vpack.c.b16 %v1343, %v1342
  %v1721 = vpack.c.b16 %v1345, %v1344
  %v1722 = vpack.c.b16 %v1347, %v1346
  %v1723 = vpack.c.b16 %v1349, %v1348
  %v1724 = vpack.c.b16 %v1351, %v1350
  %v1725 = vpack.c.b16 %v1353, %v1352
  %v1726 = vpack.c.b16 %v1355, %v1354
  %v1727 = vpack.c.b16 %v1357, %v1356
  %v1728 = vpack.c.b16 %v1359, %v1358
  %v1729 = vpack.c.b16 %v1361, %v1360
  %v1730 = vpack.c.b16 %v1363, %v1362
  %v1731 = vpack.c.b16 %v1365, %v1364
  %v1732 = vpack.c.b16 %v1367, %v1366
  %v1733 = vpack.c.b16 %v1369, %v1368
  %v1734 = vpack.c.b16 %v1371, %v1370
  %v1735 = vpack.c.b16 %v1373, %v1372
  %v1736 = vpack.c.b16 %v1375, %v1374
  %v1737 = vpack.c.b16 %v1377, %v1376
  %v1738 = vpack.c.b16 %v1379, %v1378
  %v1739 = vpack.c.b16 %v1381, %v1380
  %v1740 = vpack.c.b16 %v1383, %v1382
  %v1741 = vpack.c.b16 %v1385, %v1384
  %v1742 = vpack.c.b16 %v1387, %v1386
  %v1743 = vpack.c.b16 %v1389, %v1388
  %v1744 = vpack.c.b16 %v1391, %v1390
  %v1745 = vpack.c.b16 %v1393, %v1392
  %v1746 = vpack.c.b16 %v1395, %v1394
  %v1747 = vpack.c.b16 %v1397, %v1396
  %v1748 = vpack.c.b16 %v1399, %v1398
  %v1749 = vpack.c.b16 %v1401, %v1400
  %v1750 = vpack.c.b16 %v1403, %v1402
  %v1751 = vpack.c.b16 %v1405, %v1404
  %v1752 = vpack.c.b16 %v1407, %v1406
  %v1753 = vpack.c.b16 %v1409, %v1408
  %v1754 = vpack.c.b16 %v1411, %v1410
  %v1755 = vpack.c.b16 %v1413, %v1412
  %v1756 = vpack.c.b16 %v1415, %v1414
  %v1757 = vpack.c.b16 %v1417, %v1416
  %v1758 = vpack.c.b16 %v1419, %v1418
  %v1759 = vpack.c.b16 %v1421, %v1420
  %v1760 = vpack.c.b16 %v1423, %v1422
  %v1761 = vpack.c.b16 %v1425, %v1424
  %v1762 = vpack.c.b16 %v1427, %v1426
  %v1763 = vpack.c.b16 %v1429, %v1428
  %v1764 = vpack.c.b16 %v1431, %v1430
  %v1765 = vpack.c.b16 %v1433, %v1432
  %v1766 = vpack.c.b16 %v1435, %v1434
  %v1767 = vpack.c.b16 %v1437, %v1436
  %v1768 = vpack.c.b16 %v1439, %v1438
  %v1769 = vpack.c.b16 %v1441, %v1440
  %v1770 = vpack.c.b16 %v1443, %v1442
  %v1771 = vpack.c.b16 %v1445, %v1444
  %v1772 = vpack.c.b16 %v1447, %v1446
  %v1773 = vpack.c.b16 %v1449, %v1448
  %v1774 = vpack.c.b16 %v1451, %v1450
  %v1775 = vpack.c.b16 %v1453, %v1452
  %v1776 = vpack.c.b16 %v1455, %v1454
  %v1777 = vpack.c.b16 %v1457, %v1456
  %v1778 = vpack.c.b16 %v1459, %v1458
  %v1779 = vpack.c.b16 %v1461, %v1460
  %v1780 = vpack.c.b16 %v1463, %v1462
  %v1781 = vpack.c.b16 %v1465, %v1464
  %v1782 = vpack.c.b16 %v1467, %v1466
  %v1783 = vpack.c.b16 %v1469, %v1468
  %v1784 = vpack.c.b16 %v1471, %v1470
  %v1785 = vpack.c.b16 %v1473, %v1472
  %v1786 = vpack.c.b16 %v1475, %v1474
  %v1787 = vpack.c.b16 %v1477, %v1476
  %v1788 = vpack.c.b16 %v1479, %v1478
  %v1789 = vpack.c.b16 %v1481, %v1480
  %v1790 = vpack.c.b16 %v1483, %v1482
  %v1791 = vpack.c.b16 %v1485, %v1484
  %v1792 = vpack.c.b16 %v1487, %v1486
  %v1793 = vpack.c.b16 %v1489, %v1488
  %v1794 = vpack.c.b16 %v1491, %v1490
  %v1795 = vpack.c.b16 %v1493, %v1492
  %v1796 = vpack.c.b16 %v1495, %v1494
  %v1797 = vpack.c.b16 %v1497, %v1496
  %v1798 = vpack.c.b16 %v1499, %v1498
  %v1799 = vpack.c.b16 %v1501, %v1500
  %v1800 = vpack.c.b16 %v1503, %v1502
  %v1801 = vpack.c.b16 %v1505, %v1504
  %v1802 = vpack.c.b16 %v1507, %v1506
  %v1803 = vpack.c.b16 %v1509, %v1508
  %v1804 = vpack.c.b16 %v1511, %v1510
  %v1805 = vpack.c.b16 %v1513, %v1512
  %v1806 = vpack.c.b16 %v1515, %v1514
  %v1807 = vpack.c.b16 %v1517, %v1516
  %v1808 = vpack.c.b16 %v1519, %v1518
  %v1809 = vpack.c.b16 %v1521, %v1520
  %v1810 = vpack.c.b16 %v1523, %v1522
  %v1811 = vpack.c.b16 %v1525, %v1524
  %v1812 = vpack.c.b16 %v1527, %v1526
  %v1813 = vpack.c.b16 %v1529, %v1528
  %v1814 = vpack.c.b16 %v1531, %v1530
  %v1815 = vpack.c.b16 %v1533, %v1532
  %v1816 = vpack.c.b16 %v1535, %v1534
  %v1817 = vpack.c.b16 %v1537, %v1536
  %v1818 = vpack.c.b16 %v1539, %v1538
  %v1819 = vpack.c.b16 %v1541, %v1540
  %v1820 = vpack.c.b16 %v1543, %v1542
  %v1821 = vpack.c.b16 %v1545, %v1544
  %v1822 = vpack.c.b16 %v1547, %v1546
  %v1823 = vpack.c.b16 %v1549, %v1548
  %v1824 = vpack.c.b16 %v1551, %v1550
  %v1825 = vpack.c.b16 %v1553, %v1552
  %v1826 = vpack.c.b16 %v1555, %v1554
  %v1827 = vpack.c.b16 %v1557, %v1556
  %v1828 = vpack.c.b16 %v1559, %v1558
  %v1829 = vpack.c.b16 %v1561, %v1560
  %v1830 = vpack.c.b16 %v1563, %v1562
  %v1831 = vpack.c.b16 %v1565, %v1564
  %v1832 = vpack.c.b16 %v1567, %v1566
  %v1833 = vpack.c.b16 %v1569, %v1568
  %v1834 = vpack.c.b16 %v1571, %v1570
  %v1835 = vpack.c.b16 %v1573, %v1572
  %v1836 = vpack.c.b16 %v1575, %v1574
  %v1837 = vpack.c.b16 %v1577, %v1576
  %v1838 = vpack.c.b16 %v1579, %v1578
  %v1839 = vpack.c.b16 %v1581, %v1580
  %v1840 = vpack.c.b16 %v1583, %v1582
  %v1841 = vpack.c.b16 %v1585, %v1584
  %v1846 = vunpack.c.l.b16 %v551
  %v1847 = vunpack.c.l.b16 %v552
  %v1848 = vunpack.c.l.b16 %v553
  %v1849 = vunpack.c.l.b16 %v554
  %v1850 = vpack.c.b16 %v1847, %v1846
  %v1851 = vpack.c.b16 %v1849, %v1848
  %vm1853 = vcmask 220160
  %v1855 = vsel %vm1853, %v1586, 0
  %v1858 = vsel %vm1853, %v1587, 0
  %v1861 = vsel %vm1853, %v1588, 0
  %v1864 = vsel %vm1853, %v1589, 0
  %v1867 = vsel %vm1853, %v1590, 0
  %v1870 = vsel %vm1853, %v1591, 0
  %v1873 = vsel %vm1853, %v1592, 0
  %v1876 = vsel %vm1853, %v1593, 0
  %v1879 = vsel %vm1853, %v1594, 0
  %v1882 = vsel %vm1853, %v1595, 0
  %v1885 = vsel %vm1853, %v1596, 0
  %v1888 = vsel %vm1853, %v1597, 0
  %v1891 = vsel %vm1853, %v1598, 0
  %v1894 = vsel %vm1853, %v1599, 0
  %v1897 = vsel %vm1853, %v1600, 0
  %v1900 = vsel %vm1853, %v1601, 0
  %v1903 = vsel %vm1853, %v1602, 0
  %v1906 = vsel %vm1853, %v1603, 0
  %v1909 = vsel %vm1853, %v1604, 0
  %v1912 = vsel %vm1853, %v1605, 0
  %v1915 = vsel %vm1853, %v1606, 0
  %v1918 = vsel %vm1853, %v1607, 0
  %v1921 = vsel %vm1853, %v1608, 0
  %v1924 = vsel %vm1853, %v1609, 0
  %v1927 = vsel %vm1853, %v1610, 0
  %v1930 = vsel %vm1853, %v1611, 0
  %v1933 = vsel %vm1853, %v1612, 0
  %v1936 = vsel %vm1853, %v1613, 0
  %v1939 = vsel %vm1853, %v1614, 0
  %v1942 = vsel %vm1853, %v1615, 0
  %v1945 = vsel %vm1853, %v1616, 0
  %v1948 = vsel %vm1853, %v1617, 0
  %v1951 = vsel %vm1853, %v1618, 0
  %v1954 = vsel %vm1853, %v1619, 0
  %v1957 = vsel %vm1853, %v1620, 0
  %v1960 = vsel %vm1853, %v1621, 0
  %v1963 = vsel %vm1853, %v1622, 0
  %v1966 = vsel %vm1853, %v1623, 0
  %v1969 = vsel %vm1853, %v1624, 0
  %v1972 = vsel %vm1853, %v1625, 0
  %v1975 = vsel %vm1853, %v1626, 0
  %v1978 = vsel %vm1853, %v1627, 0
  %v1981 = vsel %vm1853, %v1628, 0
  %v1984 = vsel %vm1853, %v1629, 0
  %v1987 = vsel %vm1853, %v1630, 0
  %v1990 = vsel %vm1853, %v1631, 0
  %v1993 = vsel %vm1853, %v1632, 0
  %v1996 = vsel %vm1853, %v1633, 0
  %v1999 = vsel %vm1853, %v1634, 0
  %v2002 = vsel %vm1853, %v1635, 0
  %v2005 = vsel %vm1853, %v1636, 0
  %v2008 = vsel %vm1853, %v1637, 0
  %v2011 = vsel %vm1853, %v1638, 0
  %v2014 = vsel %vm1853, %v1639, 0
  %v2017 = vsel %vm1853, %v1640, 0
  %v2020 = vsel %vm1853, %v1641, 0
  %v2023 = vsel %vm1853, %v1642, 0
  %v2026 = vsel %vm1853, %v1643, 0
  %v2029 = vsel %vm1853, %v1644, 0
  %v2032 = vsel %vm1853, %v1645, 0
  %v2035 = vsel %vm1853, %v1646, 0
  %v2038 = vsel %vm1853, %v1647, 0
  %v2041 = vsel %vm1853, %v1648, 0
  %v2044 = vsel %vm1853, %v1649, 0
  %v2047 = vsel %vm1853, %v1650, 0
  %v2050 = vsel %vm1853, %v1651, 0
  %v2053 = vsel %vm1853, %v1652, 0
  %v2056 = vsel %vm1853, %v1653, 0
  %v2059 = vsel %vm1853, %v1654, 0
  %v2062 = vsel %vm1853, %v1655, 0
  %v2065 = vsel %vm1853, %v1656, 0
  %v2068 = vsel %vm1853, %v1657, 0
  %v2071 = vsel %vm1853, %v1658, 0
  %v2074 = vsel %vm1853, %v1659, 0
  %v2077 = vsel %vm1853, %v1660, 0
  %v2080 = vsel %vm1853, %v1661, 0
  %v2083 = vsel %vm1853, %v1662, 0
  %v2086 = vsel %vm1853, %v1663, 0
  %v2089 = vsel %vm1853, %v1664, 0
  %v2092 = vsel %vm1853, %v1665, 0
  %v2095 = vsel %vm1853, %v1666, 0
  %v2098 = vsel %vm1853, %v1667, 0
  %v2101 = vsel %vm1853, %v1668, 0
  %v2104 = vsel %vm1853, %v1669, 0
  %v2107 = vsel %vm1853, %v1670, 0
  %v2110 = vsel %vm1853, %v1671, 0
  %v2113 = vsel %vm1853, %v1672, 0
  %v2116 = vsel %vm1853, %v1673, 0
  %v2119 = vsel %vm1853, %v1674, 0
  %v2122 = vsel %vm1853, %v1675, 0
  %v2125 = vsel %vm1853, %v1676, 0
  %v2128 = vsel %vm1853, %v1677, 0
  %v2131 = vsel %vm1853, %v1678, 0
  %v2134 = vsel %vm1853, %v1679, 0
  %v2137 = vsel %vm1853, %v1680, 0
  %v2140 = vsel %vm1853, %v1681, 0
  %v2143 = vsel %vm1853, %v1682, 0
  %v2146 = vsel %vm1853, %v1683, 0
  %v2149 = vsel %vm1853, %v1684, 0
  %v2152 = vsel %vm1853, %v1685, 0
  %v2155 = vsel %vm1853, %v1686, 0
  %v2158 = vsel %vm1853, %v1687, 0
  %v2161 = vsel %vm1853, %v1688, 0
  %v2164 = vsel %vm1853, %v1689, 0
  %v2167 = vsel %vm1853, %v1690, 0
  %v2170 = vsel %vm1853, %v1691, 0
  %v2173 = vsel %vm1853, %v1692, 0
  %v2176 = vsel %vm1853, %v1693, 0
  %v2179 = vsel %vm1853, %v1694, 0
  %v2182 = vsel %vm1853, %v1695, 0
  %v2185 = vsel %vm1853, %v1696, 0
  %v2188 = vsel %vm1853, %v1697, 0
  %v2191 = vsel %vm1853, %v1698, 0
  %v2194 = vsel %vm1853, %v1699, 0
  %v2197 = vsel %vm1853, %v1700, 0
  %v2200 = vsel %vm1853, %v1701, 0
  %v2203 = vsel %vm1853, %v1702, 0
  %v2206 = vsel %vm1853, %v1703, 0
  %v2209 = vsel %vm1853, %v1704, 0
  %v2212 = vsel %vm1853, %v1705, 0
  %v2215 = vsel %vm1853, %v1706, 0
  %v2218 = vsel %vm1853, %v1707, 0
  %v2221 = vsel %vm1853, %v1708, 0
  %v2224 = vsel %vm1853, %v1709, 0
  %v2227 = vsel %vm1853, %v1710, 0
  %v2230 = vsel %vm1853, %v1711, 0
  %v2233 = vsel %vm1853, %v1712, 0
  %v2236 = vsel %vm1853, %v1713, 0
  %v2239 = vsel %vm1853, %v1714, 0
  %v2242 = vsel %vm1853, %v1715, 0
  %v2245 = vsel %vm1853, %v1716, 0
  %v2248 = vsel %vm1853, %v1717, 0
  %v2251 = vsel %vm1853, %v1718, 0
  %v2254 = vsel %vm1853, %v1719, 0
  %v2257 = vsel %vm1853, %v1720, 0
  %v2260 = vsel %vm1853, %v1721, 0
  %v2263 = vsel %vm1853, %v1722, 0
  %v2266 = vsel %vm1853, %v1723, 0
  %v2269 = vsel %vm1853, %v1724, 0
  %v2272 = vsel %vm1853, %v1725, 0
  %v2275 = vsel %vm1853, %v1726, 0
  %v2278 = vsel %vm1853, %v1727, 0
  %v2281 = vsel %vm1853, %v1728, 0
  %v2284 = vsel %vm1853, %v1729, 0
  %v2287 = vsel %vm1853, %v1730, 0
  %v2290 = vsel %vm1853, %v1731, 0
  %v2293 = vsel %vm1853, %v1732, 0
  %v2296 = vsel %vm1853, %v1733, 0
  %v2299 = vsel %vm1853, %v1734, 0
  %v2302 = vsel %vm1853, %v1735, 0
  %v2305 = vsel %vm1853, %v1736, 0
  %v2308 = vsel %vm1853, %v1737, 0
  %v2311 = vsel %vm1853, %v1738, 0
  %v2314 = vsel %vm1853, %v1739, 0
  %v2317 = vsel %vm1853, %v1740, 0
  %v2320 = vsel %vm1853, %v1741, 0
  %v2323 = vsel %vm1853, %v1742, 0
  %v2326 = vsel %vm1853, %v1743, 0
  %v2329 = vsel %vm1853, %v1744, 0
  %v2332 = vsel %vm1853, %v1745, 0
  %v2335 = vsel %vm1853, %v1746, 0
  %v2338 = vsel %vm1853, %v1747, 0
  %v2341 = vsel %vm1853, %v1748, 0
  %v2344 = vsel %vm1853, %v1749, 0
  %v2347 = vsel %vm1853, %v1750, 0
  %v2350 = vsel %vm1853, %v1751, 0
  %v2353 = vsel %vm1853, %v1752, 0
  %v2356 = vsel %vm1853, %v1753, 0
  %v2359 = vsel %vm1853, %v1754, 0
  %v2362 = vsel %vm1853, %v1755, 0
  %v2365 = vsel %vm1853, %v1756, 0
  %v2368 = vsel %vm1853, %v1757, 0
  %v2371 = vsel %vm1853, %v1758, 0
  %v2374 = vsel %vm1853, %v1759, 0
  %v2377 = vsel %vm1853, %v1760, 0
  %v2380 = vsel %vm1853, %v1761, 0
  %v2383 = vsel %vm1853, %v1762, 0
  %v2386 = vsel %vm1853, %v1763, 0
  %v2389 = vsel %vm1853, %v1764, 0
  %v2392 = vsel %vm1853, %v1765, 0
  %v2395 = vsel %vm1853, %v1766, 0
  %v2398 = vsel %vm1853, %v1767, 0
  %v2401 = vsel %vm1853, %v1768, 0
  %v2404 = vsel %vm1853, %v1769, 0
  %v2407 = vsel %vm1853, %v1770, 0
  %v2410 = vsel %vm1853, %v1771, 0
  %v2413 = vsel %vm1853, %v1772, 0
  %v2416 = vsel %vm1853, %v1773, 0
  %v2419 = vsel %vm1853, %v1774, 0
  %v2422 = vsel %vm1853, %v1775, 0
  %v2425 = vsel %vm1853, %v1776, 0
  %v2428 = vsel %vm1853, %v1777, 0
  %v2431 = vsel %vm1853, %v1778, 0
  %v2434 = vsel %vm1853, %v1779, 0
  %v2437 = vsel %vm1853, %v1780, 0
  %v2440 = vsel %vm1853, %v1781, 0
  %v2443 = vsel %vm1853, %v1782, 0
  %v2446 = vsel %vm1853, %v1783, 0
  %v2449 = vsel %vm1853, %v1784, 0
  %v2452 = vsel %vm1853, %v1785, 0
  %v2455 = vsel %vm1853, %v1786, 0
  %v2458 = vsel %vm1853, %v1787, 0
  %v2461 = vsel %vm1853, %v1788, 0
  %v2464 = vsel %vm1853, %v1789, 0
  %v2467 = vsel %vm1853, %v1790, 0
  %v2470 = vsel %vm1853, %v1791, 0
  %v2473 = vsel %vm1853, %v1792, 0
  %v2476 = vsel %vm1853, %v1793, 0
  %v2479 = vsel %vm1853, %v1794, 0
  %v2482 = vsel %vm1853, %v1795, 0
  %v2485 = vsel %vm1853, %v1796, 0
  %v2488 = vsel %vm1853, %v1797, 0
  %v2491 = vsel %vm1853, %v1798, 0
  %v2494 = vsel %vm1853, %v1799, 0
  %v2497 = vsel %vm1853, %v1800, 0
  %v2500 = vsel %vm1853, %v1801, 0
  %v2503 = vsel %vm1853, %v1802, 0
  %v2506 = vsel %vm1853, %v1803, 0
  %v2509 = vsel %vm1853, %v1804, 0
  %v2512 = vsel %vm1853, %v1805, 0
  %v2515 = vsel %vm1853, %v1806, 0
  %v2518 = vsel %vm1853, %v1807, 0
  %v2521 = vsel %vm1853, %v1808, 0
  %v2524 = vsel %vm1853, %v1809, 0
  %v2527 = vsel %vm1853, %v1810, 0
  %v2530 = vsel %vm1853, %v1811, 0
  %v2533 = vsel %vm1853, %v1812, 0
  %v2536 = vsel %vm1853, %v1813, 0
  %v2539 = vsel %vm1853, %v1814, 0
  %v2542 = vsel %vm1853, %v1815, 0
  %v2545 = vsel %vm1853, %v1816, 0
  %v2548 = vsel %vm1853, %v1817, 0
  %v2551 = vsel %vm1853, %v1818, 0
  %v2554 = vsel %vm1853, %v1819, 0
  %v2557 = vsel %vm1853, %v1820, 0
  %v2560 = vsel %vm1853, %v1821, 0
  %v2563 = vsel %vm1853, %v1822, 0
  %v2566 = vsel %vm1853, %v1823, 0
  %v2569 = vsel %vm1853, %v1824, 0
  %v2572 = vsel %vm1853, %v1825, 0
  %v2575 = vsel %vm1853, %v1826, 0
  %v2578 = vsel %vm1853, %v1827, 0
  %v2581 = vsel %vm1853, %v1828, 0
  %v2584 = vsel %vm1853, %v1829, 0
  %v2587 = vsel %vm1853, %v1830, 0
  %v2590 = vsel %vm1853, %v1831, 0
  %v2593 = vsel %vm1853, %v1832, 0
  %v2596 = vsel %vm1853, %v1833, 0
  %v2599 = vsel %vm1853, %v1834, 0
  %v2602 = vsel %vm1853, %v1835, 0
  %v2605 = vsel %vm1853, %v1836, 0
  %v2608 = vsel %vm1853, %v1837, 0
  %v2611 = vsel %vm1853, %v1838, 0
  %v2614 = vsel %vm1853, %v1839, 0
  %v2617 = vsel %vm1853, %v1840, 0
  %v2620 = vsel %vm1853, %v1841, 0
  %vm2622 = vcmask 1044480
  %vm2623 = vcmask 1045504
  %v2624 = vsel %vm2622, 4294967295, 65535
  %v2625 = vsel %vm2623, %v2624, 0
  %v2627 = vand.u32 %v1851, %v2625
  %2629 = vmatprep.subr.bf16.mxu0 0
  %2630 = vmatpush1.bf16.msra.mxu0 %v1850
  %2631 = vmatprep.subr.bf16.mxu0 0
  %2632 = vmatpush1.bf16.msra.mxu0 %v2627
  %2633 = vmatprep.subr.bf16.mxu0 0
  %2634 = vmatpush1.bf16.msra.mxu0 0
  %2635 = vmatprep.subr.bf16.mxu0 0
  %2636 = vmatpush1.bf16.msra.mxu0 0
  %2637 = vmatprep.subr.bf16.mxu0 0
  %2638 = vmatpush1.bf16.msra.mxu0 0
  %2639 = vmatprep.subr.bf16.mxu0 0
  %2640 = vmatpush1.bf16.msra.mxu0 0
  %2641 = vmatprep.subr.bf16.mxu0 0
  %2642 = vmatpush1.bf16.msra.mxu0 0
  %2643 = vmatprep.subr.bf16.mxu0 0
  %2644 = vmatpush1.bf16.msra.mxu0 0
  %2645 = vmatprep.subr.bf16.mxu0 0
  %2646 = vmatpush1.bf16.msra.mxu0 0
  %2647 = vmatprep.subr.bf16.mxu0 0
  %2648 = vmatpush1.bf16.msra.mxu0 0
  %2649 = vmatprep.subr.bf16.mxu0 0
  %2650 = vmatpush1.bf16.msra.mxu0 0
  %2651 = vmatprep.subr.bf16.mxu0 0
  %2652 = vmatpush1.bf16.msra.mxu0 0
  %2653 = vmatprep.subr.bf16.mxu0 0
  %2654 = vmatpush1.bf16.msra.mxu0 0
  %2655 = vmatprep.subr.bf16.mxu0 0
  %2656 = vmatpush1.bf16.msra.mxu0 0
  %2657 = vmatprep.subr.bf16.mxu0 0
  %2658 = vmatpush1.bf16.msra.mxu0 0
  %2659 = vmatprep.subr.bf16.mxu0 0
  %2660 = vmatpush1.bf16.msra.mxu0 0
  %2661 = vmatprep.mubr.bf16.mxu0 0
  %2662 = vmatmul.mubr.bf16.gmra.mrb[0].mxu0 %v1855
  %v2663 = vpop.f32.mrb[0].mxu0
  %v2664 = vadd.f32 %v560, %v2663
  %v2665 = vpop.f32.mrb[0].mxu0
  %v2666 = vpop.f32.mrb[0].mxu0
  %v2667 = vadd.f32 %v560, %v2666
  %v2668 = vpop.f32.mrb[0].mxu0
  %2669 = vmatprep.mubr.bf16.mxu0 0
  %2670 = vmatmul.mubr.bf16.gmra.mrb[0].mxu0 %v1858
  %v2671 = vpop.f32.mrb[0].mxu0
  %v2672 = vadd.f32 %v560, %v2671
  %v2673 = vpop.f32.mrb[0].mxu0
  %v2674 = vpop.f32.mrb[0].mxu0
  %v2675 = vadd.f32 %v560, %v2674
  %v2676 = vpop.f32.mrb[0].mxu0
  %2677 = vmatprep.mubr.bf16.mxu0 0
  %2678 = vmatmul.mubr.bf16.gmra.mrb[0].mxu0 %v1861
  %v2679 = vpop.f32.mrb[0].mxu0
  %v2680 = vadd.f32 %v560, %v2679
  %v2681 = vpop.f32.mrb[0].mxu0
  %v2682 = vpop.f32.mrb[0].mxu0
  %v2683 = vadd.f32 %v560, %v2682
  %v2684 = vpop.f32.mrb[0].mxu0
  %2685 = vmatprep.mubr.bf16.mxu0 0
  %2686 = vmatmul.mubr.bf16.gmra.mrb[0].mxu0 %v1864
  %v2687 = vpop.f32.mrb[0].mxu0
  %v2688 = vadd.f32 %v560, %v2687
  %v2689 = vpop.f32.mrb[0].mxu0
  %v2690 = vpop.f32.mrb[0].mxu0
  %v2691 = vadd.f32 %v560, %v2690
  %v2692 = vpop.f32.mrb[0].mxu0
  %2693 = vmatprep.mubr.bf16.mxu0 0
  %2694 = vmatmul.mubr.bf16.gmra.mrb[0].mxu0 %v1867
  %v2695 = vpop.f32.mrb[0].mxu0
  %v2696 = vadd.f32 %v560, %v2695
  %v2697 = vpop.f32.mrb[0].mxu0
  %v2698 = vpop.f32.mrb[0].mxu0
  %v2699 = vadd.f32 %v560, %v2698
  %v2700 = vpop.f32.mrb[0].mxu0
  %2701 = vmatprep.mubr.bf16.mxu0 0
  %2702 = vmatmul.mubr.bf16.gmra.mrb[0].mxu0 %v1870
  %v2703 = vpop.f32.mrb[0].mxu0
  %v2704 = vadd.f32 %v560, %v2703
  %v2705 = vpop.f32.mrb[0].mxu0
  %v2706 = vpop.f32.mrb[0].mxu0
  %v2707 = vadd.f32 %v560, %v2706
  %v2708 = vpop.f32.mrb[0].mxu0
  %2709 = vmatprep.mubr.bf16.mxu0 0
  %2710 = vmatmul.mubr.bf16.gmra.mrb[0].mxu0 %v1873
  %v2711 = vpop.f32.mrb[0].mxu0
  %v2712 = vadd.f32 %v560, %v2711
  %v2713 = vpop.f32.mrb[0].mxu0
  %v2714 = vpop.f32.mrb[0].mxu0
  %v2715 = vadd.f32 %v560, %v2714
  %v2716 = vpop.f32.mrb[0].mxu0
  %2717 = vmatprep.mubr.bf16.mxu0 0
  %2718 = vmatmul.mubr.bf16.gmra.mrb[0].mxu0 %v1876
  %v2719 = vpop.f32.mrb[0].mxu0
  %v2720 = vadd.f32 %v560, %v2719
  %v2721 = vpop.f32.mrb[0].mxu0
  %v2722 = vpop.f32.mrb[0].mxu0
  %v2723 = vadd.f32 %v560, %v2722
  %v2724 = vpop.f32.mrb[0].mxu0
  %2725 = vmatprep.mubr.bf16.mxu0 0
  %2726 = vmatmul.mubr.bf16.gmra.mrb[0].mxu0 %v1879
  %v2727 = vpop.f32.mrb[0].mxu0
  %v2728 = vadd.f32 %v560, %v2727
  %v2729 = vpop.f32.mrb[0].mxu0
  %v2730 = vpop.f32.mrb[0].mxu0
  %v2731 = vadd.f32 %v560, %v2730
  %v2732 = vpop.f32.mrb[0].mxu0
  %2733 = vmatprep.mubr.bf16.mxu0 0
  %2734 = vmatmul.mubr.bf16.gmra.mrb[0].mxu0 %v1882
  %v2735 = vpop.f32.mrb[0].mxu0
  %v2736 = vadd.f32 %v560, %v2735
  %v2737 = vpop.f32.mrb[0].mxu0
  %v2738 = vpop.f32.mrb[0].mxu0
  %v2739 = vadd.f32 %v560, %v2738
  %v2740 = vpop.f32.mrb[0].mxu0
  %2741 = vmatprep.mubr.bf16.mxu0 0
  %2742 = vmatmul.mubr.bf16.gmra.mrb[0].mxu0 %v1885
  %v2743 = vpop.f32.mrb[0].mxu0
  %v2744 = vadd.f32 %v560, %v2743
  %v2745 = vpop.f32.mrb[0].mxu0
  %v2746 = vpop.f32.mrb[0].mxu0
  %v2747 = vadd.f32 %v560, %v2746
  %v2748 = vpop.f32.mrb[0].mxu0
  %2749 = vmatprep.mubr.bf16.mxu0 0
  %2750 = vmatmul.mubr.bf16.gmra.mrb[0].mxu0 %v1888
  %v2751 = vpop.f32.mrb[0].mxu0
  %v2752 = vadd.f32 %v560, %v2751
  %v2753 = vpop.f32.mrb[0].mxu0
  %v2754 = vpop.f32.mrb[0].mxu0
  %v2755 = vadd.f32 %v560, %v2754
  %v2756 = vpop.f32.mrb[0].mxu0
  %2757 = vmatprep.mubr.bf16.mxu0 0
  %2758 = vmatmul.mubr.bf16.gmra.mrb[0].mxu0 %v1891
  %v2759 = vpop.f32.mrb[0].mxu0
  %v2760 = vadd.f32 %v560, %v2759
  %v2761 = vpop.f32.mrb[0].mxu0
  %v2762 = vpop.f32.mrb[0].mxu0
  %v2763 = vadd.f32 %v560, %v2762
  %v2764 = vpop.f32.mrb[0].mxu0
  %2765 = vmatprep.mubr.bf16.mxu0 0
  %2766 = vmatmul.mubr.bf16.gmra.mrb[0].mxu0 %v1894
  %v2767 = vpop.f32.mrb[0].mxu0
  %v2768 = vadd.f32 %v560, %v2767
  %v2769 = vpop.f32.mrb[0].mxu0
  %v2770 = vpop.f32.mrb[0].mxu0
  %v2771 = vadd.f32 %v560, %v2770
  %v2772 = vpop.f32.mrb[0].mxu0
  %2773 = vmatprep.mubr.bf16.mxu0 0
  %2774 = vmatmul.mubr.bf16.gmra.mrb[0].mxu0 %v1897
  %v2775 = vpop.f32.mrb[0].mxu0
  %v2776 = vadd.f32 %v560, %v2775
  %v2777 = vpop.f32.mrb[0].mxu0
  %v2778 = vpop.f32.mrb[0].mxu0
  %v2779 = vadd.f32 %v560, %v2778
  %v2780 = vpop.f32.mrb[0].mxu0
  %2781 = vmatprep.mubr.bf16.mxu0 0
  %2782 = vmatmul.mubr.bf16.gmra.mrb[0].mxu0 %v1900
  %v2783 = vpop.f32.mrb[0].mxu0
  %v2784 = vadd.f32 %v560, %v2783
  %v2785 = vpop.f32.mrb[0].mxu0
  %v2786 = vpop.f32.mrb[0].mxu0
  %v2787 = vadd.f32 %v560, %v2786
  %v2788 = vpop.f32.mrb[0].mxu0
  %2789 = vmatprep.mubr.bf16.mxu0 0
  %2790 = vmatmul.mubr.bf16.gmra.mrb[0].mxu0 %v1903
  %v2791 = vpop.f32.mrb[0].mxu0
  %v2792 = vadd.f32 %v560, %v2791
  %v2793 = vpop.f32.mrb[0].mxu0
  %v2794 = vpop.f32.mrb[0].mxu0
  %v2795 = vadd.f32 %v560, %v2794
  %v2796 = vpop.f32.mrb[0].mxu0
  %2797 = vmatprep.mubr.bf16.mxu0 0
  %2798 = vmatmul.mubr.bf16.gmra.mrb[0].mxu0 %v1906
  %v2799 = vpop.f32.mrb[0].mxu0
  %v2800 = vadd.f32 %v560, %v2799
  %v2801 = vpop.f32.mrb[0].mxu0
  %v2802 = vpop.f32.mrb[0].mxu0
  %v2803 = vadd.f32 %v560, %v2802
  %v2804 = vpop.f32.mrb[0].mxu0
  %2805 = vmatprep.mubr.bf16.mxu0 0
  %2806 = vmatmul.mubr.bf16.gmra.mrb[0].mxu0 %v1909
  %v2807 = vpop.f32.mrb[0].mxu0
  %v2808 = vadd.f32 %v560, %v2807
  %v2809 = vpop.f32.mrb[0].mxu0
  %v2810 = vpop.f32.mrb[0].mxu0
  %v2811 = vadd.f32 %v560, %v2810
  %v2812 = vpop.f32.mrb[0].mxu0
  %2813 = vmatprep.mubr.bf16.mxu0 0
  %2814 = vmatmul.mubr.bf16.gmra.mrb[0].mxu0 %v1912
  %v2815 = vpop.f32.mrb[0].mxu0
  %v2816 = vadd.f32 %v560, %v2815
  %v2817 = vpop.f32.mrb[0].mxu0
  %v2818 = vpop.f32.mrb[0].mxu0
  %v2819 = vadd.f32 %v560, %v2818
  %v2820 = vpop.f32.mrb[0].mxu0
  %2821 = vmatprep.mubr.bf16.mxu0 0
  %2822 = vmatmul.mubr.bf16.gmra.mrb[0].mxu0 %v1915
  %v2823 = vpop.f32.mrb[0].mxu0
  %v2824 = vadd.f32 %v560, %v2823
  %v2825 = vpop.f32.mrb[0].mxu0
  %v2826 = vpop.f32.mrb[0].mxu0
  %v2827 = vadd.f32 %v560, %v2826
  %v2828 = vpop.f32.mrb[0].mxu0
  %2829 = vmatprep.mubr.bf16.mxu0 0
  %2830 = vmatmul.mubr.bf16.gmra.mrb[0].mxu0 %v1918
  %v2831 = vpop.f32.mrb[0].mxu0
  %v2832 = vadd.f32 %v560, %v2831
  %v2833 = vpop.f32.mrb[0].mxu0
  %v2834 = vpop.f32.mrb[0].mxu0
  %v2835 = vadd.f32 %v560, %v2834
  %v2836 = vpop.f32.mrb[0].mxu0
  %2837 = vmatprep.mubr.bf16.mxu0 0
  %2838 = vmatmul.mubr.bf16.gmra.mrb[0].mxu0 %v1921
  %v2839 = vpop.f32.mrb[0].mxu0
  %v2840 = vadd.f32 %v560, %v2839
  %v2841 = vpop.f32.mrb[0].mxu0
  %v2842 = vpop.f32.mrb[0].mxu0
  %v2843 = vadd.f32 %v560, %v2842
  %v2844 = vpop.f32.mrb[0].mxu0
  %2845 = vmatprep.mubr.bf16.mxu0 0
  %2846 = vmatmul.mubr.bf16.gmra.mrb[0].mxu0 %v1924
  %v2847 = vpop.f32.mrb[0].mxu0
  %v2848 = vadd.f32 %v560, %v2847
  %v2849 = vpop.f32.mrb[0].mxu0
  %v2850 = vpop.f32.mrb[0].mxu0
  %v2851 = vadd.f32 %v560, %v2850
  %v2852 = vpop.f32.mrb[0].mxu0
  %2853 = vmatprep.mubr.bf16.mxu0 0
  %2854 = vmatmul.mubr.bf16.gmra.mrb[0].mxu0 %v1927
  %v2855 = vpop.f32.mrb[0].mxu0
  %v2856 = vadd.f32 %v560, %v2855
  %v2857 = vpop.f32.mrb[0].mxu0
  %v2858 = vpop.f32.mrb[0].mxu0
  %v2859 = vadd.f32 %v560, %v2858
  %v2860 = vpop.f32.mrb[0].mxu0
  %2861 = vmatprep.mubr.bf16.mxu0 0
  %2862 = vmatmul.mubr.bf16.gmra.mrb[0].mxu0 %v1930
  %v2863 = vpop.f32.mrb[0].mxu0
  %v2864 = vadd.f32 %v560, %v2863
  %v2865 = vpop.f32.mrb[0].mxu0
  %v2866 = vpop.f32.mrb[0].mxu0
  %v2867 = vadd.f32 %v560, %v2866
  %v2868 = vpop.f32.mrb[0].mxu0
  %2869 = vmatprep.mubr.bf16.mxu0 0
  %2870 = vmatmul.mubr.bf16.gmra.mrb[0].mxu0 %v1933
  %v2871 = vpop.f32.mrb[0].mxu0
  %v2872 = vadd.f32 %v560, %v2871
  %v2873 = vpop.f32.mrb[0].mxu0
  %v2874 = vpop.f32.mrb[0].mxu0
  %v2875 = vadd.f32 %v560, %v2874
  %v2876 = vpop.f32.mrb[0].mxu0
  %2877 = vmatprep.mubr.bf16.mxu0 0
  %2878 = vmatmul.mubr.bf16.gmra.mrb[0].mxu0 %v1936
  %v2879 = vpop.f32.mrb[0].mxu0
  %v2880 = vadd.f32 %v560, %v2879
  %v2881 = vpop.f32.mrb[0].mxu0
  %v2882 = vpop.f32.mrb[0].mxu0
  %v2883 = vadd.f32 %v560, %v2882
  %v2884 = vpop.f32.mrb[0].mxu0
  %2885 = vmatprep.mubr.bf16.mxu0 0
  %2886 = vmatmul.mubr.bf16.gmra.mrb[0].mxu0 %v1939
  %v2887 = vpop.f32.mrb[0].mxu0
  %v2888 = vadd.f32 %v560, %v2887
  %v2889 = vpop.f32.mrb[0].mxu0
  %v2890 = vpop.f32.mrb[0].mxu0
  %v2891 = vadd.f32 %v560, %v2890
  %v2892 = vpop.f32.mrb[0].mxu0
  %2893 = vmatprep.mubr.bf16.mxu0 0
  %2894 = vmatmul.mubr.bf16.gmra.mrb[0].mxu0 %v1942
  %v2895 = vpop.f32.mrb[0].mxu0
  %v2896 = vadd.f32 %v560, %v2895
  %v2897 = vpop.f32.mrb[0].mxu0
  %v2898 = vpop.f32.mrb[0].mxu0
  %v2899 = vadd.f32 %v560, %v2898
  %v2900 = vpop.f32.mrb[0].mxu0
  %2901 = vmatprep.mubr.bf16.mxu0 0
  %2902 = vmatmul.mubr.bf16.gmra.mrb[0].mxu0 %v1945
  %v2903 = vpop.f32.mrb[0].mxu0
  %v2904 = vadd.f32 %v560, %v2903
  %v2905 = vpop.f32.mrb[0].mxu0
  %v2906 = vpop.f32.mrb[0].mxu0
  %v2907 = vadd.f32 %v560, %v2906
  %v2908 = vpop.f32.mrb[0].mxu0
  %2909 = vmatprep.mubr.bf16.mxu0 0
  %2910 = vmatmul.mubr.bf16.gmra.mrb[0].mxu0 %v1948
  %v2911 = vpop.f32.mrb[0].mxu0
  %v2912 = vadd.f32 %v560, %v2911
  %v2913 = vpop.f32.mrb[0].mxu0
  %v2914 = vpop.f32.mrb[0].mxu0
  %v2915 = vadd.f32 %v560, %v2914
  %v2916 = vpop.f32.mrb[0].mxu0
  %2917 = vmatprep.mubr.bf16.mxu0 0
  %2918 = vmatmul.mubr.bf16.gmra.mrb[0].mxu0 %v1951
  %v2919 = vpop.f32.mrb[0].mxu0
  %v2920 = vadd.f32 %v560, %v2919
  %v2921 = vpop.f32.mrb[0].mxu0
  %v2922 = vpop.f32.mrb[0].mxu0
  %v2923 = vadd.f32 %v560, %v2922
  %v2924 = vpop.f32.mrb[0].mxu0
  %2925 = vmatprep.mubr.bf16.mxu0 0
  %2926 = vmatmul.mubr.bf16.gmra.mrb[0].mxu0 %v1954
  %v2927 = vpop.f32.mrb[0].mxu0
  %v2928 = vadd.f32 %v560, %v2927
  %v2929 = vpop.f32.mrb[0].mxu0
  %v2930 = vpop.f32.mrb[0].mxu0
  %v2931 = vadd.f32 %v560, %v2930
  %v2932 = vpop.f32.mrb[0].mxu0
  %2933 = vmatprep.mubr.bf16.mxu0 0
  %2934 = vmatmul.mubr.bf16.gmra.mrb[0].mxu0 %v1957
  %v2935 = vpop.f32.mrb[0].mxu0
  %v2936 = vadd.f32 %v560, %v2935
  %v2937 = vpop.f32.mrb[0].mxu0
  %v2938 = vpop.f32.mrb[0].mxu0
  %v2939 = vadd.f32 %v560, %v2938
  %v2940 = vpop.f32.mrb[0].mxu0
  %2941 = vmatprep.mubr.bf16.mxu0 0
  %2942 = vmatmul.mubr.bf16.gmra.mrb[0].mxu0 %v1960
  %v2943 = vpop.f32.mrb[0].mxu0
  %v2944 = vadd.f32 %v560, %v2943
  %v2945 = vpop.f32.mrb[0].mxu0
  %v2946 = vpop.f32.mrb[0].mxu0
  %v2947 = vadd.f32 %v560, %v2946
  %v2948 = vpop.f32.mrb[0].mxu0
  %2949 = vmatprep.mubr.bf16.mxu0 0
  %2950 = vmatmul.mubr.bf16.gmra.mrb[0].mxu0 %v1963
  %v2951 = vpop.f32.mrb[0].mxu0
  %v2952 = vadd.f32 %v560, %v2951
  %v2953 = vpop.f32.mrb[0].mxu0
  %v2954 = vpop.f32.mrb[0].mxu0
  %v2955 = vadd.f32 %v560, %v2954
  %v2956 = vpop.f32.mrb[0].mxu0
  %2957 = vmatprep.mubr.bf16.mxu0 0
  %2958 = vmatmul.mubr.bf16.gmra.mrb[0].mxu0 %v1966
  %v2959 = vpop.f32.mrb[0].mxu0
  %v2960 = vadd.f32 %v560, %v2959
  %v2961 = vpop.f32.mrb[0].mxu0
  %v2962 = vpop.f32.mrb[0].mxu0
  %v2963 = vadd.f32 %v560, %v2962
  %v2964 = vpop.f32.mrb[0].mxu0
  %2965 = vmatprep.mubr.bf16.mxu0 0
  %2966 = vmatmul.mubr.bf16.gmra.mrb[0].mxu0 %v1969
  %v2967 = vpop.f32.mrb[0].mxu0
  %v2968 = vadd.f32 %v560, %v2967
  %v2969 = vpop.f32.mrb[0].mxu0
  %v2970 = vpop.f32.mrb[0].mxu0
  %v2971 = vadd.f32 %v560, %v2970
  %v2972 = vpop.f32.mrb[0].mxu0
  %2973 = vmatprep.mubr.bf16.mxu0 0
  %2974 = vmatmul.mubr.bf16.gmra.mrb[0].mxu0 %v1972
  %v2975 = vpop.f32.mrb[0].mxu0
  %v2976 = vadd.f32 %v560, %v2975
  %v2977 = vpop.f32.mrb[0].mxu0
  %v2978 = vpop.f32.mrb[0].mxu0
  %v2979 = vadd.f32 %v560, %v2978
  %v2980 = vpop.f32.mrb[0].mxu0
  %2981 = vmatprep.mubr.bf16.mxu0 0
  %2982 = vmatmul.mubr.bf16.gmra.mrb[0].mxu0 %v1975
  %v2983 = vpop.f32.mrb[0].mxu0
  %v2984 = vadd.f32 %v560, %v2983
  %v2985 = vpop.f32.mrb[0].mxu0
  %v2986 = vpop.f32.mrb[0].mxu0
  %v2987 = vadd.f32 %v560, %v2986
  %v2988 = vpop.f32.mrb[0].mxu0
  %2989 = vmatprep.mubr.bf16.mxu0 0
  %2990 = vmatmul.mubr.bf16.gmra.mrb[0].mxu0 %v1978
  %v2991 = vpop.f32.mrb[0].mxu0
  %v2992 = vadd.f32 %v560, %v2991
  %v2993 = vpop.f32.mrb[0].mxu0
  %v2994 = vpop.f32.mrb[0].mxu0
  %v2995 = vadd.f32 %v560, %v2994
  %v2996 = vpop.f32.mrb[0].mxu0
  %2997 = vmatprep.mubr.bf16.mxu0 0
  %2998 = vmatmul.mubr.bf16.gmra.mrb[0].mxu0 %v1981
  %v2999 = vpop.f32.mrb[0].mxu0
  %v3000 = vadd.f32 %v560, %v2999
  %v3001 = vpop.f32.mrb[0].mxu0
  %v3002 = vpop.f32.mrb[0].mxu0
  %v3003 = vadd.f32 %v560, %v3002
  %v3004 = vpop.f32.mrb[0].mxu0
  %3005 = vmatprep.mubr.bf16.mxu0 0
  %3006 = vmatmul.mubr.bf16.gmra.mrb[0].mxu0 %v1984
  %v3007 = vpop.f32.mrb[0].mxu0
  %v3008 = vadd.f32 %v560, %v3007
  %v3009 = vpop.f32.mrb[0].mxu0
  %v3010 = vpop.f32.mrb[0].mxu0
  %v3011 = vadd.f32 %v560, %v3010
  %v3012 = vpop.f32.mrb[0].mxu0
  %3013 = vmatprep.mubr.bf16.mxu0 0
  %3014 = vmatmul.mubr.bf16.gmra.mrb[0].mxu0 %v1987
  %v3015 = vpop.f32.mrb[0].mxu0
  %v3016 = vadd.f32 %v560, %v3015
  %v3017 = vpop.f32.mrb[0].mxu0
  %v3018 = vpop.f32.mrb[0].mxu0
  %v3019 = vadd.f32 %v560, %v3018
  %v3020 = vpop.f32.mrb[0].mxu0
  %3021 = vmatprep.mubr.bf16.mxu0 0
  %3022 = vmatmul.mubr.bf16.gmra.mrb[0].mxu0 %v1990
  %v3023 = vpop.f32.mrb[0].mxu0
  %v3024 = vadd.f32 %v560, %v3023
  %v3025 = vpop.f32.mrb[0].mxu0
  %v3026 = vpop.f32.mrb[0].mxu0
  %v3027 = vadd.f32 %v560, %v3026
  %v3028 = vpop.f32.mrb[0].mxu0
  %3029 = vmatprep.mubr.bf16.mxu0 0
  %3030 = vmatmul.mubr.bf16.gmra.mrb[0].mxu0 %v1993
  %v3031 = vpop.f32.mrb[0].mxu0
  %v3032 = vadd.f32 %v560, %v3031
  %v3033 = vpop.f32.mrb[0].mxu0
  %v3034 = vpop.f32.mrb[0].mxu0
  %v3035 = vadd.f32 %v560, %v3034
  %v3036 = vpop.f32.mrb[0].mxu0
  %3037 = vmatprep.mubr.bf16.mxu0 0
  %3038 = vmatmul.mubr.bf16.gmra.mrb[0].mxu0 %v1996
  %v3039 = vpop.f32.mrb[0].mxu0
  %v3040 = vadd.f32 %v560, %v3039
  %v3041 = vpop.f32.mrb[0].mxu0
  %v3042 = vpop.f32.mrb[0].mxu0
  %v3043 = vadd.f32 %v560, %v3042
  %v3044 = vpop.f32.mrb[0].mxu0
  %3045 = vmatprep.mubr.bf16.mxu0 0
  %3046 = vmatmul.mubr.bf16.gmra.mrb[0].mxu0 %v1999
  %v3047 = vpop.f32.mrb[0].mxu0
  %v3048 = vadd.f32 %v560, %v3047
  %v3049 = vpop.f32.mrb[0].mxu0
  %v3050 = vpop.f32.mrb[0].mxu0
  %v3051 = vadd.f32 %v560, %v3050
  %v3052 = vpop.f32.mrb[0].mxu0
  %3053 = vmatprep.mubr.bf16.mxu0 0
  %3054 = vmatmul.mubr.bf16.gmra.mrb[0].mxu0 %v2002
  %v3055 = vpop.f32.mrb[0].mxu0
  %v3056 = vadd.f32 %v560, %v3055
  %v3057 = vpop.f32.mrb[0].mxu0
  %v3058 = vpop.f32.mrb[0].mxu0
  %v3059 = vadd.f32 %v560, %v3058
  %v3060 = vpop.f32.mrb[0].mxu0
  %3061 = vmatprep.mubr.bf16.mxu0 0
  %3062 = vmatmul.mubr.bf16.gmra.mrb[0].mxu0 %v2005
  %v3063 = vpop.f32.mrb[0].mxu0
  %v3064 = vadd.f32 %v560, %v3063
  %v3065 = vpop.f32.mrb[0].mxu0
  %v3066 = vpop.f32.mrb[0].mxu0
  %v3067 = vadd.f32 %v560, %v3066
  %v3068 = vpop.f32.mrb[0].mxu0
  %3069 = vmatprep.mubr.bf16.mxu0 0
  %3070 = vmatmul.mubr.bf16.gmra.mrb[0].mxu0 %v2008
  %v3071 = vpop.f32.mrb[0].mxu0
  %v3072 = vadd.f32 %v560, %v3071
  %v3073 = vpop.f32.mrb[0].mxu0
  %v3074 = vpop.f32.mrb[0].mxu0
  %v3075 = vadd.f32 %v560, %v3074
  %v3076 = vpop.f32.mrb[0].mxu0
  %3077 = vmatprep.mubr.bf16.mxu0 0
  %3078 = vmatmul.mubr.bf16.gmra.mrb[0].mxu0 %v2011
  %v3079 = vpop.f32.mrb[0].mxu0
  %v3080 = vadd.f32 %v560, %v3079
  %v3081 = vpop.f32.mrb[0].mxu0
  %v3082 = vpop.f32.mrb[0].mxu0
  %v3083 = vadd.f32 %v560, %v3082
  %v3084 = vpop.f32.mrb[0].mxu0
  %3085 = vmatprep.mubr.bf16.mxu0 0
  %3086 = vmatmul.mubr.bf16.gmra.mrb[0].mxu0 %v2014
  %v3087 = vpop.f32.mrb[0].mxu0
  %v3088 = vadd.f32 %v560, %v3087
  %v3089 = vpop.f32.mrb[0].mxu0
  %v3090 = vpop.f32.mrb[0].mxu0
  %v3091 = vadd.f32 %v560, %v3090
  %v3092 = vpop.f32.mrb[0].mxu0
  %3093 = vmatprep.mubr.bf16.mxu0 0
  %3094 = vmatmul.mubr.bf16.gmra.mrb[0].mxu0 %v2017
  %v3095 = vpop.f32.mrb[0].mxu0
  %v3096 = vadd.f32 %v560, %v3095
  %v3097 = vpop.f32.mrb[0].mxu0
  %v3098 = vpop.f32.mrb[0].mxu0
  %v3099 = vadd.f32 %v560, %v3098
  %v3100 = vpop.f32.mrb[0].mxu0
  %3101 = vmatprep.mubr.bf16.mxu0 0
  %3102 = vmatmul.mubr.bf16.gmra.mrb[0].mxu0 %v2020
  %v3103 = vpop.f32.mrb[0].mxu0
  %v3104 = vadd.f32 %v560, %v3103
  %v3105 = vpop.f32.mrb[0].mxu0
  %v3106 = vpop.f32.mrb[0].mxu0
  %v3107 = vadd.f32 %v560, %v3106
  %v3108 = vpop.f32.mrb[0].mxu0
  %3109 = vmatprep.mubr.bf16.mxu0 0
  %3110 = vmatmul.mubr.bf16.gmra.mrb[0].mxu0 %v2023
  %v3111 = vpop.f32.mrb[0].mxu0
  %v3112 = vadd.f32 %v560, %v3111
  %v3113 = vpop.f32.mrb[0].mxu0
  %v3114 = vpop.f32.mrb[0].mxu0
  %v3115 = vadd.f32 %v560, %v3114
  %v3116 = vpop.f32.mrb[0].mxu0
  %3117 = vmatprep.mubr.bf16.mxu0 0
  %3118 = vmatmul.mubr.bf16.gmra.mrb[0].mxu0 %v2026
  %v3119 = vpop.f32.mrb[0].mxu0
  %v3120 = vadd.f32 %v560, %v3119
  %v3121 = vpop.f32.mrb[0].mxu0
  %v3122 = vpop.f32.mrb[0].mxu0
  %v3123 = vadd.f32 %v560, %v3122
  %v3124 = vpop.f32.mrb[0].mxu0
  %3125 = vmatprep.mubr.bf16.mxu0 0
  %3126 = vmatmul.mubr.bf16.gmra.mrb[0].mxu0 %v2029
  %v3127 = vpop.f32.mrb[0].mxu0
  %v3128 = vadd.f32 %v560, %v3127
  %v3129 = vpop.f32.mrb[0].mxu0
  %v3130 = vpop.f32.mrb[0].mxu0
  %v3131 = vadd.f32 %v560, %v3130
  %v3132 = vpop.f32.mrb[0].mxu0
  %3133 = vmatprep.mubr.bf16.mxu0 0
  %3134 = vmatmul.mubr.bf16.gmra.mrb[0].mxu0 %v2032
  %v3135 = vpop.f32.mrb[0].mxu0
  %v3136 = vadd.f32 %v560, %v3135
  %v3137 = vpop.f32.mrb[0].mxu0
  %v3138 = vpop.f32.mrb[0].mxu0
  %v3139 = vadd.f32 %v560, %v3138
  %v3140 = vpop.f32.mrb[0].mxu0
  %3141 = vmatprep.mubr.bf16.mxu0 0
  %3142 = vmatmul.mubr.bf16.gmra.mrb[0].mxu0 %v2035
  %v3143 = vpop.f32.mrb[0].mxu0
  %v3144 = vadd.f32 %v560, %v3143
  %v3145 = vpop.f32.mrb[0].mxu0
  %v3146 = vpop.f32.mrb[0].mxu0
  %v3147 = vadd.f32 %v560, %v3146
  %v3148 = vpop.f32.mrb[0].mxu0
  %3149 = vmatprep.mubr.bf16.mxu0 0
  %3150 = vmatmul.mubr.bf16.gmra.mrb[0].mxu0 %v2038
  %v3151 = vpop.f32.mrb[0].mxu0
  %v3152 = vadd.f32 %v560, %v3151
  %v3153 = vpop.f32.mrb[0].mxu0
  %v3154 = vpop.f32.mrb[0].mxu0
  %v3155 = vadd.f32 %v560, %v3154
  %v3156 = vpop.f32.mrb[0].mxu0
  %3157 = vmatprep.mubr.bf16.mxu0 0
  %3158 = vmatmul.mubr.bf16.gmra.mrb[0].mxu0 %v2041
  %v3159 = vpop.f32.mrb[0].mxu0
  %v3160 = vadd.f32 %v560, %v3159
  %v3161 = vpop.f32.mrb[0].mxu0
  %v3162 = vpop.f32.mrb[0].mxu0
  %v3163 = vadd.f32 %v560, %v3162
  %v3164 = vpop.f32.mrb[0].mxu0
  %3165 = vmatprep.mubr.bf16.mxu0 0
  %3166 = vmatmul.mubr.bf16.gmra.mrb[0].mxu0 %v2044
  %v3167 = vpop.f32.mrb[0].mxu0
  %v3168 = vadd.f32 %v560, %v3167
  %v3169 = vpop.f32.mrb[0].mxu0
  %v3170 = vpop.f32.mrb[0].mxu0
  %v3171 = vadd.f32 %v560, %v3170
  %v3172 = vpop.f32.mrb[0].mxu0
  %3173 = vmatprep.mubr.bf16.mxu0 0
  %3174 = vmatmul.mubr.bf16.gmra.mrb[0].mxu0 %v2047
  %v3175 = vpop.f32.mrb[0].mxu0
  %v3176 = vadd.f32 %v560, %v3175
  %v3177 = vpop.f32.mrb[0].mxu0
  %v3178 = vpop.f32.mrb[0].mxu0
  %v3179 = vadd.f32 %v560, %v3178
  %v3180 = vpop.f32.mrb[0].mxu0
  %3181 = vmatprep.mubr.bf16.mxu0 0
  %3182 = vmatmul.mubr.bf16.gmra.mrb[0].mxu0 %v2050
  %v3183 = vpop.f32.mrb[0].mxu0
  %v3184 = vadd.f32 %v560, %v3183
  %v3185 = vpop.f32.mrb[0].mxu0
  %v3186 = vpop.f32.mrb[0].mxu0
  %v3187 = vadd.f32 %v560, %v3186
  %v3188 = vpop.f32.mrb[0].mxu0
  %3189 = vmatprep.mubr.bf16.mxu0 0
  %3190 = vmatmul.mubr.bf16.gmra.mrb[0].mxu0 %v2053
  %v3191 = vpop.f32.mrb[0].mxu0
  %v3192 = vadd.f32 %v560, %v3191
  %v3193 = vpop.f32.mrb[0].mxu0
  %v3194 = vpop.f32.mrb[0].mxu0
  %v3195 = vadd.f32 %v560, %v3194
  %v3196 = vpop.f32.mrb[0].mxu0
  %3197 = vmatprep.mubr.bf16.mxu0 0
  %3198 = vmatmul.mubr.bf16.gmra.mrb[0].mxu0 %v2056
  %v3199 = vpop.f32.mrb[0].mxu0
  %v3200 = vadd.f32 %v560, %v3199
  %v3201 = vpop.f32.mrb[0].mxu0
  %v3202 = vpop.f32.mrb[0].mxu0
  %v3203 = vadd.f32 %v560, %v3202
  %v3204 = vpop.f32.mrb[0].mxu0
  %3205 = vmatprep.mubr.bf16.mxu0 0
  %3206 = vmatmul.mubr.bf16.gmra.mrb[0].mxu0 %v2059
  %v3207 = vpop.f32.mrb[0].mxu0
  %v3208 = vadd.f32 %v560, %v3207
  %v3209 = vpop.f32.mrb[0].mxu0
  %v3210 = vpop.f32.mrb[0].mxu0
  %v3211 = vadd.f32 %v560, %v3210
  %v3212 = vpop.f32.mrb[0].mxu0
  %3213 = vmatprep.mubr.bf16.mxu0 0
  %3214 = vmatmul.mubr.bf16.gmra.mrb[0].mxu0 %v2062
  %v3215 = vpop.f32.mrb[0].mxu0
  %v3216 = vadd.f32 %v560, %v3215
  %v3217 = vpop.f32.mrb[0].mxu0
  %v3218 = vpop.f32.mrb[0].mxu0
  %v3219 = vadd.f32 %v560, %v3218
  %v3220 = vpop.f32.mrb[0].mxu0
  %3221 = vmatprep.mubr.bf16.mxu0 0
  %3222 = vmatmul.mubr.bf16.gmra.mrb[0].mxu0 %v2065
  %v3223 = vpop.f32.mrb[0].mxu0
  %v3224 = vadd.f32 %v560, %v3223
  %v3225 = vpop.f32.mrb[0].mxu0
  %v3226 = vpop.f32.mrb[0].mxu0
  %v3227 = vadd.f32 %v560, %v3226
  %v3228 = vpop.f32.mrb[0].mxu0
  %3229 = vmatprep.mubr.bf16.mxu0 0
  %3230 = vmatmul.mubr.bf16.gmra.mrb[0].mxu0 %v2068
  %v3231 = vpop.f32.mrb[0].mxu0
  %v3232 = vadd.f32 %v560, %v3231
  %v3233 = vpop.f32.mrb[0].mxu0
  %v3234 = vpop.f32.mrb[0].mxu0
  %v3235 = vadd.f32 %v560, %v3234
  %v3236 = vpop.f32.mrb[0].mxu0
  %3237 = vmatprep.mubr.bf16.mxu0 0
  %3238 = vmatmul.mubr.bf16.gmra.mrb[0].mxu0 %v2071
  %v3239 = vpop.f32.mrb[0].mxu0
  %v3240 = vadd.f32 %v560, %v3239
  %v3241 = vpop.f32.mrb[0].mxu0
  %v3242 = vpop.f32.mrb[0].mxu0
  %v3243 = vadd.f32 %v560, %v3242
  %v3244 = vpop.f32.mrb[0].mxu0
  %3245 = vmatprep.mubr.bf16.mxu0 0
  %3246 = vmatmul.mubr.bf16.gmra.mrb[0].mxu0 %v2074
  %v3247 = vpop.f32.mrb[0].mxu0
  %v3248 = vadd.f32 %v560, %v3247
  %v3249 = vpop.f32.mrb[0].mxu0
  %v3250 = vpop.f32.mrb[0].mxu0
  %v3251 = vadd.f32 %v560, %v3250
  %v3252 = vpop.f32.mrb[0].mxu0
  %3253 = vmatprep.mubr.bf16.mxu0 0
  %3254 = vmatmul.mubr.bf16.gmra.mrb[0].mxu0 %v2077
  %v3255 = vpop.f32.mrb[0].mxu0
  %v3256 = vadd.f32 %v560, %v3255
  %v3257 = vpop.f32.mrb[0].mxu0
  %v3258 = vpop.f32.mrb[0].mxu0
  %v3259 = vadd.f32 %v560, %v3258
  %v3260 = vpop.f32.mrb[0].mxu0
  %3261 = vmatprep.mubr.bf16.mxu0 0
  %3262 = vmatmul.mubr.bf16.gmra.mrb[0].mxu0 %v2080
  %v3263 = vpop.f32.mrb[0].mxu0
  %v3264 = vadd.f32 %v560, %v3263
  %v3265 = vpop.f32.mrb[0].mxu0
  %v3266 = vpop.f32.mrb[0].mxu0
  %v3267 = vadd.f32 %v560, %v3266
  %v3268 = vpop.f32.mrb[0].mxu0
  %3269 = vmatprep.mubr.bf16.mxu0 0
  %3270 = vmatmul.mubr.bf16.gmra.mrb[0].mxu0 %v2083
  %v3271 = vpop.f32.mrb[0].mxu0
  %v3272 = vadd.f32 %v560, %v3271
  %v3273 = vpop.f32.mrb[0].mxu0
  %v3274 = vpop.f32.mrb[0].mxu0
  %v3275 = vadd.f32 %v560, %v3274
  %v3276 = vpop.f32.mrb[0].mxu0
  %3277 = vmatprep.mubr.bf16.mxu0 0
  %3278 = vmatmul.mubr.bf16.gmra.mrb[0].mxu0 %v2086
  %v3279 = vpop.f32.mrb[0].mxu0
  %v3280 = vadd.f32 %v560, %v3279
  %v3281 = vpop.f32.mrb[0].mxu0
  %v3282 = vpop.f32.mrb[0].mxu0
  %v3283 = vadd.f32 %v560, %v3282
  %v3284 = vpop.f32.mrb[0].mxu0
  %3285 = vmatprep.mubr.bf16.mxu0 0
  %3286 = vmatmul.mubr.bf16.gmra.mrb[0].mxu0 %v2089
  %v3287 = vpop.f32.mrb[0].mxu0
  %v3288 = vadd.f32 %v560, %v3287
  %v3289 = vpop.f32.mrb[0].mxu0
  %v3290 = vpop.f32.mrb[0].mxu0
  %v3291 = vadd.f32 %v560, %v3290
  %v3292 = vpop.f32.mrb[0].mxu0
  %3293 = vmatprep.mubr.bf16.mxu0 0
  %3294 = vmatmul.mubr.bf16.gmra.mrb[0].mxu0 %v2092
  %v3295 = vpop.f32.mrb[0].mxu0
  %v3296 = vadd.f32 %v560, %v3295
  %v3297 = vpop.f32.mrb[0].mxu0
  %v3298 = vpop.f32.mrb[0].mxu0
  %v3299 = vadd.f32 %v560, %v3298
  %v3300 = vpop.f32.mrb[0].mxu0
  %3301 = vmatprep.mubr.bf16.mxu0 0
  %3302 = vmatmul.mubr.bf16.gmra.mrb[0].mxu0 %v2095
  %v3303 = vpop.f32.mrb[0].mxu0
  %v3304 = vadd.f32 %v560, %v3303
  %v3305 = vpop.f32.mrb[0].mxu0
  %v3306 = vpop.f32.mrb[0].mxu0
  %v3307 = vadd.f32 %v560, %v3306
  %v3308 = vpop.f32.mrb[0].mxu0
  %3309 = vmatprep.mubr.bf16.mxu0 0
  %3310 = vmatmul.mubr.bf16.gmra.mrb[0].mxu0 %v2098
  %v3311 = vpop.f32.mrb[0].mxu0
  %v3312 = vadd.f32 %v560, %v3311
  %v3313 = vpop.f32.mrb[0].mxu0
  %v3314 = vpop.f32.mrb[0].mxu0
  %v3315 = vadd.f32 %v560, %v3314
  %v3316 = vpop.f32.mrb[0].mxu0
  %3317 = vmatprep.mubr.bf16.mxu0 0
  %3318 = vmatmul.mubr.bf16.gmra.mrb[0].mxu0 %v2101
  %v3319 = vpop.f32.mrb[0].mxu0
  %v3320 = vadd.f32 %v560, %v3319
  %v3321 = vpop.f32.mrb[0].mxu0
  %v3322 = vpop.f32.mrb[0].mxu0
  %v3323 = vadd.f32 %v560, %v3322
  %v3324 = vpop.f32.mrb[0].mxu0
  %3325 = vmatprep.mubr.bf16.mxu0 0
  %3326 = vmatmul.mubr.bf16.gmra.mrb[0].mxu0 %v2104
  %v3327 = vpop.f32.mrb[0].mxu0
  %v3328 = vadd.f32 %v560, %v3327
  %v3329 = vpop.f32.mrb[0].mxu0
  %v3330 = vpop.f32.mrb[0].mxu0
  %v3331 = vadd.f32 %v560, %v3330
  %v3332 = vpop.f32.mrb[0].mxu0
  %3333 = vmatprep.mubr.bf16.mxu0 0
  %3334 = vmatmul.mubr.bf16.gmra.mrb[0].mxu0 %v2107
  %v3335 = vpop.f32.mrb[0].mxu0
  %v3336 = vadd.f32 %v560, %v3335
  %v3337 = vpop.f32.mrb[0].mxu0
  %v3338 = vpop.f32.mrb[0].mxu0
  %v3339 = vadd.f32 %v560, %v3338
  %v3340 = vpop.f32.mrb[0].mxu0
  %3341 = vmatprep.mubr.bf16.mxu0 0
  %3342 = vmatmul.mubr.bf16.gmra.mrb[0].mxu0 %v2110
  %v3343 = vpop.f32.mrb[0].mxu0
  %v3344 = vadd.f32 %v560, %v3343
  %v3345 = vpop.f32.mrb[0].mxu0
  %v3346 = vpop.f32.mrb[0].mxu0
  %v3347 = vadd.f32 %v560, %v3346
  %v3348 = vpop.f32.mrb[0].mxu0
  %3349 = vmatprep.mubr.bf16.mxu0 0
  %3350 = vmatmul.mubr.bf16.gmra.mrb[0].mxu0 %v2113
  %v3351 = vpop.f32.mrb[0].mxu0
  %v3352 = vadd.f32 %v560, %v3351
  %v3353 = vpop.f32.mrb[0].mxu0
  %v3354 = vpop.f32.mrb[0].mxu0
  %v3355 = vadd.f32 %v560, %v3354
  %v3356 = vpop.f32.mrb[0].mxu0
  %3357 = vmatprep.mubr.bf16.mxu0 0
  %3358 = vmatmul.mubr.bf16.gmra.mrb[0].mxu0 %v2116
  %v3359 = vpop.f32.mrb[0].mxu0
  %v3360 = vadd.f32 %v560, %v3359
  %v3361 = vpop.f32.mrb[0].mxu0
  %v3362 = vpop.f32.mrb[0].mxu0
  %v3363 = vadd.f32 %v560, %v3362
  %v3364 = vpop.f32.mrb[0].mxu0
  %3365 = vmatprep.mubr.bf16.mxu0 0
  %3366 = vmatmul.mubr.bf16.gmra.mrb[0].mxu0 %v2119
  %v3367 = vpop.f32.mrb[0].mxu0
  %v3368 = vadd.f32 %v560, %v3367
  %v3369 = vpop.f32.mrb[0].mxu0
  %v3370 = vpop.f32.mrb[0].mxu0
  %v3371 = vadd.f32 %v560, %v3370
  %v3372 = vpop.f32.mrb[0].mxu0
  %3373 = vmatprep.mubr.bf16.mxu0 0
  %3374 = vmatmul.mubr.bf16.gmra.mrb[0].mxu0 %v2122
  %v3375 = vpop.f32.mrb[0].mxu0
  %v3376 = vadd.f32 %v560, %v3375
  %v3377 = vpop.f32.mrb[0].mxu0
  %v3378 = vpop.f32.mrb[0].mxu0
  %v3379 = vadd.f32 %v560, %v3378
  %v3380 = vpop.f32.mrb[0].mxu0
  %3381 = vmatprep.mubr.bf16.mxu0 0
  %3382 = vmatmul.mubr.bf16.gmra.mrb[0].mxu0 %v2125
  %v3383 = vpop.f32.mrb[0].mxu0
  %v3384 = vadd.f32 %v560, %v3383
  %v3385 = vpop.f32.mrb[0].mxu0
  %v3386 = vpop.f32.mrb[0].mxu0
  %v3387 = vadd.f32 %v560, %v3386
  %v3388 = vpop.f32.mrb[0].mxu0
  %3389 = vmatprep.mubr.bf16.mxu0 0
  %3390 = vmatmul.mubr.bf16.gmra.mrb[0].mxu0 %v2128
  %v3391 = vpop.f32.mrb[0].mxu0
  %v3392 = vadd.f32 %v560, %v3391
  %v3393 = vpop.f32.mrb[0].mxu0
  %v3394 = vpop.f32.mrb[0].mxu0
  %v3395 = vadd.f32 %v560, %v3394
  %v3396 = vpop.f32.mrb[0].mxu0
  %3397 = vmatprep.mubr.bf16.mxu0 0
  %3398 = vmatmul.mubr.bf16.gmra.mrb[0].mxu0 %v2131
  %v3399 = vpop.f32.mrb[0].mxu0
  %v3400 = vadd.f32 %v560, %v3399
  %v3401 = vpop.f32.mrb[0].mxu0
  %v3402 = vpop.f32.mrb[0].mxu0
  %v3403 = vadd.f32 %v560, %v3402
  %v3404 = vpop.f32.mrb[0].mxu0
  %3405 = vmatprep.mubr.bf16.mxu0 0
  %3406 = vmatmul.mubr.bf16.gmra.mrb[0].mxu0 %v2134
  %v3407 = vpop.f32.mrb[0].mxu0
  %v3408 = vadd.f32 %v560, %v3407
  %v3409 = vpop.f32.mrb[0].mxu0
  %v3410 = vpop.f32.mrb[0].mxu0
  %v3411 = vadd.f32 %v560, %v3410
  %v3412 = vpop.f32.mrb[0].mxu0
  %3413 = vmatprep.mubr.bf16.mxu0 0
  %3414 = vmatmul.mubr.bf16.gmra.mrb[0].mxu0 %v2137
  %v3415 = vpop.f32.mrb[0].mxu0
  %v3416 = vadd.f32 %v560, %v3415
  %v3417 = vpop.f32.mrb[0].mxu0
  %v3418 = vpop.f32.mrb[0].mxu0
  %v3419 = vadd.f32 %v560, %v3418
  %v3420 = vpop.f32.mrb[0].mxu0
  %3421 = vmatprep.mubr.bf16.mxu0 0
  %3422 = vmatmul.mubr.bf16.gmra.mrb[0].mxu0 %v2140
  %v3423 = vpop.f32.mrb[0].mxu0
  %v3424 = vadd.f32 %v560, %v3423
  %v3425 = vpop.f32.mrb[0].mxu0
  %v3426 = vpop.f32.mrb[0].mxu0
  %v3427 = vadd.f32 %v560, %v3426
  %v3428 = vpop.f32.mrb[0].mxu0
  %3429 = vmatprep.mubr.bf16.mxu0 0
  %3430 = vmatmul.mubr.bf16.gmra.mrb[0].mxu0 %v2143
  %v3431 = vpop.f32.mrb[0].mxu0
  %v3432 = vadd.f32 %v560, %v3431
  %v3433 = vpop.f32.mrb[0].mxu0
  %v3434 = vpop.f32.mrb[0].mxu0
  %v3435 = vadd.f32 %v560, %v3434
  %v3436 = vpop.f32.mrb[0].mxu0
  %3437 = vmatprep.mubr.bf16.mxu0 0
  %3438 = vmatmul.mubr.bf16.gmra.mrb[0].mxu0 %v2146
  %v3439 = vpop.f32.mrb[0].mxu0
  %v3440 = vadd.f32 %v560, %v3439
  %v3441 = vpop.f32.mrb[0].mxu0
  %v3442 = vpop.f32.mrb[0].mxu0
  %v3443 = vadd.f32 %v560, %v3442
  %v3444 = vpop.f32.mrb[0].mxu0
  %3445 = vmatprep.mubr.bf16.mxu0 0
  %3446 = vmatmul.mubr.bf16.gmra.mrb[0].mxu0 %v2149
  %v3447 = vpop.f32.mrb[0].mxu0
  %v3448 = vadd.f32 %v560, %v3447
  %v3449 = vpop.f32.mrb[0].mxu0
  %v3450 = vpop.f32.mrb[0].mxu0
  %v3451 = vadd.f32 %v560, %v3450
  %v3452 = vpop.f32.mrb[0].mxu0
  %3453 = vmatprep.mubr.bf16.mxu0 0
  %3454 = vmatmul.mubr.bf16.gmra.mrb[0].mxu0 %v2152
  %v3455 = vpop.f32.mrb[0].mxu0
  %v3456 = vadd.f32 %v560, %v3455
  %v3457 = vpop.f32.mrb[0].mxu0
  %v3458 = vpop.f32.mrb[0].mxu0
  %v3459 = vadd.f32 %v560, %v3458
  %v3460 = vpop.f32.mrb[0].mxu0
  %3461 = vmatprep.mubr.bf16.mxu0 0
  %3462 = vmatmul.mubr.bf16.gmra.mrb[0].mxu0 %v2155
  %v3463 = vpop.f32.mrb[0].mxu0
  %v3464 = vadd.f32 %v560, %v3463
  %v3465 = vpop.f32.mrb[0].mxu0
  %v3466 = vpop.f32.mrb[0].mxu0
  %v3467 = vadd.f32 %v560, %v3466
  %v3468 = vpop.f32.mrb[0].mxu0
  %3469 = vmatprep.mubr.bf16.mxu0 0
  %3470 = vmatmul.mubr.bf16.gmra.mrb[0].mxu0 %v2158
  %v3471 = vpop.f32.mrb[0].mxu0
  %v3472 = vadd.f32 %v560, %v3471
  %v3473 = vpop.f32.mrb[0].mxu0
  %v3474 = vpop.f32.mrb[0].mxu0
  %v3475 = vadd.f32 %v560, %v3474
  %v3476 = vpop.f32.mrb[0].mxu0
  %3477 = vmatprep.mubr.bf16.mxu0 0
  %3478 = vmatmul.mubr.bf16.gmra.mrb[0].mxu0 %v2161
  %v3479 = vpop.f32.mrb[0].mxu0
  %v3480 = vadd.f32 %v560, %v3479
  %v3481 = vpop.f32.mrb[0].mxu0
  %v3482 = vpop.f32.mrb[0].mxu0
  %v3483 = vadd.f32 %v560, %v3482
  %v3484 = vpop.f32.mrb[0].mxu0
  %3485 = vmatprep.mubr.bf16.mxu0 0
  %3486 = vmatmul.mubr.bf16.gmra.mrb[0].mxu0 %v2164
  %v3487 = vpop.f32.mrb[0].mxu0
  %v3488 = vadd.f32 %v560, %v3487
  %v3489 = vpop.f32.mrb[0].mxu0
  %v3490 = vpop.f32.mrb[0].mxu0
  %v3491 = vadd.f32 %v560, %v3490
  %v3492 = vpop.f32.mrb[0].mxu0
  %3493 = vmatprep.mubr.bf16.mxu0 0
  %3494 = vmatmul.mubr.bf16.gmra.mrb[0].mxu0 %v2167
  %v3495 = vpop.f32.mrb[0].mxu0
  %v3496 = vadd.f32 %v560, %v3495
  %v3497 = vpop.f32.mrb[0].mxu0
  %v3498 = vpop.f32.mrb[0].mxu0
  %v3499 = vadd.f32 %v560, %v3498
  %v3500 = vpop.f32.mrb[0].mxu0
  %3501 = vmatprep.mubr.bf16.mxu0 0
  %3502 = vmatmul.mubr.bf16.gmra.mrb[0].mxu0 %v2170
  %v3503 = vpop.f32.mrb[0].mxu0
  %v3504 = vadd.f32 %v560, %v3503
  %v3505 = vpop.f32.mrb[0].mxu0
  %v3506 = vpop.f32.mrb[0].mxu0
  %v3507 = vadd.f32 %v560, %v3506
  %v3508 = vpop.f32.mrb[0].mxu0
  %3509 = vmatprep.mubr.bf16.mxu0 0
  %3510 = vmatmul.mubr.bf16.gmra.mrb[0].mxu0 %v2173
  %v3511 = vpop.f32.mrb[0].mxu0
  %v3512 = vadd.f32 %v560, %v3511
  %v3513 = vpop.f32.mrb[0].mxu0
  %v3514 = vpop.f32.mrb[0].mxu0
  %v3515 = vadd.f32 %v560, %v3514
  %v3516 = vpop.f32.mrb[0].mxu0
  %3517 = vmatprep.mubr.bf16.mxu0 0
  %3518 = vmatmul.mubr.bf16.gmra.mrb[0].mxu0 %v2176
  %v3519 = vpop.f32.mrb[0].mxu0
  %v3520 = vadd.f32 %v560, %v3519
  %v3521 = vpop.f32.mrb[0].mxu0
  %v3522 = vpop.f32.mrb[0].mxu0
  %v3523 = vadd.f32 %v560, %v3522
  %v3524 = vpop.f32.mrb[0].mxu0
  %3525 = vmatprep.mubr.bf16.mxu0 0
  %3526 = vmatmul.mubr.bf16.gmra.mrb[0].mxu0 %v2179
  %v3527 = vpop.f32.mrb[0].mxu0
  %v3528 = vadd.f32 %v560, %v3527
  %v3529 = vpop.f32.mrb[0].mxu0
  %v3530 = vpop.f32.mrb[0].mxu0
  %v3531 = vadd.f32 %v560, %v3530
  %v3532 = vpop.f32.mrb[0].mxu0
  %3533 = vmatprep.mubr.bf16.mxu0 0
  %3534 = vmatmul.mubr.bf16.gmra.mrb[0].mxu0 %v2182
  %v3535 = vpop.f32.mrb[0].mxu0
  %v3536 = vadd.f32 %v560, %v3535
  %v3537 = vpop.f32.mrb[0].mxu0
  %v3538 = vpop.f32.mrb[0].mxu0
  %v3539 = vadd.f32 %v560, %v3538
  %v3540 = vpop.f32.mrb[0].mxu0
  %3541 = vmatprep.mubr.bf16.mxu0 0
  %3542 = vmatmul.mubr.bf16.gmra.mrb[0].mxu0 %v2185
  %v3543 = vpop.f32.mrb[0].mxu0
  %v3544 = vadd.f32 %v560, %v3543
  %v3545 = vpop.f32.mrb[0].mxu0
  %v3546 = vpop.f32.mrb[0].mxu0
  %v3547 = vadd.f32 %v560, %v3546
  %v3548 = vpop.f32.mrb[0].mxu0
  %3549 = vmatprep.mubr.bf16.mxu0 0
  %3550 = vmatmul.mubr.bf16.gmra.mrb[0].mxu0 %v2188
  %v3551 = vpop.f32.mrb[0].mxu0
  %v3552 = vadd.f32 %v560, %v3551
  %v3553 = vpop.f32.mrb[0].mxu0
  %v3554 = vpop.f32.mrb[0].mxu0
  %v3555 = vadd.f32 %v560, %v3554
  %v3556 = vpop.f32.mrb[0].mxu0
  %3557 = vmatprep.mubr.bf16.mxu0 0
  %3558 = vmatmul.mubr.bf16.gmra.mrb[0].mxu0 %v2191
  %v3559 = vpop.f32.mrb[0].mxu0
  %v3560 = vadd.f32 %v560, %v3559
  %v3561 = vpop.f32.mrb[0].mxu0
  %v3562 = vpop.f32.mrb[0].mxu0
  %v3563 = vadd.f32 %v560, %v3562
  %v3564 = vpop.f32.mrb[0].mxu0
  %3565 = vmatprep.mubr.bf16.mxu0 0
  %3566 = vmatmul.mubr.bf16.gmra.mrb[0].mxu0 %v2194
  %v3567 = vpop.f32.mrb[0].mxu0
  %v3568 = vadd.f32 %v560, %v3567
  %v3569 = vpop.f32.mrb[0].mxu0
  %v3570 = vpop.f32.mrb[0].mxu0
  %v3571 = vadd.f32 %v560, %v3570
  %v3572 = vpop.f32.mrb[0].mxu0
  %3573 = vmatprep.mubr.bf16.mxu0 0
  %3574 = vmatmul.mubr.bf16.gmra.mrb[0].mxu0 %v2197
  %v3575 = vpop.f32.mrb[0].mxu0
  %v3576 = vadd.f32 %v560, %v3575
  %v3577 = vpop.f32.mrb[0].mxu0
  %v3578 = vpop.f32.mrb[0].mxu0
  %v3579 = vadd.f32 %v560, %v3578
  %v3580 = vpop.f32.mrb[0].mxu0
  %3581 = vmatprep.mubr.bf16.mxu0 0
  %3582 = vmatmul.mubr.bf16.gmra.mrb[0].mxu0 %v2200
  %v3583 = vpop.f32.mrb[0].mxu0
  %v3584 = vadd.f32 %v560, %v3583
  %v3585 = vpop.f32.mrb[0].mxu0
  %v3586 = vpop.f32.mrb[0].mxu0
  %v3587 = vadd.f32 %v560, %v3586
  %v3588 = vpop.f32.mrb[0].mxu0
  %3589 = vmatprep.mubr.bf16.mxu0 0
  %3590 = vmatmul.mubr.bf16.gmra.mrb[0].mxu0 %v2203
  %v3591 = vpop.f32.mrb[0].mxu0
  %v3592 = vadd.f32 %v560, %v3591
  %v3593 = vpop.f32.mrb[0].mxu0
  %v3594 = vpop.f32.mrb[0].mxu0
  %v3595 = vadd.f32 %v560, %v3594
  %v3596 = vpop.f32.mrb[0].mxu0
  %3597 = vmatprep.mubr.bf16.mxu0 0
  %3598 = vmatmul.mubr.bf16.gmra.mrb[0].mxu0 %v2206
  %v3599 = vpop.f32.mrb[0].mxu0
  %v3600 = vadd.f32 %v560, %v3599
  %v3601 = vpop.f32.mrb[0].mxu0
  %v3602 = vpop.f32.mrb[0].mxu0
  %v3603 = vadd.f32 %v560, %v3602
  %v3604 = vpop.f32.mrb[0].mxu0
  %3605 = vmatprep.mubr.bf16.mxu0 0
  %3606 = vmatmul.mubr.bf16.gmra.mrb[0].mxu0 %v2209
  %v3607 = vpop.f32.mrb[0].mxu0
  %v3608 = vadd.f32 %v560, %v3607
  %v3609 = vpop.f32.mrb[0].mxu0
  %v3610 = vpop.f32.mrb[0].mxu0
  %v3611 = vadd.f32 %v560, %v3610
  %v3612 = vpop.f32.mrb[0].mxu0
  %3613 = vmatprep.mubr.bf16.mxu0 0
  %3614 = vmatmul.mubr.bf16.gmra.mrb[0].mxu0 %v2212
  %v3615 = vpop.f32.mrb[0].mxu0
  %v3616 = vadd.f32 %v560, %v3615
  %v3617 = vpop.f32.mrb[0].mxu0
  %v3618 = vpop.f32.mrb[0].mxu0
  %v3619 = vadd.f32 %v560, %v3618
  %v3620 = vpop.f32.mrb[0].mxu0
  %3621 = vmatprep.mubr.bf16.mxu0 0
  %3622 = vmatmul.mubr.bf16.gmra.mrb[0].mxu0 %v2215
  %v3623 = vpop.f32.mrb[0].mxu0
  %v3624 = vadd.f32 %v560, %v3623
  %v3625 = vpop.f32.mrb[0].mxu0
  %v3626 = vpop.f32.mrb[0].mxu0
  %v3627 = vadd.f32 %v560, %v3626
  %v3628 = vpop.f32.mrb[0].mxu0
  %3629 = vmatprep.mubr.bf16.mxu0 0
  %3630 = vmatmul.mubr.bf16.gmra.mrb[0].mxu0 %v2218
  %v3631 = vpop.f32.mrb[0].mxu0
  %v3632 = vadd.f32 %v560, %v3631
  %v3633 = vpop.f32.mrb[0].mxu0
  %v3634 = vpop.f32.mrb[0].mxu0
  %v3635 = vadd.f32 %v560, %v3634
  %v3636 = vpop.f32.mrb[0].mxu0
  %3637 = vmatprep.mubr.bf16.mxu0 0
  %3638 = vmatmul.mubr.bf16.gmra.mrb[0].mxu0 %v2221
  %v3639 = vpop.f32.mrb[0].mxu0
  %v3640 = vadd.f32 %v560, %v3639
  %v3641 = vpop.f32.mrb[0].mxu0
  %v3642 = vpop.f32.mrb[0].mxu0
  %v3643 = vadd.f32 %v560, %v3642
  %v3644 = vpop.f32.mrb[0].mxu0
  %3645 = vmatprep.mubr.bf16.mxu0 0
  %3646 = vmatmul.mubr.bf16.gmra.mrb[0].mxu0 %v2224
  %v3647 = vpop.f32.mrb[0].mxu0
  %v3648 = vadd.f32 %v560, %v3647
  %v3649 = vpop.f32.mrb[0].mxu0
  %v3650 = vpop.f32.mrb[0].mxu0
  %v3651 = vadd.f32 %v560, %v3650
  %v3652 = vpop.f32.mrb[0].mxu0
  %3653 = vmatprep.mubr.bf16.mxu0 0
  %3654 = vmatmul.mubr.bf16.gmra.mrb[0].mxu0 %v2227
  %v3655 = vpop.f32.mrb[0].mxu0
  %v3656 = vadd.f32 %v560, %v3655
  %v3657 = vpop.f32.mrb[0].mxu0
  %v3658 = vpop.f32.mrb[0].mxu0
  %v3659 = vadd.f32 %v560, %v3658
  %v3660 = vpop.f32.mrb[0].mxu0
  %3661 = vmatprep.mubr.bf16.mxu0 0
  %3662 = vmatmul.mubr.bf16.gmra.mrb[0].mxu0 %v2230
  %v3663 = vpop.f32.mrb[0].mxu0
  %v3664 = vadd.f32 %v560, %v3663
  %v3665 = vpop.f32.mrb[0].mxu0
  %v3666 = vpop.f32.mrb[0].mxu0
  %v3667 = vadd.f32 %v560, %v3666
  %v3668 = vpop.f32.mrb[0].mxu0
  %3669 = vmatprep.mubr.bf16.mxu0 0
  %3670 = vmatmul.mubr.bf16.gmra.mrb[0].mxu0 %v2233
  %v3671 = vpop.f32.mrb[0].mxu0
  %v3672 = vadd.f32 %v560, %v3671
  %v3673 = vpop.f32.mrb[0].mxu0
  %v3674 = vpop.f32.mrb[0].mxu0
  %v3675 = vadd.f32 %v560, %v3674
  %v3676 = vpop.f32.mrb[0].mxu0
  %3677 = vmatprep.mubr.bf16.mxu0 0
  %3678 = vmatmul.mubr.bf16.gmra.mrb[0].mxu0 %v2236
  %v3679 = vpop.f32.mrb[0].mxu0
  %v3680 = vadd.f32 %v560, %v3679
  %v3681 = vpop.f32.mrb[0].mxu0
  %v3682 = vpop.f32.mrb[0].mxu0
  %v3683 = vadd.f32 %v560, %v3682
  %v3684 = vpop.f32.mrb[0].mxu0
  %3685 = vmatprep.mubr.bf16.mxu0 0
  %3686 = vmatmul.mubr.bf16.gmra.mrb[0].mxu0 %v2239
  %v3687 = vpop.f32.mrb[0].mxu0
  %v3688 = vadd.f32 %v560, %v3687
  %v3689 = vpop.f32.mrb[0].mxu0
  %v3690 = vpop.f32.mrb[0].mxu0
  %v3691 = vadd.f32 %v560, %v3690
  %v3692 = vpop.f32.mrb[0].mxu0
  %3693 = vmatprep.mubr.bf16.mxu0 0
  %3694 = vmatmul.mubr.bf16.gmra.mrb[0].mxu0 %v2242
  %v3695 = vpop.f32.mrb[0].mxu0
  %v3696 = vadd.f32 %v560, %v3695
  %v3697 = vpop.f32.mrb[0].mxu0
  %v3698 = vpop.f32.mrb[0].mxu0
  %v3699 = vadd.f32 %v560, %v3698
  %v3700 = vpop.f32.mrb[0].mxu0
  %3701 = vmatprep.mubr.bf16.mxu0 0
  %3702 = vmatmul.mubr.bf16.gmra.mrb[0].mxu0 %v2245
  %v3703 = vpop.f32.mrb[0].mxu0
  %v3704 = vadd.f32 %v560, %v3703
  %v3705 = vpop.f32.mrb[0].mxu0
  %v3706 = vpop.f32.mrb[0].mxu0
  %v3707 = vadd.f32 %v560, %v3706
  %v3708 = vpop.f32.mrb[0].mxu0
  %3709 = vmatprep.mubr.bf16.mxu0 0
  %3710 = vmatmul.mubr.bf16.gmra.mrb[0].mxu0 %v2248
  %v3711 = vpop.f32.mrb[0].mxu0
  %v3712 = vadd.f32 %v560, %v3711
  %v3713 = vpop.f32.mrb[0].mxu0
  %v3714 = vpop.f32.mrb[0].mxu0
  %v3715 = vadd.f32 %v560, %v3714
  %v3716 = vpop.f32.mrb[0].mxu0
  %3717 = vmatprep.mubr.bf16.mxu0 0
  %3718 = vmatmul.mubr.bf16.gmra.mrb[0].mxu0 %v2251
  %v3719 = vpop.f32.mrb[0].mxu0
  %v3720 = vadd.f32 %v560, %v3719
  %v3721 = vpop.f32.mrb[0].mxu0
  %v3722 = vpop.f32.mrb[0].mxu0
  %v3723 = vadd.f32 %v560, %v3722
  %v3724 = vpop.f32.mrb[0].mxu0
  %3725 = vmatprep.mubr.bf16.mxu0 0
  %3726 = vmatmul.mubr.bf16.gmra.mrb[0].mxu0 %v2254
  %v3727 = vpop.f32.mrb[0].mxu0
  %v3728 = vadd.f32 %v560, %v3727
  %v3729 = vpop.f32.mrb[0].mxu0
  %v3730 = vpop.f32.mrb[0].mxu0
  %v3731 = vadd.f32 %v560, %v3730
  %v3732 = vpop.f32.mrb[0].mxu0
  %3733 = vmatprep.mubr.bf16.mxu0 0
  %3734 = vmatmul.mubr.bf16.gmra.mrb[0].mxu0 %v2257
  %v3735 = vpop.f32.mrb[0].mxu0
  %v3736 = vadd.f32 %v560, %v3735
  %v3737 = vpop.f32.mrb[0].mxu0
  %v3738 = vpop.f32.mrb[0].mxu0
  %v3739 = vadd.f32 %v560, %v3738
  %v3740 = vpop.f32.mrb[0].mxu0
  %3741 = vmatprep.mubr.bf16.mxu0 0
  %3742 = vmatmul.mubr.bf16.gmra.mrb[0].mxu0 %v2260
  %v3743 = vpop.f32.mrb[0].mxu0
  %v3744 = vadd.f32 %v560, %v3743
  %v3745 = vpop.f32.mrb[0].mxu0
  %v3746 = vpop.f32.mrb[0].mxu0
  %v3747 = vadd.f32 %v560, %v3746
  %v3748 = vpop.f32.mrb[0].mxu0
  %3749 = vmatprep.mubr.bf16.mxu0 0
  %3750 = vmatmul.mubr.bf16.gmra.mrb[0].mxu0 %v2263
  %v3751 = vpop.f32.mrb[0].mxu0
  %v3752 = vadd.f32 %v560, %v3751
  %v3753 = vpop.f32.mrb[0].mxu0
  %v3754 = vpop.f32.mrb[0].mxu0
  %v3755 = vadd.f32 %v560, %v3754
  %v3756 = vpop.f32.mrb[0].mxu0
  %3757 = vmatprep.mubr.bf16.mxu0 0
  %3758 = vmatmul.mubr.bf16.gmra.mrb[0].mxu0 %v2266
  %v3759 = vpop.f32.mrb[0].mxu0
  %v3760 = vadd.f32 %v560, %v3759
  %v3761 = vpop.f32.mrb[0].mxu0
  %v3762 = vpop.f32.mrb[0].mxu0
  %v3763 = vadd.f32 %v560, %v3762
  %v3764 = vpop.f32.mrb[0].mxu0
  %3765 = vmatprep.mubr.bf16.mxu0 0
  %3766 = vmatmul.mubr.bf16.gmra.mrb[0].mxu0 %v2269
  %v3767 = vpop.f32.mrb[0].mxu0
  %v3768 = vadd.f32 %v560, %v3767
  %v3769 = vpop.f32.mrb[0].mxu0
  %v3770 = vpop.f32.mrb[0].mxu0
  %v3771 = vadd.f32 %v560, %v3770
  %v3772 = vpop.f32.mrb[0].mxu0
  %3773 = vmatprep.mubr.bf16.mxu0 0
  %3774 = vmatmul.mubr.bf16.gmra.mrb[0].mxu0 %v2272
  %v3775 = vpop.f32.mrb[0].mxu0
  %v3776 = vadd.f32 %v560, %v3775
  %v3777 = vpop.f32.mrb[0].mxu0
  %v3778 = vpop.f32.mrb[0].mxu0
  %v3779 = vadd.f32 %v560, %v3778
  %v3780 = vpop.f32.mrb[0].mxu0
  %3781 = vmatprep.mubr.bf16.mxu0 0
  %3782 = vmatmul.mubr.bf16.gmra.mrb[0].mxu0 %v2275
  %v3783 = vpop.f32.mrb[0].mxu0
  %v3784 = vadd.f32 %v560, %v3783
  %v3785 = vpop.f32.mrb[0].mxu0
  %v3786 = vpop.f32.mrb[0].mxu0
  %v3787 = vadd.f32 %v560, %v3786
  %v3788 = vpop.f32.mrb[0].mxu0
  %3789 = vmatprep.mubr.bf16.mxu0 0
  %3790 = vmatmul.mubr.bf16.gmra.mrb[0].mxu0 %v2278
  %v3791 = vpop.f32.mrb[0].mxu0
  %v3792 = vadd.f32 %v560, %v3791
  %v3793 = vpop.f32.mrb[0].mxu0
  %v3794 = vpop.f32.mrb[0].mxu0
  %v3795 = vadd.f32 %v560, %v3794
  %v3796 = vpop.f32.mrb[0].mxu0
  %3797 = vmatprep.mubr.bf16.mxu0 0
  %3798 = vmatmul.mubr.bf16.gmra.mrb[0].mxu0 %v2281
  %v3799 = vpop.f32.mrb[0].mxu0
  %v3800 = vadd.f32 %v560, %v3799
  %v3801 = vpop.f32.mrb[0].mxu0
  %v3802 = vpop.f32.mrb[0].mxu0
  %v3803 = vadd.f32 %v560, %v3802
  %v3804 = vpop.f32.mrb[0].mxu0
  %3805 = vmatprep.mubr.bf16.mxu0 0
  %3806 = vmatmul.mubr.bf16.gmra.mrb[0].mxu0 %v2284
  %v3807 = vpop.f32.mrb[0].mxu0
  %v3808 = vadd.f32 %v560, %v3807
  %v3809 = vpop.f32.mrb[0].mxu0
  %v3810 = vpop.f32.mrb[0].mxu0
  %v3811 = vadd.f32 %v560, %v3810
  %v3812 = vpop.f32.mrb[0].mxu0
  %3813 = vmatprep.mubr.bf16.mxu0 0
  %3814 = vmatmul.mubr.bf16.gmra.mrb[0].mxu0 %v2287
  %v3815 = vpop.f32.mrb[0].mxu0
  %v3816 = vadd.f32 %v560, %v3815
  %v3817 = vpop.f32.mrb[0].mxu0
  %v3818 = vpop.f32.mrb[0].mxu0
  %v3819 = vadd.f32 %v560, %v3818
  %v3820 = vpop.f32.mrb[0].mxu0
  %3821 = vmatprep.mubr.bf16.mxu0 0
  %3822 = vmatmul.mubr.bf16.gmra.mrb[0].mxu0 %v2290
  %v3823 = vpop.f32.mrb[0].mxu0
  %v3824 = vadd.f32 %v560, %v3823
  %v3825 = vpop.f32.mrb[0].mxu0
  %v3826 = vpop.f32.mrb[0].mxu0
  %v3827 = vadd.f32 %v560, %v3826
  %v3828 = vpop.f32.mrb[0].mxu0
  %3829 = vmatprep.mubr.bf16.mxu0 0
  %3830 = vmatmul.mubr.bf16.gmra.mrb[0].mxu0 %v2293
  %v3831 = vpop.f32.mrb[0].mxu0
  %v3832 = vadd.f32 %v560, %v3831
  %v3833 = vpop.f32.mrb[0].mxu0
  %v3834 = vpop.f32.mrb[0].mxu0
  %v3835 = vadd.f32 %v560, %v3834
  %v3836 = vpop.f32.mrb[0].mxu0
  %3837 = vmatprep.mubr.bf16.mxu0 0
  %3838 = vmatmul.mubr.bf16.gmra.mrb[0].mxu0 %v2296
  %v3839 = vpop.f32.mrb[0].mxu0
  %v3840 = vadd.f32 %v560, %v3839
  %v3841 = vpop.f32.mrb[0].mxu0
  %v3842 = vpop.f32.mrb[0].mxu0
  %v3843 = vadd.f32 %v560, %v3842
  %v3844 = vpop.f32.mrb[0].mxu0
  %3845 = vmatprep.mubr.bf16.mxu0 0
  %3846 = vmatmul.mubr.bf16.gmra.mrb[0].mxu0 %v2299
  %v3847 = vpop.f32.mrb[0].mxu0
  %v3848 = vadd.f32 %v560, %v3847
  %v3849 = vpop.f32.mrb[0].mxu0
  %v3850 = vpop.f32.mrb[0].mxu0
  %v3851 = vadd.f32 %v560, %v3850
  %v3852 = vpop.f32.mrb[0].mxu0
  %3853 = vmatprep.mubr.bf16.mxu0 0
  %3854 = vmatmul.mubr.bf16.gmra.mrb[0].mxu0 %v2302
  %v3855 = vpop.f32.mrb[0].mxu0
  %v3856 = vadd.f32 %v560, %v3855
  %v3857 = vpop.f32.mrb[0].mxu0
  %v3858 = vpop.f32.mrb[0].mxu0
  %v3859 = vadd.f32 %v560, %v3858
  %v3860 = vpop.f32.mrb[0].mxu0
  %3861 = vmatprep.mubr.bf16.mxu0 0
  %3862 = vmatmul.mubr.bf16.gmra.mrb[0].mxu0 %v2305
  %v3863 = vpop.f32.mrb[0].mxu0
  %v3864 = vadd.f32 %v560, %v3863
  %v3865 = vpop.f32.mrb[0].mxu0
  %v3866 = vpop.f32.mrb[0].mxu0
  %v3867 = vadd.f32 %v560, %v3866
  %v3868 = vpop.f32.mrb[0].mxu0
  %3869 = vmatprep.mubr.bf16.mxu0 0
  %3870 = vmatmul.mubr.bf16.gmra.mrb[0].mxu0 %v2308
  %v3871 = vpop.f32.mrb[0].mxu0
  %v3872 = vadd.f32 %v560, %v3871
  %v3873 = vpop.f32.mrb[0].mxu0
  %v3874 = vpop.f32.mrb[0].mxu0
  %v3875 = vadd.f32 %v560, %v3874
  %v3876 = vpop.f32.mrb[0].mxu0
  %3877 = vmatprep.mubr.bf16.mxu0 0
  %3878 = vmatmul.mubr.bf16.gmra.mrb[0].mxu0 %v2311
  %v3879 = vpop.f32.mrb[0].mxu0
  %v3880 = vadd.f32 %v560, %v3879
  %v3881 = vpop.f32.mrb[0].mxu0
  %v3882 = vpop.f32.mrb[0].mxu0
  %v3883 = vadd.f32 %v560, %v3882
  %v3884 = vpop.f32.mrb[0].mxu0
  %3885 = vmatprep.mubr.bf16.mxu0 0
  %3886 = vmatmul.mubr.bf16.gmra.mrb[0].mxu0 %v2314
  %v3887 = vpop.f32.mrb[0].mxu0
  %v3888 = vadd.f32 %v560, %v3887
  %v3889 = vpop.f32.mrb[0].mxu0
  %v3890 = vpop.f32.mrb[0].mxu0
  %v3891 = vadd.f32 %v560, %v3890
  %v3892 = vpop.f32.mrb[0].mxu0
  %3893 = vmatprep.mubr.bf16.mxu0 0
  %3894 = vmatmul.mubr.bf16.gmra.mrb[0].mxu0 %v2317
  %v3895 = vpop.f32.mrb[0].mxu0
  %v3896 = vadd.f32 %v560, %v3895
  %v3897 = vpop.f32.mrb[0].mxu0
  %v3898 = vpop.f32.mrb[0].mxu0
  %v3899 = vadd.f32 %v560, %v3898
  %v3900 = vpop.f32.mrb[0].mxu0
  %3901 = vmatprep.mubr.bf16.mxu0 0
  %3902 = vmatmul.mubr.bf16.gmra.mrb[0].mxu0 %v2320
  %v3903 = vpop.f32.mrb[0].mxu0
  %v3904 = vadd.f32 %v560, %v3903
  %v3905 = vpop.f32.mrb[0].mxu0
  %v3906 = vpop.f32.mrb[0].mxu0
  %v3907 = vadd.f32 %v560, %v3906
  %v3908 = vpop.f32.mrb[0].mxu0
  %3909 = vmatprep.mubr.bf16.mxu0 0
  %3910 = vmatmul.mubr.bf16.gmra.mrb[0].mxu0 %v2323
  %v3911 = vpop.f32.mrb[0].mxu0
  %v3912 = vadd.f32 %v560, %v3911
  %v3913 = vpop.f32.mrb[0].mxu0
  %v3914 = vpop.f32.mrb[0].mxu0
  %v3915 = vadd.f32 %v560, %v3914
  %v3916 = vpop.f32.mrb[0].mxu0
  %3917 = vmatprep.mubr.bf16.mxu0 0
  %3918 = vmatmul.mubr.bf16.gmra.mrb[0].mxu0 %v2326
  %v3919 = vpop.f32.mrb[0].mxu0
  %v3920 = vadd.f32 %v560, %v3919
  %v3921 = vpop.f32.mrb[0].mxu0
  %v3922 = vpop.f32.mrb[0].mxu0
  %v3923 = vadd.f32 %v560, %v3922
  %v3924 = vpop.f32.mrb[0].mxu0
  %3925 = vmatprep.mubr.bf16.mxu0 0
  %3926 = vmatmul.mubr.bf16.gmra.mrb[0].mxu0 %v2329
  %v3927 = vpop.f32.mrb[0].mxu0
  %v3928 = vadd.f32 %v560, %v3927
  %v3929 = vpop.f32.mrb[0].mxu0
  %v3930 = vpop.f32.mrb[0].mxu0
  %v3931 = vadd.f32 %v560, %v3930
  %v3932 = vpop.f32.mrb[0].mxu0
  %3933 = vmatprep.mubr.bf16.mxu0 0
  %3934 = vmatmul.mubr.bf16.gmra.mrb[0].mxu0 %v2332
  %v3935 = vpop.f32.mrb[0].mxu0
  %v3936 = vadd.f32 %v560, %v3935
  %v3937 = vpop.f32.mrb[0].mxu0
  %v3938 = vpop.f32.mrb[0].mxu0
  %v3939 = vadd.f32 %v560, %v3938
  %v3940 = vpop.f32.mrb[0].mxu0
  %3941 = vmatprep.mubr.bf16.mxu0 0
  %3942 = vmatmul.mubr.bf16.gmra.mrb[0].mxu0 %v2335
  %v3943 = vpop.f32.mrb[0].mxu0
  %v3944 = vadd.f32 %v560, %v3943
  %v3945 = vpop.f32.mrb[0].mxu0
  %v3946 = vpop.f32.mrb[0].mxu0
  %v3947 = vadd.f32 %v560, %v3946
  %v3948 = vpop.f32.mrb[0].mxu0
  %3949 = vmatprep.mubr.bf16.mxu0 0
  %3950 = vmatmul.mubr.bf16.gmra.mrb[0].mxu0 %v2338
  %v3951 = vpop.f32.mrb[0].mxu0
  %v3952 = vadd.f32 %v560, %v3951
  %v3953 = vpop.f32.mrb[0].mxu0
  %v3954 = vpop.f32.mrb[0].mxu0
  %v3955 = vadd.f32 %v560, %v3954
  %v3956 = vpop.f32.mrb[0].mxu0
  %3957 = vmatprep.mubr.bf16.mxu0 0
  %3958 = vmatmul.mubr.bf16.gmra.mrb[0].mxu0 %v2341
  %v3959 = vpop.f32.mrb[0].mxu0
  %v3960 = vadd.f32 %v560, %v3959
  %v3961 = vpop.f32.mrb[0].mxu0
  %v3962 = vpop.f32.mrb[0].mxu0
  %v3963 = vadd.f32 %v560, %v3962
  %v3964 = vpop.f32.mrb[0].mxu0
  %3965 = vmatprep.mubr.bf16.mxu0 0
  %3966 = vmatmul.mubr.bf16.gmra.mrb[0].mxu0 %v2344
  %v3967 = vpop.f32.mrb[0].mxu0
  %v3968 = vadd.f32 %v560, %v3967
  %v3969 = vpop.f32.mrb[0].mxu0
  %v3970 = vpop.f32.mrb[0].mxu0
  %v3971 = vadd.f32 %v560, %v3970
  %v3972 = vpop.f32.mrb[0].mxu0
  %3973 = vmatprep.mubr.bf16.mxu0 0
  %3974 = vmatmul.mubr.bf16.gmra.mrb[0].mxu0 %v2347
  %v3975 = vpop.f32.mrb[0].mxu0
  %v3976 = vadd.f32 %v560, %v3975
  %v3977 = vpop.f32.mrb[0].mxu0
  %v3978 = vpop.f32.mrb[0].mxu0
  %v3979 = vadd.f32 %v560, %v3978
  %v3980 = vpop.f32.mrb[0].mxu0
  %3981 = vmatprep.mubr.bf16.mxu0 0
  %3982 = vmatmul.mubr.bf16.gmra.mrb[0].mxu0 %v2350
  %v3983 = vpop.f32.mrb[0].mxu0
  %v3984 = vadd.f32 %v560, %v3983
  %v3985 = vpop.f32.mrb[0].mxu0
  %v3986 = vpop.f32.mrb[0].mxu0
  %v3987 = vadd.f32 %v560, %v3986
  %v3988 = vpop.f32.mrb[0].mxu0
  %3989 = vmatprep.mubr.bf16.mxu0 0
  %3990 = vmatmul.mubr.bf16.gmra.mrb[0].mxu0 %v2353
  %v3991 = vpop.f32.mrb[0].mxu0
  %v3992 = vadd.f32 %v560, %v3991
  %v3993 = vpop.f32.mrb[0].mxu0
  %v3994 = vpop.f32.mrb[0].mxu0
  %v3995 = vadd.f32 %v560, %v3994
  %v3996 = vpop.f32.mrb[0].mxu0
  %3997 = vmatprep.mubr.bf16.mxu0 0
  %3998 = vmatmul.mubr.bf16.gmra.mrb[0].mxu0 %v2356
  %v3999 = vpop.f32.mrb[0].mxu0
  %v4000 = vadd.f32 %v560, %v3999
  %v4001 = vpop.f32.mrb[0].mxu0
  %v4002 = vpop.f32.mrb[0].mxu0
  %v4003 = vadd.f32 %v560, %v4002
  %v4004 = vpop.f32.mrb[0].mxu0
  %4005 = vmatprep.mubr.bf16.mxu0 0
  %4006 = vmatmul.mubr.bf16.gmra.mrb[0].mxu0 %v2359
  %v4007 = vpop.f32.mrb[0].mxu0
  %v4008 = vadd.f32 %v560, %v4007
  %v4009 = vpop.f32.mrb[0].mxu0
  %v4010 = vpop.f32.mrb[0].mxu0
  %v4011 = vadd.f32 %v560, %v4010
  %v4012 = vpop.f32.mrb[0].mxu0
  %4013 = vmatprep.mubr.bf16.mxu0 0
  %4014 = vmatmul.mubr.bf16.gmra.mrb[0].mxu0 %v2362
  %v4015 = vpop.f32.mrb[0].mxu0
  %v4016 = vadd.f32 %v560, %v4015
  %v4017 = vpop.f32.mrb[0].mxu0
  %v4018 = vpop.f32.mrb[0].mxu0
  %v4019 = vadd.f32 %v560, %v4018
  %v4020 = vpop.f32.mrb[0].mxu0
  %4021 = vmatprep.mubr.bf16.mxu0 0
  %4022 = vmatmul.mubr.bf16.gmra.mrb[0].mxu0 %v2365
  %v4023 = vpop.f32.mrb[0].mxu0
  %v4024 = vadd.f32 %v560, %v4023
  %v4025 = vpop.f32.mrb[0].mxu0
  %v4026 = vpop.f32.mrb[0].mxu0
  %v4027 = vadd.f32 %v560, %v4026
  %v4028 = vpop.f32.mrb[0].mxu0
  %4029 = vmatprep.mubr.bf16.mxu0 0
  %4030 = vmatmul.mubr.bf16.gmra.mrb[0].mxu0 %v2368
  %v4031 = vpop.f32.mrb[0].mxu0
  %v4032 = vadd.f32 %v560, %v4031
  %v4033 = vpop.f32.mrb[0].mxu0
  %v4034 = vpop.f32.mrb[0].mxu0
  %v4035 = vadd.f32 %v560, %v4034
  %v4036 = vpop.f32.mrb[0].mxu0
  %4037 = vmatprep.mubr.bf16.mxu0 0
  %4038 = vmatmul.mubr.bf16.gmra.mrb[0].mxu0 %v2371
  %v4039 = vpop.f32.mrb[0].mxu0
  %v4040 = vadd.f32 %v560, %v4039
  %v4041 = vpop.f32.mrb[0].mxu0
  %v4042 = vpop.f32.mrb[0].mxu0
  %v4043 = vadd.f32 %v560, %v4042
  %v4044 = vpop.f32.mrb[0].mxu0
  %4045 = vmatprep.mubr.bf16.mxu0 0
  %4046 = vmatmul.mubr.bf16.gmra.mrb[0].mxu0 %v2374
  %v4047 = vpop.f32.mrb[0].mxu0
  %v4048 = vadd.f32 %v560, %v4047
  %v4049 = vpop.f32.mrb[0].mxu0
  %v4050 = vpop.f32.mrb[0].mxu0
  %v4051 = vadd.f32 %v560, %v4050
  %v4052 = vpop.f32.mrb[0].mxu0
  %4053 = vmatprep.mubr.bf16.mxu0 0
  %4054 = vmatmul.mubr.bf16.gmra.mrb[0].mxu0 %v2377
  %v4055 = vpop.f32.mrb[0].mxu0
  %v4056 = vadd.f32 %v560, %v4055
  %v4057 = vpop.f32.mrb[0].mxu0
  %v4058 = vpop.f32.mrb[0].mxu0
  %v4059 = vadd.f32 %v560, %v4058
  %v4060 = vpop.f32.mrb[0].mxu0
  %4061 = vmatprep.mubr.bf16.mxu0 0
  %4062 = vmatmul.mubr.bf16.gmra.mrb[0].mxu0 %v2380
  %v4063 = vpop.f32.mrb[0].mxu0
  %v4064 = vadd.f32 %v560, %v4063
  %v4065 = vpop.f32.mrb[0].mxu0
  %v4066 = vpop.f32.mrb[0].mxu0
  %v4067 = vadd.f32 %v560, %v4066
  %v4068 = vpop.f32.mrb[0].mxu0
  %4069 = vmatprep.mubr.bf16.mxu0 0
  %4070 = vmatmul.mubr.bf16.gmra.mrb[0].mxu0 %v2383
  %v4071 = vpop.f32.mrb[0].mxu0
  %v4072 = vadd.f32 %v560, %v4071
  %v4073 = vpop.f32.mrb[0].mxu0
  %v4074 = vpop.f32.mrb[0].mxu0
  %v4075 = vadd.f32 %v560, %v4074
  %v4076 = vpop.f32.mrb[0].mxu0
  %4077 = vmatprep.mubr.bf16.mxu0 0
  %4078 = vmatmul.mubr.bf16.gmra.mrb[0].mxu0 %v2386
  %v4079 = vpop.f32.mrb[0].mxu0
  %v4080 = vadd.f32 %v560, %v4079
  %v4081 = vpop.f32.mrb[0].mxu0
  %v4082 = vpop.f32.mrb[0].mxu0
  %v4083 = vadd.f32 %v560, %v4082
  %v4084 = vpop.f32.mrb[0].mxu0
  %4085 = vmatprep.mubr.bf16.mxu0 0
  %4086 = vmatmul.mubr.bf16.gmra.mrb[0].mxu0 %v2389
  %v4087 = vpop.f32.mrb[0].mxu0
  %v4088 = vadd.f32 %v560, %v4087
  %v4089 = vpop.f32.mrb[0].mxu0
  %v4090 = vpop.f32.mrb[0].mxu0
  %v4091 = vadd.f32 %v560, %v4090
  %v4092 = vpop.f32.mrb[0].mxu0
  %4093 = vmatprep.mubr.bf16.mxu0 0
  %4094 = vmatmul.mubr.bf16.gmra.mrb[0].mxu0 %v2392
  %v4095 = vpop.f32.mrb[0].mxu0
  %v4096 = vadd.f32 %v560, %v4095
  %v4097 = vpop.f32.mrb[0].mxu0
  %v4098 = vpop.f32.mrb[0].mxu0
  %v4099 = vadd.f32 %v560, %v4098
  %v4100 = vpop.f32.mrb[0].mxu0
  %4101 = vmatprep.mubr.bf16.mxu0 0
  %4102 = vmatmul.mubr.bf16.gmra.mrb[0].mxu0 %v2395
  %v4103 = vpop.f32.mrb[0].mxu0
  %v4104 = vadd.f32 %v560, %v4103
  %v4105 = vpop.f32.mrb[0].mxu0
  %v4106 = vpop.f32.mrb[0].mxu0
  %v4107 = vadd.f32 %v560, %v4106
  %v4108 = vpop.f32.mrb[0].mxu0
  %4109 = vmatprep.mubr.bf16.mxu0 0
  %4110 = vmatmul.mubr.bf16.gmra.mrb[0].mxu0 %v2398
  %v4111 = vpop.f32.mrb[0].mxu0
  %v4112 = vadd.f32 %v560, %v4111
  %v4113 = vpop.f32.mrb[0].mxu0
  %v4114 = vpop.f32.mrb[0].mxu0
  %v4115 = vadd.f32 %v560, %v4114
  %v4116 = vpop.f32.mrb[0].mxu0
  %4117 = vmatprep.mubr.bf16.mxu0 0
  %4118 = vmatmul.mubr.bf16.gmra.mrb[0].mxu0 %v2401
  %v4119 = vpop.f32.mrb[0].mxu0
  %v4120 = vadd.f32 %v560, %v4119
  %v4121 = vpop.f32.mrb[0].mxu0
  %v4122 = vpop.f32.mrb[0].mxu0
  %v4123 = vadd.f32 %v560, %v4122
  %v4124 = vpop.f32.mrb[0].mxu0
  %4125 = vmatprep.mubr.bf16.mxu0 0
  %4126 = vmatmul.mubr.bf16.gmra.mrb[0].mxu0 %v2404
  %v4127 = vpop.f32.mrb[0].mxu0
  %v4128 = vadd.f32 %v560, %v4127
  %v4129 = vpop.f32.mrb[0].mxu0
  %v4130 = vpop.f32.mrb[0].mxu0
  %v4131 = vadd.f32 %v560, %v4130
  %v4132 = vpop.f32.mrb[0].mxu0
  %4133 = vmatprep.mubr.bf16.mxu0 0
  %4134 = vmatmul.mubr.bf16.gmra.mrb[0].mxu0 %v2407
  %v4135 = vpop.f32.mrb[0].mxu0
  %v4136 = vadd.f32 %v560, %v4135
  %v4137 = vpop.f32.mrb[0].mxu0
  %v4138 = vpop.f32.mrb[0].mxu0
  %v4139 = vadd.f32 %v560, %v4138
  %v4140 = vpop.f32.mrb[0].mxu0
  %4141 = vmatprep.mubr.bf16.mxu0 0
  %4142 = vmatmul.mubr.bf16.gmra.mrb[0].mxu0 %v2410
  %v4143 = vpop.f32.mrb[0].mxu0
  %v4144 = vadd.f32 %v560, %v4143
  %v4145 = vpop.f32.mrb[0].mxu0
  %v4146 = vpop.f32.mrb[0].mxu0
  %v4147 = vadd.f32 %v560, %v4146
  %v4148 = vpop.f32.mrb[0].mxu0
  %4149 = vmatprep.mubr.bf16.mxu0 0
  %4150 = vmatmul.mubr.bf16.gmra.mrb[0].mxu0 %v2413
  %v4151 = vpop.f32.mrb[0].mxu0
  %v4152 = vadd.f32 %v560, %v4151
  %v4153 = vpop.f32.mrb[0].mxu0
  %v4154 = vpop.f32.mrb[0].mxu0
  %v4155 = vadd.f32 %v560, %v4154
  %v4156 = vpop.f32.mrb[0].mxu0
  %4157 = vmatprep.mubr.bf16.mxu0 0
  %4158 = vmatmul.mubr.bf16.gmra.mrb[0].mxu0 %v2416
  %v4159 = vpop.f32.mrb[0].mxu0
  %v4160 = vadd.f32 %v560, %v4159
  %v4161 = vpop.f32.mrb[0].mxu0
  %v4162 = vpop.f32.mrb[0].mxu0
  %v4163 = vadd.f32 %v560, %v4162
  %v4164 = vpop.f32.mrb[0].mxu0
  %4165 = vmatprep.mubr.bf16.mxu0 0
  %4166 = vmatmul.mubr.bf16.gmra.mrb[0].mxu0 %v2419
  %v4167 = vpop.f32.mrb[0].mxu0
  %v4168 = vadd.f32 %v560, %v4167
  %v4169 = vpop.f32.mrb[0].mxu0
  %v4170 = vpop.f32.mrb[0].mxu0
  %v4171 = vadd.f32 %v560, %v4170
  %v4172 = vpop.f32.mrb[0].mxu0
  %4173 = vmatprep.mubr.bf16.mxu0 0
  %4174 = vmatmul.mubr.bf16.gmra.mrb[0].mxu0 %v2422
  %v4175 = vpop.f32.mrb[0].mxu0
  %v4176 = vadd.f32 %v560, %v4175
  %v4177 = vpop.f32.mrb[0].mxu0
  %v4178 = vpop.f32.mrb[0].mxu0
  %v4179 = vadd.f32 %v560, %v4178
  %v4180 = vpop.f32.mrb[0].mxu0
  %4181 = vmatprep.mubr.bf16.mxu0 0
  %4182 = vmatmul.mubr.bf16.gmra.mrb[0].mxu0 %v2425
  %v4183 = vpop.f32.mrb[0].mxu0
  %v4184 = vadd.f32 %v560, %v4183
  %v4185 = vpop.f32.mrb[0].mxu0
  %v4186 = vpop.f32.mrb[0].mxu0
  %v4187 = vadd.f32 %v560, %v4186
  %v4188 = vpop.f32.mrb[0].mxu0
  %4189 = vmatprep.mubr.bf16.mxu0 0
  %4190 = vmatmul.mubr.bf16.gmra.mrb[0].mxu0 %v2428
  %v4191 = vpop.f32.mrb[0].mxu0
  %v4192 = vadd.f32 %v560, %v4191
  %v4193 = vpop.f32.mrb[0].mxu0
  %v4194 = vpop.f32.mrb[0].mxu0
  %v4195 = vadd.f32 %v560, %v4194
  %v4196 = vpop.f32.mrb[0].mxu0
  %4197 = vmatprep.mubr.bf16.mxu0 0
  %4198 = vmatmul.mubr.bf16.gmra.mrb[0].mxu0 %v2431
  %v4199 = vpop.f32.mrb[0].mxu0
  %v4200 = vadd.f32 %v560, %v4199
  %v4201 = vpop.f32.mrb[0].mxu0
  %v4202 = vpop.f32.mrb[0].mxu0
  %v4203 = vadd.f32 %v560, %v4202
  %v4204 = vpop.f32.mrb[0].mxu0
  %4205 = vmatprep.mubr.bf16.mxu0 0
  %4206 = vmatmul.mubr.bf16.gmra.mrb[0].mxu0 %v2434
  %v4207 = vpop.f32.mrb[0].mxu0
  %v4208 = vadd.f32 %v560, %v4207
  %v4209 = vpop.f32.mrb[0].mxu0
  %v4210 = vpop.f32.mrb[0].mxu0
  %v4211 = vadd.f32 %v560, %v4210
  %v4212 = vpop.f32.mrb[0].mxu0
  %4213 = vmatprep.mubr.bf16.mxu0 0
  %4214 = vmatmul.mubr.bf16.gmra.mrb[0].mxu0 %v2437
  %v4215 = vpop.f32.mrb[0].mxu0
  %v4216 = vadd.f32 %v560, %v4215
  %v4217 = vpop.f32.mrb[0].mxu0
  %v4218 = vpop.f32.mrb[0].mxu0
  %v4219 = vadd.f32 %v560, %v4218
  %v4220 = vpop.f32.mrb[0].mxu0
  %4221 = vmatprep.mubr.bf16.mxu0 0
  %4222 = vmatmul.mubr.bf16.gmra.mrb[0].mxu0 %v2440
  %v4223 = vpop.f32.mrb[0].mxu0
  %v4224 = vadd.f32 %v560, %v4223
  %v4225 = vpop.f32.mrb[0].mxu0
  %v4226 = vpop.f32.mrb[0].mxu0
  %v4227 = vadd.f32 %v560, %v4226
  %v4228 = vpop.f32.mrb[0].mxu0
  %4229 = vmatprep.mubr.bf16.mxu0 0
  %4230 = vmatmul.mubr.bf16.gmra.mrb[0].mxu0 %v2443
  %v4231 = vpop.f32.mrb[0].mxu0
  %v4232 = vadd.f32 %v560, %v4231
  %v4233 = vpop.f32.mrb[0].mxu0
  %v4234 = vpop.f32.mrb[0].mxu0
  %v4235 = vadd.f32 %v560, %v4234
  %v4236 = vpop.f32.mrb[0].mxu0
  %4237 = vmatprep.mubr.bf16.mxu0 0
  %4238 = vmatmul.mubr.bf16.gmra.mrb[0].mxu0 %v2446
  %v4239 = vpop.f32.mrb[0].mxu0
  %v4240 = vadd.f32 %v560, %v4239
  %v4241 = vpop.f32.mrb[0].mxu0
  %v4242 = vpop.f32.mrb[0].mxu0
  %v4243 = vadd.f32 %v560, %v4242
  %v4244 = vpop.f32.mrb[0].mxu0
  %4245 = vmatprep.mubr.bf16.mxu0 0
  %4246 = vmatmul.mubr.bf16.gmra.mrb[0].mxu0 %v2449
  %v4247 = vpop.f32.mrb[0].mxu0
  %v4248 = vadd.f32 %v560, %v4247
  %v4249 = vpop.f32.mrb[0].mxu0
  %v4250 = vpop.f32.mrb[0].mxu0
  %v4251 = vadd.f32 %v560, %v4250
  %v4252 = vpop.f32.mrb[0].mxu0
  %4253 = vmatprep.mubr.bf16.mxu0 0
  %4254 = vmatmul.mubr.bf16.gmra.mrb[0].mxu0 %v2452
  %v4255 = vpop.f32.mrb[0].mxu0
  %v4256 = vadd.f32 %v560, %v4255
  %v4257 = vpop.f32.mrb[0].mxu0
  %v4258 = vpop.f32.mrb[0].mxu0
  %v4259 = vadd.f32 %v560, %v4258
  %v4260 = vpop.f32.mrb[0].mxu0
  %4261 = vmatprep.mubr.bf16.mxu0 0
  %4262 = vmatmul.mubr.bf16.gmra.mrb[0].mxu0 %v2455
  %v4263 = vpop.f32.mrb[0].mxu0
  %v4264 = vadd.f32 %v560, %v4263
  %v4265 = vpop.f32.mrb[0].mxu0
  %v4266 = vpop.f32.mrb[0].mxu0
  %v4267 = vadd.f32 %v560, %v4266
  %v4268 = vpop.f32.mrb[0].mxu0
  %4269 = vmatprep.mubr.bf16.mxu0 0
  %4270 = vmatmul.mubr.bf16.gmra.mrb[0].mxu0 %v2458
  %v4271 = vpop.f32.mrb[0].mxu0
  %v4272 = vadd.f32 %v560, %v4271
  %v4273 = vpop.f32.mrb[0].mxu0
  %v4274 = vpop.f32.mrb[0].mxu0
  %v4275 = vadd.f32 %v560, %v4274
  %v4276 = vpop.f32.mrb[0].mxu0
  %4277 = vmatprep.mubr.bf16.mxu0 0
  %4278 = vmatmul.mubr.bf16.gmra.mrb[0].mxu0 %v2461
  %v4279 = vpop.f32.mrb[0].mxu0
  %v4280 = vadd.f32 %v560, %v4279
  %v4281 = vpop.f32.mrb[0].mxu0
  %v4282 = vpop.f32.mrb[0].mxu0
  %v4283 = vadd.f32 %v560, %v4282
  %v4284 = vpop.f32.mrb[0].mxu0
  %4285 = vmatprep.mubr.bf16.mxu0 0
  %4286 = vmatmul.mubr.bf16.gmra.mrb[0].mxu0 %v2464
  %v4287 = vpop.f32.mrb[0].mxu0
  %v4288 = vadd.f32 %v560, %v4287
  %v4289 = vpop.f32.mrb[0].mxu0
  %v4290 = vpop.f32.mrb[0].mxu0
  %v4291 = vadd.f32 %v560, %v4290
  %v4292 = vpop.f32.mrb[0].mxu0
  %4293 = vmatprep.mubr.bf16.mxu0 0
  %4294 = vmatmul.mubr.bf16.gmra.mrb[0].mxu0 %v2467
  %v4295 = vpop.f32.mrb[0].mxu0
  %v4296 = vadd.f32 %v560, %v4295
  %v4297 = vpop.f32.mrb[0].mxu0
  %v4298 = vpop.f32.mrb[0].mxu0
  %v4299 = vadd.f32 %v560, %v4298
  %v4300 = vpop.f32.mrb[0].mxu0
  %4301 = vmatprep.mubr.bf16.mxu0 0
  %4302 = vmatmul.mubr.bf16.gmra.mrb[0].mxu0 %v2470
  %v4303 = vpop.f32.mrb[0].mxu0
  %v4304 = vadd.f32 %v560, %v4303
  %v4305 = vpop.f32.mrb[0].mxu0
  %v4306 = vpop.f32.mrb[0].mxu0
  %v4307 = vadd.f32 %v560, %v4306
  %v4308 = vpop.f32.mrb[0].mxu0
  %4309 = vmatprep.mubr.bf16.mxu0 0
  %4310 = vmatmul.mubr.bf16.gmra.mrb[0].mxu0 %v2473
  %v4311 = vpop.f32.mrb[0].mxu0
  %v4312 = vadd.f32 %v560, %v4311
  %v4313 = vpop.f32.mrb[0].mxu0
  %v4314 = vpop.f32.mrb[0].mxu0
  %v4315 = vadd.f32 %v560, %v4314
  %v4316 = vpop.f32.mrb[0].mxu0
  %4317 = vmatprep.mubr.bf16.mxu0 0
  %4318 = vmatmul.mubr.bf16.gmra.mrb[0].mxu0 %v2476
  %v4319 = vpop.f32.mrb[0].mxu0
  %v4320 = vadd.f32 %v560, %v4319
  %v4321 = vpop.f32.mrb[0].mxu0
  %v4322 = vpop.f32.mrb[0].mxu0
  %v4323 = vadd.f32 %v560, %v4322
  %v4324 = vpop.f32.mrb[0].mxu0
  %4325 = vmatprep.mubr.bf16.mxu0 0
  %4326 = vmatmul.mubr.bf16.gmra.mrb[0].mxu0 %v2479
  %v4327 = vpop.f32.mrb[0].mxu0
  %v4328 = vadd.f32 %v560, %v4327
  %v4329 = vpop.f32.mrb[0].mxu0
  %v4330 = vpop.f32.mrb[0].mxu0
  %v4331 = vadd.f32 %v560, %v4330
  %v4332 = vpop.f32.mrb[0].mxu0
  %4333 = vmatprep.mubr.bf16.mxu0 0
  %4334 = vmatmul.mubr.bf16.gmra.mrb[0].mxu0 %v2482
  %v4335 = vpop.f32.mrb[0].mxu0
  %v4336 = vadd.f32 %v560, %v4335
  %v4337 = vpop.f32.mrb[0].mxu0
  %v4338 = vpop.f32.mrb[0].mxu0
  %v4339 = vadd.f32 %v560, %v4338
  %v4340 = vpop.f32.mrb[0].mxu0
  %4341 = vmatprep.mubr.bf16.mxu0 0
  %4342 = vmatmul.mubr.bf16.gmra.mrb[0].mxu0 %v2485
  %v4343 = vpop.f32.mrb[0].mxu0
  %v4344 = vadd.f32 %v560, %v4343
  %v4345 = vpop.f32.mrb[0].mxu0
  %v4346 = vpop.f32.mrb[0].mxu0
  %v4347 = vadd.f32 %v560, %v4346
  %v4348 = vpop.f32.mrb[0].mxu0
  %4349 = vmatprep.mubr.bf16.mxu0 0
  %4350 = vmatmul.mubr.bf16.gmra.mrb[0].mxu0 %v2488
  %v4351 = vpop.f32.mrb[0].mxu0
  %v4352 = vadd.f32 %v560, %v4351
  %v4353 = vpop.f32.mrb[0].mxu0
  %v4354 = vpop.f32.mrb[0].mxu0
  %v4355 = vadd.f32 %v560, %v4354
  %v4356 = vpop.f32.mrb[0].mxu0
  %4357 = vmatprep.mubr.bf16.mxu0 0
  %4358 = vmatmul.mubr.bf16.gmra.mrb[0].mxu0 %v2491
  %v4359 = vpop.f32.mrb[0].mxu0
  %v4360 = vadd.f32 %v560, %v4359
  %v4361 = vpop.f32.mrb[0].mxu0
  %v4362 = vpop.f32.mrb[0].mxu0
  %v4363 = vadd.f32 %v560, %v4362
  %v4364 = vpop.f32.mrb[0].mxu0
  %4365 = vmatprep.mubr.bf16.mxu0 0
  %4366 = vmatmul.mubr.bf16.gmra.mrb[0].mxu0 %v2494
  %v4367 = vpop.f32.mrb[0].mxu0
  %v4368 = vadd.f32 %v560, %v4367
  %v4369 = vpop.f32.mrb[0].mxu0
  %v4370 = vpop.f32.mrb[0].mxu0
  %v4371 = vadd.f32 %v560, %v4370
  %v4372 = vpop.f32.mrb[0].mxu0
  %4373 = vmatprep.mubr.bf16.mxu0 0
  %4374 = vmatmul.mubr.bf16.gmra.mrb[0].mxu0 %v2497
  %v4375 = vpop.f32.mrb[0].mxu0
  %v4376 = vadd.f32 %v560, %v4375
  %v4377 = vpop.f32.mrb[0].mxu0
  %v4378 = vpop.f32.mrb[0].mxu0
  %v4379 = vadd.f32 %v560, %v4378
  %v4380 = vpop.f32.mrb[0].mxu0
  %4381 = vmatprep.mubr.bf16.mxu0 0
  %4382 = vmatmul.mubr.bf16.gmra.mrb[0].mxu0 %v2500
  %v4383 = vpop.f32.mrb[0].mxu0
  %v4384 = vadd.f32 %v560, %v4383
  %v4385 = vpop.f32.mrb[0].mxu0
  %v4386 = vpop.f32.mrb[0].mxu0
  %v4387 = vadd.f32 %v560, %v4386
  %v4388 = vpop.f32.mrb[0].mxu0
  %4389 = vmatprep.mubr.bf16.mxu0 0
  %4390 = vmatmul.mubr.bf16.gmra.mrb[0].mxu0 %v2503
  %v4391 = vpop.f32.mrb[0].mxu0
  %v4392 = vadd.f32 %v560, %v4391
  %v4393 = vpop.f32.mrb[0].mxu0
  %v4394 = vpop.f32.mrb[0].mxu0
  %v4395 = vadd.f32 %v560, %v4394
  %v4396 = vpop.f32.mrb[0].mxu0
  %4397 = vmatprep.mubr.bf16.mxu0 0
  %4398 = vmatmul.mubr.bf16.gmra.mrb[0].mxu0 %v2506
  %v4399 = vpop.f32.mrb[0].mxu0
  %v4400 = vadd.f32 %v560, %v4399
  %v4401 = vpop.f32.mrb[0].mxu0
  %v4402 = vpop.f32.mrb[0].mxu0
  %v4403 = vadd.f32 %v560, %v4402
  %v4404 = vpop.f32.mrb[0].mxu0
  %4405 = vmatprep.mubr.bf16.mxu0 0
  %4406 = vmatmul.mubr.bf16.gmra.mrb[0].mxu0 %v2509
  %v4407 = vpop.f32.mrb[0].mxu0
  %v4408 = vadd.f32 %v560, %v4407
  %v4409 = vpop.f32.mrb[0].mxu0
  %v4410 = vpop.f32.mrb[0].mxu0
  %v4411 = vadd.f32 %v560, %v4410
  %v4412 = vpop.f32.mrb[0].mxu0
  %4413 = vmatprep.mubr.bf16.mxu0 0
  %4414 = vmatmul.mubr.bf16.gmra.mrb[0].mxu0 %v2512
  %v4415 = vpop.f32.mrb[0].mxu0
  %v4416 = vadd.f32 %v560, %v4415
  %v4417 = vpop.f32.mrb[0].mxu0
  %v4418 = vpop.f32.mrb[0].mxu0
  %v4419 = vadd.f32 %v560, %v4418
  %v4420 = vpop.f32.mrb[0].mxu0
  %4421 = vmatprep.mubr.bf16.mxu0 0
  %4422 = vmatmul.mubr.bf16.gmra.mrb[0].mxu0 %v2515
  %v4423 = vpop.f32.mrb[0].mxu0
  %v4424 = vadd.f32 %v560, %v4423
  %v4425 = vpop.f32.mrb[0].mxu0
  %v4426 = vpop.f32.mrb[0].mxu0
  %v4427 = vadd.f32 %v560, %v4426
  %v4428 = vpop.f32.mrb[0].mxu0
  %4429 = vmatprep.mubr.bf16.mxu0 0
  %4430 = vmatmul.mubr.bf16.gmra.mrb[0].mxu0 %v2518
  %v4431 = vpop.f32.mrb[0].mxu0
  %v4432 = vadd.f32 %v560, %v4431
  %v4433 = vpop.f32.mrb[0].mxu0
  %v4434 = vpop.f32.mrb[0].mxu0
  %v4435 = vadd.f32 %v560, %v4434
  %v4436 = vpop.f32.mrb[0].mxu0
  %4437 = vmatprep.mubr.bf16.mxu0 0
  %4438 = vmatmul.mubr.bf16.gmra.mrb[0].mxu0 %v2521
  %v4439 = vpop.f32.mrb[0].mxu0
  %v4440 = vadd.f32 %v560, %v4439
  %v4441 = vpop.f32.mrb[0].mxu0
  %v4442 = vpop.f32.mrb[0].mxu0
  %v4443 = vadd.f32 %v560, %v4442
  %v4444 = vpop.f32.mrb[0].mxu0
  %4445 = vmatprep.mubr.bf16.mxu0 0
  %4446 = vmatmul.mubr.bf16.gmra.mrb[0].mxu0 %v2524
  %v4447 = vpop.f32.mrb[0].mxu0
  %v4448 = vadd.f32 %v560, %v4447
  %v4449 = vpop.f32.mrb[0].mxu0
  %v4450 = vpop.f32.mrb[0].mxu0
  %v4451 = vadd.f32 %v560, %v4450
  %v4452 = vpop.f32.mrb[0].mxu0
  %4453 = vmatprep.mubr.bf16.mxu0 0
  %4454 = vmatmul.mubr.bf16.gmra.mrb[0].mxu0 %v2527
  %v4455 = vpop.f32.mrb[0].mxu0
  %v4456 = vadd.f32 %v560, %v4455
  %v4457 = vpop.f32.mrb[0].mxu0
  %v4458 = vpop.f32.mrb[0].mxu0
  %v4459 = vadd.f32 %v560, %v4458
  %v4460 = vpop.f32.mrb[0].mxu0
  %4461 = vmatprep.mubr.bf16.mxu0 0
  %4462 = vmatmul.mubr.bf16.gmra.mrb[0].mxu0 %v2530
  %v4463 = vpop.f32.mrb[0].mxu0
  %v4464 = vadd.f32 %v560, %v4463
  %v4465 = vpop.f32.mrb[0].mxu0
  %v4466 = vpop.f32.mrb[0].mxu0
  %v4467 = vadd.f32 %v560, %v4466
  %v4468 = vpop.f32.mrb[0].mxu0
  %4469 = vmatprep.mubr.bf16.mxu0 0
  %4470 = vmatmul.mubr.bf16.gmra.mrb[0].mxu0 %v2533
  %v4471 = vpop.f32.mrb[0].mxu0
  %v4472 = vadd.f32 %v560, %v4471
  %v4473 = vpop.f32.mrb[0].mxu0
  %v4474 = vpop.f32.mrb[0].mxu0
  %v4475 = vadd.f32 %v560, %v4474
  %v4476 = vpop.f32.mrb[0].mxu0
  %4477 = vmatprep.mubr.bf16.mxu0 0
  %4478 = vmatmul.mubr.bf16.gmra.mrb[0].mxu0 %v2536
  %v4479 = vpop.f32.mrb[0].mxu0
  %v4480 = vadd.f32 %v560, %v4479
  %v4481 = vpop.f32.mrb[0].mxu0
  %v4482 = vpop.f32.mrb[0].mxu0
  %v4483 = vadd.f32 %v560, %v4482
  %v4484 = vpop.f32.mrb[0].mxu0
  %4485 = vmatprep.mubr.bf16.mxu0 0
  %4486 = vmatmul.mubr.bf16.gmra.mrb[0].mxu0 %v2539
  %v4487 = vpop.f32.mrb[0].mxu0
  %v4488 = vadd.f32 %v560, %v4487
  %v4489 = vpop.f32.mrb[0].mxu0
  %v4490 = vpop.f32.mrb[0].mxu0
  %v4491 = vadd.f32 %v560, %v4490
  %v4492 = vpop.f32.mrb[0].mxu0
  %4493 = vmatprep.mubr.bf16.mxu0 0
  %4494 = vmatmul.mubr.bf16.gmra.mrb[0].mxu0 %v2542
  %v4495 = vpop.f32.mrb[0].mxu0
  %v4496 = vadd.f32 %v560, %v4495
  %v4497 = vpop.f32.mrb[0].mxu0
  %v4498 = vpop.f32.mrb[0].mxu0
  %v4499 = vadd.f32 %v560, %v4498
  %v4500 = vpop.f32.mrb[0].mxu0
  %4501 = vmatprep.mubr.bf16.mxu0 0
  %4502 = vmatmul.mubr.bf16.gmra.mrb[0].mxu0 %v2545
  %v4503 = vpop.f32.mrb[0].mxu0
  %v4504 = vadd.f32 %v560, %v4503
  %v4505 = vpop.f32.mrb[0].mxu0
  %v4506 = vpop.f32.mrb[0].mxu0
  %v4507 = vadd.f32 %v560, %v4506
  %v4508 = vpop.f32.mrb[0].mxu0
  %4509 = vmatprep.mubr.bf16.mxu0 0
  %4510 = vmatmul.mubr.bf16.gmra.mrb[0].mxu0 %v2548
  %v4511 = vpop.f32.mrb[0].mxu0
  %v4512 = vadd.f32 %v560, %v4511
  %v4513 = vpop.f32.mrb[0].mxu0
  %v4514 = vpop.f32.mrb[0].mxu0
  %v4515 = vadd.f32 %v560, %v4514
  %v4516 = vpop.f32.mrb[0].mxu0
  %4517 = vmatprep.mubr.bf16.mxu0 0
  %4518 = vmatmul.mubr.bf16.gmra.mrb[0].mxu0 %v2551
  %v4519 = vpop.f32.mrb[0].mxu0
  %v4520 = vadd.f32 %v560, %v4519
  %v4521 = vpop.f32.mrb[0].mxu0
  %v4522 = vpop.f32.mrb[0].mxu0
  %v4523 = vadd.f32 %v560, %v4522
  %v4524 = vpop.f32.mrb[0].mxu0
  %4525 = vmatprep.mubr.bf16.mxu0 0
  %4526 = vmatmul.mubr.bf16.gmra.mrb[0].mxu0 %v2554
  %v4527 = vpop.f32.mrb[0].mxu0
  %v4528 = vadd.f32 %v560, %v4527
  %v4529 = vpop.f32.mrb[0].mxu0
  %v4530 = vpop.f32.mrb[0].mxu0
  %v4531 = vadd.f32 %v560, %v4530
  %v4532 = vpop.f32.mrb[0].mxu0
  %4533 = vmatprep.mubr.bf16.mxu0 0
  %4534 = vmatmul.mubr.bf16.gmra.mrb[0].mxu0 %v2557
  %v4535 = vpop.f32.mrb[0].mxu0
  %v4536 = vadd.f32 %v560, %v4535
  %v4537 = vpop.f32.mrb[0].mxu0
  %v4538 = vpop.f32.mrb[0].mxu0
  %v4539 = vadd.f32 %v560, %v4538
  %v4540 = vpop.f32.mrb[0].mxu0
  %4541 = vmatprep.mubr.bf16.mxu0 0
  %4542 = vmatmul.mubr.bf16.gmra.mrb[0].mxu0 %v2560
  %v4543 = vpop.f32.mrb[0].mxu0
  %v4544 = vadd.f32 %v560, %v4543
  %v4545 = vpop.f32.mrb[0].mxu0
  %v4546 = vpop.f32.mrb[0].mxu0
  %v4547 = vadd.f32 %v560, %v4546
  %v4548 = vpop.f32.mrb[0].mxu0
  %4549 = vmatprep.mubr.bf16.mxu0 0
  %4550 = vmatmul.mubr.bf16.gmra.mrb[0].mxu0 %v2563
  %v4551 = vpop.f32.mrb[0].mxu0
  %v4552 = vadd.f32 %v560, %v4551
  %v4553 = vpop.f32.mrb[0].mxu0
  %v4554 = vpop.f32.mrb[0].mxu0
  %v4555 = vadd.f32 %v560, %v4554
  %v4556 = vpop.f32.mrb[0].mxu0
  %4557 = vmatprep.mubr.bf16.mxu0 0
  %4558 = vmatmul.mubr.bf16.gmra.mrb[0].mxu0 %v2566
  %v4559 = vpop.f32.mrb[0].mxu0
  %v4560 = vadd.f32 %v560, %v4559
  %v4561 = vpop.f32.mrb[0].mxu0
  %v4562 = vpop.f32.mrb[0].mxu0
  %v4563 = vadd.f32 %v560, %v4562
  %v4564 = vpop.f32.mrb[0].mxu0
  %4565 = vmatprep.mubr.bf16.mxu0 0
  %4566 = vmatmul.mubr.bf16.gmra.mrb[0].mxu0 %v2569
  %v4567 = vpop.f32.mrb[0].mxu0
  %v4568 = vadd.f32 %v560, %v4567
  %v4569 = vpop.f32.mrb[0].mxu0
  %v4570 = vpop.f32.mrb[0].mxu0
  %v4571 = vadd.f32 %v560, %v4570
  %v4572 = vpop.f32.mrb[0].mxu0
  %4573 = vmatprep.mubr.bf16.mxu0 0
  %4574 = vmatmul.mubr.bf16.gmra.mrb[0].mxu0 %v2572
  %v4575 = vpop.f32.mrb[0].mxu0
  %v4576 = vadd.f32 %v560, %v4575
  %v4577 = vpop.f32.mrb[0].mxu0
  %v4578 = vpop.f32.mrb[0].mxu0
  %v4579 = vadd.f32 %v560, %v4578
  %v4580 = vpop.f32.mrb[0].mxu0
  %4581 = vmatprep.mubr.bf16.mxu0 0
  %4582 = vmatmul.mubr.bf16.gmra.mrb[0].mxu0 %v2575
  %v4583 = vpop.f32.mrb[0].mxu0
  %v4584 = vadd.f32 %v560, %v4583
  %v4585 = vpop.f32.mrb[0].mxu0
  %v4586 = vpop.f32.mrb[0].mxu0
  %v4587 = vadd.f32 %v560, %v4586
  %v4588 = vpop.f32.mrb[0].mxu0
  %4589 = vmatprep.mubr.bf16.mxu0 0
  %4590 = vmatmul.mubr.bf16.gmra.mrb[0].mxu0 %v2578
  %v4591 = vpop.f32.mrb[0].mxu0
  %v4592 = vadd.f32 %v560, %v4591
  %v4593 = vpop.f32.mrb[0].mxu0
  %v4594 = vpop.f32.mrb[0].mxu0
  %v4595 = vadd.f32 %v560, %v4594
  %v4596 = vpop.f32.mrb[0].mxu0
  %4597 = vmatprep.mubr.bf16.mxu0 0
  %4598 = vmatmul.mubr.bf16.gmra.mrb[0].mxu0 %v2581
  %v4599 = vpop.f32.mrb[0].mxu0
  %v4600 = vadd.f32 %v560, %v4599
  %v4601 = vpop.f32.mrb[0].mxu0
  %v4602 = vpop.f32.mrb[0].mxu0
  %v4603 = vadd.f32 %v560, %v4602
  %v4604 = vpop.f32.mrb[0].mxu0
  %4605 = vmatprep.mubr.bf16.mxu0 0
  %4606 = vmatmul.mubr.bf16.gmra.mrb[0].mxu0 %v2584
  %v4607 = vpop.f32.mrb[0].mxu0
  %v4608 = vadd.f32 %v560, %v4607
  %v4609 = vpop.f32.mrb[0].mxu0
  %v4610 = vpop.f32.mrb[0].mxu0
  %v4611 = vadd.f32 %v560, %v4610
  %v4612 = vpop.f32.mrb[0].mxu0
  %4613 = vmatprep.mubr.bf16.mxu0 0
  %4614 = vmatmul.mubr.bf16.gmra.mrb[0].mxu0 %v2587
  %v4615 = vpop.f32.mrb[0].mxu0
  %v4616 = vadd.f32 %v560, %v4615
  %v4617 = vpop.f32.mrb[0].mxu0
  %v4618 = vpop.f32.mrb[0].mxu0
  %v4619 = vadd.f32 %v560, %v4618
  %v4620 = vpop.f32.mrb[0].mxu0
  %4621 = vmatprep.mubr.bf16.mxu0 0
  %4622 = vmatmul.mubr.bf16.gmra.mrb[0].mxu0 %v2590
  %v4623 = vpop.f32.mrb[0].mxu0
  %v4624 = vadd.f32 %v560, %v4623
  %v4625 = vpop.f32.mrb[0].mxu0
  %v4626 = vpop.f32.mrb[0].mxu0
  %v4627 = vadd.f32 %v560, %v4626
  %v4628 = vpop.f32.mrb[0].mxu0
  %4629 = vmatprep.mubr.bf16.mxu0 0
  %4630 = vmatmul.mubr.bf16.gmra.mrb[0].mxu0 %v2593
  %v4631 = vpop.f32.mrb[0].mxu0
  %v4632 = vadd.f32 %v560, %v4631
  %v4633 = vpop.f32.mrb[0].mxu0
  %v4634 = vpop.f32.mrb[0].mxu0
  %v4635 = vadd.f32 %v560, %v4634
  %v4636 = vpop.f32.mrb[0].mxu0
  %4637 = vmatprep.mubr.bf16.mxu0 0
  %4638 = vmatmul.mubr.bf16.gmra.mrb[0].mxu0 %v2596
  %v4639 = vpop.f32.mrb[0].mxu0
  %v4640 = vadd.f32 %v560, %v4639
  %v4641 = vpop.f32.mrb[0].mxu0
  %v4642 = vpop.f32.mrb[0].mxu0
  %v4643 = vadd.f32 %v560, %v4642
  %v4644 = vpop.f32.mrb[0].mxu0
  %4645 = vmatprep.mubr.bf16.mxu0 0
  %4646 = vmatmul.mubr.bf16.gmra.mrb[0].mxu0 %v2599
  %v4647 = vpop.f32.mrb[0].mxu0
  %v4648 = vadd.f32 %v560, %v4647
  %v4649 = vpop.f32.mrb[0].mxu0
  %v4650 = vpop.f32.mrb[0].mxu0
  %v4651 = vadd.f32 %v560, %v4650
  %v4652 = vpop.f32.mrb[0].mxu0
  %4653 = vmatprep.mubr.bf16.mxu0 0
  %4654 = vmatmul.mubr.bf16.gmra.mrb[0].mxu0 %v2602
  %v4655 = vpop.f32.mrb[0].mxu0
  %v4656 = vadd.f32 %v560, %v4655
  %v4657 = vpop.f32.mrb[0].mxu0
  %v4658 = vpop.f32.mrb[0].mxu0
  %v4659 = vadd.f32 %v560, %v4658
  %v4660 = vpop.f32.mrb[0].mxu0
  %4661 = vmatprep.mubr.bf16.mxu0 0
  %4662 = vmatmul.mubr.bf16.gmra.mrb[0].mxu0 %v2605
  %v4663 = vpop.f32.mrb[0].mxu0
  %v4664 = vadd.f32 %v560, %v4663
  %v4665 = vpop.f32.mrb[0].mxu0
  %v4666 = vpop.f32.mrb[0].mxu0
  %v4667 = vadd.f32 %v560, %v4666
  %v4668 = vpop.f32.mrb[0].mxu0
  %4669 = vmatprep.mubr.bf16.mxu0 0
  %4670 = vmatmul.mubr.bf16.gmra.mrb[0].mxu0 %v2608
  %v4671 = vpop.f32.mrb[0].mxu0
  %v4672 = vadd.f32 %v560, %v4671
  %v4673 = vpop.f32.mrb[0].mxu0
  %v4674 = vpop.f32.mrb[0].mxu0
  %v4675 = vadd.f32 %v560, %v4674
  %v4676 = vpop.f32.mrb[0].mxu0
  %4677 = vmatprep.mubr.bf16.mxu0 0
  %4678 = vmatmul.mubr.bf16.gmra.mrb[0].mxu0 %v2611
  %v4679 = vpop.f32.mrb[0].mxu0
  %v4680 = vadd.f32 %v560, %v4679
  %v4681 = vpop.f32.mrb[0].mxu0
  %v4682 = vpop.f32.mrb[0].mxu0
  %v4683 = vadd.f32 %v560, %v4682
  %v4684 = vpop.f32.mrb[0].mxu0
  %4685 = vmatprep.mubr.bf16.mxu0 0
  %4686 = vmatmul.mubr.bf16.gmra.mrb[0].mxu0 %v2614
  %v4687 = vpop.f32.mrb[0].mxu0
  %v4688 = vadd.f32 %v560, %v4687
  %v4689 = vpop.f32.mrb[0].mxu0
  %v4690 = vpop.f32.mrb[0].mxu0
  %v4691 = vadd.f32 %v560, %v4690
  %v4692 = vpop.f32.mrb[0].mxu0
  %4693 = vmatprep.mubr.bf16.mxu0 0
  %4694 = vmatmul.mubr.bf16.gmra.mrb[0].mxu0 %v2617
  %v4695 = vpop.f32.mrb[0].mxu0
  %v4696 = vadd.f32 %v560, %v4695
  %v4697 = vpop.f32.mrb[0].mxu0
  %v4698 = vpop.f32.mrb[0].mxu0
  %v4699 = vadd.f32 %v560, %v4698
  %v4700 = vpop.f32.mrb[0].mxu0
  %4701 = vmatprep.mubr.bf16.mxu0 0
  %4702 = vmatmul.mubr.bf16.gmra.mrb[0].mxu0 %v2620
  %v4703 = vpop.f32.mrb[0].mxu0
  %v4704 = vadd.f32 %v560, %v4703
  %v4705 = vpop.f32.mrb[0].mxu0
  %v4706 = vpop.f32.mrb[0].mxu0
  %v4707 = vadd.f32 %v560, %v4706
  %v4708 = vpop.f32.mrb[0].mxu0
  %4709 = vdwg.mxu0
  %v4710 = vmax.f32 %v2664, 0.0
  %v4711 = vmax.f32 %v2667, 0.0
  %v4712 = vmax.f32 %v2672, 0.0
  %v4713 = vmax.f32 %v2675, 0.0
  %v4714 = vmax.f32 %v2680, 0.0
  %v4715 = vmax.f32 %v2683, 0.0
  %v4716 = vmax.f32 %v2688, 0.0
  %v4717 = vmax.f32 %v2691, 0.0
  %v4718 = vmax.f32 %v2696, 0.0
  %v4719 = vmax.f32 %v2699, 0.0
  %v4720 = vmax.f32 %v2704, 0.0
  %v4721 = vmax.f32 %v2707, 0.0
  %v4722 = vmax.f32 %v2712, 0.0
  %v4723 = vmax.f32 %v2715, 0.0
  %v4724 = vmax.f32 %v2720, 0.0
  %v4725 = vmax.f32 %v2723, 0.0
  %v4726 = vmax.f32 %v2728, 0.0
  %v4727 = vmax.f32 %v2731, 0.0
  %v4728 = vmax.f32 %v2736, 0.0
  %v4729 = vmax.f32 %v2739, 0.0
  %v4730 = vmax.f32 %v2744, 0.0
  %v4731 = vmax.f32 %v2747, 0.0
  %v4732 = vmax.f32 %v2752, 0.0
  %v4733 = vmax.f32 %v2755, 0.0
  %v4734 = vmax.f32 %v2760, 0.0
  %v4735 = vmax.f32 %v2763, 0.0
  %v4736 = vmax.f32 %v2768, 0.0
  %v4737 = vmax.f32 %v2771, 0.0
  %v4738 = vmax.f32 %v2776, 0.0
  %v4739 = vmax.f32 %v2779, 0.0
  %v4740 = vmax.f32 %v2784, 0.0
  %v4741 = vmax.f32 %v2787, 0.0
  %v4742 = vmax.f32 %v2792, 0.0
  %v4743 = vmax.f32 %v2795, 0.0
  %v4744 = vmax.f32 %v2800, 0.0
  %v4745 = vmax.f32 %v2803, 0.0
  %v4746 = vmax.f32 %v2808, 0.0
  %v4747 = vmax.f32 %v2811, 0.0
  %v4748 = vmax.f32 %v2816, 0.0
  %v4749 = vmax.f32 %v2819, 0.0
  %v4750 = vmax.f32 %v2824, 0.0
  %v4751 = vmax.f32 %v2827, 0.0
  %v4752 = vmax.f32 %v2832, 0.0
  %v4753 = vmax.f32 %v2835, 0.0
  %v4754 = vmax.f32 %v2840, 0.0
  %v4755 = vmax.f32 %v2843, 0.0
  %v4756 = vmax.f32 %v2848, 0.0
  %v4757 = vmax.f32 %v2851, 0.0
  %v4758 = vmax.f32 %v2856, 0.0
  %v4759 = vmax.f32 %v2859, 0.0
  %v4760 = vmax.f32 %v2864, 0.0
  %v4761 = vmax.f32 %v2867, 0.0
  %v4762 = vmax.f32 %v2872, 0.0
  %v4763 = vmax.f32 %v2875, 0.0
  %v4764 = vmax.f32 %v2880, 0.0
  %v4765 = vmax.f32 %v2883, 0.0
  %v4766 = vmax.f32 %v2888, 0.0
  %v4767 = vmax.f32 %v2891, 0.0
  %v4768 = vmax.f32 %v2896, 0.0
  %v4769 = vmax.f32 %v2899, 0.0
  %v4770 = vmax.f32 %v2904, 0.0
  %v4771 = vmax.f32 %v2907, 0.0
  %v4772 = vmax.f32 %v2912, 0.0
  %v4773 = vmax.f32 %v2915, 0.0
  %v4774 = vmax.f32 %v2920, 0.0
  %v4775 = vmax.f32 %v2923, 0.0
  %v4776 = vmax.f32 %v2928, 0.0
  %v4777 = vmax.f32 %v2931, 0.0
  %v4778 = vmax.f32 %v2936, 0.0
  %v4779 = vmax.f32 %v2939, 0.0
  %v4780 = vmax.f32 %v2944, 0.0
  %v4781 = vmax.f32 %v2947, 0.0
  %v4782 = vmax.f32 %v2952, 0.0
  %v4783 = vmax.f32 %v2955, 0.0
  %v4784 = vmax.f32 %v2960, 0.0
  %v4785 = vmax.f32 %v2963, 0.0
  %v4786 = vmax.f32 %v2968, 0.0
  %v4787 = vmax.f32 %v2971, 0.0
  %v4788 = vmax.f32 %v2976, 0.0
  %v4789 = vmax.f32 %v2979, 0.0
  %v4790 = vmax.f32 %v2984, 0.0
  %v4791 = vmax.f32 %v2987, 0.0
  %v4792 = vmax.f32 %v2992, 0.0
  %v4793 = vmax.f32 %v2995, 0.0
  %v4794 = vmax.f32 %v3000, 0.0
  %v4795 = vmax.f32 %v3003, 0.0
  %v4796 = vmax.f32 %v3008, 0.0
  %v4797 = vmax.f32 %v3011, 0.0
  %v4798 = vmax.f32 %v3016, 0.0
  %v4799 = vmax.f32 %v3019, 0.0
  %v4800 = vmax.f32 %v3024, 0.0
  %v4801 = vmax.f32 %v3027, 0.0
  %v4802 = vmax.f32 %v3032, 0.0
  %v4803 = vmax.f32 %v3035, 0.0
  %v4804 = vmax.f32 %v3040, 0.0
  %v4805 = vmax.f32 %v3043, 0.0
  %v4806 = vmax.f32 %v3048, 0.0
  %v4807 = vmax.f32 %v3051, 0.0
  %v4808 = vmax.f32 %v3056, 0.0
  %v4809 = vmax.f32 %v3059, 0.0
  %v4810 = vmax.f32 %v3064, 0.0
  %v4811 = vmax.f32 %v3067, 0.0
  %v4812 = vmax.f32 %v3072, 0.0
  %v4813 = vmax.f32 %v3075, 0.0
  %v4814 = vmax.f32 %v3080, 0.0
  %v4815 = vmax.f32 %v3083, 0.0
  %v4816 = vmax.f32 %v3088, 0.0
  %v4817 = vmax.f32 %v3091, 0.0
  %v4818 = vmax.f32 %v3096, 0.0
  %v4819 = vmax.f32 %v3099, 0.0
  %v4820 = vmax.f32 %v3104, 0.0
  %v4821 = vmax.f32 %v3107, 0.0
  %v4822 = vmax.f32 %v3112, 0.0
  %v4823 = vmax.f32 %v3115, 0.0
  %v4824 = vmax.f32 %v3120, 0.0
  %v4825 = vmax.f32 %v3123, 0.0
  %v4826 = vmax.f32 %v3128, 0.0
  %v4827 = vmax.f32 %v3131, 0.0
  %v4828 = vmax.f32 %v3136, 0.0
  %v4829 = vmax.f32 %v3139, 0.0
  %v4830 = vmax.f32 %v3144, 0.0
  %v4831 = vmax.f32 %v3147, 0.0
  %v4832 = vmax.f32 %v3152, 0.0
  %v4833 = vmax.f32 %v3155, 0.0
  %v4834 = vmax.f32 %v3160, 0.0
  %v4835 = vmax.f32 %v3163, 0.0
  %v4836 = vmax.f32 %v3168, 0.0
  %v4837 = vmax.f32 %v3171, 0.0
  %v4838 = vmax.f32 %v3176, 0.0
  %v4839 = vmax.f32 %v3179, 0.0
  %v4840 = vmax.f32 %v3184, 0.0
  %v4841 = vmax.f32 %v3187, 0.0
  %v4842 = vmax.f32 %v3192, 0.0
  %v4843 = vmax.f32 %v3195, 0.0
  %v4844 = vmax.f32 %v3200, 0.0
  %v4845 = vmax.f32 %v3203, 0.0
  %v4846 = vmax.f32 %v3208, 0.0
  %v4847 = vmax.f32 %v3211, 0.0
  %v4848 = vmax.f32 %v3216, 0.0
  %v4849 = vmax.f32 %v3219, 0.0
  %v4850 = vmax.f32 %v3224, 0.0
  %v4851 = vmax.f32 %v3227, 0.0
  %v4852 = vmax.f32 %v3232, 0.0
  %v4853 = vmax.f32 %v3235, 0.0
  %v4854 = vmax.f32 %v3240, 0.0
  %v4855 = vmax.f32 %v3243, 0.0
  %v4856 = vmax.f32 %v3248, 0.0
  %v4857 = vmax.f32 %v3251, 0.0
  %v4858 = vmax.f32 %v3256, 0.0
  %v4859 = vmax.f32 %v3259, 0.0
  %v4860 = vmax.f32 %v3264, 0.0
  %v4861 = vmax.f32 %v3267, 0.0
  %v4862 = vmax.f32 %v3272, 0.0
  %v4863 = vmax.f32 %v3275, 0.0
  %v4864 = vmax.f32 %v3280, 0.0
  %v4865 = vmax.f32 %v3283, 0.0
  %v4866 = vmax.f32 %v3288, 0.0
  %v4867 = vmax.f32 %v3291, 0.0
  %v4868 = vmax.f32 %v3296, 0.0
  %v4869 = vmax.f32 %v3299, 0.0
  %v4870 = vmax.f32 %v3304, 0.0
  %v4871 = vmax.f32 %v3307, 0.0
  %v4872 = vmax.f32 %v3312, 0.0
  %v4873 = vmax.f32 %v3315, 0.0
  %v4874 = vmax.f32 %v3320, 0.0
  %v4875 = vmax.f32 %v3323, 0.0
  %v4876 = vmax.f32 %v3328, 0.0
  %v4877 = vmax.f32 %v3331, 0.0
  %v4878 = vmax.f32 %v3336, 0.0
  %v4879 = vmax.f32 %v3339, 0.0
  %v4880 = vmax.f32 %v3344, 0.0
  %v4881 = vmax.f32 %v3347, 0.0
  %v4882 = vmax.f32 %v3352, 0.0
  %v4883 = vmax.f32 %v3355, 0.0
  %v4884 = vmax.f32 %v3360, 0.0
  %v4885 = vmax.f32 %v3363, 0.0
  %v4886 = vmax.f32 %v3368, 0.0
  %v4887 = vmax.f32 %v3371, 0.0
  %v4888 = vmax.f32 %v3376, 0.0
  %v4889 = vmax.f32 %v3379, 0.0
  %v4890 = vmax.f32 %v3384, 0.0
  %v4891 = vmax.f32 %v3387, 0.0
  %v4892 = vmax.f32 %v3392, 0.0
  %v4893 = vmax.f32 %v3395, 0.0
  %v4894 = vmax.f32 %v3400, 0.0
  %v4895 = vmax.f32 %v3403, 0.0
  %v4896 = vmax.f32 %v3408, 0.0
  %v4897 = vmax.f32 %v3411, 0.0
  %v4898 = vmax.f32 %v3416, 0.0
  %v4899 = vmax.f32 %v3419, 0.0
  %v4900 = vmax.f32 %v3424, 0.0
  %v4901 = vmax.f32 %v3427, 0.0
  %v4902 = vmax.f32 %v3432, 0.0
  %v4903 = vmax.f32 %v3435, 0.0
  %v4904 = vmax.f32 %v3440, 0.0
  %v4905 = vmax.f32 %v3443, 0.0
  %v4906 = vmax.f32 %v3448, 0.0
  %v4907 = vmax.f32 %v3451, 0.0
  %v4908 = vmax.f32 %v3456, 0.0
  %v4909 = vmax.f32 %v3459, 0.0
  %v4910 = vmax.f32 %v3464, 0.0
  %v4911 = vmax.f32 %v3467, 0.0
  %v4912 = vmax.f32 %v3472, 0.0
  %v4913 = vmax.f32 %v3475, 0.0
  %v4914 = vmax.f32 %v3480, 0.0
  %v4915 = vmax.f32 %v3483, 0.0
  %v4916 = vmax.f32 %v3488, 0.0
  %v4917 = vmax.f32 %v3491, 0.0
  %v4918 = vmax.f32 %v3496, 0.0
  %v4919 = vmax.f32 %v3499, 0.0
  %v4920 = vmax.f32 %v3504, 0.0
  %v4921 = vmax.f32 %v3507, 0.0
  %v4922 = vmax.f32 %v3512, 0.0
  %v4923 = vmax.f32 %v3515, 0.0
  %v4924 = vmax.f32 %v3520, 0.0
  %v4925 = vmax.f32 %v3523, 0.0
  %v4926 = vmax.f32 %v3528, 0.0
  %v4927 = vmax.f32 %v3531, 0.0
  %v4928 = vmax.f32 %v3536, 0.0
  %v4929 = vmax.f32 %v3539, 0.0
  %v4930 = vmax.f32 %v3544, 0.0
  %v4931 = vmax.f32 %v3547, 0.0
  %v4932 = vmax.f32 %v3552, 0.0
  %v4933 = vmax.f32 %v3555, 0.0
  %v4934 = vmax.f32 %v3560, 0.0
  %v4935 = vmax.f32 %v3563, 0.0
  %v4936 = vmax.f32 %v3568, 0.0
  %v4937 = vmax.f32 %v3571, 0.0
  %v4938 = vmax.f32 %v3576, 0.0
  %v4939 = vmax.f32 %v3579, 0.0
  %v4940 = vmax.f32 %v3584, 0.0
  %v4941 = vmax.f32 %v3587, 0.0
  %v4942 = vmax.f32 %v3592, 0.0
  %v4943 = vmax.f32 %v3595, 0.0
  %v4944 = vmax.f32 %v3600, 0.0
  %v4945 = vmax.f32 %v3603, 0.0
  %v4946 = vmax.f32 %v3608, 0.0
  %v4947 = vmax.f32 %v3611, 0.0
  %v4948 = vmax.f32 %v3616, 0.0
  %v4949 = vmax.f32 %v3619, 0.0
  %v4950 = vmax.f32 %v3624, 0.0
  %v4951 = vmax.f32 %v3627, 0.0
  %v4952 = vmax.f32 %v3632, 0.0
  %v4953 = vmax.f32 %v3635, 0.0
  %v4954 = vmax.f32 %v3640, 0.0
  %v4955 = vmax.f32 %v3643, 0.0
  %v4956 = vmax.f32 %v3648, 0.0
  %v4957 = vmax.f32 %v3651, 0.0
  %v4958 = vmax.f32 %v3656, 0.0
  %v4959 = vmax.f32 %v3659, 0.0
  %v4960 = vmax.f32 %v3664, 0.0
  %v4961 = vmax.f32 %v3667, 0.0
  %v4962 = vmax.f32 %v3672, 0.0
  %v4963 = vmax.f32 %v3675, 0.0
  %v4964 = vmax.f32 %v3680, 0.0
  %v4965 = vmax.f32 %v3683, 0.0
  %v4966 = vmax.f32 %v3688, 0.0
  %v4967 = vmax.f32 %v3691, 0.0
  %v4968 = vmax.f32 %v3696, 0.0
  %v4969 = vmax.f32 %v3699, 0.0
  %v4970 = vmax.f32 %v3704, 0.0
  %v4971 = vmax.f32 %v3707, 0.0
  %v4972 = vmax.f32 %v3712, 0.0
  %v4973 = vmax.f32 %v3715, 0.0
  %v4974 = vmax.f32 %v3720, 0.0
  %v4975 = vmax.f32 %v3723, 0.0
  %v4976 = vmax.f32 %v3728, 0.0
  %v4977 = vmax.f32 %v3731, 0.0
  %v4978 = vmax.f32 %v3736, 0.0
  %v4979 = vmax.f32 %v3739, 0.0
  %v4980 = vmax.f32 %v3744, 0.0
  %v4981 = vmax.f32 %v3747, 0.0
  %v4982 = vmax.f32 %v3752, 0.0
  %v4983 = vmax.f32 %v3755, 0.0
  %v4984 = vmax.f32 %v3760, 0.0
  %v4985 = vmax.f32 %v3763, 0.0
  %v4986 = vmax.f32 %v3768, 0.0
  %v4987 = vmax.f32 %v3771, 0.0
  %v4988 = vmax.f32 %v3776, 0.0
  %v4989 = vmax.f32 %v3779, 0.0
  %v4990 = vmax.f32 %v3784, 0.0
  %v4991 = vmax.f32 %v3787, 0.0
  %v4992 = vmax.f32 %v3792, 0.0
  %v4993 = vmax.f32 %v3795, 0.0
  %v4994 = vmax.f32 %v3800, 0.0
  %v4995 = vmax.f32 %v3803, 0.0
  %v4996 = vmax.f32 %v3808, 0.0
  %v4997 = vmax.f32 %v3811, 0.0
  %v4998 = vmax.f32 %v3816, 0.0
  %v4999 = vmax.f32 %v3819, 0.0
  %v5000 = vmax.f32 %v3824, 0.0
  %v5001 = vmax.f32 %v3827, 0.0
  %v5002 = vmax.f32 %v3832, 0.0
  %v5003 = vmax.f32 %v3835, 0.0
  %v5004 = vmax.f32 %v3840, 0.0
  %v5005 = vmax.f32 %v3843, 0.0
  %v5006 = vmax.f32 %v3848, 0.0
  %v5007 = vmax.f32 %v3851, 0.0
  %v5008 = vmax.f32 %v3856, 0.0
  %v5009 = vmax.f32 %v3859, 0.0
  %v5010 = vmax.f32 %v3864, 0.0
  %v5011 = vmax.f32 %v3867, 0.0
  %v5012 = vmax.f32 %v3872, 0.0
  %v5013 = vmax.f32 %v3875, 0.0
  %v5014 = vmax.f32 %v3880, 0.0
  %v5015 = vmax.f32 %v3883, 0.0
  %v5016 = vmax.f32 %v3888, 0.0
  %v5017 = vmax.f32 %v3891, 0.0
  %v5018 = vmax.f32 %v3896, 0.0
  %v5019 = vmax.f32 %v3899, 0.0
  %v5020 = vmax.f32 %v3904, 0.0
  %v5021 = vmax.f32 %v3907, 0.0
  %v5022 = vmax.f32 %v3912, 0.0
  %v5023 = vmax.f32 %v3915, 0.0
  %v5024 = vmax.f32 %v3920, 0.0
  %v5025 = vmax.f32 %v3923, 0.0
  %v5026 = vmax.f32 %v3928, 0.0
  %v5027 = vmax.f32 %v3931, 0.0
  %v5028 = vmax.f32 %v3936, 0.0
  %v5029 = vmax.f32 %v3939, 0.0
  %v5030 = vmax.f32 %v3944, 0.0
  %v5031 = vmax.f32 %v3947, 0.0
  %v5032 = vmax.f32 %v3952, 0.0
  %v5033 = vmax.f32 %v3955, 0.0
  %v5034 = vmax.f32 %v3960, 0.0
  %v5035 = vmax.f32 %v3963, 0.0
  %v5036 = vmax.f32 %v3968, 0.0
  %v5037 = vmax.f32 %v3971, 0.0
  %v5038 = vmax.f32 %v3976, 0.0
  %v5039 = vmax.f32 %v3979, 0.0
  %v5040 = vmax.f32 %v3984, 0.0
  %v5041 = vmax.f32 %v3987, 0.0
  %v5042 = vmax.f32 %v3992, 0.0
  %v5043 = vmax.f32 %v3995, 0.0
  %v5044 = vmax.f32 %v4000, 0.0
  %v5045 = vmax.f32 %v4003, 0.0
  %v5046 = vmax.f32 %v4008, 0.0
  %v5047 = vmax.f32 %v4011, 0.0
  %v5048 = vmax.f32 %v4016, 0.0
  %v5049 = vmax.f32 %v4019, 0.0
  %v5050 = vmax.f32 %v4024, 0.0
  %v5051 = vmax.f32 %v4027, 0.0
  %v5052 = vmax.f32 %v4032, 0.0
  %v5053 = vmax.f32 %v4035, 0.0
  %v5054 = vmax.f32 %v4040, 0.0
  %v5055 = vmax.f32 %v4043, 0.0
  %v5056 = vmax.f32 %v4048, 0.0
  %v5057 = vmax.f32 %v4051, 0.0
  %v5058 = vmax.f32 %v4056, 0.0
  %v5059 = vmax.f32 %v4059, 0.0
  %v5060 = vmax.f32 %v4064, 0.0
  %v5061 = vmax.f32 %v4067, 0.0
  %v5062 = vmax.f32 %v4072, 0.0
  %v5063 = vmax.f32 %v4075, 0.0
  %v5064 = vmax.f32 %v4080, 0.0
  %v5065 = vmax.f32 %v4083, 0.0
  %v5066 = vmax.f32 %v4088, 0.0
  %v5067 = vmax.f32 %v4091, 0.0
  %v5068 = vmax.f32 %v4096, 0.0
  %v5069 = vmax.f32 %v4099, 0.0
  %v5070 = vmax.f32 %v4104, 0.0
  %v5071 = vmax.f32 %v4107, 0.0
  %v5072 = vmax.f32 %v4112, 0.0
  %v5073 = vmax.f32 %v4115, 0.0
  %v5074 = vmax.f32 %v4120, 0.0
  %v5075 = vmax.f32 %v4123, 0.0
  %v5076 = vmax.f32 %v4128, 0.0
  %v5077 = vmax.f32 %v4131, 0.0
  %v5078 = vmax.f32 %v4136, 0.0
  %v5079 = vmax.f32 %v4139, 0.0
  %v5080 = vmax.f32 %v4144, 0.0
  %v5081 = vmax.f32 %v4147, 0.0
  %v5082 = vmax.f32 %v4152, 0.0
  %v5083 = vmax.f32 %v4155, 0.0
  %v5084 = vmax.f32 %v4160, 0.0
  %v5085 = vmax.f32 %v4163, 0.0
  %v5086 = vmax.f32 %v4168, 0.0
  %v5087 = vmax.f32 %v4171, 0.0
  %v5088 = vmax.f32 %v4176, 0.0
  %v5089 = vmax.f32 %v4179, 0.0
  %v5090 = vmax.f32 %v4184, 0.0
  %v5091 = vmax.f32 %v4187, 0.0
  %v5092 = vmax.f32 %v4192, 0.0
  %v5093 = vmax.f32 %v4195, 0.0
  %v5094 = vmax.f32 %v4200, 0.0
  %v5095 = vmax.f32 %v4203, 0.0
  %v5096 = vmax.f32 %v4208, 0.0
  %v5097 = vmax.f32 %v4211, 0.0
  %v5098 = vmax.f32 %v4216, 0.0
  %v5099 = vmax.f32 %v4219, 0.0
  %v5100 = vmax.f32 %v4224, 0.0
  %v5101 = vmax.f32 %v4227, 0.0
  %v5102 = vmax.f32 %v4232, 0.0
  %v5103 = vmax.f32 %v4235, 0.0
  %v5104 = vmax.f32 %v4240, 0.0
  %v5105 = vmax.f32 %v4243, 0.0
  %v5106 = vmax.f32 %v4248, 0.0
  %v5107 = vmax.f32 %v4251, 0.0
  %v5108 = vmax.f32 %v4256, 0.0
  %v5109 = vmax.f32 %v4259, 0.0
  %v5110 = vmax.f32 %v4264, 0.0
  %v5111 = vmax.f32 %v4267, 0.0
  %v5112 = vmax.f32 %v4272, 0.0
  %v5113 = vmax.f32 %v4275, 0.0
  %v5114 = vmax.f32 %v4280, 0.0
  %v5115 = vmax.f32 %v4283, 0.0
  %v5116 = vmax.f32 %v4288, 0.0
  %v5117 = vmax.f32 %v4291, 0.0
  %v5118 = vmax.f32 %v4296, 0.0
  %v5119 = vmax.f32 %v4299, 0.0
  %v5120 = vmax.f32 %v4304, 0.0
  %v5121 = vmax.f32 %v4307, 0.0
  %v5122 = vmax.f32 %v4312, 0.0
  %v5123 = vmax.f32 %v4315, 0.0
  %v5124 = vmax.f32 %v4320, 0.0
  %v5125 = vmax.f32 %v4323, 0.0
  %v5126 = vmax.f32 %v4328, 0.0
  %v5127 = vmax.f32 %v4331, 0.0
  %v5128 = vmax.f32 %v4336, 0.0
  %v5129 = vmax.f32 %v4339, 0.0
  %v5130 = vmax.f32 %v4344, 0.0
  %v5131 = vmax.f32 %v4347, 0.0
  %v5132 = vmax.f32 %v4352, 0.0
  %v5133 = vmax.f32 %v4355, 0.0
  %v5134 = vmax.f32 %v4360, 0.0
  %v5135 = vmax.f32 %v4363, 0.0
  %v5136 = vmax.f32 %v4368, 0.0
  %v5137 = vmax.f32 %v4371, 0.0
  %v5138 = vmax.f32 %v4376, 0.0
  %v5139 = vmax.f32 %v4379, 0.0
  %v5140 = vmax.f32 %v4384, 0.0
  %v5141 = vmax.f32 %v4387, 0.0
  %v5142 = vmax.f32 %v4392, 0.0
  %v5143 = vmax.f32 %v4395, 0.0
  %v5144 = vmax.f32 %v4400, 0.0
  %v5145 = vmax.f32 %v4403, 0.0
  %v5146 = vmax.f32 %v4408, 0.0
  %v5147 = vmax.f32 %v4411, 0.0
  %v5148 = vmax.f32 %v4416, 0.0
  %v5149 = vmax.f32 %v4419, 0.0
  %v5150 = vmax.f32 %v4424, 0.0
  %v5151 = vmax.f32 %v4427, 0.0
  %v5152 = vmax.f32 %v4432, 0.0
  %v5153 = vmax.f32 %v4435, 0.0
  %v5154 = vmax.f32 %v4440, 0.0
  %v5155 = vmax.f32 %v4443, 0.0
  %v5156 = vmax.f32 %v4448, 0.0
  %v5157 = vmax.f32 %v4451, 0.0
  %v5158 = vmax.f32 %v4456, 0.0
  %v5159 = vmax.f32 %v4459, 0.0
  %v5160 = vmax.f32 %v4464, 0.0
  %v5161 = vmax.f32 %v4467, 0.0
  %v5162 = vmax.f32 %v4472, 0.0
  %v5163 = vmax.f32 %v4475, 0.0
  %v5164 = vmax.f32 %v4480, 0.0
  %v5165 = vmax.f32 %v4483, 0.0
  %v5166 = vmax.f32 %v4488, 0.0
  %v5167 = vmax.f32 %v4491, 0.0
  %v5168 = vmax.f32 %v4496, 0.0
  %v5169 = vmax.f32 %v4499, 0.0
  %v5170 = vmax.f32 %v4504, 0.0
  %v5171 = vmax.f32 %v4507, 0.0
  %v5172 = vmax.f32 %v4512, 0.0
  %v5173 = vmax.f32 %v4515, 0.0
  %v5174 = vmax.f32 %v4520, 0.0
  %v5175 = vmax.f32 %v4523, 0.0
  %v5176 = vmax.f32 %v4528, 0.0
  %v5177 = vmax.f32 %v4531, 0.0
  %v5178 = vmax.f32 %v4536, 0.0
  %v5179 = vmax.f32 %v4539, 0.0
  %v5180 = vmax.f32 %v4544, 0.0
  %v5181 = vmax.f32 %v4547, 0.0
  %v5182 = vmax.f32 %v4552, 0.0
  %v5183 = vmax.f32 %v4555, 0.0
  %v5184 = vmax.f32 %v4560, 0.0
  %v5185 = vmax.f32 %v4563, 0.0
  %v5186 = vmax.f32 %v4568, 0.0
  %v5187 = vmax.f32 %v4571, 0.0
  %v5188 = vmax.f32 %v4576, 0.0
  %v5189 = vmax.f32 %v4579, 0.0
  %v5190 = vmax.f32 %v4584, 0.0
  %v5191 = vmax.f32 %v4587, 0.0
  %v5192 = vmax.f32 %v4592, 0.0
  %v5193 = vmax.f32 %v4595, 0.0
  %v5194 = vmax.f32 %v4600, 0.0
  %v5195 = vmax.f32 %v4603, 0.0
  %v5196 = vmax.f32 %v4608, 0.0
  %v5197 = vmax.f32 %v4611, 0.0
  %v5198 = vmax.f32 %v4616, 0.0
  %v5199 = vmax.f32 %v4619, 0.0
  %v5200 = vmax.f32 %v4624, 0.0
  %v5201 = vmax.f32 %v4627, 0.0
  %v5202 = vmax.f32 %v4632, 0.0
  %v5203 = vmax.f32 %v4635, 0.0
  %v5204 = vmax.f32 %v4640, 0.0
  %v5205 = vmax.f32 %v4643, 0.0
  %v5206 = vmax.f32 %v4648, 0.0
  %v5207 = vmax.f32 %v4651, 0.0
  %v5208 = vmax.f32 %v4656, 0.0
  %v5209 = vmax.f32 %v4659, 0.0
  %v5210 = vmax.f32 %v4664, 0.0
  %v5211 = vmax.f32 %v4667, 0.0
  %v5212 = vmax.f32 %v4672, 0.0
  %v5213 = vmax.f32 %v4675, 0.0
  %v5214 = vmax.f32 %v4680, 0.0
  %v5215 = vmax.f32 %v4683, 0.0
  %v5216 = vmax.f32 %v4688, 0.0
  %v5217 = vmax.f32 %v4691, 0.0
  %v5218 = vmax.f32 %v4696, 0.0
  %v5219 = vmax.f32 %v4699, 0.0
  %v5220 = vmax.f32 %v4704, 0.0
  %v5221 = vmax.f32 %v4707, 0.0
  %v5222 = vld [vmem:[%s1] sm:$0xff]
  %v5223 = vld [vmem:[%s1 + $0x8] sm:$0xff]
  %v5224 = vld [vmem:[%s1 + $0x10] sm:$0xff]
  %v5225 = vld [vmem:[%s1 + $0x18] sm:$0xff]
  %v5226 = vld [vmem:[%s1 + $0x20] sm:$0xff]
  %v5227 = vld [vmem:[%s1 + $0x28] sm:$0xff]
  %v5228 = vld [vmem:[%s1 + $0x30] sm:$0xff]
  %v5229 = vld [vmem:[%s1 + $0x38] sm:$0xff]
  %v5230 = vld [vmem:[%s1 + $0x40] sm:$0xff]
  %v5231 = vld [vmem:[%s1 + $0x48] sm:$0xff]
  %v5232 = vld [vmem:[%s1 + $0x50] sm:$0xff]
  %v5233 = vld [vmem:[%s1 + $0x58] sm:$0xff]
  %v5234 = vld [vmem:[%s1 + $0x60] sm:$0xff]
  %v5235 = vld [vmem:[%s1 + $0x68] sm:$0xff]
  %v5236 = vld [vmem:[%s1 + $0x70] sm:$0xff]
  %v5237 = vld [vmem:[%s1 + $0x78] sm:$0xff]
  %v5238 = vld [vmem:[%s1 + $0x80] sm:$0xff]
  %v5239 = vld [vmem:[%s1 + $0x88] sm:$0xff]
  %v5240 = vld [vmem:[%s1 + $0x90] sm:$0xff]
  %v5241 = vld [vmem:[%s1 + $0x98] sm:$0xff]
  %v5242 = vld [vmem:[%s1 + $0xa0] sm:$0xff]
  %v5243 = vld [vmem:[%s1 + $0xa8] sm:$0xff]
  %v5244 = vld [vmem:[%s1 + $0xb0] sm:$0xff]
  %v5245 = vld [vmem:[%s1 + $0xb8] sm:$0xff]
  %v5246 = vld [vmem:[%s1 + $0xc0] sm:$0xff]
  %v5247 = vld [vmem:[%s1 + $0xc8] sm:$0xff]
  %v5248 = vld [vmem:[%s1 + $0xd0] sm:$0xff]
  %v5249 = vld [vmem:[%s1 + $0xd8] sm:$0xff]
  %v5250 = vld [vmem:[%s1 + $0xe0] sm:$0xff]
  %v5251 = vld [vmem:[%s1 + $0xe8] sm:$0xff]
  %v5252 = vld [vmem:[%s1 + $0xf0] sm:$0xff]
  %v5253 = vld [vmem:[%s1 + $0xf8] sm:$0xff]
  %v5254 = vpack.c.bf16 %v4711, %v4710
  %v5255 = vpack.c.bf16 %v4713, %v4712
  %v5256 = vpack.c.bf16 %v4715, %v4714
  %v5257 = vpack.c.bf16 %v4717, %v4716
  %v5258 = vpack.c.bf16 %v4719, %v4718
  %v5259 = vpack.c.bf16 %v4721, %v4720
  %v5260 = vpack.c.bf16 %v4723, %v4722
  %v5261 = vpack.c.bf16 %v4725, %v4724
  %v5262 = vpack.c.bf16 %v4727, %v4726
  %v5263 = vpack.c.bf16 %v4729, %v4728
  %v5264 = vpack.c.bf16 %v4731, %v4730
  %v5265 = vpack.c.bf16 %v4733, %v4732
  %v5266 = vpack.c.bf16 %v4735, %v4734
  %v5267 = vpack.c.bf16 %v4737, %v4736
  %v5268 = vpack.c.bf16 %v4739, %v4738
  %v5269 = vpack.c.bf16 %v4741, %v4740
  %v5270 = vpack.c.bf16 %v4743, %v4742
  %v5271 = vpack.c.bf16 %v4745, %v4744
  %v5272 = vpack.c.bf16 %v4747, %v4746
  %v5273 = vpack.c.bf16 %v4749, %v4748
  %v5274 = vpack.c.bf16 %v4751, %v4750
  %v5275 = vpack.c.bf16 %v4753, %v4752
  %v5276 = vpack.c.bf16 %v4755, %v4754
  %v5277 = vpack.c.bf16 %v4757, %v4756
  %v5278 = vpack.c.bf16 %v4759, %v4758
  %v5279 = vpack.c.bf16 %v4761, %v4760
  %v5280 = vpack.c.bf16 %v4763, %v4762
  %v5281 = vpack.c.bf16 %v4765, %v4764
  %v5282 = vpack.c.bf16 %v4767, %v4766
  %v5283 = vpack.c.bf16 %v4769, %v4768
  %v5284 = vpack.c.bf16 %v4771, %v4770
  %v5285 = vpack.c.bf16 %v4773, %v4772
  %v5286 = vpack.c.bf16 %v4775, %v4774
  %v5287 = vpack.c.bf16 %v4777, %v4776
  %v5288 = vpack.c.bf16 %v4779, %v4778
  %v5289 = vpack.c.bf16 %v4781, %v4780
  %v5290 = vpack.c.bf16 %v4783, %v4782
  %v5291 = vpack.c.bf16 %v4785, %v4784
  %v5292 = vpack.c.bf16 %v4787, %v4786
  %v5293 = vpack.c.bf16 %v4789, %v4788
  %v5294 = vpack.c.bf16 %v4791, %v4790
  %v5295 = vpack.c.bf16 %v4793, %v4792
  %v5296 = vpack.c.bf16 %v4795, %v4794
  %v5297 = vpack.c.bf16 %v4797, %v4796
  %v5298 = vpack.c.bf16 %v4799, %v4798
  %v5299 = vpack.c.bf16 %v4801, %v4800
  %v5300 = vpack.c.bf16 %v4803, %v4802
  %v5301 = vpack.c.bf16 %v4805, %v4804
  %v5302 = vpack.c.bf16 %v4807, %v4806
  %v5303 = vpack.c.bf16 %v4809, %v4808
  %v5304 = vpack.c.bf16 %v4811, %v4810
  %v5305 = vpack.c.bf16 %v4813, %v4812
  %v5306 = vpack.c.bf16 %v4815, %v4814
  %v5307 = vpack.c.bf16 %v4817, %v4816
  %v5308 = vpack.c.bf16 %v4819, %v4818
  %v5309 = vpack.c.bf16 %v4821, %v4820
  %v5310 = vpack.c.bf16 %v4823, %v4822
  %v5311 = vpack.c.bf16 %v4825, %v4824
  %v5312 = vpack.c.bf16 %v4827, %v4826
  %v5313 = vpack.c.bf16 %v4829, %v4828
  %v5314 = vpack.c.bf16 %v4831, %v4830
  %v5315 = vpack.c.bf16 %v4833, %v4832
  %v5316 = vpack.c.bf16 %v4835, %v4834
  %v5317 = vpack.c.bf16 %v4837, %v4836
  %v5318 = vpack.c.bf16 %v4839, %v4838
  %v5319 = vpack.c.bf16 %v4841, %v4840
  %v5320 = vpack.c.bf16 %v4843, %v4842
  %v5321 = vpack.c.bf16 %v4845, %v4844
  %v5322 = vpack.c.bf16 %v4847, %v4846
  %v5323 = vpack.c.bf16 %v4849, %v4848
  %v5324 = vpack.c.bf16 %v4851, %v4850
  %v5325 = vpack.c.bf16 %v4853, %v4852
  %v5326 = vpack.c.bf16 %v4855, %v4854
  %v5327 = vpack.c.bf16 %v4857, %v4856
  %v5328 = vpack.c.bf16 %v4859, %v4858
  %v5329 = vpack.c.bf16 %v4861, %v4860
  %v5330 = vpack.c.bf16 %v4863, %v4862
  %v5331 = vpack.c.bf16 %v4865, %v4864
  %v5332 = vpack.c.bf16 %v4867, %v4866
  %v5333 = vpack.c.bf16 %v4869, %v4868
  %v5334 = vpack.c.bf16 %v4871, %v4870
  %v5335 = vpack.c.bf16 %v4873, %v4872
  %v5336 = vpack.c.bf16 %v4875, %v4874
  %v5337 = vpack.c.bf16 %v4877, %v4876
  %v5338 = vpack.c.bf16 %v4879, %v4878
  %v5339 = vpack.c.bf16 %v4881, %v4880
  %v5340 = vpack.c.bf16 %v4883, %v4882
  %v5341 = vpack.c.bf16 %v4885, %v4884
  %v5342 = vpack.c.bf16 %v4887, %v4886
  %v5343 = vpack.c.bf16 %v4889, %v4888
  %v5344 = vpack.c.bf16 %v4891, %v4890
  %v5345 = vpack.c.bf16 %v4893, %v4892
  %v5346 = vpack.c.bf16 %v4895, %v4894
  %v5347 = vpack.c.bf16 %v4897, %v4896
  %v5348 = vpack.c.bf16 %v4899, %v4898
  %v5349 = vpack.c.bf16 %v4901, %v4900
  %v5350 = vpack.c.bf16 %v4903, %v4902
  %v5351 = vpack.c.bf16 %v4905, %v4904
  %v5352 = vpack.c.bf16 %v4907, %v4906
  %v5353 = vpack.c.bf16 %v4909, %v4908
  %v5354 = vpack.c.bf16 %v4911, %v4910
  %v5355 = vpack.c.bf16 %v4913, %v4912
  %v5356 = vpack.c.bf16 %v4915, %v4914
  %v5357 = vpack.c.bf16 %v4917, %v4916
  %v5358 = vpack.c.bf16 %v4919, %v4918
  %v5359 = vpack.c.bf16 %v4921, %v4920
  %v5360 = vpack.c.bf16 %v4923, %v4922
  %v5361 = vpack.c.bf16 %v4925, %v4924
  %v5362 = vpack.c.bf16 %v4927, %v4926
  %v5363 = vpack.c.bf16 %v4929, %v4928
  %v5364 = vpack.c.bf16 %v4931, %v4930
  %v5365 = vpack.c.bf16 %v4933, %v4932
  %v5366 = vpack.c.bf16 %v4935, %v4934
  %v5367 = vpack.c.bf16 %v4937, %v4936
  %v5368 = vpack.c.bf16 %v4939, %v4938
  %v5369 = vpack.c.bf16 %v4941, %v4940
  %v5370 = vpack.c.bf16 %v4943, %v4942
  %v5371 = vpack.c.bf16 %v4945, %v4944
  %v5372 = vpack.c.bf16 %v4947, %v4946
  %v5373 = vpack.c.bf16 %v4949, %v4948
  %v5374 = vpack.c.bf16 %v4951, %v4950
  %v5375 = vpack.c.bf16 %v4953, %v4952
  %v5376 = vpack.c.bf16 %v4955, %v4954
  %v5377 = vpack.c.bf16 %v4957, %v4956
  %v5378 = vpack.c.bf16 %v4959, %v4958
  %v5379 = vpack.c.bf16 %v4961, %v4960
  %v5380 = vpack.c.bf16 %v4963, %v4962
  %v5381 = vpack.c.bf16 %v4965, %v4964
  %v5382 = vpack.c.bf16 %v4967, %v4966
  %v5383 = vpack.c.bf16 %v4969, %v4968
  %v5384 = vpack.c.bf16 %v4971, %v4970
  %v5385 = vpack.c.bf16 %v4973, %v4972
  %v5386 = vpack.c.bf16 %v4975, %v4974
  %v5387 = vpack.c.bf16 %v4977, %v4976
  %v5388 = vpack.c.bf16 %v4979, %v4978
  %v5389 = vpack.c.bf16 %v4981, %v4980
  %v5390 = vpack.c.bf16 %v4983, %v4982
  %v5391 = vpack.c.bf16 %v4985, %v4984
  %v5392 = vpack.c.bf16 %v4987, %v4986
  %v5393 = vpack.c.bf16 %v4989, %v4988
  %v5394 = vpack.c.bf16 %v4991, %v4990
  %v5395 = vpack.c.bf16 %v4993, %v4992
  %v5396 = vpack.c.bf16 %v4995, %v4994
  %v5397 = vpack.c.bf16 %v4997, %v4996
  %v5398 = vpack.c.bf16 %v4999, %v4998
  %v5399 = vpack.c.bf16 %v5001, %v5000
  %v5400 = vpack.c.bf16 %v5003, %v5002
  %v5401 = vpack.c.bf16 %v5005, %v5004
  %v5402 = vpack.c.bf16 %v5007, %v5006
  %v5403 = vpack.c.bf16 %v5009, %v5008
  %v5404 = vpack.c.bf16 %v5011, %v5010
  %v5405 = vpack.c.bf16 %v5013, %v5012
  %v5406 = vpack.c.bf16 %v5015, %v5014
  %v5407 = vpack.c.bf16 %v5017, %v5016
  %v5408 = vpack.c.bf16 %v5019, %v5018
  %v5409 = vpack.c.bf16 %v5021, %v5020
  %v5410 = vpack.c.bf16 %v5023, %v5022
  %v5411 = vpack.c.bf16 %v5025, %v5024
  %v5412 = vpack.c.bf16 %v5027, %v5026
  %v5413 = vpack.c.bf16 %v5029, %v5028
  %v5414 = vpack.c.bf16 %v5031, %v5030
  %v5415 = vpack.c.bf16 %v5033, %v5032
  %v5416 = vpack.c.bf16 %v5035, %v5034
  %v5417 = vpack.c.bf16 %v5037, %v5036
  %v5418 = vpack.c.bf16 %v5039, %v5038
  %v5419 = vpack.c.bf16 %v5041, %v5040
  %v5420 = vpack.c.bf16 %v5043, %v5042
  %v5421 = vpack.c.bf16 %v5045, %v5044
  %v5422 = vpack.c.bf16 %v5047, %v5046
  %v5423 = vpack.c.bf16 %v5049, %v5048
  %v5424 = vpack.c.bf16 %v5051, %v5050
  %v5425 = vpack.c.bf16 %v5053, %v5052
  %v5426 = vpack.c.bf16 %v5055, %v5054
  %v5427 = vpack.c.bf16 %v5057, %v5056
  %v5428 = vpack.c.bf16 %v5059, %v5058
  %v5429 = vpack.c.bf16 %v5061, %v5060
  %v5430 = vpack.c.bf16 %v5063, %v5062
  %v5431 = vpack.c.bf16 %v5065, %v5064
  %v5432 = vpack.c.bf16 %v5067, %v5066
  %v5433 = vpack.c.bf16 %v5069, %v5068
  %v5434 = vpack.c.bf16 %v5071, %v5070
  %v5435 = vpack.c.bf16 %v5073, %v5072
  %v5436 = vpack.c.bf16 %v5075, %v5074
  %v5437 = vpack.c.bf16 %v5077, %v5076
  %v5438 = vpack.c.bf16 %v5079, %v5078
  %v5439 = vpack.c.bf16 %v5081, %v5080
  %v5440 = vpack.c.bf16 %v5083, %v5082
  %v5441 = vpack.c.bf16 %v5085, %v5084
  %v5442 = vpack.c.bf16 %v5087, %v5086
  %v5443 = vpack.c.bf16 %v5089, %v5088
  %v5444 = vpack.c.bf16 %v5091, %v5090
  %v5445 = vpack.c.bf16 %v5093, %v5092
  %v5446 = vpack.c.bf16 %v5095, %v5094
  %v5447 = vpack.c.bf16 %v5097, %v5096
  %v5448 = vpack.c.bf16 %v5099, %v5098
  %v5449 = vpack.c.bf16 %v5101, %v5100
  %v5450 = vpack.c.bf16 %v5103, %v5102
  %v5451 = vpack.c.bf16 %v5105, %v5104
  %v5452 = vpack.c.bf16 %v5107, %v5106
  %v5453 = vpack.c.bf16 %v5109, %v5108
  %v5454 = vpack.c.bf16 %v5111, %v5110
  %v5455 = vpack.c.bf16 %v5113, %v5112
  %v5456 = vpack.c.bf16 %v5115, %v5114
  %v5457 = vpack.c.bf16 %v5117, %v5116
  %v5458 = vpack.c.bf16 %v5119, %v5118
  %v5459 = vpack.c.bf16 %v5121, %v5120
  %v5460 = vpack.c.bf16 %v5123, %v5122
  %v5461 = vpack.c.bf16 %v5125, %v5124
  %v5462 = vpack.c.bf16 %v5127, %v5126
  %v5463 = vpack.c.bf16 %v5129, %v5128
  %v5464 = vpack.c.bf16 %v5131, %v5130
  %v5465 = vpack.c.bf16 %v5133, %v5132
  %v5466 = vpack.c.bf16 %v5135, %v5134
  %v5467 = vpack.c.bf16 %v5137, %v5136
  %v5468 = vpack.c.bf16 %v5139, %v5138
  %v5469 = vpack.c.bf16 %v5141, %v5140
  %v5470 = vpack.c.bf16 %v5143, %v5142
  %v5471 = vpack.c.bf16 %v5145, %v5144
  %v5472 = vpack.c.bf16 %v5147, %v5146
  %v5473 = vpack.c.bf16 %v5149, %v5148
  %v5474 = vpack.c.bf16 %v5151, %v5150
  %v5475 = vpack.c.bf16 %v5153, %v5152
  %v5476 = vpack.c.bf16 %v5155, %v5154
  %v5477 = vpack.c.bf16 %v5157, %v5156
  %v5478 = vpack.c.bf16 %v5159, %v5158
  %v5479 = vpack.c.bf16 %v5161, %v5160
  %v5480 = vpack.c.bf16 %v5163, %v5162
  %v5481 = vpack.c.bf16 %v5165, %v5164
  %v5482 = vpack.c.bf16 %v5167, %v5166
  %v5483 = vpack.c.bf16 %v5169, %v5168
  %v5484 = vpack.c.bf16 %v5171, %v5170
  %v5485 = vpack.c.bf16 %v5173, %v5172
  %v5486 = vpack.c.bf16 %v5175, %v5174
  %v5487 = vpack.c.bf16 %v5177, %v5176
  %v5488 = vpack.c.bf16 %v5179, %v5178
  %v5489 = vpack.c.bf16 %v5181, %v5180
  %v5490 = vpack.c.bf16 %v5183, %v5182
  %v5491 = vpack.c.bf16 %v5185, %v5184
  %v5492 = vpack.c.bf16 %v5187, %v5186
  %v5493 = vpack.c.bf16 %v5189, %v5188
  %v5494 = vpack.c.bf16 %v5191, %v5190
  %v5495 = vpack.c.bf16 %v5193, %v5192
  %v5496 = vpack.c.bf16 %v5195, %v5194
  %v5497 = vpack.c.bf16 %v5197, %v5196
  %v5498 = vpack.c.bf16 %v5199, %v5198
  %v5499 = vpack.c.bf16 %v5201, %v5200
  %v5500 = vpack.c.bf16 %v5203, %v5202
  %v5501 = vpack.c.bf16 %v5205, %v5204
  %v5502 = vpack.c.bf16 %v5207, %v5206
  %v5503 = vpack.c.bf16 %v5209, %v5208
  %v5504 = vpack.c.bf16 %v5211, %v5210
  %v5505 = vpack.c.bf16 %v5213, %v5212
  %v5506 = vpack.c.bf16 %v5215, %v5214
  %v5507 = vpack.c.bf16 %v5217, %v5216
  %v5508 = vpack.c.bf16 %v5219, %v5218
  %v5509 = vpack.c.bf16 %v5221, %v5220
  %v5542 = vunpack.c.l.b16 %v5222
  %v5543 = vunpack.c.h.b16 %v5222
  %v5544 = vunpack.c.l.b16 %v5223
  %v5545 = vunpack.c.h.b16 %v5223
  %v5546 = vunpack.c.l.b16 %v5224
  %v5547 = vunpack.c.h.b16 %v5224
  %v5548 = vunpack.c.l.b16 %v5225
  %v5549 = vunpack.c.h.b16 %v5225
  %v5550 = vunpack.c.l.b16 %v5226
  %v5551 = vunpack.c.h.b16 %v5226
  %v5552 = vunpack.c.l.b16 %v5227
  %v5553 = vunpack.c.h.b16 %v5227
  %v5554 = vunpack.c.l.b16 %v5228
  %v5555 = vunpack.c.h.b16 %v5228
  %v5556 = vunpack.c.l.b16 %v5229
  %v5557 = vunpack.c.h.b16 %v5229
  %v5558 = vunpack.c.l.b16 %v5230
  %v5559 = vunpack.c.h.b16 %v5230
  %v5560 = vunpack.c.l.b16 %v5231
  %v5561 = vunpack.c.h.b16 %v5231
  %v5562 = vunpack.c.l.b16 %v5232
  %v5563 = vunpack.c.h.b16 %v5232
  %v5564 = vunpack.c.l.b16 %v5233
  %v5565 = vunpack.c.h.b16 %v5233
  %v5566 = vunpack.c.l.b16 %v5234
  %v5567 = vunpack.c.h.b16 %v5234
  %v5568 = vunpack.c.l.b16 %v5235
  %v5569 = vunpack.c.h.b16 %v5235
  %v5570 = vunpack.c.l.b16 %v5236
  %v5571 = vunpack.c.h.b16 %v5236
  %v5572 = vunpack.c.l.b16 %v5237
  %v5573 = vunpack.c.h.b16 %v5237
  %v5574 = vunpack.c.l.b16 %v5238
  %v5575 = vunpack.c.h.b16 %v5238
  %v5576 = vunpack.c.l.b16 %v5239
  %v5577 = vunpack.c.h.b16 %v5239
  %v5578 = vunpack.c.l.b16 %v5240
  %v5579 = vunpack.c.h.b16 %v5240
  %v5580 = vunpack.c.l.b16 %v5241
  %v5581 = vunpack.c.h.b16 %v5241
  %v5582 = vunpack.c.l.b16 %v5242
  %v5583 = vunpack.c.h.b16 %v5242
  %v5584 = vunpack.c.l.b16 %v5243
  %v5585 = vunpack.c.h.b16 %v5243
  %v5586 = vunpack.c.l.b16 %v5244
  %v5587 = vunpack.c.h.b16 %v5244
  %v5588 = vunpack.c.l.b16 %v5245
  %v5589 = vunpack.c.h.b16 %v5245
  %v5590 = vunpack.c.l.b16 %v5246
  %v5591 = vunpack.c.h.b16 %v5246
  %v5592 = vunpack.c.l.b16 %v5247
  %v5593 = vunpack.c.h.b16 %v5247
  %v5594 = vunpack.c.l.b16 %v5248
  %v5595 = vunpack.c.h.b16 %v5248
  %v5596 = vunpack.c.l.b16 %v5249
  %v5597 = vunpack.c.h.b16 %v5249
  %v5598 = vunpack.c.l.b16 %v5250
  %v5599 = vunpack.c.h.b16 %v5250
  %v5600 = vunpack.c.l.b16 %v5251
  %v5601 = vunpack.c.h.b16 %v5251
  %v5602 = vunpack.c.l.b16 %v5252
  %v5603 = vunpack.c.h.b16 %v5252
  %v5604 = vunpack.c.l.b16 %v5253
  %v5605 = vunpack.c.h.b16 %v5253
  %v5606 = vpack.c.b16 %v5574, %v5542
  %v5607 = vpack.c.b16 %v5575, %v5543
  %v5608 = vpack.c.b16 %v5576, %v5544
  %v5609 = vpack.c.b16 %v5577, %v5545
  %v5610 = vpack.c.b16 %v5578, %v5546
  %v5611 = vpack.c.b16 %v5579, %v5547
  %v5612 = vpack.c.b16 %v5580, %v5548
  %v5613 = vpack.c.b16 %v5581, %v5549
  %v5614 = vpack.c.b16 %v5582, %v5550
  %v5615 = vpack.c.b16 %v5583, %v5551
  %v5616 = vpack.c.b16 %v5584, %v5552
  %v5617 = vpack.c.b16 %v5585, %v5553
  %v5618 = vpack.c.b16 %v5586, %v5554
  %v5619 = vpack.c.b16 %v5587, %v5555
  %v5620 = vpack.c.b16 %v5588, %v5556
  %v5621 = vpack.c.b16 %v5589, %v5557
  %v5622 = vpack.c.b16 %v5590, %v5558
  %v5623 = vpack.c.b16 %v5591, %v5559
  %v5624 = vpack.c.b16 %v5592, %v5560
  %v5625 = vpack.c.b16 %v5593, %v5561
  %v5626 = vpack.c.b16 %v5594, %v5562
  %v5627 = vpack.c.b16 %v5595, %v5563
  %v5628 = vpack.c.b16 %v5596, %v5564
  %v5629 = vpack.c.b16 %v5597, %v5565
  %v5630 = vpack.c.b16 %v5598, %v5566
  %v5631 = vpack.c.b16 %v5599, %v5567
  %v5632 = vpack.c.b16 %v5600, %v5568
  %v5633 = vpack.c.b16 %v5601, %v5569
  %v5634 = vpack.c.b16 %v5602, %v5570
  %v5635 = vpack.c.b16 %v5603, %v5571
  %v5636 = vpack.c.b16 %v5604, %v5572
  %v5637 = vpack.c.b16 %v5605, %v5573
  %5670 = vmatprep.subr.bf16.mxu0 0
  %5671 = vmatpush1.bf16.msra.mxu0 %v5254
  %5672 = vmatprep.subr.bf16.mxu0 0
  %5673 = vmatpush1.bf16.msra.mxu0 %v5255
  %5674 = vmatprep.subr.bf16.mxu0 0
  %5675 = vmatpush1.bf16.msra.mxu0 %v5256
  %5676 = vmatprep.subr.bf16.mxu0 0
  %5677 = vmatpush1.bf16.msra.mxu0 %v5257
  %5678 = vmatprep.subr.bf16.mxu0 0
  %5679 = vmatpush1.bf16.msra.mxu0 %v5258
  %5680 = vmatprep.subr.bf16.mxu0 0
  %5681 = vmatpush1.bf16.msra.mxu0 %v5259
  %5682 = vmatprep.subr.bf16.mxu0 0
  %5683 = vmatpush1.bf16.msra.mxu0 %v5260
  %5684 = vmatprep.subr.bf16.mxu0 0
  %5685 = vmatpush1.bf16.msra.mxu0 %v5261
  %5686 = vmatprep.subr.bf16.mxu0 0
  %5687 = vmatpush1.bf16.msra.mxu0 %v5262
  %5688 = vmatprep.subr.bf16.mxu0 0
  %5689 = vmatpush1.bf16.msra.mxu0 %v5263
  %5690 = vmatprep.subr.bf16.mxu0 0
  %5691 = vmatpush1.bf16.msra.mxu0 %v5264
  %5692 = vmatprep.subr.bf16.mxu0 0
  %5693 = vmatpush1.bf16.msra.mxu0 %v5265
  %5694 = vmatprep.subr.bf16.mxu0 0
  %5695 = vmatpush1.bf16.msra.mxu0 %v5266
  %5696 = vmatprep.subr.bf16.mxu0 0
  %5697 = vmatpush1.bf16.msra.mxu0 %v5267
  %5698 = vmatprep.subr.bf16.mxu0 0
  %5699 = vmatpush1.bf16.msra.mxu0 %v5268
  %5700 = vmatprep.subr.bf16.mxu0 0
  %5701 = vmatpush1.bf16.msra.mxu0 %v5269
  %5702 = vmatprep.mubr.bf16.mxu0 %v5607
  %5703 = vmatmul.mubr.bf16.gmra.mrb[0].mxu0 %v5606
  %v5704 = vpop.f32.mrb[0].mxu0
  %v5705 = vadd.f32 0.0, %v5704
  %v5706 = vpop.f32.mrb[0].mxu0
  %v5707 = vpop.f32.mrb[0].mxu0
  %v5708 = vadd.f32 0.0, %v5707
  %v5709 = vpop.f32.mrb[0].mxu0
  %5710 = vdwg.mxu0
  %5711 = vmatprep.subr.bf16.mxu0 0
  %5712 = vmatpush1.bf16.msra.mxu0 %v5270
  %5713 = vmatprep.subr.bf16.mxu0 0
  %5714 = vmatpush1.bf16.msra.mxu0 %v5271
  %5715 = vmatprep.subr.bf16.mxu0 0
  %5716 = vmatpush1.bf16.msra.mxu0 %v5272
  %5717 = vmatprep.subr.bf16.mxu0 0
  %5718 = vmatpush1.bf16.msra.mxu0 %v5273
  %5719 = vmatprep.subr.bf16.mxu0 0
  %5720 = vmatpush1.bf16.msra.mxu0 %v5274
  %5721 = vmatprep.subr.bf16.mxu0 0
  %5722 = vmatpush1.bf16.msra.mxu0 %v5275
  %5723 = vmatprep.subr.bf16.mxu0 0
  %5724 = vmatpush1.bf16.msra.mxu0 %v5276
  %5725 = vmatprep.subr.bf16.mxu0 0
  %5726 = vmatpush1.bf16.msra.mxu0 %v5277
  %5727 = vmatprep.subr.bf16.mxu0 0
  %5728 = vmatpush1.bf16.msra.mxu0 %v5278
  %5729 = vmatprep.subr.bf16.mxu0 0
  %5730 = vmatpush1.bf16.msra.mxu0 %v5279
  %5731 = vmatprep.subr.bf16.mxu0 0
  %5732 = vmatpush1.bf16.msra.mxu0 %v5280
  %5733 = vmatprep.subr.bf16.mxu0 0
  %5734 = vmatpush1.bf16.msra.mxu0 %v5281
  %5735 = vmatprep.subr.bf16.mxu0 0
  %5736 = vmatpush1.bf16.msra.mxu0 %v5282
  %5737 = vmatprep.subr.bf16.mxu0 0
  %5738 = vmatpush1.bf16.msra.mxu0 %v5283
  %5739 = vmatprep.subr.bf16.mxu0 0
  %5740 = vmatpush1.bf16.msra.mxu0 %v5284
  %5741 = vmatprep.subr.bf16.mxu0 0
  %5742 = vmatpush1.bf16.msra.mxu0 %v5285
  %5743 = vmatprep.mubr.bf16.mxu0 %v5609
  %5744 = vmatmul.mubr.bf16.gmra.mrb[0].mxu0 %v5608
  %v5745 = vpop.f32.mrb[0].mxu0
  %v5746 = vadd.f32 %v5705, %v5745
  %v5747 = vpop.f32.mrb[0].mxu0
  %v5748 = vpop.f32.mrb[0].mxu0
  %v5749 = vadd.f32 %v5708, %v5748
  %v5750 = vpop.f32.mrb[0].mxu0
  %5751 = vdwg.mxu0
  %5752 = vmatprep.subr.bf16.mxu0 0
  %5753 = vmatpush1.bf16.msra.mxu0 %v5286
  %5754 = vmatprep.subr.bf16.mxu0 0
  %5755 = vmatpush1.bf16.msra.mxu0 %v5287
  %5756 = vmatprep.subr.bf16.mxu0 0
  %5757 = vmatpush1.bf16.msra.mxu0 %v5288
  %5758 = vmatprep.subr.bf16.mxu0 0
  %5759 = vmatpush1.bf16.msra.mxu0 %v5289
  %5760 = vmatprep.subr.bf16.mxu0 0
  %5761 = vmatpush1.bf16.msra.mxu0 %v5290
  %5762 = vmatprep.subr.bf16.mxu0 0
  %5763 = vmatpush1.bf16.msra.mxu0 %v5291
  %5764 = vmatprep.subr.bf16.mxu0 0
  %5765 = vmatpush1.bf16.msra.mxu0 %v5292
  %5766 = vmatprep.subr.bf16.mxu0 0
  %5767 = vmatpush1.bf16.msra.mxu0 %v5293
  %5768 = vmatprep.subr.bf16.mxu0 0
  %5769 = vmatpush1.bf16.msra.mxu0 %v5294
  %5770 = vmatprep.subr.bf16.mxu0 0
  %5771 = vmatpush1.bf16.msra.mxu0 %v5295
  %5772 = vmatprep.subr.bf16.mxu0 0
  %5773 = vmatpush1.bf16.msra.mxu0 %v5296
  %5774 = vmatprep.subr.bf16.mxu0 0
  %5775 = vmatpush1.bf16.msra.mxu0 %v5297
  %5776 = vmatprep.subr.bf16.mxu0 0
  %5777 = vmatpush1.bf16.msra.mxu0 %v5298
  %5778 = vmatprep.subr.bf16.mxu0 0
  %5779 = vmatpush1.bf16.msra.mxu0 %v5299
  %5780 = vmatprep.subr.bf16.mxu0 0
  %5781 = vmatpush1.bf16.msra.mxu0 %v5300
  %5782 = vmatprep.subr.bf16.mxu0 0
  %5783 = vmatpush1.bf16.msra.mxu0 %v5301
  %5784 = vmatprep.mubr.bf16.mxu0 %v5611
  %5785 = vmatmul.mubr.bf16.gmra.mrb[0].mxu0 %v5610
  %v5786 = vpop.f32.mrb[0].mxu0
  %v5787 = vadd.f32 %v5746, %v5786
  %v5788 = vpop.f32.mrb[0].mxu0
  %v5789 = vpop.f32.mrb[0].mxu0
  %v5790 = vadd.f32 %v5749, %v5789
  %v5791 = vpop.f32.mrb[0].mxu0
  %5792 = vdwg.mxu0
  %5793 = vmatprep.subr.bf16.mxu0 0
  %5794 = vmatpush1.bf16.msra.mxu0 %v5302
  %5795 = vmatprep.subr.bf16.mxu0 0
  %5796 = vmatpush1.bf16.msra.mxu0 %v5303
  %5797 = vmatprep.subr.bf16.mxu0 0
  %5798 = vmatpush1.bf16.msra.mxu0 %v5304
  %5799 = vmatprep.subr.bf16.mxu0 0
  %5800 = vmatpush1.bf16.msra.mxu0 %v5305
  %5801 = vmatprep.subr.bf16.mxu0 0
  %5802 = vmatpush1.bf16.msra.mxu0 %v5306
  %5803 = vmatprep.subr.bf16.mxu0 0
  %5804 = vmatpush1.bf16.msra.mxu0 %v5307
  %5805 = vmatprep.subr.bf16.mxu0 0
  %5806 = vmatpush1.bf16.msra.mxu0 %v5308
  %5807 = vmatprep.subr.bf16.mxu0 0
  %5808 = vmatpush1.bf16.msra.mxu0 %v5309
  %5809 = vmatprep.subr.bf16.mxu0 0
  %5810 = vmatpush1.bf16.msra.mxu0 %v5310
  %5811 = vmatprep.subr.bf16.mxu0 0
  %5812 = vmatpush1.bf16.msra.mxu0 %v5311
  %5813 = vmatprep.subr.bf16.mxu0 0
  %5814 = vmatpush1.bf16.msra.mxu0 %v5312
  %5815 = vmatprep.subr.bf16.mxu0 0
  %5816 = vmatpush1.bf16.msra.mxu0 %v5313
  %5817 = vmatprep.subr.bf16.mxu0 0
  %5818 = vmatpush1.bf16.msra.mxu0 %v5314
  %5819 = vmatprep.subr.bf16.mxu0 0
  %5820 = vmatpush1.bf16.msra.mxu0 %v5315
  %5821 = vmatprep.subr.bf16.mxu0 0
  %5822 = vmatpush1.bf16.msra.mxu0 %v5316
  %5823 = vmatprep.subr.bf16.mxu0 0
  %5824 = vmatpush1.bf16.msra.mxu0 %v5317
  %5825 = vmatprep.mubr.bf16.mxu0 %v5613
  %5826 = vmatmul.mubr.bf16.gmra.mrb[0].mxu0 %v5612
  %v5827 = vpop.f32.mrb[0].mxu0
  %v5828 = vadd.f32 %v5787, %v5827
  %v5829 = vpop.f32.mrb[0].mxu0
  %v5830 = vpop.f32.mrb[0].mxu0
  %v5831 = vadd.f32 %v5790, %v5830
  %v5832 = vpop.f32.mrb[0].mxu0
  %5833 = vdwg.mxu0
  %5834 = vmatprep.subr.bf16.mxu0 0
  %5835 = vmatpush1.bf16.msra.mxu0 %v5318
  %5836 = vmatprep.subr.bf16.mxu0 0
  %5837 = vmatpush1.bf16.msra.mxu0 %v5319
  %5838 = vmatprep.subr.bf16.mxu0 0
  %5839 = vmatpush1.bf16.msra.mxu0 %v5320
  %5840 = vmatprep.subr.bf16.mxu0 0
  %5841 = vmatpush1.bf16.msra.mxu0 %v5321
  %5842 = vmatprep.subr.bf16.mxu0 0
  %5843 = vmatpush1.bf16.msra.mxu0 %v5322
  %5844 = vmatprep.subr.bf16.mxu0 0
  %5845 = vmatpush1.bf16.msra.mxu0 %v5323
  %5846 = vmatprep.subr.bf16.mxu0 0
  %5847 = vmatpush1.bf16.msra.mxu0 %v5324
  %5848 = vmatprep.subr.bf16.mxu0 0
  %5849 = vmatpush1.bf16.msra.mxu0 %v5325
  %5850 = vmatprep.subr.bf16.mxu0 0
  %5851 = vmatpush1.bf16.msra.mxu0 %v5326
  %5852 = vmatprep.subr.bf16.mxu0 0
  %5853 = vmatpush1.bf16.msra.mxu0 %v5327
  %5854 = vmatprep.subr.bf16.mxu0 0
  %5855 = vmatpush1.bf16.msra.mxu0 %v5328
  %5856 = vmatprep.subr.bf16.mxu0 0
  %5857 = vmatpush1.bf16.msra.mxu0 %v5329
  %5858 = vmatprep.subr.bf16.mxu0 0
  %5859 = vmatpush1.bf16.msra.mxu0 %v5330
  %5860 = vmatprep.subr.bf16.mxu0 0
  %5861 = vmatpush1.bf16.msra.mxu0 %v5331
  %5862 = vmatprep.subr.bf16.mxu0 0
  %5863 = vmatpush1.bf16.msra.mxu0 %v5332
  %5864 = vmatprep.subr.bf16.mxu0 0
  %5865 = vmatpush1.bf16.msra.mxu0 %v5333
  %5866 = vmatprep.mubr.bf16.mxu0 %v5615
  %5867 = vmatmul.mubr.bf16.gmra.mrb[0].mxu0 %v5614
  %v5868 = vpop.f32.mrb[0].mxu0
  %v5869 = vadd.f32 %v5828, %v5868
  %v5870 = vpop.f32.mrb[0].mxu0
  %v5871 = vpop.f32.mrb[0].mxu0
  %v5872 = vadd.f32 %v5831, %v5871
  %v5873 = vpop.f32.mrb[0].mxu0
  %5874 = vdwg.mxu0
  %5875 = vmatprep.subr.bf16.mxu0 0
  %5876 = vmatpush1.bf16.msra.mxu0 %v5334
  %5877 = vmatprep.subr.bf16.mxu0 0
  %5878 = vmatpush1.bf16.msra.mxu0 %v5335
  %5879 = vmatprep.subr.bf16.mxu0 0
  %5880 = vmatpush1.bf16.msra.mxu0 %v5336
  %5881 = vmatprep.subr.bf16.mxu0 0
  %5882 = vmatpush1.bf16.msra.mxu0 %v5337
  %5883 = vmatprep.subr.bf16.mxu0 0
  %5884 = vmatpush1.bf16.msra.mxu0 %v5338
  %5885 = vmatprep.subr.bf16.mxu0 0
  %5886 = vmatpush1.bf16.msra.mxu0 %v5339
  %5887 = vmatprep.subr.bf16.mxu0 0
  %5888 = vmatpush1.bf16.msra.mxu0 %v5340
  %5889 = vmatprep.subr.bf16.mxu0 0
  %5890 = vmatpush1.bf16.msra.mxu0 %v5341
  %5891 = vmatprep.subr.bf16.mxu0 0
  %5892 = vmatpush1.bf16.msra.mxu0 %v5342
  %5893 = vmatprep.subr.bf16.mxu0 0
  %5894 = vmatpush1.bf16.msra.mxu0 %v5343
  %5895 = vmatprep.subr.bf16.mxu0 0
  %5896 = vmatpush1.bf16.msra.mxu0 %v5344
  %5897 = vmatprep.subr.bf16.mxu0 0
  %5898 = vmatpush1.bf16.msra.mxu0 %v5345
  %5899 = vmatprep.subr.bf16.mxu0 0
  %5900 = vmatpush1.bf16.msra.mxu0 %v5346
  %5901 = vmatprep.subr.bf16.mxu0 0
  %5902 = vmatpush1.bf16.msra.mxu0 %v5347
  %5903 = vmatprep.subr.bf16.mxu0 0
  %5904 = vmatpush1.bf16.msra.mxu0 %v5348
  %5905 = vmatprep.subr.bf16.mxu0 0
  %5906 = vmatpush1.bf16.msra.mxu0 %v5349
  %5907 = vmatprep.mubr.bf16.mxu0 %v5617
  %5908 = vmatmul.mubr.bf16.gmra.mrb[0].mxu0 %v5616
  %v5909 = vpop.f32.mrb[0].mxu0
  %v5910 = vadd.f32 %v5869, %v5909
  %v5911 = vpop.f32.mrb[0].mxu0
  %v5912 = vpop.f32.mrb[0].mxu0
  %v5913 = vadd.f32 %v5872, %v5912
  %v5914 = vpop.f32.mrb[0].mxu0
  %5915 = vdwg.mxu0
  %5916 = vmatprep.subr.bf16.mxu0 0
  %5917 = vmatpush1.bf16.msra.mxu0 %v5350
  %5918 = vmatprep.subr.bf16.mxu0 0
  %5919 = vmatpush1.bf16.msra.mxu0 %v5351
  %5920 = vmatprep.subr.bf16.mxu0 0
  %5921 = vmatpush1.bf16.msra.mxu0 %v5352
  %5922 = vmatprep.subr.bf16.mxu0 0
  %5923 = vmatpush1.bf16.msra.mxu0 %v5353
  %5924 = vmatprep.subr.bf16.mxu0 0
  %5925 = vmatpush1.bf16.msra.mxu0 %v5354
  %5926 = vmatprep.subr.bf16.mxu0 0
  %5927 = vmatpush1.bf16.msra.mxu0 %v5355
  %5928 = vmatprep.subr.bf16.mxu0 0
  %5929 = vmatpush1.bf16.msra.mxu0 %v5356
  %5930 = vmatprep.subr.bf16.mxu0 0
  %5931 = vmatpush1.bf16.msra.mxu0 %v5357
  %5932 = vmatprep.subr.bf16.mxu0 0
  %5933 = vmatpush1.bf16.msra.mxu0 %v5358
  %5934 = vmatprep.subr.bf16.mxu0 0
  %5935 = vmatpush1.bf16.msra.mxu0 %v5359
  %5936 = vmatprep.subr.bf16.mxu0 0
  %5937 = vmatpush1.bf16.msra.mxu0 %v5360
  %5938 = vmatprep.subr.bf16.mxu0 0
  %5939 = vmatpush1.bf16.msra.mxu0 %v5361
  %5940 = vmatprep.subr.bf16.mxu0 0
  %5941 = vmatpush1.bf16.msra.mxu0 %v5362
  %5942 = vmatprep.subr.bf16.mxu0 0
  %5943 = vmatpush1.bf16.msra.mxu0 %v5363
  %5944 = vmatprep.subr.bf16.mxu0 0
  %5945 = vmatpush1.bf16.msra.mxu0 %v5364
  %5946 = vmatprep.subr.bf16.mxu0 0
  %5947 = vmatpush1.bf16.msra.mxu0 %v5365
  %5948 = vmatprep.mubr.bf16.mxu0 %v5619
  %5949 = vmatmul.mubr.bf16.gmra.mrb[0].mxu0 %v5618
  %v5950 = vpop.f32.mrb[0].mxu0
  %v5951 = vadd.f32 %v5910, %v5950
  %v5952 = vpop.f32.mrb[0].mxu0
  %v5953 = vpop.f32.mrb[0].mxu0
  %v5954 = vadd.f32 %v5913, %v5953
  %v5955 = vpop.f32.mrb[0].mxu0
  %5956 = vdwg.mxu0
  %5957 = vmatprep.subr.bf16.mxu0 0
  %5958 = vmatpush1.bf16.msra.mxu0 %v5366
  %5959 = vmatprep.subr.bf16.mxu0 0
  %5960 = vmatpush1.bf16.msra.mxu0 %v5367
  %5961 = vmatprep.subr.bf16.mxu0 0
  %5962 = vmatpush1.bf16.msra.mxu0 %v5368
  %5963 = vmatprep.subr.bf16.mxu0 0
  %5964 = vmatpush1.bf16.msra.mxu0 %v5369
  %5965 = vmatprep.subr.bf16.mxu0 0
  %5966 = vmatpush1.bf16.msra.mxu0 %v5370
  %5967 = vmatprep.subr.bf16.mxu0 0
  %5968 = vmatpush1.bf16.msra.mxu0 %v5371
  %5969 = vmatprep.subr.bf16.mxu0 0
  %5970 = vmatpush1.bf16.msra.mxu0 %v5372
  %5971 = vmatprep.subr.bf16.mxu0 0
  %5972 = vmatpush1.bf16.msra.mxu0 %v5373
  %5973 = vmatprep.subr.bf16.mxu0 0
  %5974 = vmatpush1.bf16.msra.mxu0 %v5374
  %5975 = vmatprep.subr.bf16.mxu0 0
  %5976 = vmatpush1.bf16.msra.mxu0 %v5375
  %5977 = vmatprep.subr.bf16.mxu0 0
  %5978 = vmatpush1.bf16.msra.mxu0 %v5376
  %5979 = vmatprep.subr.bf16.mxu0 0
  %5980 = vmatpush1.bf16.msra.mxu0 %v5377
  %5981 = vmatprep.subr.bf16.mxu0 0
  %5982 = vmatpush1.bf16.msra.mxu0 %v5378
  %5983 = vmatprep.subr.bf16.mxu0 0
  %5984 = vmatpush1.bf16.msra.mxu0 %v5379
  %5985 = vmatprep.subr.bf16.mxu0 0
  %5986 = vmatpush1.bf16.msra.mxu0 %v5380
  %5987 = vmatprep.subr.bf16.mxu0 0
  %5988 = vmatpush1.bf16.msra.mxu0 %v5381
  %5989 = vmatprep.mubr.bf16.mxu0 %v5621
  %5990 = vmatmul.mubr.bf16.gmra.mrb[0].mxu0 %v5620
  %v5991 = vpop.f32.mrb[0].mxu0
  %v5992 = vadd.f32 %v5951, %v5991
  %v5993 = vpop.f32.mrb[0].mxu0
  %v5994 = vpop.f32.mrb[0].mxu0
  %v5995 = vadd.f32 %v5954, %v5994
  %v5996 = vpop.f32.mrb[0].mxu0
  %5997 = vdwg.mxu0
  %5998 = vmatprep.subr.bf16.mxu0 0
  %5999 = vmatpush1.bf16.msra.mxu0 %v5382
  %6000 = vmatprep.subr.bf16.mxu0 0
  %6001 = vmatpush1.bf16.msra.mxu0 %v5383
  %6002 = vmatprep.subr.bf16.mxu0 0
  %6003 = vmatpush1.bf16.msra.mxu0 %v5384
  %6004 = vmatprep.subr.bf16.mxu0 0
  %6005 = vmatpush1.bf16.msra.mxu0 %v5385
  %6006 = vmatprep.subr.bf16.mxu0 0
  %6007 = vmatpush1.bf16.msra.mxu0 %v5386
  %6008 = vmatprep.subr.bf16.mxu0 0
  %6009 = vmatpush1.bf16.msra.mxu0 %v5387
  %6010 = vmatprep.subr.bf16.mxu0 0
  %6011 = vmatpush1.bf16.msra.mxu0 %v5388
  %6012 = vmatprep.subr.bf16.mxu0 0
  %6013 = vmatpush1.bf16.msra.mxu0 %v5389
  %6014 = vmatprep.subr.bf16.mxu0 0
  %6015 = vmatpush1.bf16.msra.mxu0 %v5390
  %6016 = vmatprep.subr.bf16.mxu0 0
  %6017 = vmatpush1.bf16.msra.mxu0 %v5391
  %6018 = vmatprep.subr.bf16.mxu0 0
  %6019 = vmatpush1.bf16.msra.mxu0 %v5392
  %6020 = vmatprep.subr.bf16.mxu0 0
  %6021 = vmatpush1.bf16.msra.mxu0 %v5393
  %6022 = vmatprep.subr.bf16.mxu0 0
  %6023 = vmatpush1.bf16.msra.mxu0 %v5394
  %6024 = vmatprep.subr.bf16.mxu0 0
  %6025 = vmatpush1.bf16.msra.mxu0 %v5395
  %6026 = vmatprep.subr.bf16.mxu0 0
  %6027 = vmatpush1.bf16.msra.mxu0 %v5396
  %6028 = vmatprep.subr.bf16.mxu0 0
  %6029 = vmatpush1.bf16.msra.mxu0 %v5397
  %6030 = vmatprep.mubr.bf16.mxu0 %v5623
  %6031 = vmatmul.mubr.bf16.gmra.mrb[0].mxu0 %v5622
  %v6032 = vpop.f32.mrb[0].mxu0
  %v6033 = vadd.f32 %v5992, %v6032
  %v6034 = vpop.f32.mrb[0].mxu0
  %v6035 = vpop.f32.mrb[0].mxu0
  %v6036 = vadd.f32 %v5995, %v6035
  %v6037 = vpop.f32.mrb[0].mxu0
  %6038 = vdwg.mxu0
  %6039 = vmatprep.subr.bf16.mxu0 0
  %6040 = vmatpush1.bf16.msra.mxu0 %v5398
  %6041 = vmatprep.subr.bf16.mxu0 0
  %6042 = vmatpush1.bf16.msra.mxu0 %v5399
  %6043 = vmatprep.subr.bf16.mxu0 0
  %6044 = vmatpush1.bf16.msra.mxu0 %v5400
  %6045 = vmatprep.subr.bf16.mxu0 0
  %6046 = vmatpush1.bf16.msra.mxu0 %v5401
  %6047 = vmatprep.subr.bf16.mxu0 0
  %6048 = vmatpush1.bf16.msra.mxu0 %v5402
  %6049 = vmatprep.subr.bf16.mxu0 0
  %6050 = vmatpush1.bf16.msra.mxu0 %v5403
  %6051 = vmatprep.subr.bf16.mxu0 0
  %6052 = vmatpush1.bf16.msra.mxu0 %v5404
  %6053 = vmatprep.subr.bf16.mxu0 0
  %6054 = vmatpush1.bf16.msra.mxu0 %v5405
  %6055 = vmatprep.subr.bf16.mxu0 0
  %6056 = vmatpush1.bf16.msra.mxu0 %v5406
  %6057 = vmatprep.subr.bf16.mxu0 0
  %6058 = vmatpush1.bf16.msra.mxu0 %v5407
  %6059 = vmatprep.subr.bf16.mxu0 0
  %6060 = vmatpush1.bf16.msra.mxu0 %v5408
  %6061 = vmatprep.subr.bf16.mxu0 0
  %6062 = vmatpush1.bf16.msra.mxu0 %v5409
  %6063 = vmatprep.subr.bf16.mxu0 0
  %6064 = vmatpush1.bf16.msra.mxu0 %v5410
  %6065 = vmatprep.subr.bf16.mxu0 0
  %6066 = vmatpush1.bf16.msra.mxu0 %v5411
  %6067 = vmatprep.subr.bf16.mxu0 0
  %6068 = vmatpush1.bf16.msra.mxu0 %v5412
  %6069 = vmatprep.subr.bf16.mxu0 0
  %6070 = vmatpush1.bf16.msra.mxu0 %v5413
  %6071 = vmatprep.mubr.bf16.mxu0 %v5625
  %6072 = vmatmul.mubr.bf16.gmra.mrb[0].mxu0 %v5624
  %v6073 = vpop.f32.mrb[0].mxu0
  %v6074 = vadd.f32 %v6033, %v6073
  %v6075 = vpop.f32.mrb[0].mxu0
  %v6076 = vpop.f32.mrb[0].mxu0
  %v6077 = vadd.f32 %v6036, %v6076
  %v6078 = vpop.f32.mrb[0].mxu0
  %6079 = vdwg.mxu0
  %6080 = vmatprep.subr.bf16.mxu0 0
  %6081 = vmatpush1.bf16.msra.mxu0 %v5414
  %6082 = vmatprep.subr.bf16.mxu0 0
  %6083 = vmatpush1.bf16.msra.mxu0 %v5415
  %6084 = vmatprep.subr.bf16.mxu0 0
  %6085 = vmatpush1.bf16.msra.mxu0 %v5416
  %6086 = vmatprep.subr.bf16.mxu0 0
  %6087 = vmatpush1.bf16.msra.mxu0 %v5417
  %6088 = vmatprep.subr.bf16.mxu0 0
  %6089 = vmatpush1.bf16.msra.mxu0 %v5418
  %6090 = vmatprep.subr.bf16.mxu0 0
  %6091 = vmatpush1.bf16.msra.mxu0 %v5419
  %6092 = vmatprep.subr.bf16.mxu0 0
  %6093 = vmatpush1.bf16.msra.mxu0 %v5420
  %6094 = vmatprep.subr.bf16.mxu0 0
  %6095 = vmatpush1.bf16.msra.mxu0 %v5421
  %6096 = vmatprep.subr.bf16.mxu0 0
  %6097 = vmatpush1.bf16.msra.mxu0 %v5422
  %6098 = vmatprep.subr.bf16.mxu0 0
  %6099 = vmatpush1.bf16.msra.mxu0 %v5423
  %6100 = vmatprep.subr.bf16.mxu0 0
  %6101 = vmatpush1.bf16.msra.mxu0 %v5424
  %6102 = vmatprep.subr.bf16.mxu0 0
  %6103 = vmatpush1.bf16.msra.mxu0 %v5425
  %6104 = vmatprep.subr.bf16.mxu0 0
  %6105 = vmatpush1.bf16.msra.mxu0 %v5426
  %6106 = vmatprep.subr.bf16.mxu0 0
  %6107 = vmatpush1.bf16.msra.mxu0 %v5427
  %6108 = vmatprep.subr.bf16.mxu0 0
  %6109 = vmatpush1.bf16.msra.mxu0 %v5428
  %6110 = vmatprep.subr.bf16.mxu0 0
  %6111 = vmatpush1.bf16.msra.mxu0 %v5429
  %6112 = vmatprep.mubr.bf16.mxu0 %v5627
  %6113 = vmatmul.mubr.bf16.gmra.mrb[0].mxu0 %v5626
  %v6114 = vpop.f32.mrb[0].mxu0
  %v6115 = vadd.f32 %v6074, %v6114
  %v6116 = vpop.f32.mrb[0].mxu0
  %v6117 = vpop.f32.mrb[0].mxu0
  %v6118 = vadd.f32 %v6077, %v6117
  %v6119 = vpop.f32.mrb[0].mxu0
  %6120 = vdwg.mxu0
  %6121 = vmatprep.subr.bf16.mxu0 0
  %6122 = vmatpush1.bf16.msra.mxu0 %v5430
  %6123 = vmatprep.subr.bf16.mxu0 0
  %6124 = vmatpush1.bf16.msra.mxu0 %v5431
  %6125 = vmatprep.subr.bf16.mxu0 0
  %6126 = vmatpush1.bf16.msra.mxu0 %v5432
  %6127 = vmatprep.subr.bf16.mxu0 0
  %6128 = vmatpush1.bf16.msra.mxu0 %v5433
  %6129 = vmatprep.subr.bf16.mxu0 0
  %6130 = vmatpush1.bf16.msra.mxu0 %v5434
  %6131 = vmatprep.subr.bf16.mxu0 0
  %6132 = vmatpush1.bf16.msra.mxu0 %v5435
  %6133 = vmatprep.subr.bf16.mxu0 0
  %6134 = vmatpush1.bf16.msra.mxu0 %v5436
  %6135 = vmatprep.subr.bf16.mxu0 0
  %6136 = vmatpush1.bf16.msra.mxu0 %v5437
  %6137 = vmatprep.subr.bf16.mxu0 0
  %6138 = vmatpush1.bf16.msra.mxu0 %v5438
  %6139 = vmatprep.subr.bf16.mxu0 0
  %6140 = vmatpush1.bf16.msra.mxu0 %v5439
  %6141 = vmatprep.subr.bf16.mxu0 0
  %6142 = vmatpush1.bf16.msra.mxu0 %v5440
  %6143 = vmatprep.subr.bf16.mxu0 0
  %6144 = vmatpush1.bf16.msra.mxu0 %v5441
  %6145 = vmatprep.subr.bf16.mxu0 0
  %6146 = vmatpush1.bf16.msra.mxu0 %v5442
  %6147 = vmatprep.subr.bf16.mxu0 0
  %6148 = vmatpush1.bf16.msra.mxu0 %v5443
  %6149 = vmatprep.subr.bf16.mxu0 0
  %6150 = vmatpush1.bf16.msra.mxu0 %v5444
  %6151 = vmatprep.subr.bf16.mxu0 0
  %6152 = vmatpush1.bf16.msra.mxu0 %v5445
  %6153 = vmatprep.mubr.bf16.mxu0 %v5629
  %6154 = vmatmul.mubr.bf16.gmra.mrb[0].mxu0 %v5628
  %v6155 = vpop.f32.mrb[0].mxu0
  %v6156 = vadd.f32 %v6115, %v6155
  %v6157 = vpop.f32.mrb[0].mxu0
  %v6158 = vpop.f32.mrb[0].mxu0
  %v6159 = vadd.f32 %v6118, %v6158
  %v6160 = vpop.f32.mrb[0].mxu0
  %6161 = vdwg.mxu0
  %6162 = vmatprep.subr.bf16.mxu0 0
  %6163 = vmatpush1.bf16.msra.mxu0 %v5446
  %6164 = vmatprep.subr.bf16.mxu0 0
  %6165 = vmatpush1.bf16.msra.mxu0 %v5447
  %6166 = vmatprep.subr.bf16.mxu0 0
  %6167 = vmatpush1.bf16.msra.mxu0 %v5448
  %6168 = vmatprep.subr.bf16.mxu0 0
  %6169 = vmatpush1.bf16.msra.mxu0 %v5449
  %6170 = vmatprep.subr.bf16.mxu0 0
  %6171 = vmatpush1.bf16.msra.mxu0 %v5450
  %6172 = vmatprep.subr.bf16.mxu0 0
  %6173 = vmatpush1.bf16.msra.mxu0 %v5451
  %6174 = vmatprep.subr.bf16.mxu0 0
  %6175 = vmatpush1.bf16.msra.mxu0 %v5452
  %6176 = vmatprep.subr.bf16.mxu0 0
  %6177 = vmatpush1.bf16.msra.mxu0 %v5453
  %6178 = vmatprep.subr.bf16.mxu0 0
  %6179 = vmatpush1.bf16.msra.mxu0 %v5454
  %6180 = vmatprep.subr.bf16.mxu0 0
  %6181 = vmatpush1.bf16.msra.mxu0 %v5455
  %6182 = vmatprep.subr.bf16.mxu0 0
  %6183 = vmatpush1.bf16.msra.mxu0 %v5456
  %6184 = vmatprep.subr.bf16.mxu0 0
  %6185 = vmatpush1.bf16.msra.mxu0 %v5457
  %6186 = vmatprep.subr.bf16.mxu0 0
  %6187 = vmatpush1.bf16.msra.mxu0 %v5458
  %6188 = vmatprep.subr.bf16.mxu0 0
  %6189 = vmatpush1.bf16.msra.mxu0 %v5459
  %6190 = vmatprep.subr.bf16.mxu0 0
  %6191 = vmatpush1.bf16.msra.mxu0 %v5460
  %6192 = vmatprep.subr.bf16.mxu0 0
  %6193 = vmatpush1.bf16.msra.mxu0 %v5461
  %6194 = vmatprep.mubr.bf16.mxu0 %v5631
  %6195 = vmatmul.mubr.bf16.gmra.mrb[0].mxu0 %v5630
  %v6196 = vpop.f32.mrb[0].mxu0
  %v6197 = vadd.f32 %v6156, %v6196
  %v6198 = vpop.f32.mrb[0].mxu0
  %v6199 = vpop.f32.mrb[0].mxu0
  %v6200 = vadd.f32 %v6159, %v6199
  %v6201 = vpop.f32.mrb[0].mxu0
  %6202 = vdwg.mxu0
  %6203 = vmatprep.subr.bf16.mxu0 0
  %6204 = vmatpush1.bf16.msra.mxu0 %v5462
  %6205 = vmatprep.subr.bf16.mxu0 0
  %6206 = vmatpush1.bf16.msra.mxu0 %v5463
  %6207 = vmatprep.subr.bf16.mxu0 0
  %6208 = vmatpush1.bf16.msra.mxu0 %v5464
  %6209 = vmatprep.subr.bf16.mxu0 0
  %6210 = vmatpush1.bf16.msra.mxu0 %v5465
  %6211 = vmatprep.subr.bf16.mxu0 0
  %6212 = vmatpush1.bf16.msra.mxu0 %v5466
  %6213 = vmatprep.subr.bf16.mxu0 0
  %6214 = vmatpush1.bf16.msra.mxu0 %v5467
  %6215 = vmatprep.subr.bf16.mxu0 0
  %6216 = vmatpush1.bf16.msra.mxu0 %v5468
  %6217 = vmatprep.subr.bf16.mxu0 0
  %6218 = vmatpush1.bf16.msra.mxu0 %v5469
  %6219 = vmatprep.subr.bf16.mxu0 0
  %6220 = vmatpush1.bf16.msra.mxu0 %v5470
  %6221 = vmatprep.subr.bf16.mxu0 0
  %6222 = vmatpush1.bf16.msra.mxu0 %v5471
  %6223 = vmatprep.subr.bf16.mxu0 0
  %6224 = vmatpush1.bf16.msra.mxu0 %v5472
  %6225 = vmatprep.subr.bf16.mxu0 0
  %6226 = vmatpush1.bf16.msra.mxu0 %v5473
  %6227 = vmatprep.subr.bf16.mxu0 0
  %6228 = vmatpush1.bf16.msra.mxu0 %v5474
  %6229 = vmatprep.subr.bf16.mxu0 0
  %6230 = vmatpush1.bf16.msra.mxu0 %v5475
  %6231 = vmatprep.subr.bf16.mxu0 0
  %6232 = vmatpush1.bf16.msra.mxu0 %v5476
  %6233 = vmatprep.subr.bf16.mxu0 0
  %6234 = vmatpush1.bf16.msra.mxu0 %v5477
  %6235 = vmatprep.mubr.bf16.mxu0 %v5633
  %6236 = vmatmul.mubr.bf16.gmra.mrb[0].mxu0 %v5632
  %v6237 = vpop.f32.mrb[0].mxu0
  %v6238 = vadd.f32 %v6197, %v6237
  %v6239 = vpop.f32.mrb[0].mxu0
  %v6240 = vpop.f32.mrb[0].mxu0
  %v6241 = vadd.f32 %v6200, %v6240
  %v6242 = vpop.f32.mrb[0].mxu0
  %6243 = vdwg.mxu0
  %6244 = vmatprep.subr.bf16.mxu0 0
  %6245 = vmatpush1.bf16.msra.mxu0 %v5478
  %6246 = vmatprep.subr.bf16.mxu0 0
  %6247 = vmatpush1.bf16.msra.mxu0 %v5479
  %6248 = vmatprep.subr.bf16.mxu0 0
  %6249 = vmatpush1.bf16.msra.mxu0 %v5480
  %6250 = vmatprep.subr.bf16.mxu0 0
  %6251 = vmatpush1.bf16.msra.mxu0 %v5481
  %6252 = vmatprep.subr.bf16.mxu0 0
  %6253 = vmatpush1.bf16.msra.mxu0 %v5482
  %6254 = vmatprep.subr.bf16.mxu0 0
  %6255 = vmatpush1.bf16.msra.mxu0 %v5483
  %6256 = vmatprep.subr.bf16.mxu0 0
  %6257 = vmatpush1.bf16.msra.mxu0 %v5484
  %6258 = vmatprep.subr.bf16.mxu0 0
  %6259 = vmatpush1.bf16.msra.mxu0 %v5485
  %6260 = vmatprep.subr.bf16.mxu0 0
  %6261 = vmatpush1.bf16.msra.mxu0 %v5486
  %6262 = vmatprep.subr.bf16.mxu0 0
  %6263 = vmatpush1.bf16.msra.mxu0 %v5487
  %6264 = vmatprep.subr.bf16.mxu0 0
  %6265 = vmatpush1.bf16.msra.mxu0 %v5488
  %6266 = vmatprep.subr.bf16.mxu0 0
  %6267 = vmatpush1.bf16.msra.mxu0 %v5489
  %6268 = vmatprep.subr.bf16.mxu0 0
  %6269 = vmatpush1.bf16.msra.mxu0 %v5490
  %6270 = vmatprep.subr.bf16.mxu0 0
  %6271 = vmatpush1.bf16.msra.mxu0 %v5491
  %6272 = vmatprep.subr.bf16.mxu0 0
  %6273 = vmatpush1.bf16.msra.mxu0 %v5492
  %6274 = vmatprep.subr.bf16.mxu0 0
  %6275 = vmatpush1.bf16.msra.mxu0 %v5493
  %6276 = vmatprep.mubr.bf16.mxu0 %v5635
  %6277 = vmatmul.mubr.bf16.gmra.mrb[0].mxu0 %v5634
  %v6278 = vpop.f32.mrb[0].mxu0
  %v6279 = vadd.f32 %v6238, %v6278
  %v6280 = vpop.f32.mrb[0].mxu0
  %v6281 = vpop.f32.mrb[0].mxu0
  %v6282 = vadd.f32 %v6241, %v6281
  %v6283 = vpop.f32.mrb[0].mxu0
  %6284 = vdwg.mxu0
  %6285 = vmatprep.subr.bf16.mxu0 0
  %6286 = vmatpush1.bf16.msra.mxu0 %v5494
  %6287 = vmatprep.subr.bf16.mxu0 0
  %6288 = vmatpush1.bf16.msra.mxu0 %v5495
  %6289 = vmatprep.subr.bf16.mxu0 0
  %6290 = vmatpush1.bf16.msra.mxu0 %v5496
  %6291 = vmatprep.subr.bf16.mxu0 0
  %6292 = vmatpush1.bf16.msra.mxu0 %v5497
  %6293 = vmatprep.subr.bf16.mxu0 0
  %6294 = vmatpush1.bf16.msra.mxu0 %v5498
  %6295 = vmatprep.subr.bf16.mxu0 0
  %6296 = vmatpush1.bf16.msra.mxu0 %v5499
  %6297 = vmatprep.subr.bf16.mxu0 0
  %6298 = vmatpush1.bf16.msra.mxu0 %v5500
  %6299 = vmatprep.subr.bf16.mxu0 0
  %6300 = vmatpush1.bf16.msra.mxu0 %v5501
  %6301 = vmatprep.subr.bf16.mxu0 0
  %6302 = vmatpush1.bf16.msra.mxu0 %v5502
  %6303 = vmatprep.subr.bf16.mxu0 0
  %6304 = vmatpush1.bf16.msra.mxu0 %v5503
  %6305 = vmatprep.subr.bf16.mxu0 0
  %6306 = vmatpush1.bf16.msra.mxu0 %v5504
  %6307 = vmatprep.subr.bf16.mxu0 0
  %6308 = vmatpush1.bf16.msra.mxu0 %v5505
  %6309 = vmatprep.subr.bf16.mxu0 0
  %6310 = vmatpush1.bf16.msra.mxu0 %v5506
  %6311 = vmatprep.subr.bf16.mxu0 0
  %6312 = vmatpush1.bf16.msra.mxu0 %v5507
  %6313 = vmatprep.subr.bf16.mxu0 0
  %6314 = vmatpush1.bf16.msra.mxu0 %v5508
  %6315 = vmatprep.subr.bf16.mxu0 0
  %6316 = vmatpush1.bf16.msra.mxu0 %v5509
  %6317 = vmatprep.mubr.bf16.mxu0 %v5637
  %6318 = vmatmul.mubr.bf16.gmra.mrb[0].mxu0 %v5636
  %v6319 = vpop.f32.mrb[0].mxu0
  %v6320 = vadd.f32 %v6279, %v6319
  %v6321 = vpop.f32.mrb[0].mxu0
  %v6322 = vpop.f32.mrb[0].mxu0
  %v6323 = vadd.f32 %v6282, %v6322
  %v6324 = vpop.f32.mrb[0].mxu0
  %6325 = vdwg.mxu0
  %v6326 = vpack.c.bf16 %v6323, %v6320
  %v6327 = vld [vmem:[%s4] sm:$0xff]
  %v6328 = vld [vmem:[%s4 + $0x8] sm:$0xff]
  %v6329 = vld [vmem:[%s4 + $0x10] sm:$0xff]
  %v6330 = vld [vmem:[%s4 + $0x18] sm:$0xff]
  %v6331 = vld [vmem:[%s4 + $0x20] sm:$0xff]
  %v6332 = vld [vmem:[%s4 + $0x28] sm:$0xff]
  %v6333 = vld [vmem:[%s4 + $0x30] sm:$0xff]
  %v6334 = vld [vmem:[%s4 + $0x38] sm:$0xff]
  %v6335 = vld [vmem:[%s5] sm:$0xf]
  %v6337 = vlaneseq
  %v6338 = vshrl.u32 %v6337, 7
  %v6339 = vsub.s32 0, %v6338
  %v6340 = vrot.slane %v6335, %v6339
  %v6341 = vlaneseq
  %v6342 = vshrl.u32 %v6341, 7
  %v6343 = vsub.s32 1, %v6342
  %v6344 = vrot.slane %v6335, %v6343
  %v6345 = vlaneseq
  %v6346 = vshrl.u32 %v6345, 7
  %v6347 = vsub.s32 2, %v6346
  %v6348 = vrot.slane %v6335, %v6347
  %v6349 = vlaneseq
  %v6350 = vshrl.u32 %v6349, 7
  %v6351 = vsub.s32 3, %v6350
  %v6352 = vrot.slane %v6335, %v6351
  %v6365 = vunpack.c.l.b16 %v6327
  %v6366 = vunpack.c.h.b16 %v6327
  %v6367 = vunpack.c.l.b16 %v6328
  %v6368 = vunpack.c.h.b16 %v6328
  %v6369 = vunpack.c.l.b16 %v6329
  %v6370 = vunpack.c.h.b16 %v6329
  %v6371 = vunpack.c.l.b16 %v6330
  %v6372 = vunpack.c.h.b16 %v6330
  %v6373 = vunpack.c.l.b16 %v6331
  %v6374 = vunpack.c.h.b16 %v6331
  %v6375 = vunpack.c.l.b16 %v6332
  %v6376 = vunpack.c.h.b16 %v6332
  %v6377 = vunpack.c.l.b16 %v6333
  %v6378 = vunpack.c.h.b16 %v6333
  %v6379 = vunpack.c.l.b16 %v6334
  %v6380 = vunpack.c.h.b16 %v6334
  %v6381 = vpack.c.b16 %v6369, %v6365
  %v6382 = vpack.c.b16 %v6370, %v6366
  %v6383 = vpack.c.b16 %v6371, %v6367
  %v6384 = vpack.c.b16 %v6372, %v6368
  %v6385 = vpack.c.b16 %v6377, %v6373
  %v6386 = vpack.c.b16 %v6378, %v6374
  %v6387 = vpack.c.b16 %v6379, %v6375
  %v6388 = vpack.c.b16 %v6380, %v6376
  %vm6397 = vcmask 261120
  %v6399 = vsel %vm6397, %v6326, 0
  %6401 = vmatprep.subr.bf16.mxu0 %v6382
  %6402 = vmatpush1.bf16.msra.mxu0 %v6381
  %6403 = vmatprep.subr.bf16.mxu0 %v6386
  %6404 = vmatpush1.bf16.msra.mxu0 %v6385
  %6405 = vmatprep.subr.bf16.mxu0 0
  %6406 = vmatpush1.bf16.msra.mxu0 0
  %6407 = vmatprep.subr.bf16.mxu0 0
  %6408 = vmatpush1.bf16.msra.mxu0 0
  %6409 = vmatprep.subr.bf16.mxu0 0
  %6410 = vmatpush1.bf16.msra.mxu0 0
  %6411 = vmatprep.subr.bf16.mxu0 0
  %6412 = vmatpush1.bf16.msra.mxu0 0
  %6413 = vmatprep.subr.bf16.mxu0 0
  %6414 = vmatpush1.bf16.msra.mxu0 0
  %6415 = vmatprep.subr.bf16.mxu0 0
  %6416 = vmatpush1.bf16.msra.mxu0 0
  %6417 = vmatprep.subr.bf16.mxu0 0
  %6418 = vmatpush1.bf16.msra.mxu0 0
  %6419 = vmatprep.subr.bf16.mxu0 0
  %6420 = vmatpush1.bf16.msra.mxu0 0
  %6421 = vmatprep.subr.bf16.mxu0 0
  %6422 = vmatpush1.bf16.msra.mxu0 0
  %6423 = vmatprep.subr.bf16.mxu0 0
  %6424 = vmatpush1.bf16.msra.mxu0 0
  %6425 = vmatprep.subr.bf16.mxu0 0
  %6426 = vmatpush1.bf16.msra.mxu0 0
  %6427 = vmatprep.subr.bf16.mxu0 0
  %6428 = vmatpush1.bf16.msra.mxu0 0
  %6429 = vmatprep.subr.bf16.mxu0 0
  %6430 = vmatpush1.bf16.msra.mxu0 0
  %6431 = vmatprep.subr.bf16.mxu0 0
  %6432 = vmatpush1.bf16.msra.mxu0 0
  %6433 = vmatprep.mubr.bf16.mxu0 0
  %6434 = vmatmul.mubr.bf16.gmra.mrb[0].mxu0 %v6399
  %v6435 = vpop.f32.mrb[0].mxu0
  %v6436 = vadd.f32 %v6340, %v6435
  %v6437 = vpop.f32.mrb[0].mxu0
  %v6438 = vadd.f32 %v6344, %v6437
  %v6439 = vpop.f32.mrb[0].mxu0
  %v6440 = vadd.f32 %v6340, %v6439
  %v6441 = vpop.f32.mrb[0].mxu0
  %v6442 = vadd.f32 %v6344, %v6441
  %6443 = vdwg.mxu0
  %6444 = vmatprep.subr.bf16.mxu0 %v6384
  %6445 = vmatpush1.bf16.msra.mxu0 %v6383
  %6446 = vmatprep.subr.bf16.mxu0 %v6388
  %6447 = vmatpush1.bf16.msra.mxu0 %v6387
  %6448 = vmatprep.subr.bf16.mxu0 0
  %6449 = vmatpush1.bf16.msra.mxu0 0
  %6450 = vmatprep.subr.bf16.mxu0 0
  %6451 = vmatpush1.bf16.msra.mxu0 0
  %6452 = vmatprep.subr.bf16.mxu0 0
  %6453 = vmatpush1.bf16.msra.mxu0 0
  %6454 = vmatprep.subr.bf16.mxu0 0
  %6455 = vmatpush1.bf16.msra.mxu0 0
  %6456 = vmatprep.subr.bf16.mxu0 0
  %6457 = vmatpush1.bf16.msra.mxu0 0
  %6458 = vmatprep.subr.bf16.mxu0 0
  %6459 = vmatpush1.bf16.msra.mxu0 0
  %6460 = vmatprep.subr.bf16.mxu0 0
  %6461 = vmatpush1.bf16.msra.mxu0 0
  %6462 = vmatprep.subr.bf16.mxu0 0
  %6463 = vmatpush1.bf16.msra.mxu0 0
  %6464 = vmatprep.subr.bf16.mxu0 0
  %6465 = vmatpush1.bf16.msra.mxu0 0
  %6466 = vmatprep.subr.bf16.mxu0 0
  %6467 = vmatpush1.bf16.msra.mxu0 0
  %6468 = vmatprep.subr.bf16.mxu0 0
  %6469 = vmatpush1.bf16.msra.mxu0 0
  %6470 = vmatprep.subr.bf16.mxu0 0
  %6471 = vmatpush1.bf16.msra.mxu0 0
  %6472 = vmatprep.subr.bf16.mxu0 0
  %6473 = vmatpush1.bf16.msra.mxu0 0
  %6474 = vmatprep.subr.bf16.mxu0 0
  %6475 = vmatpush1.bf16.msra.mxu0 0
  %6476 = vmatprep.mubr.bf16.mxu0 0
  %6477 = vmatmul.mubr.bf16.gmra.mrb[0].mxu0 %v6399
  %v6478 = vpop.f32.mrb[0].mxu0
  %v6479 = vadd.f32 %v6348, %v6478
  %v6480 = vpop.f32.mrb[0].mxu0
  %v6481 = vadd.f32 %v6352, %v6480
  %v6482 = vpop.f32.mrb[0].mxu0
  %v6483 = vadd.f32 %v6348, %v6482
  %v6484 = vpop.f32.mrb[0].mxu0
  %v6485 = vadd.f32 %v6352, %v6484
  %6486 = vdwg.mxu0
  %v6487 = vpack.c.bf16 %v6440, %v6436
  %v6488 = vpack.c.bf16 %v6442, %v6438
  %v6489 = vpack.c.bf16 %v6483, %v6479
  %v6490 = vpack.c.bf16 %v6485, %v6481
  %v6491 = vld [vmem:[%s6] sm:$0xff]
  %v6492 = vld [vmem:[%s6 + $0x8] sm:$0xff]
  %v6493 = vld [vmem:[%s6 + $0x10] sm:$0xff]
  %v6494 = vld [vmem:[%s6 + $0x18] sm:$0xff]
  %v6495 = vld [vmem:[%s6 + $0x20] sm:$0xff]
  %v6496 = vld [vmem:[%s6 + $0x28] sm:$0xff]
  %v6497 = vld [vmem:[%s6 + $0x30] sm:$0xff]
  %v6498 = vld [vmem:[%s6 + $0x38] sm:$0xff]
  %v6499 = vld [vmem:[%s6 + $0x40] sm:$0xff]
  %v6500 = vld [vmem:[%s6 + $0x48] sm:$0xff]
  %v6501 = vld [vmem:[%s6 + $0x50] sm:$0xff]
  %v6502 = vld [vmem:[%s6 + $0x58] sm:$0xff]
  %v6503 = vld [vmem:[%s6 + $0x60] sm:$0xff]
  %v6504 = vld [vmem:[%s6 + $0x68] sm:$0xff]
  %v6505 = vld [vmem:[%s6 + $0x70] sm:$0xff]
  %v6506 = vld [vmem:[%s6 + $0x78] sm:$0xff]
  %v6507 = vld [vmem:[%s6 + $0x80] sm:$0xff]
  %v6508 = vld [vmem:[%s6 + $0x88] sm:$0xff]
  %v6509 = vld [vmem:[%s6 + $0x90] sm:$0xff]
  %v6510 = vld [vmem:[%s6 + $0x98] sm:$0xff]
  %v6511 = vld [vmem:[%s6 + $0xa0] sm:$0xff]
  %v6512 = vld [vmem:[%s6 + $0xa8] sm:$0xff]
  %v6513 = vld [vmem:[%s6 + $0xb0] sm:$0xff]
  %v6514 = vld [vmem:[%s6 + $0xb8] sm:$0xff]
  %v6515 = vld [vmem:[%s6 + $0xc0] sm:$0xff]
  %v6516 = vld [vmem:[%s6 + $0xc8] sm:$0xff]
  %v6517 = vld [vmem:[%s6 + $0xd0] sm:$0xff]
  %v6518 = vld [vmem:[%s6 + $0xd8] sm:$0xff]
  %v6519 = vld [vmem:[%s6 + $0xe0] sm:$0xff]
  %v6520 = vld [vmem:[%s6 + $0xe8] sm:$0xff]
  %v6521 = vld [vmem:[%s6 + $0xf0] sm:$0xff]
  %v6522 = vld [vmem:[%s6 + $0xf8] sm:$0xff]
  %v6523 = vld [vmem:[%s6 + $0x100] sm:$0xff]
  %v6524 = vld [vmem:[%s6 + $0x108] sm:$0xff]
  %v6525 = vld [vmem:[%s6 + $0x110] sm:$0xff]
  %v6526 = vld [vmem:[%s6 + $0x118] sm:$0xff]
  %v6527 = vld [vmem:[%s6 + $0x120] sm:$0xff]
  %v6528 = vld [vmem:[%s6 + $0x128] sm:$0xff]
  %v6529 = vld [vmem:[%s6 + $0x130] sm:$0xff]
  %v6530 = vld [vmem:[%s6 + $0x138] sm:$0xff]
  %v6531 = vld [vmem:[%s6 + $0x140] sm:$0xff]
  %v6532 = vld [vmem:[%s6 + $0x148] sm:$0xff]
  %v6533 = vld [vmem:[%s6 + $0x150] sm:$0xff]
  %v6534 = vld [vmem:[%s6 + $0x158] sm:$0xff]
  %v6535 = vld [vmem:[%s6 + $0x160] sm:$0xff]
  %v6536 = vld [vmem:[%s6 + $0x168] sm:$0xff]
  %v6537 = vld [vmem:[%s6 + $0x170] sm:$0xff]
  %v6538 = vld [vmem:[%s6 + $0x178] sm:$0xff]
  %v6539 = vld [vmem:[%s6 + $0x180] sm:$0xff]
  %v6540 = vld [vmem:[%s6 + $0x188] sm:$0xff]
  %v6541 = vld [vmem:[%s6 + $0x190] sm:$0xff]
  %v6542 = vld [vmem:[%s6 + $0x198] sm:$0xff]
  %v6543 = vld [vmem:[%s6 + $0x1a0] sm:$0xff]
  %v6544 = vld [vmem:[%s6 + $0x1a8] sm:$0xff]
  %v6545 = vld [vmem:[%s6 + $0x1b0] sm:$0xff]
  %v6546 = vld [vmem:[%s6 + $0x1b8] sm:$0xff]
  %v6547 = vld [vmem:[%s6 + $0x1c0] sm:$0xff]
  %v6548 = vld [vmem:[%s6 + $0x1c8] sm:$0xff]
  %v6549 = vld [vmem:[%s6 + $0x1d0] sm:$0xff]
  %v6550 = vld [vmem:[%s6 + $0x1d8] sm:$0xff]
  %v6551 = vld [vmem:[%s6 + $0x1e0] sm:$0xff]
  %v6552 = vld [vmem:[%s6 + $0x1e8] sm:$0xff]
  %v6553 = vld [vmem:[%s6 + $0x1f0] sm:$0xff]
  %v6554 = vld [vmem:[%s6 + $0x1f8] sm:$0xff]
  %v6555 = vld [vmem:[%s6 + $0x200] sm:$0xff]
  %v6556 = vld [vmem:[%s6 + $0x208] sm:$0xff]
  %v6557 = vld [vmem:[%s6 + $0x210] sm:$0xff]
  %v6558 = vld [vmem:[%s6 + $0x218] sm:$0xff]
  %v6559 = vld [vmem:[%s6 + $0x220] sm:$0xff]
  %v6560 = vld [vmem:[%s6 + $0x228] sm:$0xff]
  %v6561 = vld [vmem:[%s6 + $0x230] sm:$0xff]
  %v6562 = vld [vmem:[%s6 + $0x238] sm:$0xff]
  %v6563 = vld [vmem:[%s6 + $0x240] sm:$0xff]
  %v6564 = vld [vmem:[%s6 + $0x248] sm:$0xff]
  %v6565 = vld [vmem:[%s6 + $0x250] sm:$0xff]
  %v6566 = vld [vmem:[%s6 + $0x258] sm:$0xff]
  %v6567 = vld [vmem:[%s6 + $0x260] sm:$0xff]
  %v6568 = vld [vmem:[%s6 + $0x268] sm:$0xff]
  %v6569 = vld [vmem:[%s6 + $0x270] sm:$0xff]
  %v6570 = vld [vmem:[%s6 + $0x278] sm:$0xff]
  %v6571 = vld [vmem:[%s6 + $0x280] sm:$0xff]
  %v6572 = vld [vmem:[%s6 + $0x288] sm:$0xff]
  %v6573 = vld [vmem:[%s6 + $0x290] sm:$0xff]
  %v6574 = vld [vmem:[%s6 + $0x298] sm:$0xff]
  %v6575 = vld [vmem:[%s6 + $0x2a0] sm:$0xff]
  %v6576 = vld [vmem:[%s6 + $0x2a8] sm:$0xff]
  %v6577 = vld [vmem:[%s6 + $0x2b0] sm:$0xff]
  %v6578 = vld [vmem:[%s6 + $0x2b8] sm:$0xff]
  %v6579 = vld [vmem:[%s6 + $0x2c0] sm:$0xff]
  %v6580 = vld [vmem:[%s6 + $0x2c8] sm:$0xff]
  %v6581 = vld [vmem:[%s6 + $0x2d0] sm:$0xff]
  %v6582 = vld [vmem:[%s6 + $0x2d8] sm:$0xff]
  %v6583 = vld [vmem:[%s6 + $0x2e0] sm:$0xff]
  %v6584 = vld [vmem:[%s6 + $0x2e8] sm:$0xff]
  %v6585 = vld [vmem:[%s6 + $0x2f0] sm:$0xff]
  %v6586 = vld [vmem:[%s6 + $0x2f8] sm:$0xff]
  %v6587 = vld [vmem:[%s6 + $0x300] sm:$0xff]
  %v6588 = vld [vmem:[%s6 + $0x308] sm:$0xff]
  %v6589 = vld [vmem:[%s6 + $0x310] sm:$0xff]
  %v6590 = vld [vmem:[%s6 + $0x318] sm:$0xff]
  %v6591 = vld [vmem:[%s6 + $0x320] sm:$0xff]
  %v6592 = vld [vmem:[%s6 + $0x328] sm:$0xff]
  %v6593 = vld [vmem:[%s6 + $0x330] sm:$0xff]
  %v6594 = vld [vmem:[%s6 + $0x338] sm:$0xff]
  %v6595 = vld [vmem:[%s6 + $0x340] sm:$0xff]
  %v6596 = vld [vmem:[%s6 + $0x348] sm:$0xff]
  %v6597 = vld [vmem:[%s6 + $0x350] sm:$0xff]
  %v6598 = vld [vmem:[%s6 + $0x358] sm:$0xff]
  %v6599 = vld [vmem:[%s6 + $0x360] sm:$0xff]
  %v6600 = vld [vmem:[%s6 + $0x368] sm:$0xff]
  %v6601 = vld [vmem:[%s6 + $0x370] sm:$0xff]
  %v6602 = vld [vmem:[%s6 + $0x378] sm:$0xff]
  %v6603 = vld [vmem:[%s6 + $0x380] sm:$0xff]
  %v6604 = vld [vmem:[%s6 + $0x388] sm:$0xff]
  %v6605 = vld [vmem:[%s6 + $0x390] sm:$0xff]
  %v6606 = vld [vmem:[%s6 + $0x398] sm:$0xff]
  %v6607 = vld [vmem:[%s6 + $0x3a0] sm:$0xff]
  %v6608 = vld [vmem:[%s6 + $0x3a8] sm:$0xff]
  %v6609 = vld [vmem:[%s6 + $0x3b0] sm:$0xff]
  %v6610 = vld [vmem:[%s6 + $0x3b8] sm:$0xff]
  %v6611 = vld [vmem:[%s6 + $0x3c0] sm:$0xff]
  %v6612 = vld [vmem:[%s6 + $0x3c8] sm:$0xff]
  %v6613 = vld [vmem:[%s6 + $0x3d0] sm:$0xff]
  %v6614 = vld [vmem:[%s6 + $0x3d8] sm:$0xff]
  %v6615 = vld [vmem:[%s6 + $0x3e0] sm:$0xff]
  %v6616 = vld [vmem:[%s6 + $0x3e8] sm:$0xff]
  %v6617 = vld [vmem:[%s6 + $0x3f0] sm:$0xff]
  %v6618 = vld [vmem:[%s6 + $0x3f8] sm:$0xff]
  %v6619 = vld [vmem:[%s6 + $0x400] sm:$0xff]
  %v6620 = vld [vmem:[%s6 + $0x408] sm:$0xff]
  %v6621 = vld [vmem:[%s6 + $0x410] sm:$0xff]
  %v6622 = vld [vmem:[%s6 + $0x418] sm:$0xff]
  %v6623 = vld [vmem:[%s6 + $0x420] sm:$0xff]
  %v6624 = vld [vmem:[%s6 + $0x428] sm:$0xff]
  %v6625 = vld [vmem:[%s6 + $0x430] sm:$0xff]
  %v6626 = vld [vmem:[%s6 + $0x438] sm:$0xff]
  %v6627 = vld [vmem:[%s6 + $0x440] sm:$0xff]
  %v6628 = vld [vmem:[%s6 + $0x448] sm:$0xff]
  %v6629 = vld [vmem:[%s6 + $0x450] sm:$0xff]
  %v6630 = vld [vmem:[%s6 + $0x458] sm:$0xff]
  %v6631 = vld [vmem:[%s6 + $0x460] sm:$0xff]
  %v6632 = vld [vmem:[%s6 + $0x468] sm:$0xff]
  %v6633 = vld [vmem:[%s6 + $0x470] sm:$0xff]
  %v6634 = vld [vmem:[%s6 + $0x478] sm:$0xff]
  %v6635 = vld [vmem:[%s6 + $0x480] sm:$0xff]
  %v6636 = vld [vmem:[%s6 + $0x488] sm:$0xff]
  %v6637 = vld [vmem:[%s6 + $0x490] sm:$0xff]
  %v6638 = vld [vmem:[%s6 + $0x498] sm:$0xff]
  %v6639 = vld [vmem:[%s6 + $0x4a0] sm:$0xff]
  %v6640 = vld [vmem:[%s6 + $0x4a8] sm:$0xff]
  %v6641 = vld [vmem:[%s6 + $0x4b0] sm:$0xff]
  %v6642 = vld [vmem:[%s6 + $0x4b8] sm:$0xff]
  %v6643 = vld [vmem:[%s6 + $0x4c0] sm:$0xff]
  %v6644 = vld [vmem:[%s6 + $0x4c8] sm:$0xff]
  %v6645 = vld [vmem:[%s6 + $0x4d0] sm:$0xff]
  %v6646 = vld [vmem:[%s6 + $0x4d8] sm:$0xff]
  %v6647 = vld [vmem:[%s6 + $0x4e0] sm:$0xff]
  %v6648 = vld [vmem:[%s6 + $0x4e8] sm:$0xff]
  %v6649 = vld [vmem:[%s6 + $0x4f0] sm:$0xff]
  %v6650 = vld [vmem:[%s6 + $0x4f8] sm:$0xff]
  %v6651 = vld [vmem:[%s6 + $0x500] sm:$0xff]
  %v6652 = vld [vmem:[%s6 + $0x508] sm:$0xff]
  %v6653 = vld [vmem:[%s6 + $0x510] sm:$0xff]
  %v6654 = vld [vmem:[%s6 + $0x518] sm:$0xff]
  %v6655 = vld [vmem:[%s6 + $0x520] sm:$0xff]
  %v6656 = vld [vmem:[%s6 + $0x528] sm:$0xff]
  %v6657 = vld [vmem:[%s6 + $0x530] sm:$0xff]
  %v6658 = vld [vmem:[%s6 + $0x538] sm:$0xff]
  %v6659 = vld [vmem:[%s6 + $0x540] sm:$0xff]
  %v6660 = vld [vmem:[%s6 + $0x548] sm:$0xff]
  %v6661 = vld [vmem:[%s6 + $0x550] sm:$0xff]
  %v6662 = vld [vmem:[%s6 + $0x558] sm:$0xff]
  %v6663 = vld [vmem:[%s6 + $0x560] sm:$0xff]
  %v6664 = vld [vmem:[%s6 + $0x568] sm:$0xff]
  %v6665 = vld [vmem:[%s6 + $0x570] sm:$0xff]
  %v6666 = vld [vmem:[%s6 + $0x578] sm:$0xff]
  %v6667 = vld [vmem:[%s6 + $0x580] sm:$0xff]
  %v6668 = vld [vmem:[%s6 + $0x588] sm:$0xff]
  %v6669 = vld [vmem:[%s6 + $0x590] sm:$0xff]
  %v6670 = vld [vmem:[%s6 + $0x598] sm:$0xff]
  %v6671 = vld [vmem:[%s6 + $0x5a0] sm:$0xff]
  %v6672 = vld [vmem:[%s6 + $0x5a8] sm:$0xff]
  %v6673 = vld [vmem:[%s6 + $0x5b0] sm:$0xff]
  %v6674 = vld [vmem:[%s6 + $0x5b8] sm:$0xff]
  %v6675 = vld [vmem:[%s6 + $0x5c0] sm:$0xff]
  %v6676 = vld [vmem:[%s6 + $0x5c8] sm:$0xff]
  %v6677 = vld [vmem:[%s6 + $0x5d0] sm:$0xff]
  %v6678 = vld [vmem:[%s6 + $0x5d8] sm:$0xff]
  %v6679 = vld [vmem:[%s6 + $0x5e0] sm:$0xff]
  %v6680 = vld [vmem:[%s6 + $0x5e8] sm:$0xff]
  %v6681 = vld [vmem:[%s6 + $0x5f0] sm:$0xff]
  %v6682 = vld [vmem:[%s6 + $0x5f8] sm:$0xff]
  %v6683 = vld [vmem:[%s6 + $0x600] sm:$0xff]
  %v6684 = vld [vmem:[%s6 + $0x608] sm:$0xff]
  %v6685 = vld [vmem:[%s6 + $0x610] sm:$0xff]
  %v6686 = vld [vmem:[%s6 + $0x618] sm:$0xff]
  %v6687 = vld [vmem:[%s6 + $0x620] sm:$0xff]
  %v6688 = vld [vmem:[%s6 + $0x628] sm:$0xff]
  %v6689 = vld [vmem:[%s6 + $0x630] sm:$0xff]
  %v6690 = vld [vmem:[%s6 + $0x638] sm:$0xff]
  %v6691 = vld [vmem:[%s6 + $0x640] sm:$0xff]
  %v6692 = vld [vmem:[%s6 + $0x648] sm:$0xff]
  %v6693 = vld [vmem:[%s6 + $0x650] sm:$0xff]
  %v6694 = vld [vmem:[%s6 + $0x658] sm:$0xff]
  %v6695 = vld [vmem:[%s6 + $0x660] sm:$0xff]
  %v6696 = vld [vmem:[%s6 + $0x668] sm:$0xff]
  %v6697 = vld [vmem:[%s6 + $0x670] sm:$0xff]
  %v6698 = vld [vmem:[%s6 + $0x678] sm:$0xff]
  %v6699 = vld [vmem:[%s6 + $0x680] sm:$0xff]
  %v6700 = vld [vmem:[%s6 + $0x688] sm:$0xff]
  %v6701 = vld [vmem:[%s6 + $0x690] sm:$0xff]
  %v6702 = vld [vmem:[%s6 + $0x698] sm:$0xff]
  %v6703 = vld [vmem:[%s6 + $0x6a0] sm:$0xff]
  %v6704 = vld [vmem:[%s6 + $0x6a8] sm:$0xff]
  %v6705 = vld [vmem:[%s6 + $0x6b0] sm:$0xff]
  %v6706 = vld [vmem:[%s6 + $0x6b8] sm:$0xff]
  %v6707 = vld [vmem:[%s6 + $0x6c0] sm:$0xff]
  %v6708 = vld [vmem:[%s6 + $0x6c8] sm:$0xff]
  %v6709 = vld [vmem:[%s6 + $0x6d0] sm:$0xff]
  %v6710 = vld [vmem:[%s6 + $0x6d8] sm:$0xff]
  %v6711 = vld [vmem:[%s6 + $0x6e0] sm:$0xff]
  %v6712 = vld [vmem:[%s6 + $0x6e8] sm:$0xff]
  %v6713 = vld [vmem:[%s6 + $0x6f0] sm:$0xff]
  %v6714 = vld [vmem:[%s6 + $0x6f8] sm:$0xff]
  %v6715 = vld [vmem:[%s6 + $0x700] sm:$0xff]
  %v6716 = vld [vmem:[%s6 + $0x708] sm:$0xff]
  %v6717 = vld [vmem:[%s6 + $0x710] sm:$0xff]
  %v6718 = vld [vmem:[%s6 + $0x718] sm:$0xff]
  %v6719 = vld [vmem:[%s6 + $0x720] sm:$0xff]
  %v6720 = vld [vmem:[%s6 + $0x728] sm:$0xff]
  %v6721 = vld [vmem:[%s6 + $0x730] sm:$0xff]
  %v6722 = vld [vmem:[%s6 + $0x738] sm:$0xff]
  %v6723 = vld [vmem:[%s6 + $0x740] sm:$0xff]
  %v6724 = vld [vmem:[%s6 + $0x748] sm:$0xff]
  %v6725 = vld [vmem:[%s6 + $0x750] sm:$0xff]
  %v6726 = vld [vmem:[%s6 + $0x758] sm:$0xff]
  %v6727 = vld [vmem:[%s6 + $0x760] sm:$0xff]
  %v6728 = vld [vmem:[%s6 + $0x768] sm:$0xff]
  %v6729 = vld [vmem:[%s6 + $0x770] sm:$0xff]
  %v6730 = vld [vmem:[%s6 + $0x778] sm:$0xff]
  %v6731 = vld [vmem:[%s6 + $0x780] sm:$0xff]
  %v6732 = vld [vmem:[%s6 + $0x788] sm:$0xff]
  %v6733 = vld [vmem:[%s6 + $0x790] sm:$0xff]
  %v6734 = vld [vmem:[%s6 + $0x798] sm:$0xff]
  %v6735 = vld [vmem:[%s6 + $0x7a0] sm:$0xff]
  %v6736 = vld [vmem:[%s6 + $0x7a8] sm:$0xff]
  %v6737 = vld [vmem:[%s6 + $0x7b0] sm:$0xff]
  %v6738 = vld [vmem:[%s6 + $0x7b8] sm:$0xff]
  %v6739 = vld [vmem:[%s6 + $0x7c0] sm:$0xff]
  %v6740 = vld [vmem:[%s6 + $0x7c8] sm:$0xff]
  %v6741 = vld [vmem:[%s6 + $0x7d0] sm:$0xff]
  %v6742 = vld [vmem:[%s6 + $0x7d8] sm:$0xff]
  %v6743 = vld [vmem:[%s6 + $0x7e0] sm:$0xff]
  %v6744 = vld [vmem:[%s6 + $0x7e8] sm:$0xff]
  %v6745 = vld [vmem:[%s6 + $0x7f0] sm:$0xff]
  %v6746 = vld [vmem:[%s6 + $0x7f8] sm:$0xff]
  %v6747 = vld [vmem:[%s8] sm:$0xff]
  %v6749 = vlaneseq
  %v6750 = vshrl.u32 %v6749, 7
  %v6751 = vsub.s32 0, %v6750
  %v6752 = vrot.slane %v6747, %v6751
  %v6753 = vlaneseq
  %v6754 = vshrl.u32 %v6753, 7
  %v6755 = vsub.s32 1, %v6754
  %v6756 = vrot.slane %v6747, %v6755
  %v6757 = vlaneseq
  %v6758 = vshrl.u32 %v6757, 7
  %v6759 = vsub.s32 2, %v6758
  %v6760 = vrot.slane %v6747, %v6759
  %v6761 = vlaneseq
  %v6762 = vshrl.u32 %v6761, 7
  %v6763 = vsub.s32 3, %v6762
  %v6764 = vrot.slane %v6747, %v6763
  %v6765 = vlaneseq
  %v6766 = vshrl.u32 %v6765, 7
  %v6767 = vsub.s32 4, %v6766
  %v6768 = vrot.slane %v6747, %v6767
  %v6769 = vlaneseq
  %v6770 = vshrl.u32 %v6769, 7
  %v6771 = vsub.s32 5, %v6770
  %v6772 = vrot.slane %v6747, %v6771
  %v6773 = vlaneseq
  %v6774 = vshrl.u32 %v6773, 7
  %v6775 = vsub.s32 6, %v6774
  %v6776 = vrot.slane %v6747, %v6775
  %v6777 = vlaneseq
  %v6778 = vshrl.u32 %v6777, 7
  %v6779 = vsub.s32 7, %v6778
  %v6780 = vrot.slane %v6747, %v6779
  %v7045 = vunpack.c.l.b16 %v6491
  %v7046 = vunpack.c.h.b16 %v6491
  %v7047 = vunpack.c.l.b16 %v6492
  %v7048 = vunpack.c.h.b16 %v6492
  %v7049 = vunpack.c.l.b16 %v6493
  %v7050 = vunpack.c.h.b16 %v6493
  %v7051 = vunpack.c.l.b16 %v6494
  %v7052 = vunpack.c.h.b16 %v6494
  %v7053 = vunpack.c.l.b16 %v6495
  %v7054 = vunpack.c.h.b16 %v6495
  %v7055 = vunpack.c.l.b16 %v6496
  %v7056 = vunpack.c.h.b16 %v6496
  %v7057 = vunpack.c.l.b16 %v6497
  %v7058 = vunpack.c.h.b16 %v6497
  %v7059 = vunpack.c.l.b16 %v6498
  %v7060 = vunpack.c.h.b16 %v6498
  %v7061 = vunpack.c.l.b16 %v6499
  %v7062 = vunpack.c.h.b16 %v6499
  %v7063 = vunpack.c.l.b16 %v6500
  %v7064 = vunpack.c.h.b16 %v6500
  %v7065 = vunpack.c.l.b16 %v6501
  %v7066 = vunpack.c.h.b16 %v6501
  %v7067 = vunpack.c.l.b16 %v6502
  %v7068 = vunpack.c.h.b16 %v6502
  %v7069 = vunpack.c.l.b16 %v6503
  %v7070 = vunpack.c.h.b16 %v6503
  %v7071 = vunpack.c.l.b16 %v6504
  %v7072 = vunpack.c.h.b16 %v6504
  %v7073 = vunpack.c.l.b16 %v6505
  %v7074 = vunpack.c.h.b16 %v6505
  %v7075 = vunpack.c.l.b16 %v6506
  %v7076 = vunpack.c.h.b16 %v6506
  %v7077 = vunpack.c.l.b16 %v6507
  %v7078 = vunpack.c.h.b16 %v6507
  %v7079 = vunpack.c.l.b16 %v6508
  %v7080 = vunpack.c.h.b16 %v6508
  %v7081 = vunpack.c.l.b16 %v6509
  %v7082 = vunpack.c.h.b16 %v6509
  %v7083 = vunpack.c.l.b16 %v6510
  %v7084 = vunpack.c.h.b16 %v6510
  %v7085 = vunpack.c.l.b16 %v6511
  %v7086 = vunpack.c.h.b16 %v6511
  %v7087 = vunpack.c.l.b16 %v6512
  %v7088 = vunpack.c.h.b16 %v6512
  %v7089 = vunpack.c.l.b16 %v6513
  %v7090 = vunpack.c.h.b16 %v6513
  %v7091 = vunpack.c.l.b16 %v6514
  %v7092 = vunpack.c.h.b16 %v6514
  %v7093 = vunpack.c.l.b16 %v6515
  %v7094 = vunpack.c.h.b16 %v6515
  %v7095 = vunpack.c.l.b16 %v6516
  %v7096 = vunpack.c.h.b16 %v6516
  %v7097 = vunpack.c.l.b16 %v6517
  %v7098 = vunpack.c.h.b16 %v6517
  %v7099 = vunpack.c.l.b16 %v6518
  %v7100 = vunpack.c.h.b16 %v6518
  %v7101 = vunpack.c.l.b16 %v6519
  %v7102 = vunpack.c.h.b16 %v6519
  %v7103 = vunpack.c.l.b16 %v6520
  %v7104 = vunpack.c.h.b16 %v6520
  %v7105 = vunpack.c.l.b16 %v6521
  %v7106 = vunpack.c.h.b16 %v6521
  %v7107 = vunpack.c.l.b16 %v6522
  %v7108 = vunpack.c.h.b16 %v6522
  %v7109 = vunpack.c.l.b16 %v6523
  %v7110 = vunpack.c.h.b16 %v6523
  %v7111 = vunpack.c.l.b16 %v6524
  %v7112 = vunpack.c.h.b16 %v6524
  %v7113 = vunpack.c.l.b16 %v6525
  %v7114 = vunpack.c.h.b16 %v6525
  %v7115 = vunpack.c.l.b16 %v6526
  %v7116 = vunpack.c.h.b16 %v6526
  %v7117 = vunpack.c.l.b16 %v6527
  %v7118 = vunpack.c.h.b16 %v6527
  %v7119 = vunpack.c.l.b16 %v6528
  %v7120 = vunpack.c.h.b16 %v6528
  %v7121 = vunpack.c.l.b16 %v6529
  %v7122 = vunpack.c.h.b16 %v6529
  %v7123 = vunpack.c.l.b16 %v6530
  %v7124 = vunpack.c.h.b16 %v6530
  %v7125 = vunpack.c.l.b16 %v6531
  %v7126 = vunpack.c.h.b16 %v6531
  %v7127 = vunpack.c.l.b16 %v6532
  %v7128 = vunpack.c.h.b16 %v6532
  %v7129 = vunpack.c.l.b16 %v6533
  %v7130 = vunpack.c.h.b16 %v6533
  %v7131 = vunpack.c.l.b16 %v6534
  %v7132 = vunpack.c.h.b16 %v6534
  %v7133 = vunpack.c.l.b16 %v6535
  %v7134 = vunpack.c.h.b16 %v6535
  %v7135 = vunpack.c.l.b16 %v6536
  %v7136 = vunpack.c.h.b16 %v6536
  %v7137 = vunpack.c.l.b16 %v6537
  %v7138 = vunpack.c.h.b16 %v6537
  %v7139 = vunpack.c.l.b16 %v6538
  %v7140 = vunpack.c.h.b16 %v6538
  %v7141 = vunpack.c.l.b16 %v6539
  %v7142 = vunpack.c.h.b16 %v6539
  %v7143 = vunpack.c.l.b16 %v6540
  %v7144 = vunpack.c.h.b16 %v6540
  %v7145 = vunpack.c.l.b16 %v6541
  %v7146 = vunpack.c.h.b16 %v6541
  %v7147 = vunpack.c.l.b16 %v6542
  %v7148 = vunpack.c.h.b16 %v6542
  %v7149 = vunpack.c.l.b16 %v6543
  %v7150 = vunpack.c.h.b16 %v6543
  %v7151 = vunpack.c.l.b16 %v6544
  %v7152 = vunpack.c.h.b16 %v6544
  %v7153 = vunpack.c.l.b16 %v6545
  %v7154 = vunpack.c.h.b16 %v6545
  %v7155 = vunpack.c.l.b16 %v6546
  %v7156 = vunpack.c.h.b16 %v6546
  %v7157 = vunpack.c.l.b16 %v6547
  %v7158 = vunpack.c.h.b16 %v6547
  %v7159 = vunpack.c.l.b16 %v6548
  %v7160 = vunpack.c.h.b16 %v6548
  %v7161 = vunpack.c.l.b16 %v6549
  %v7162 = vunpack.c.h.b16 %v6549
  %v7163 = vunpack.c.l.b16 %v6550
  %v7164 = vunpack.c.h.b16 %v6550
  %v7165 = vunpack.c.l.b16 %v6551
  %v7166 = vunpack.c.h.b16 %v6551
  %v7167 = vunpack.c.l.b16 %v6552
  %v7168 = vunpack.c.h.b16 %v6552
  %v7169 = vunpack.c.l.b16 %v6553
  %v7170 = vunpack.c.h.b16 %v6553
  %v7171 = vunpack.c.l.b16 %v6554
  %v7172 = vunpack.c.h.b16 %v6554
  %v7173 = vunpack.c.l.b16 %v6555
  %v7174 = vunpack.c.h.b16 %v6555
  %v7175 = vunpack.c.l.b16 %v6556
  %v7176 = vunpack.c.h.b16 %v6556
  %v7177 = vunpack.c.l.b16 %v6557
  %v7178 = vunpack.c.h.b16 %v6557
  %v7179 = vunpack.c.l.b16 %v6558
  %v7180 = vunpack.c.h.b16 %v6558
  %v7181 = vunpack.c.l.b16 %v6559
  %v7182 = vunpack.c.h.b16 %v6559
  %v7183 = vunpack.c.l.b16 %v6560
  %v7184 = vunpack.c.h.b16 %v6560
  %v7185 = vunpack.c.l.b16 %v6561
  %v7186 = vunpack.c.h.b16 %v6561
  %v7187 = vunpack.c.l.b16 %v6562
  %v7188 = vunpack.c.h.b16 %v6562
  %v7189 = vunpack.c.l.b16 %v6563
  %v7190 = vunpack.c.h.b16 %v6563
  %v7191 = vunpack.c.l.b16 %v6564
  %v7192 = vunpack.c.h.b16 %v6564
  %v7193 = vunpack.c.l.b16 %v6565
  %v7194 = vunpack.c.h.b16 %v6565
  %v7195 = vunpack.c.l.b16 %v6566
  %v7196 = vunpack.c.h.b16 %v6566
  %v7197 = vunpack.c.l.b16 %v6567
  %v7198 = vunpack.c.h.b16 %v6567
  %v7199 = vunpack.c.l.b16 %v6568
  %v7200 = vunpack.c.h.b16 %v6568
  %v7201 = vunpack.c.l.b16 %v6569
  %v7202 = vunpack.c.h.b16 %v6569
  %v7203 = vunpack.c.l.b16 %v6570
  %v7204 = vunpack.c.h.b16 %v6570
  %v7205 = vunpack.c.l.b16 %v6571
  %v7206 = vunpack.c.h.b16 %v6571
  %v7207 = vunpack.c.l.b16 %v6572
  %v7208 = vunpack.c.h.b16 %v6572
  %v7209 = vunpack.c.l.b16 %v6573
  %v7210 = vunpack.c.h.b16 %v6573
  %v7211 = vunpack.c.l.b16 %v6574
  %v7212 = vunpack.c.h.b16 %v6574
  %v7213 = vunpack.c.l.b16 %v6575
  %v7214 = vunpack.c.h.b16 %v6575
  %v7215 = vunpack.c.l.b16 %v6576
  %v7216 = vunpack.c.h.b16 %v6576
  %v7217 = vunpack.c.l.b16 %v6577
  %v7218 = vunpack.c.h.b16 %v6577
  %v7219 = vunpack.c.l.b16 %v6578
  %v7220 = vunpack.c.h.b16 %v6578
  %v7221 = vunpack.c.l.b16 %v6579
  %v7222 = vunpack.c.h.b16 %v6579
  %v7223 = vunpack.c.l.b16 %v6580
  %v7224 = vunpack.c.h.b16 %v6580
  %v7225 = vunpack.c.l.b16 %v6581
  %v7226 = vunpack.c.h.b16 %v6581
  %v7227 = vunpack.c.l.b16 %v6582
  %v7228 = vunpack.c.h.b16 %v6582
  %v7229 = vunpack.c.l.b16 %v6583
  %v7230 = vunpack.c.h.b16 %v6583
  %v7231 = vunpack.c.l.b16 %v6584
  %v7232 = vunpack.c.h.b16 %v6584
  %v7233 = vunpack.c.l.b16 %v6585
  %v7234 = vunpack.c.h.b16 %v6585
  %v7235 = vunpack.c.l.b16 %v6586
  %v7236 = vunpack.c.h.b16 %v6586
  %v7237 = vunpack.c.l.b16 %v6587
  %v7238 = vunpack.c.h.b16 %v6587
  %v7239 = vunpack.c.l.b16 %v6588
  %v7240 = vunpack.c.h.b16 %v6588
  %v7241 = vunpack.c.l.b16 %v6589
  %v7242 = vunpack.c.h.b16 %v6589
  %v7243 = vunpack.c.l.b16 %v6590
  %v7244 = vunpack.c.h.b16 %v6590
  %v7245 = vunpack.c.l.b16 %v6591
  %v7246 = vunpack.c.h.b16 %v6591
  %v7247 = vunpack.c.l.b16 %v6592
  %v7248 = vunpack.c.h.b16 %v6592
  %v7249 = vunpack.c.l.b16 %v6593
  %v7250 = vunpack.c.h.b16 %v6593
  %v7251 = vunpack.c.l.b16 %v6594
  %v7252 = vunpack.c.h.b16 %v6594
  %v7253 = vunpack.c.l.b16 %v6595
  %v7254 = vunpack.c.h.b16 %v6595
  %v7255 = vunpack.c.l.b16 %v6596
  %v7256 = vunpack.c.h.b16 %v6596
  %v7257 = vunpack.c.l.b16 %v6597
  %v7258 = vunpack.c.h.b16 %v6597
  %v7259 = vunpack.c.l.b16 %v6598
  %v7260 = vunpack.c.h.b16 %v6598
  %v7261 = vunpack.c.l.b16 %v6599
  %v7262 = vunpack.c.h.b16 %v6599
  %v7263 = vunpack.c.l.b16 %v6600
  %v7264 = vunpack.c.h.b16 %v6600
  %v7265 = vunpack.c.l.b16 %v6601
  %v7266 = vunpack.c.h.b16 %v6601
  %v7267 = vunpack.c.l.b16 %v6602
  %v7268 = vunpack.c.h.b16 %v6602
  %v7269 = vunpack.c.l.b16 %v6603
  %v7270 = vunpack.c.h.b16 %v6603
  %v7271 = vunpack.c.l.b16 %v6604
  %v7272 = vunpack.c.h.b16 %v6604
  %v7273 = vunpack.c.l.b16 %v6605
  %v7274 = vunpack.c.h.b16 %v6605
  %v7275 = vunpack.c.l.b16 %v6606
  %v7276 = vunpack.c.h.b16 %v6606
  %v7277 = vunpack.c.l.b16 %v6607
  %v7278 = vunpack.c.h.b16 %v6607
  %v7279 = vunpack.c.l.b16 %v6608
  %v7280 = vunpack.c.h.b16 %v6608
  %v7281 = vunpack.c.l.b16 %v6609
  %v7282 = vunpack.c.h.b16 %v6609
  %v7283 = vunpack.c.l.b16 %v6610
  %v7284 = vunpack.c.h.b16 %v6610
  %v7285 = vunpack.c.l.b16 %v6611
  %v7286 = vunpack.c.h.b16 %v6611
  %v7287 = vunpack.c.l.b16 %v6612
  %v7288 = vunpack.c.h.b16 %v6612
  %v7289 = vunpack.c.l.b16 %v6613
  %v7290 = vunpack.c.h.b16 %v6613
  %v7291 = vunpack.c.l.b16 %v6614
  %v7292 = vunpack.c.h.b16 %v6614
  %v7293 = vunpack.c.l.b16 %v6615
  %v7294 = vunpack.c.h.b16 %v6615
  %v7295 = vunpack.c.l.b16 %v6616
  %v7296 = vunpack.c.h.b16 %v6616
  %v7297 = vunpack.c.l.b16 %v6617
  %v7298 = vunpack.c.h.b16 %v6617
  %v7299 = vunpack.c.l.b16 %v6618
  %v7300 = vunpack.c.h.b16 %v6618
  %v7301 = vunpack.c.l.b16 %v6619
  %v7302 = vunpack.c.h.b16 %v6619
  %v7303 = vunpack.c.l.b16 %v6620
  %v7304 = vunpack.c.h.b16 %v6620
  %v7305 = vunpack.c.l.b16 %v6621
  %v7306 = vunpack.c.h.b16 %v6621
  %v7307 = vunpack.c.l.b16 %v6622
  %v7308 = vunpack.c.h.b16 %v6622
  %v7309 = vunpack.c.l.b16 %v6623
  %v7310 = vunpack.c.h.b16 %v6623
  %v7311 = vunpack.c.l.b16 %v6624
  %v7312 = vunpack.c.h.b16 %v6624
  %v7313 = vunpack.c.l.b16 %v6625
  %v7314 = vunpack.c.h.b16 %v6625
  %v7315 = vunpack.c.l.b16 %v6626
  %v7316 = vunpack.c.h.b16 %v6626
  %v7317 = vunpack.c.l.b16 %v6627
  %v7318 = vunpack.c.h.b16 %v6627
  %v7319 = vunpack.c.l.b16 %v6628
  %v7320 = vunpack.c.h.b16 %v6628
  %v7321 = vunpack.c.l.b16 %v6629
  %v7322 = vunpack.c.h.b16 %v6629
  %v7323 = vunpack.c.l.b16 %v6630
  %v7324 = vunpack.c.h.b16 %v6630
  %v7325 = vunpack.c.l.b16 %v6631
  %v7326 = vunpack.c.h.b16 %v6631
  %v7327 = vunpack.c.l.b16 %v6632
  %v7328 = vunpack.c.h.b16 %v6632
  %v7329 = vunpack.c.l.b16 %v6633
  %v7330 = vunpack.c.h.b16 %v6633
  %v7331 = vunpack.c.l.b16 %v6634
  %v7332 = vunpack.c.h.b16 %v6634
  %v7333 = vunpack.c.l.b16 %v6635
  %v7334 = vunpack.c.h.b16 %v6635
  %v7335 = vunpack.c.l.b16 %v6636
  %v7336 = vunpack.c.h.b16 %v6636
  %v7337 = vunpack.c.l.b16 %v6637
  %v7338 = vunpack.c.h.b16 %v6637
  %v7339 = vunpack.c.l.b16 %v6638
  %v7340 = vunpack.c.h.b16 %v6638
  %v7341 = vunpack.c.l.b16 %v6639
  %v7342 = vunpack.c.h.b16 %v6639
  %v7343 = vunpack.c.l.b16 %v6640
  %v7344 = vunpack.c.h.b16 %v6640
  %v7345 = vunpack.c.l.b16 %v6641
  %v7346 = vunpack.c.h.b16 %v6641
  %v7347 = vunpack.c.l.b16 %v6642
  %v7348 = vunpack.c.h.b16 %v6642
  %v7349 = vunpack.c.l.b16 %v6643
  %v7350 = vunpack.c.h.b16 %v6643
  %v7351 = vunpack.c.l.b16 %v6644
  %v7352 = vunpack.c.h.b16 %v6644
  %v7353 = vunpack.c.l.b16 %v6645
  %v7354 = vunpack.c.h.b16 %v6645
  %v7355 = vunpack.c.l.b16 %v6646
  %v7356 = vunpack.c.h.b16 %v6646
  %v7357 = vunpack.c.l.b16 %v6647
  %v7358 = vunpack.c.h.b16 %v6647
  %v7359 = vunpack.c.l.b16 %v6648
  %v7360 = vunpack.c.h.b16 %v6648
  %v7361 = vunpack.c.l.b16 %v6649
  %v7362 = vunpack.c.h.b16 %v6649
  %v7363 = vunpack.c.l.b16 %v6650
  %v7364 = vunpack.c.h.b16 %v6650
  %v7365 = vunpack.c.l.b16 %v6651
  %v7366 = vunpack.c.h.b16 %v6651
  %v7367 = vunpack.c.l.b16 %v6652
  %v7368 = vunpack.c.h.b16 %v6652
  %v7369 = vunpack.c.l.b16 %v6653
  %v7370 = vunpack.c.h.b16 %v6653
  %v7371 = vunpack.c.l.b16 %v6654
  %v7372 = vunpack.c.h.b16 %v6654
  %v7373 = vunpack.c.l.b16 %v6655
  %v7374 = vunpack.c.h.b16 %v6655
  %v7375 = vunpack.c.l.b16 %v6656
  %v7376 = vunpack.c.h.b16 %v6656
  %v7377 = vunpack.c.l.b16 %v6657
  %v7378 = vunpack.c.h.b16 %v6657
  %v7379 = vunpack.c.l.b16 %v6658
  %v7380 = vunpack.c.h.b16 %v6658
  %v7381 = vunpack.c.l.b16 %v6659
  %v7382 = vunpack.c.h.b16 %v6659
  %v7383 = vunpack.c.l.b16 %v6660
  %v7384 = vunpack.c.h.b16 %v6660
  %v7385 = vunpack.c.l.b16 %v6661
  %v7386 = vunpack.c.h.b16 %v6661
  %v7387 = vunpack.c.l.b16 %v6662
  %v7388 = vunpack.c.h.b16 %v6662
  %v7389 = vunpack.c.l.b16 %v6663
  %v7390 = vunpack.c.h.b16 %v6663
  %v7391 = vunpack.c.l.b16 %v6664
  %v7392 = vunpack.c.h.b16 %v6664
  %v7393 = vunpack.c.l.b16 %v6665
  %v7394 = vunpack.c.h.b16 %v6665
  %v7395 = vunpack.c.l.b16 %v6666
  %v7396 = vunpack.c.h.b16 %v6666
  %v7397 = vunpack.c.l.b16 %v6667
  %v7398 = vunpack.c.h.b16 %v6667
  %v7399 = vunpack.c.l.b16 %v6668
  %v7400 = vunpack.c.h.b16 %v6668
  %v7401 = vunpack.c.l.b16 %v6669
  %v7402 = vunpack.c.h.b16 %v6669
  %v7403 = vunpack.c.l.b16 %v6670
  %v7404 = vunpack.c.h.b16 %v6670
  %v7405 = vunpack.c.l.b16 %v6671
  %v7406 = vunpack.c.h.b16 %v6671
  %v7407 = vunpack.c.l.b16 %v6672
  %v7408 = vunpack.c.h.b16 %v6672
  %v7409 = vunpack.c.l.b16 %v6673
  %v7410 = vunpack.c.h.b16 %v6673
  %v7411 = vunpack.c.l.b16 %v6674
  %v7412 = vunpack.c.h.b16 %v6674
  %v7413 = vunpack.c.l.b16 %v6675
  %v7414 = vunpack.c.h.b16 %v6675
  %v7415 = vunpack.c.l.b16 %v6676
  %v7416 = vunpack.c.h.b16 %v6676
  %v7417 = vunpack.c.l.b16 %v6677
  %v7418 = vunpack.c.h.b16 %v6677
  %v7419 = vunpack.c.l.b16 %v6678
  %v7420 = vunpack.c.h.b16 %v6678
  %v7421 = vunpack.c.l.b16 %v6679
  %v7422 = vunpack.c.h.b16 %v6679
  %v7423 = vunpack.c.l.b16 %v6680
  %v7424 = vunpack.c.h.b16 %v6680
  %v7425 = vunpack.c.l.b16 %v6681
  %v7426 = vunpack.c.h.b16 %v6681
  %v7427 = vunpack.c.l.b16 %v6682
  %v7428 = vunpack.c.h.b16 %v6682
  %v7429 = vunpack.c.l.b16 %v6683
  %v7430 = vunpack.c.h.b16 %v6683
  %v7431 = vunpack.c.l.b16 %v6684
  %v7432 = vunpack.c.h.b16 %v6684
  %v7433 = vunpack.c.l.b16 %v6685
  %v7434 = vunpack.c.h.b16 %v6685
  %v7435 = vunpack.c.l.b16 %v6686
  %v7436 = vunpack.c.h.b16 %v6686
  %v7437 = vunpack.c.l.b16 %v6687
  %v7438 = vunpack.c.h.b16 %v6687
  %v7439 = vunpack.c.l.b16 %v6688
  %v7440 = vunpack.c.h.b16 %v6688
  %v7441 = vunpack.c.l.b16 %v6689
  %v7442 = vunpack.c.h.b16 %v6689
  %v7443 = vunpack.c.l.b16 %v6690
  %v7444 = vunpack.c.h.b16 %v6690
  %v7445 = vunpack.c.l.b16 %v6691
  %v7446 = vunpack.c.h.b16 %v6691
  %v7447 = vunpack.c.l.b16 %v6692
  %v7448 = vunpack.c.h.b16 %v6692
  %v7449 = vunpack.c.l.b16 %v6693
  %v7450 = vunpack.c.h.b16 %v6693
  %v7451 = vunpack.c.l.b16 %v6694
  %v7452 = vunpack.c.h.b16 %v6694
  %v7453 = vunpack.c.l.b16 %v6695
  %v7454 = vunpack.c.h.b16 %v6695
  %v7455 = vunpack.c.l.b16 %v6696
  %v7456 = vunpack.c.h.b16 %v6696
  %v7457 = vunpack.c.l.b16 %v6697
  %v7458 = vunpack.c.h.b16 %v6697
  %v7459 = vunpack.c.l.b16 %v6698
  %v7460 = vunpack.c.h.b16 %v6698
  %v7461 = vunpack.c.l.b16 %v6699
  %v7462 = vunpack.c.h.b16 %v6699
  %v7463 = vunpack.c.l.b16 %v6700
  %v7464 = vunpack.c.h.b16 %v6700
  %v7465 = vunpack.c.l.b16 %v6701
  %v7466 = vunpack.c.h.b16 %v6701
  %v7467 = vunpack.c.l.b16 %v6702
  %v7468 = vunpack.c.h.b16 %v6702
  %v7469 = vunpack.c.l.b16 %v6703
  %v7470 = vunpack.c.h.b16 %v6703
  %v7471 = vunpack.c.l.b16 %v6704
  %v7472 = vunpack.c.h.b16 %v6704
  %v7473 = vunpack.c.l.b16 %v6705
  %v7474 = vunpack.c.h.b16 %v6705
  %v7475 = vunpack.c.l.b16 %v6706
  %v7476 = vunpack.c.h.b16 %v6706
  %v7477 = vunpack.c.l.b16 %v6707
  %v7478 = vunpack.c.h.b16 %v6707
  %v7479 = vunpack.c.l.b16 %v6708
  %v7480 = vunpack.c.h.b16 %v6708
  %v7481 = vunpack.c.l.b16 %v6709
  %v7482 = vunpack.c.h.b16 %v6709
  %v7483 = vunpack.c.l.b16 %v6710
  %v7484 = vunpack.c.h.b16 %v6710
  %v7485 = vunpack.c.l.b16 %v6711
  %v7486 = vunpack.c.h.b16 %v6711
  %v7487 = vunpack.c.l.b16 %v6712
  %v7488 = vunpack.c.h.b16 %v6712
  %v7489 = vunpack.c.l.b16 %v6713
  %v7490 = vunpack.c.h.b16 %v6713
  %v7491 = vunpack.c.l.b16 %v6714
  %v7492 = vunpack.c.h.b16 %v6714
  %v7493 = vunpack.c.l.b16 %v6715
  %v7494 = vunpack.c.h.b16 %v6715
  %v7495 = vunpack.c.l.b16 %v6716
  %v7496 = vunpack.c.h.b16 %v6716
  %v7497 = vunpack.c.l.b16 %v6717
  %v7498 = vunpack.c.h.b16 %v6717
  %v7499 = vunpack.c.l.b16 %v6718
  %v7500 = vunpack.c.h.b16 %v6718
  %v7501 = vunpack.c.l.b16 %v6719
  %v7502 = vunpack.c.h.b16 %v6719
  %v7503 = vunpack.c.l.b16 %v6720
  %v7504 = vunpack.c.h.b16 %v6720
  %v7505 = vunpack.c.l.b16 %v6721
  %v7506 = vunpack.c.h.b16 %v6721
  %v7507 = vunpack.c.l.b16 %v6722
  %v7508 = vunpack.c.h.b16 %v6722
  %v7509 = vunpack.c.l.b16 %v6723
  %v7510 = vunpack.c.h.b16 %v6723
  %v7511 = vunpack.c.l.b16 %v6724
  %v7512 = vunpack.c.h.b16 %v6724
  %v7513 = vunpack.c.l.b16 %v6725
  %v7514 = vunpack.c.h.b16 %v6725
  %v7515 = vunpack.c.l.b16 %v6726
  %v7516 = vunpack.c.h.b16 %v6726
  %v7517 = vunpack.c.l.b16 %v6727
  %v7518 = vunpack.c.h.b16 %v6727
  %v7519 = vunpack.c.l.b16 %v6728
  %v7520 = vunpack.c.h.b16 %v6728
  %v7521 = vunpack.c.l.b16 %v6729
  %v7522 = vunpack.c.h.b16 %v6729
  %v7523 = vunpack.c.l.b16 %v6730
  %v7524 = vunpack.c.h.b16 %v6730
  %v7525 = vunpack.c.l.b16 %v6731
  %v7526 = vunpack.c.h.b16 %v6731
  %v7527 = vunpack.c.l.b16 %v6732
  %v7528 = vunpack.c.h.b16 %v6732
  %v7529 = vunpack.c.l.b16 %v6733
  %v7530 = vunpack.c.h.b16 %v6733
  %v7531 = vunpack.c.l.b16 %v6734
  %v7532 = vunpack.c.h.b16 %v6734
  %v7533 = vunpack.c.l.b16 %v6735
  %v7534 = vunpack.c.h.b16 %v6735
  %v7535 = vunpack.c.l.b16 %v6736
  %v7536 = vunpack.c.h.b16 %v6736
  %v7537 = vunpack.c.l.b16 %v6737
  %v7538 = vunpack.c.h.b16 %v6737
  %v7539 = vunpack.c.l.b16 %v6738
  %v7540 = vunpack.c.h.b16 %v6738
  %v7541 = vunpack.c.l.b16 %v6739
  %v7542 = vunpack.c.h.b16 %v6739
  %v7543 = vunpack.c.l.b16 %v6740
  %v7544 = vunpack.c.h.b16 %v6740
  %v7545 = vunpack.c.l.b16 %v6741
  %v7546 = vunpack.c.h.b16 %v6741
  %v7547 = vunpack.c.l.b16 %v6742
  %v7548 = vunpack.c.h.b16 %v6742
  %v7549 = vunpack.c.l.b16 %v6743
  %v7550 = vunpack.c.h.b16 %v6743
  %v7551 = vunpack.c.l.b16 %v6744
  %v7552 = vunpack.c.h.b16 %v6744
  %v7553 = vunpack.c.l.b16 %v6745
  %v7554 = vunpack.c.h.b16 %v6745
  %v7555 = vunpack.c.l.b16 %v6746
  %v7556 = vunpack.c.h.b16 %v6746
  %v7557 = vpack.c.b16 %v7053, %v7045
  %v7558 = vpack.c.b16 %v7054, %v7046
  %v7559 = vpack.c.b16 %v7055, %v7047
  %v7560 = vpack.c.b16 %v7056, %v7048
  %v7561 = vpack.c.b16 %v7057, %v7049
  %v7562 = vpack.c.b16 %v7058, %v7050
  %v7563 = vpack.c.b16 %v7059, %v7051
  %v7564 = vpack.c.b16 %v7060, %v7052
  %v7565 = vpack.c.b16 %v7069, %v7061
  %v7566 = vpack.c.b16 %v7070, %v7062
  %v7567 = vpack.c.b16 %v7071, %v7063
  %v7568 = vpack.c.b16 %v7072, %v7064
  %v7569 = vpack.c.b16 %v7073, %v7065
  %v7570 = vpack.c.b16 %v7074, %v7066
  %v7571 = vpack.c.b16 %v7075, %v7067
  %v7572 = vpack.c.b16 %v7076, %v7068
  %v7573 = vpack.c.b16 %v7085, %v7077
  %v7574 = vpack.c.b16 %v7086, %v7078
  %v7575 = vpack.c.b16 %v7087, %v7079
  %v7576 = vpack.c.b16 %v7088, %v7080
  %v7577 = vpack.c.b16 %v7089, %v7081
  %v7578 = vpack.c.b16 %v7090, %v7082
  %v7579 = vpack.c.b16 %v7091, %v7083
  %v7580 = vpack.c.b16 %v7092, %v7084
  %v7581 = vpack.c.b16 %v7101, %v7093
  %v7582 = vpack.c.b16 %v7102, %v7094
  %v7583 = vpack.c.b16 %v7103, %v7095
  %v7584 = vpack.c.b16 %v7104, %v7096
  %v7585 = vpack.c.b16 %v7105, %v7097
  %v7586 = vpack.c.b16 %v7106, %v7098
  %v7587 = vpack.c.b16 %v7107, %v7099
  %v7588 = vpack.c.b16 %v7108, %v7100
  %v7589 = vpack.c.b16 %v7117, %v7109
  %v7590 = vpack.c.b16 %v7118, %v7110
  %v7591 = vpack.c.b16 %v7119, %v7111
  %v7592 = vpack.c.b16 %v7120, %v7112
  %v7593 = vpack.c.b16 %v7121, %v7113
  %v7594 = vpack.c.b16 %v7122, %v7114
  %v7595 = vpack.c.b16 %v7123, %v7115
  %v7596 = vpack.c.b16 %v7124, %v7116
  %v7597 = vpack.c.b16 %v7133, %v7125
  %v7598 = vpack.c.b16 %v7134, %v7126
  %v7599 = vpack.c.b16 %v7135, %v7127
  %v7600 = vpack.c.b16 %v7136, %v7128
  %v7601 = vpack.c.b16 %v7137, %v7129
  %v7602 = vpack.c.b16 %v7138, %v7130
  %v7603 = vpack.c.b16 %v7139, %v7131
  %v7604 = vpack.c.b16 %v7140, %v7132
  %v7605 = vpack.c.b16 %v7149, %v7141
  %v7606 = vpack.c.b16 %v7150, %v7142
  %v7607 = vpack.c.b16 %v7151, %v7143
  %v7608 = vpack.c.b16 %v7152, %v7144
  %v7609 = vpack.c.b16 %v7153, %v7145
  %v7610 = vpack.c.b16 %v7154, %v7146
  %v7611 = vpack.c.b16 %v7155, %v7147
  %v7612 = vpack.c.b16 %v7156, %v7148
  %v7613 = vpack.c.b16 %v7165, %v7157
  %v7614 = vpack.c.b16 %v7166, %v7158
  %v7615 = vpack.c.b16 %v7167, %v7159
  %v7616 = vpack.c.b16 %v7168, %v7160
  %v7617 = vpack.c.b16 %v7169, %v7161
  %v7618 = vpack.c.b16 %v7170, %v7162
  %v7619 = vpack.c.b16 %v7171, %v7163
  %v7620 = vpack.c.b16 %v7172, %v7164
  %v7621 = vpack.c.b16 %v7181, %v7173
  %v7622 = vpack.c.b16 %v7182, %v7174
  %v7623 = vpack.c.b16 %v7183, %v7175
  %v7624 = vpack.c.b16 %v7184, %v7176
  %v7625 = vpack.c.b16 %v7185, %v7177
  %v7626 = vpack.c.b16 %v7186, %v7178
  %v7627 = vpack.c.b16 %v7187, %v7179
  %v7628 = vpack.c.b16 %v7188, %v7180
  %v7629 = vpack.c.b16 %v7197, %v7189
  %v7630 = vpack.c.b16 %v7198, %v7190
  %v7631 = vpack.c.b16 %v7199, %v7191
  %v7632 = vpack.c.b16 %v7200, %v7192
  %v7633 = vpack.c.b16 %v7201, %v7193
  %v7634 = vpack.c.b16 %v7202, %v7194
  %v7635 = vpack.c.b16 %v7203, %v7195
  %v7636 = vpack.c.b16 %v7204, %v7196
  %v7637 = vpack.c.b16 %v7213, %v7205
  %v7638 = vpack.c.b16 %v7214, %v7206
  %v7639 = vpack.c.b16 %v7215, %v7207
  %v7640 = vpack.c.b16 %v7216, %v7208
  %v7641 = vpack.c.b16 %v7217, %v7209
  %v7642 = vpack.c.b16 %v7218, %v7210
  %v7643 = vpack.c.b16 %v7219, %v7211
  %v7644 = vpack.c.b16 %v7220, %v7212
  %v7645 = vpack.c.b16 %v7229, %v7221
  %v7646 = vpack.c.b16 %v7230, %v7222
  %v7647 = vpack.c.b16 %v7231, %v7223
  %v7648 = vpack.c.b16 %v7232, %v7224
  %v7649 = vpack.c.b16 %v7233, %v7225
  %v7650 = vpack.c.b16 %v7234, %v7226
  %v7651 = vpack.c.b16 %v7235, %v7227
  %v7652 = vpack.c.b16 %v7236, %v7228
  %v7653 = vpack.c.b16 %v7245, %v7237
  %v7654 = vpack.c.b16 %v7246, %v7238
  %v7655 = vpack.c.b16 %v7247, %v7239
  %v7656 = vpack.c.b16 %v7248, %v7240
  %v7657 = vpack.c.b16 %v7249, %v7241
  %v7658 = vpack.c.b16 %v7250, %v7242
  %v7659 = vpack.c.b16 %v7251, %v7243
  %v7660 = vpack.c.b16 %v7252, %v7244
  %v7661 = vpack.c.b16 %v7261, %v7253
  %v7662 = vpack.c.b16 %v7262, %v7254
  %v7663 = vpack.c.b16 %v7263, %v7255
  %v7664 = vpack.c.b16 %v7264, %v7256
  %v7665 = vpack.c.b16 %v7265, %v7257
  %v7666 = vpack.c.b16 %v7266, %v7258
  %v7667 = vpack.c.b16 %v7267, %v7259
  %v7668 = vpack.c.b16 %v7268, %v7260
  %v7669 = vpack.c.b16 %v7277, %v7269
  %v7670 = vpack.c.b16 %v7278, %v7270
  %v7671 = vpack.c.b16 %v7279, %v7271
  %v7672 = vpack.c.b16 %v7280, %v7272
  %v7673 = vpack.c.b16 %v7281, %v7273
  %v7674 = vpack.c.b16 %v7282, %v7274
  %v7675 = vpack.c.b16 %v7283, %v7275
  %v7676 = vpack.c.b16 %v7284, %v7276
  %v7677 = vpack.c.b16 %v7293, %v7285
  %v7678 = vpack.c.b16 %v7294, %v7286
  %v7679 = vpack.c.b16 %v7295, %v7287
  %v7680 = vpack.c.b16 %v7296, %v7288
  %v7681 = vpack.c.b16 %v7297, %v7289
  %v7682 = vpack.c.b16 %v7298, %v7290
  %v7683 = vpack.c.b16 %v7299, %v7291
  %v7684 = vpack.c.b16 %v7300, %v7292
  %v7685 = vpack.c.b16 %v7309, %v7301
  %v7686 = vpack.c.b16 %v7310, %v7302
  %v7687 = vpack.c.b16 %v7311, %v7303
  %v7688 = vpack.c.b16 %v7312, %v7304
  %v7689 = vpack.c.b16 %v7313, %v7305
  %v7690 = vpack.c.b16 %v7314, %v7306
  %v7691 = vpack.c.b16 %v7315, %v7307
  %v7692 = vpack.c.b16 %v7316, %v7308
  %v7693 = vpack.c.b16 %v7325, %v7317
  %v7694 = vpack.c.b16 %v7326, %v7318
  %v7695 = vpack.c.b16 %v7327, %v7319
  %v7696 = vpack.c.b16 %v7328, %v7320
  %v7697 = vpack.c.b16 %v7329, %v7321
  %v7698 = vpack.c.b16 %v7330, %v7322
  %v7699 = vpack.c.b16 %v7331, %v7323
  %v7700 = vpack.c.b16 %v7332, %v7324
  %v7701 = vpack.c.b16 %v7341, %v7333
  %v7702 = vpack.c.b16 %v7342, %v7334
  %v7703 = vpack.c.b16 %v7343, %v7335
  %v7704 = vpack.c.b16 %v7344, %v7336
  %v7705 = vpack.c.b16 %v7345, %v7337
  %v7706 = vpack.c.b16 %v7346, %v7338
  %v7707 = vpack.c.b16 %v7347, %v7339
  %v7708 = vpack.c.b16 %v7348, %v7340
  %v7709 = vpack.c.b16 %v7357, %v7349
  %v7710 = vpack.c.b16 %v7358, %v7350
  %v7711 = vpack.c.b16 %v7359, %v7351
  %v7712 = vpack.c.b16 %v7360, %v7352
  %v7713 = vpack.c.b16 %v7361, %v7353
  %v7714 = vpack.c.b16 %v7362, %v7354
  %v7715 = vpack.c.b16 %v7363, %v7355
  %v7716 = vpack.c.b16 %v7364, %v7356
  %v7717 = vpack.c.b16 %v7373, %v7365
  %v7718 = vpack.c.b16 %v7374, %v7366
  %v7719 = vpack.c.b16 %v7375, %v7367
  %v7720 = vpack.c.b16 %v7376, %v7368
  %v7721 = vpack.c.b16 %v7377, %v7369
  %v7722 = vpack.c.b16 %v7378, %v7370
  %v7723 = vpack.c.b16 %v7379, %v7371
  %v7724 = vpack.c.b16 %v7380, %v7372
  %v7725 = vpack.c.b16 %v7389, %v7381
  %v7726 = vpack.c.b16 %v7390, %v7382
  %v7727 = vpack.c.b16 %v7391, %v7383
  %v7728 = vpack.c.b16 %v7392, %v7384
  %v7729 = vpack.c.b16 %v7393, %v7385
  %v7730 = vpack.c.b16 %v7394, %v7386
  %v7731 = vpack.c.b16 %v7395, %v7387
  %v7732 = vpack.c.b16 %v7396, %v7388
  %v7733 = vpack.c.b16 %v7405, %v7397
  %v7734 = vpack.c.b16 %v7406, %v7398
  %v7735 = vpack.c.b16 %v7407, %v7399
  %v7736 = vpack.c.b16 %v7408, %v7400
  %v7737 = vpack.c.b16 %v7409, %v7401
  %v7738 = vpack.c.b16 %v7410, %v7402
  %v7739 = vpack.c.b16 %v7411, %v7403
  %v7740 = vpack.c.b16 %v7412, %v7404
  %v7741 = vpack.c.b16 %v7421, %v7413
  %v7742 = vpack.c.b16 %v7422, %v7414
  %v7743 = vpack.c.b16 %v7423, %v7415
  %v7744 = vpack.c.b16 %v7424, %v7416
  %v7745 = vpack.c.b16 %v7425, %v7417
  %v7746 = vpack.c.b16 %v7426, %v7418
  %v7747 = vpack.c.b16 %v7427, %v7419
  %v7748 = vpack.c.b16 %v7428, %v7420
  %v7749 = vpack.c.b16 %v7437, %v7429
  %v7750 = vpack.c.b16 %v7438, %v7430
  %v7751 = vpack.c.b16 %v7439, %v7431
  %v7752 = vpack.c.b16 %v7440, %v7432
  %v7753 = vpack.c.b16 %v7441, %v7433
  %v7754 = vpack.c.b16 %v7442, %v7434
  %v7755 = vpack.c.b16 %v7443, %v7435
  %v7756 = vpack.c.b16 %v7444, %v7436
  %v7757 = vpack.c.b16 %v7453, %v7445
  %v7758 = vpack.c.b16 %v7454, %v7446
  %v7759 = vpack.c.b16 %v7455, %v7447
  %v7760 = vpack.c.b16 %v7456, %v7448
  %v7761 = vpack.c.b16 %v7457, %v7449
  %v7762 = vpack.c.b16 %v7458, %v7450
  %v7763 = vpack.c.b16 %v7459, %v7451
  %v7764 = vpack.c.b16 %v7460, %v7452
  %v7765 = vpack.c.b16 %v7469, %v7461
  %v7766 = vpack.c.b16 %v7470, %v7462
  %v7767 = vpack.c.b16 %v7471, %v7463
  %v7768 = vpack.c.b16 %v7472, %v7464
  %v7769 = vpack.c.b16 %v7473, %v7465
  %v7770 = vpack.c.b16 %v7474, %v7466
  %v7771 = vpack.c.b16 %v7475, %v7467
  %v7772 = vpack.c.b16 %v7476, %v7468
  %v7773 = vpack.c.b16 %v7485, %v7477
  %v7774 = vpack.c.b16 %v7486, %v7478
  %v7775 = vpack.c.b16 %v7487, %v7479
  %v7776 = vpack.c.b16 %v7488, %v7480
  %v7777 = vpack.c.b16 %v7489, %v7481
  %v7778 = vpack.c.b16 %v7490, %v7482
  %v7779 = vpack.c.b16 %v7491, %v7483
  %v7780 = vpack.c.b16 %v7492, %v7484
  %v7781 = vpack.c.b16 %v7501, %v7493
  %v7782 = vpack.c.b16 %v7502, %v7494
  %v7783 = vpack.c.b16 %v7503, %v7495
  %v7784 = vpack.c.b16 %v7504, %v7496
  %v7785 = vpack.c.b16 %v7505, %v7497
  %v7786 = vpack.c.b16 %v7506, %v7498
  %v7787 = vpack.c.b16 %v7507, %v7499
  %v7788 = vpack.c.b16 %v7508, %v7500
  %v7789 = vpack.c.b16 %v7517, %v7509
  %v7790 = vpack.c.b16 %v7518, %v7510
  %v7791 = vpack.c.b16 %v7519, %v7511
  %v7792 = vpack.c.b16 %v7520, %v7512
  %v7793 = vpack.c.b16 %v7521, %v7513
  %v7794 = vpack.c.b16 %v7522, %v7514
  %v7795 = vpack.c.b16 %v7523, %v7515
  %v7796 = vpack.c.b16 %v7524, %v7516
  %v7797 = vpack.c.b16 %v7533, %v7525
  %v7798 = vpack.c.b16 %v7534, %v7526
  %v7799 = vpack.c.b16 %v7535, %v7527
  %v7800 = vpack.c.b16 %v7536, %v7528
  %v7801 = vpack.c.b16 %v7537, %v7529
  %v7802 = vpack.c.b16 %v7538, %v7530
  %v7803 = vpack.c.b16 %v7539, %v7531
  %v7804 = vpack.c.b16 %v7540, %v7532
  %v7805 = vpack.c.b16 %v7549, %v7541
  %v7806 = vpack.c.b16 %v7550, %v7542
  %v7807 = vpack.c.b16 %v7551, %v7543
  %v7808 = vpack.c.b16 %v7552, %v7544
  %v7809 = vpack.c.b16 %v7553, %v7545
  %v7810 = vpack.c.b16 %v7554, %v7546
  %v7811 = vpack.c.b16 %v7555, %v7547
  %v7812 = vpack.c.b16 %v7556, %v7548
  %8069 = vmatprep.subr.bf16.mxu0 %v7558
  %8070 = vmatpush1.bf16.msra.mxu0 %v7557
  %8071 = vmatprep.subr.bf16.mxu0 %v7566
  %8072 = vmatpush1.bf16.msra.mxu0 %v7565
  %8073 = vmatprep.subr.bf16.mxu0 %v7574
  %8074 = vmatpush1.bf16.msra.mxu0 %v7573
  %8075 = vmatprep.subr.bf16.mxu0 %v7582
  %8076 = vmatpush1.bf16.msra.mxu0 %v7581
  %8077 = vmatprep.subr.bf16.mxu0 %v7590
  %8078 = vmatpush1.bf16.msra.mxu0 %v7589
  %8079 = vmatprep.subr.bf16.mxu0 %v7598
  %8080 = vmatpush1.bf16.msra.mxu0 %v7597
  %8081 = vmatprep.subr.bf16.mxu0 %v7606
  %8082 = vmatpush1.bf16.msra.mxu0 %v7605
  %8083 = vmatprep.subr.bf16.mxu0 %v7614
  %8084 = vmatpush1.bf16.msra.mxu0 %v7613
  %8085 = vmatprep.subr.bf16.mxu0 %v7622
  %8086 = vmatpush1.bf16.msra.mxu0 %v7621
  %8087 = vmatprep.subr.bf16.mxu0 %v7630
  %8088 = vmatpush1.bf16.msra.mxu0 %v7629
  %8089 = vmatprep.subr.bf16.mxu0 %v7638
  %8090 = vmatpush1.bf16.msra.mxu0 %v7637
  %8091 = vmatprep.subr.bf16.mxu0 %v7646
  %8092 = vmatpush1.bf16.msra.mxu0 %v7645
  %8093 = vmatprep.subr.bf16.mxu0 %v7654
  %8094 = vmatpush1.bf16.msra.mxu0 %v7653
  %8095 = vmatprep.subr.bf16.mxu0 %v7662
  %8096 = vmatpush1.bf16.msra.mxu0 %v7661
  %8097 = vmatprep.subr.bf16.mxu0 %v7670
  %8098 = vmatpush1.bf16.msra.mxu0 %v7669
  %8099 = vmatprep.subr.bf16.mxu0 %v7678
  %8100 = vmatpush1.bf16.msra.mxu0 %v7677
  %8101 = vmatprep.mubr.bf16.mxu0 %v6488
  %8102 = vmatmul.mubr.bf16.gmra.mrb[0].mxu0 %v6487
  %v8103 = vpop.f32.mrb[0].mxu0
  %v8104 = vadd.f32 %v6752, %v8103
  %v8105 = vpop.f32.mrb[0].mxu0
  %v8106 = vadd.f32 %v6756, %v8105
  %v8107 = vpop.f32.mrb[0].mxu0
  %v8108 = vadd.f32 %v6752, %v8107
  %v8109 = vpop.f32.mrb[0].mxu0
  %v8110 = vadd.f32 %v6756, %v8109
  %8111 = vdwg.mxu0
  %8112 = vmatprep.subr.bf16.mxu0 %v7686
  %8113 = vmatpush1.bf16.msra.mxu0 %v7685
  %8114 = vmatprep.subr.bf16.mxu0 %v7694
  %8115 = vmatpush1.bf16.msra.mxu0 %v7693
  %8116 = vmatprep.subr.bf16.mxu0 %v7702
  %8117 = vmatpush1.bf16.msra.mxu0 %v7701
  %8118 = vmatprep.subr.bf16.mxu0 %v7710
  %8119 = vmatpush1.bf16.msra.mxu0 %v7709
  %8120 = vmatprep.subr.bf16.mxu0 %v7718
  %8121 = vmatpush1.bf16.msra.mxu0 %v7717
  %8122 = vmatprep.subr.bf16.mxu0 %v7726
  %8123 = vmatpush1.bf16.msra.mxu0 %v7725
  %8124 = vmatprep.subr.bf16.mxu0 %v7734
  %8125 = vmatpush1.bf16.msra.mxu0 %v7733
  %8126 = vmatprep.subr.bf16.mxu0 %v7742
  %8127 = vmatpush1.bf16.msra.mxu0 %v7741
  %8128 = vmatprep.subr.bf16.mxu0 %v7750
  %8129 = vmatpush1.bf16.msra.mxu0 %v7749
  %8130 = vmatprep.subr.bf16.mxu0 %v7758
  %8131 = vmatpush1.bf16.msra.mxu0 %v7757
  %8132 = vmatprep.subr.bf16.mxu0 %v7766
  %8133 = vmatpush1.bf16.msra.mxu0 %v7765
  %8134 = vmatprep.subr.bf16.mxu0 %v7774
  %8135 = vmatpush1.bf16.msra.mxu0 %v7773
  %8136 = vmatprep.subr.bf16.mxu0 %v7782
  %8137 = vmatpush1.bf16.msra.mxu0 %v7781
  %8138 = vmatprep.subr.bf16.mxu0 %v7790
  %8139 = vmatpush1.bf16.msra.mxu0 %v7789
  %8140 = vmatprep.subr.bf16.mxu0 %v7798
  %8141 = vmatpush1.bf16.msra.mxu0 %v7797
  %8142 = vmatprep.subr.bf16.mxu0 %v7806
  %8143 = vmatpush1.bf16.msra.mxu0 %v7805
  %8144 = vmatprep.mubr.bf16.mxu0 %v6490
  %8145 = vmatmul.mubr.bf16.gmra.mrb[0].mxu0 %v6489
  %v8146 = vpop.f32.mrb[0].mxu0
  %v8147 = vadd.f32 %v8104, %v8146
  %v8148 = vpop.f32.mrb[0].mxu0
  %v8149 = vadd.f32 %v8106, %v8148
  %v8150 = vpop.f32.mrb[0].mxu0
  %v8151 = vadd.f32 %v8108, %v8150
  %v8152 = vpop.f32.mrb[0].mxu0
  %v8153 = vadd.f32 %v8110, %v8152
  %8154 = vdwg.mxu0
  %8155 = vmatprep.subr.bf16.mxu0 %v7560
  %8156 = vmatpush1.bf16.msra.mxu0 %v7559
  %8157 = vmatprep.subr.bf16.mxu0 %v7568
  %8158 = vmatpush1.bf16.msra.mxu0 %v7567
  %8159 = vmatprep.subr.bf16.mxu0 %v7576
  %8160 = vmatpush1.bf16.msra.mxu0 %v7575
  %8161 = vmatprep.subr.bf16.mxu0 %v7584
  %8162 = vmatpush1.bf16.msra.mxu0 %v7583
  %8163 = vmatprep.subr.bf16.mxu0 %v7592
  %8164 = vmatpush1.bf16.msra.mxu0 %v7591
  %8165 = vmatprep.subr.bf16.mxu0 %v7600
  %8166 = vmatpush1.bf16.msra.mxu0 %v7599
  %8167 = vmatprep.subr.bf16.mxu0 %v7608
  %8168 = vmatpush1.bf16.msra.mxu0 %v7607
  %8169 = vmatprep.subr.bf16.mxu0 %v7616
  %8170 = vmatpush1.bf16.msra.mxu0 %v7615
  %8171 = vmatprep.subr.bf16.mxu0 %v7624
  %8172 = vmatpush1.bf16.msra.mxu0 %v7623
  %8173 = vmatprep.subr.bf16.mxu0 %v7632
  %8174 = vmatpush1.bf16.msra.mxu0 %v7631
  %8175 = vmatprep.subr.bf16.mxu0 %v7640
  %8176 = vmatpush1.bf16.msra.mxu0 %v7639
  %8177 = vmatprep.subr.bf16.mxu0 %v7648
  %8178 = vmatpush1.bf16.msra.mxu0 %v7647
  %8179 = vmatprep.subr.bf16.mxu0 %v7656
  %8180 = vmatpush1.bf16.msra.mxu0 %v7655
  %8181 = vmatprep.subr.bf16.mxu0 %v7664
  %8182 = vmatpush1.bf16.msra.mxu0 %v7663
  %8183 = vmatprep.subr.bf16.mxu0 %v7672
  %8184 = vmatpush1.bf16.msra.mxu0 %v7671
  %8185 = vmatprep.subr.bf16.mxu0 %v7680
  %8186 = vmatpush1.bf16.msra.mxu0 %v7679
  %8187 = vmatprep.mubr.bf16.mxu0 %v6488
  %8188 = vmatmul.mubr.bf16.gmra.mrb[0].mxu0 %v6487
  %v8189 = vpop.f32.mrb[0].mxu0
  %v8190 = vadd.f32 %v6760, %v8189
  %v8191 = vpop.f32.mrb[0].mxu0
  %v8192 = vadd.f32 %v6764, %v8191
  %v8193 = vpop.f32.mrb[0].mxu0
  %v8194 = vadd.f32 %v6760, %v8193
  %v8195 = vpop.f32.mrb[0].mxu0
  %v8196 = vadd.f32 %v6764, %v8195
  %8197 = vdwg.mxu0
  %8198 = vmatprep.subr.bf16.mxu0 %v7688
  %8199 = vmatpush1.bf16.msra.mxu0 %v7687
  %8200 = vmatprep.subr.bf16.mxu0 %v7696
  %8201 = vmatpush1.bf16.msra.mxu0 %v7695
  %8202 = vmatprep.subr.bf16.mxu0 %v7704
  %8203 = vmatpush1.bf16.msra.mxu0 %v7703
  %8204 = vmatprep.subr.bf16.mxu0 %v7712
  %8205 = vmatpush1.bf16.msra.mxu0 %v7711
  %8206 = vmatprep.subr.bf16.mxu0 %v7720
  %8207 = vmatpush1.bf16.msra.mxu0 %v7719
  %8208 = vmatprep.subr.bf16.mxu0 %v7728
  %8209 = vmatpush1.bf16.msra.mxu0 %v7727
  %8210 = vmatprep.subr.bf16.mxu0 %v7736
  %8211 = vmatpush1.bf16.msra.mxu0 %v7735
  %8212 = vmatprep.subr.bf16.mxu0 %v7744
  %8213 = vmatpush1.bf16.msra.mxu0 %v7743
  %8214 = vmatprep.subr.bf16.mxu0 %v7752
  %8215 = vmatpush1.bf16.msra.mxu0 %v7751
  %8216 = vmatprep.subr.bf16.mxu0 %v7760
  %8217 = vmatpush1.bf16.msra.mxu0 %v7759
  %8218 = vmatprep.subr.bf16.mxu0 %v7768
  %8219 = vmatpush1.bf16.msra.mxu0 %v7767
  %8220 = vmatprep.subr.bf16.mxu0 %v7776
  %8221 = vmatpush1.bf16.msra.mxu0 %v7775
  %8222 = vmatprep.subr.bf16.mxu0 %v7784
  %8223 = vmatpush1.bf16.msra.mxu0 %v7783
  %8224 = vmatprep.subr.bf16.mxu0 %v7792
  %8225 = vmatpush1.bf16.msra.mxu0 %v7791
  %8226 = vmatprep.subr.bf16.mxu0 %v7800
  %8227 = vmatpush1.bf16.msra.mxu0 %v7799
  %8228 = vmatprep.subr.bf16.mxu0 %v7808
  %8229 = vmatpush1.bf16.msra.mxu0 %v7807
  %8230 = vmatprep.mubr.bf16.mxu0 %v6490
  %8231 = vmatmul.mubr.bf16.gmra.mrb[0].mxu0 %v6489
  %v8232 = vpop.f32.mrb[0].mxu0
  %v8233 = vadd.f32 %v8190, %v8232
  %v8234 = vpop.f32.mrb[0].mxu0
  %v8235 = vadd.f32 %v8192, %v8234
  %v8236 = vpop.f32.mrb[0].mxu0
  %v8237 = vadd.f32 %v8194, %v8236
  %v8238 = vpop.f32.mrb[0].mxu0
  %v8239 = vadd.f32 %v8196, %v8238
  %8240 = vdwg.mxu0
  %8241 = vmatprep.subr.bf16.mxu0 %v7562
  %8242 = vmatpush1.bf16.msra.mxu0 %v7561
  %8243 = vmatprep.subr.bf16.mxu0 %v7570
  %8244 = vmatpush1.bf16.msra.mxu0 %v7569
  %8245 = vmatprep.subr.bf16.mxu0 %v7578
  %8246 = vmatpush1.bf16.msra.mxu0 %v7577
  %8247 = vmatprep.subr.bf16.mxu0 %v7586
  %8248 = vmatpush1.bf16.msra.mxu0 %v7585
  %8249 = vmatprep.subr.bf16.mxu0 %v7594
  %8250 = vmatpush1.bf16.msra.mxu0 %v7593
  %8251 = vmatprep.subr.bf16.mxu0 %v7602
  %8252 = vmatpush1.bf16.msra.mxu0 %v7601
  %8253 = vmatprep.subr.bf16.mxu0 %v7610
  %8254 = vmatpush1.bf16.msra.mxu0 %v7609
  %8255 = vmatprep.subr.bf16.mxu0 %v7618
  %8256 = vmatpush1.bf16.msra.mxu0 %v7617
  %8257 = vmatprep.subr.bf16.mxu0 %v7626
  %8258 = vmatpush1.bf16.msra.mxu0 %v7625
  %8259 = vmatprep.subr.bf16.mxu0 %v7634
  %8260 = vmatpush1.bf16.msra.mxu0 %v7633
  %8261 = vmatprep.subr.bf16.mxu0 %v7642
  %8262 = vmatpush1.bf16.msra.mxu0 %v7641
  %8263 = vmatprep.subr.bf16.mxu0 %v7650
  %8264 = vmatpush1.bf16.msra.mxu0 %v7649
  %8265 = vmatprep.subr.bf16.mxu0 %v7658
  %8266 = vmatpush1.bf16.msra.mxu0 %v7657
  %8267 = vmatprep.subr.bf16.mxu0 %v7666
  %8268 = vmatpush1.bf16.msra.mxu0 %v7665
  %8269 = vmatprep.subr.bf16.mxu0 %v7674
  %8270 = vmatpush1.bf16.msra.mxu0 %v7673
  %8271 = vmatprep.subr.bf16.mxu0 %v7682
  %8272 = vmatpush1.bf16.msra.mxu0 %v7681
  %8273 = vmatprep.mubr.bf16.mxu0 %v6488
  %8274 = vmatmul.mubr.bf16.gmra.mrb[0].mxu0 %v6487
  %v8275 = vpop.f32.mrb[0].mxu0
  %v8276 = vadd.f32 %v6768, %v8275
  %v8277 = vpop.f32.mrb[0].mxu0
  %v8278 = vadd.f32 %v6772, %v8277
  %v8279 = vpop.f32.mrb[0].mxu0
  %v8280 = vadd.f32 %v6768, %v8279
  %v8281 = vpop.f32.mrb[0].mxu0
  %v8282 = vadd.f32 %v6772, %v8281
  %8283 = vdwg.mxu0
  %8284 = vmatprep.subr.bf16.mxu0 %v7690
  %8285 = vmatpush1.bf16.msra.mxu0 %v7689
  %8286 = vmatprep.subr.bf16.mxu0 %v7698
  %8287 = vmatpush1.bf16.msra.mxu0 %v7697
  %8288 = vmatprep.subr.bf16.mxu0 %v7706
  %8289 = vmatpush1.bf16.msra.mxu0 %v7705
  %8290 = vmatprep.subr.bf16.mxu0 %v7714
  %8291 = vmatpush1.bf16.msra.mxu0 %v7713
  %8292 = vmatprep.subr.bf16.mxu0 %v7722
  %8293 = vmatpush1.bf16.msra.mxu0 %v7721
  %8294 = vmatprep.subr.bf16.mxu0 %v7730
  %8295 = vmatpush1.bf16.msra.mxu0 %v7729
  %8296 = vmatprep.subr.bf16.mxu0 %v7738
  %8297 = vmatpush1.bf16.msra.mxu0 %v7737
  %8298 = vmatprep.subr.bf16.mxu0 %v7746
  %8299 = vmatpush1.bf16.msra.mxu0 %v7745
  %8300 = vmatprep.subr.bf16.mxu0 %v7754
  %8301 = vmatpush1.bf16.msra.mxu0 %v7753
  %8302 = vmatprep.subr.bf16.mxu0 %v7762
  %8303 = vmatpush1.bf16.msra.mxu0 %v7761
  %8304 = vmatprep.subr.bf16.mxu0 %v7770
  %8305 = vmatpush1.bf16.msra.mxu0 %v7769
  %8306 = vmatprep.subr.bf16.mxu0 %v7778
  %8307 = vmatpush1.bf16.msra.mxu0 %v7777
  %8308 = vmatprep.subr.bf16.mxu0 %v7786
  %8309 = vmatpush1.bf16.msra.mxu0 %v7785
  %8310 = vmatprep.subr.bf16.mxu0 %v7794
  %8311 = vmatpush1.bf16.msra.mxu0 %v7793
  %8312 = vmatprep.subr.bf16.mxu0 %v7802
  %8313 = vmatpush1.bf16.msra.mxu0 %v7801
  %8314 = vmatprep.subr.bf16.mxu0 %v7810
  %8315 = vmatpush1.bf16.msra.mxu0 %v7809
  %8316 = vmatprep.mubr.bf16.mxu0 %v6490
  %8317 = vmatmul.mubr.bf16.gmra.mrb[0].mxu0 %v6489
  %v8318 = vpop.f32.mrb[0].mxu0
  %v8319 = vadd.f32 %v8276, %v8318
  %v8320 = vpop.f32.mrb[0].mxu0
  %v8321 = vadd.f32 %v8278, %v8320
  %v8322 = vpop.f32.mrb[0].mxu0
  %v8323 = vadd.f32 %v8280, %v8322
  %v8324 = vpop.f32.mrb[0].mxu0
  %v8325 = vadd.f32 %v8282, %v8324
  %8326 = vdwg.mxu0
  %8327 = vmatprep.subr.bf16.mxu0 %v7564
  %8328 = vmatpush1.bf16.msra.mxu0 %v7563
  %8329 = vmatprep.subr.bf16.mxu0 %v7572
  %8330 = vmatpush1.bf16.msra.mxu0 %v7571
  %8331 = vmatprep.subr.bf16.mxu0 %v7580
  %8332 = vmatpush1.bf16.msra.mxu0 %v7579
  %8333 = vmatprep.subr.bf16.mxu0 %v7588
  %8334 = vmatpush1.bf16.msra.mxu0 %v7587
  %8335 = vmatprep.subr.bf16.mxu0 %v7596
  %8336 = vmatpush1.bf16.msra.mxu0 %v7595
  %8337 = vmatprep.subr.bf16.mxu0 %v7604
  %8338 = vmatpush1.bf16.msra.mxu0 %v7603
  %8339 = vmatprep.subr.bf16.mxu0 %v7612
  %8340 = vmatpush1.bf16.msra.mxu0 %v7611
  %8341 = vmatprep.subr.bf16.mxu0 %v7620
  %8342 = vmatpush1.bf16.msra.mxu0 %v7619
  %8343 = vmatprep.subr.bf16.mxu0 %v7628
  %8344 = vmatpush1.bf16.msra.mxu0 %v7627
  %8345 = vmatprep.subr.bf16.mxu0 %v7636
  %8346 = vmatpush1.bf16.msra.mxu0 %v7635
  %8347 = vmatprep.subr.bf16.mxu0 %v7644
  %8348 = vmatpush1.bf16.msra.mxu0 %v7643
  %8349 = vmatprep.subr.bf16.mxu0 %v7652
  %8350 = vmatpush1.bf16.msra.mxu0 %v7651
  %8351 = vmatprep.subr.bf16.mxu0 %v7660
  %8352 = vmatpush1.bf16.msra.mxu0 %v7659
  %8353 = vmatprep.subr.bf16.mxu0 %v7668
  %8354 = vmatpush1.bf16.msra.mxu0 %v7667
  %8355 = vmatprep.subr.bf16.mxu0 %v7676
  %8356 = vmatpush1.bf16.msra.mxu0 %v7675
  %8357 = vmatprep.subr.bf16.mxu0 %v7684
  %8358 = vmatpush1.bf16.msra.mxu0 %v7683
  %8359 = vmatprep.mubr.bf16.mxu0 %v6488
  %8360 = vmatmul.mubr.bf16.gmra.mrb[0].mxu0 %v6487
  %v8361 = vpop.f32.mrb[0].mxu0
  %v8362 = vadd.f32 %v6776, %v8361
  %v8363 = vpop.f32.mrb[0].mxu0
  %v8364 = vadd.f32 %v6780, %v8363
  %v8365 = vpop.f32.mrb[0].mxu0
  %v8366 = vadd.f32 %v6776, %v8365
  %v8367 = vpop.f32.mrb[0].mxu0
  %v8368 = vadd.f32 %v6780, %v8367
  %8369 = vdwg.mxu0
  %8370 = vmatprep.subr.bf16.mxu0 %v7692
  %8371 = vmatpush1.bf16.msra.mxu0 %v7691
  %8372 = vmatprep.subr.bf16.mxu0 %v7700
  %8373 = vmatpush1.bf16.msra.mxu0 %v7699
  %8374 = vmatprep.subr.bf16.mxu0 %v7708
  %8375 = vmatpush1.bf16.msra.mxu0 %v7707
  %8376 = vmatprep.subr.bf16.mxu0 %v7716
  %8377 = vmatpush1.bf16.msra.mxu0 %v7715
  %8378 = vmatprep.subr.bf16.mxu0 %v7724
  %8379 = vmatpush1.bf16.msra.mxu0 %v7723
  %8380 = vmatprep.subr.bf16.mxu0 %v7732
  %8381 = vmatpush1.bf16.msra.mxu0 %v7731
  %8382 = vmatprep.subr.bf16.mxu0 %v7740
  %8383 = vmatpush1.bf16.msra.mxu0 %v7739
  %8384 = vmatprep.subr.bf16.mxu0 %v7748
  %8385 = vmatpush1.bf16.msra.mxu0 %v7747
  %8386 = vmatprep.subr.bf16.mxu0 %v7756
  %8387 = vmatpush1.bf16.msra.mxu0 %v7755
  %8388 = vmatprep.subr.bf16.mxu0 %v7764
  %8389 = vmatpush1.bf16.msra.mxu0 %v7763
  %8390 = vmatprep.subr.bf16.mxu0 %v7772
  %8391 = vmatpush1.bf16.msra.mxu0 %v7771
  %8392 = vmatprep.subr.bf16.mxu0 %v7780
  %8393 = vmatpush1.bf16.msra.mxu0 %v7779
  %8394 = vmatprep.subr.bf16.mxu0 %v7788
  %8395 = vmatpush1.bf16.msra.mxu0 %v7787
  %8396 = vmatprep.subr.bf16.mxu0 %v7796
  %8397 = vmatpush1.bf16.msra.mxu0 %v7795
  %8398 = vmatprep.subr.bf16.mxu0 %v7804
  %8399 = vmatpush1.bf16.msra.mxu0 %v7803
  %8400 = vmatprep.subr.bf16.mxu0 %v7812
  %8401 = vmatpush1.bf16.msra.mxu0 %v7811
  %8402 = vmatprep.mubr.bf16.mxu0 %v6490
  %8403 = vmatmul.mubr.bf16.gmra.mrb[0].mxu0 %v6489
  %v8404 = vpop.f32.mrb[0].mxu0
  %v8405 = vadd.f32 %v8362, %v8404
  %v8406 = vpop.f32.mrb[0].mxu0
  %v8407 = vadd.f32 %v8364, %v8406
  %v8408 = vpop.f32.mrb[0].mxu0
  %v8409 = vadd.f32 %v8366, %v8408
  %v8410 = vpop.f32.mrb[0].mxu0
  %v8411 = vadd.f32 %v8368, %v8410
  %8412 = vdwg.mxu0
  %v8413 = vld [vmem:[%s7] sm:$0xff]
  %v8414 = vld [vmem:[%s7 + $0x8] sm:$0xff]
  %v8415 = vld [vmem:[%s7 + $0x10] sm:$0xff]
  %v8416 = vld [vmem:[%s7 + $0x18] sm:$0xff]
  %v8417 = vld [vmem:[%s7 + $0x20] sm:$0xff]
  %v8418 = vld [vmem:[%s7 + $0x28] sm:$0xff]
  %v8419 = vld [vmem:[%s7 + $0x30] sm:$0xff]
  %v8420 = vld [vmem:[%s7 + $0x38] sm:$0xff]
  %v8421 = vld [vmem:[%s7 + $0x40] sm:$0xff]
  %v8422 = vld [vmem:[%s7 + $0x48] sm:$0xff]
  %v8423 = vld [vmem:[%s7 + $0x50] sm:$0xff]
  %v8424 = vld [vmem:[%s7 + $0x58] sm:$0xff]
  %v8425 = vld [vmem:[%s7 + $0x60] sm:$0xff]
  %v8426 = vld [vmem:[%s7 + $0x68] sm:$0xff]
  %v8427 = vld [vmem:[%s7 + $0x70] sm:$0xff]
  %v8428 = vld [vmem:[%s7 + $0x78] sm:$0xff]
  %v8429 = vld [vmem:[%s7 + $0x80] sm:$0xff]
  %v8430 = vld [vmem:[%s7 + $0x88] sm:$0xff]
  %v8431 = vld [vmem:[%s7 + $0x90] sm:$0xff]
  %v8432 = vld [vmem:[%s7 + $0x98] sm:$0xff]
  %v8433 = vld [vmem:[%s7 + $0xa0] sm:$0xff]
  %v8434 = vld [vmem:[%s7 + $0xa8] sm:$0xff]
  %v8435 = vld [vmem:[%s7 + $0xb0] sm:$0xff]
  %v8436 = vld [vmem:[%s7 + $0xb8] sm:$0xff]
  %v8437 = vld [vmem:[%s7 + $0xc0] sm:$0xff]
  %v8438 = vld [vmem:[%s7 + $0xc8] sm:$0xff]
  %v8439 = vld [vmem:[%s7 + $0xd0] sm:$0xff]
  %v8440 = vld [vmem:[%s7 + $0xd8] sm:$0xff]
  %v8441 = vld [vmem:[%s7 + $0xe0] sm:$0xff]
  %v8442 = vld [vmem:[%s7 + $0xe8] sm:$0xff]
  %v8443 = vld [vmem:[%s7 + $0xf0] sm:$0xff]
  %v8444 = vld [vmem:[%s7 + $0xf8] sm:$0xff]
  %v8445 = vld [vmem:[%s7 + $0x100] sm:$0xff]
  %v8446 = vld [vmem:[%s7 + $0x108] sm:$0xff]
  %v8447 = vld [vmem:[%s7 + $0x110] sm:$0xff]
  %v8448 = vld [vmem:[%s7 + $0x118] sm:$0xff]
  %v8449 = vld [vmem:[%s7 + $0x120] sm:$0xff]
  %v8450 = vld [vmem:[%s7 + $0x128] sm:$0xff]
  %v8451 = vld [vmem:[%s7 + $0x130] sm:$0xff]
  %v8452 = vld [vmem:[%s7 + $0x138] sm:$0xff]
  %v8453 = vld [vmem:[%s7 + $0x140] sm:$0xff]
  %v8454 = vld [vmem:[%s7 + $0x148] sm:$0xff]
  %v8455 = vld [vmem:[%s7 + $0x150] sm:$0xff]
  %v8456 = vld [vmem:[%s7 + $0x158] sm:$0xff]
  %v8457 = vld [vmem:[%s7 + $0x160] sm:$0xff]
  %v8458 = vld [vmem:[%s7 + $0x168] sm:$0xff]
  %v8459 = vld [vmem:[%s7 + $0x170] sm:$0xff]
  %v8460 = vld [vmem:[%s7 + $0x178] sm:$0xff]
  %v8461 = vld [vmem:[%s7 + $0x180] sm:$0xff]
  %v8462 = vld [vmem:[%s7 + $0x188] sm:$0xff]
  %v8463 = vld [vmem:[%s7 + $0x190] sm:$0xff]
  %v8464 = vld [vmem:[%s7 + $0x198] sm:$0xff]
  %v8465 = vld [vmem:[%s7 + $0x1a0] sm:$0xff]
  %v8466 = vld [vmem:[%s7 + $0x1a8] sm:$0xff]
  %v8467 = vld [vmem:[%s7 + $0x1b0] sm:$0xff]
  %v8468 = vld [vmem:[%s7 + $0x1b8] sm:$0xff]
  %v8469 = vld [vmem:[%s7 + $0x1c0] sm:$0xff]
  %v8470 = vld [vmem:[%s7 + $0x1c8] sm:$0xff]
  %v8471 = vld [vmem:[%s7 + $0x1d0] sm:$0xff]
  %v8472 = vld [vmem:[%s7 + $0x1d8] sm:$0xff]
  %v8473 = vld [vmem:[%s7 + $0x1e0] sm:$0xff]
  %v8474 = vld [vmem:[%s7 + $0x1e8] sm:$0xff]
  %v8475 = vld [vmem:[%s7 + $0x1f0] sm:$0xff]
  %v8476 = vld [vmem:[%s7 + $0x1f8] sm:$0xff]
  %v8477 = vld [vmem:[%s7 + $0x200] sm:$0xff]
  %v8478 = vld [vmem:[%s7 + $0x208] sm:$0xff]
  %v8479 = vld [vmem:[%s7 + $0x210] sm:$0xff]
  %v8480 = vld [vmem:[%s7 + $0x218] sm:$0xff]
  %v8481 = vld [vmem:[%s7 + $0x220] sm:$0xff]
  %v8482 = vld [vmem:[%s7 + $0x228] sm:$0xff]
  %v8483 = vld [vmem:[%s7 + $0x230] sm:$0xff]
  %v8484 = vld [vmem:[%s7 + $0x238] sm:$0xff]
  %v8485 = vld [vmem:[%s7 + $0x240] sm:$0xff]
  %v8486 = vld [vmem:[%s7 + $0x248] sm:$0xff]
  %v8487 = vld [vmem:[%s7 + $0x250] sm:$0xff]
  %v8488 = vld [vmem:[%s7 + $0x258] sm:$0xff]
  %v8489 = vld [vmem:[%s7 + $0x260] sm:$0xff]
  %v8490 = vld [vmem:[%s7 + $0x268] sm:$0xff]
  %v8491 = vld [vmem:[%s7 + $0x270] sm:$0xff]
  %v8492 = vld [vmem:[%s7 + $0x278] sm:$0xff]
  %v8493 = vld [vmem:[%s7 + $0x280] sm:$0xff]
  %v8494 = vld [vmem:[%s7 + $0x288] sm:$0xff]
  %v8495 = vld [vmem:[%s7 + $0x290] sm:$0xff]
  %v8496 = vld [vmem:[%s7 + $0x298] sm:$0xff]
  %v8497 = vld [vmem:[%s7 + $0x2a0] sm:$0xff]
  %v8498 = vld [vmem:[%s7 + $0x2a8] sm:$0xff]
  %v8499 = vld [vmem:[%s7 + $0x2b0] sm:$0xff]
  %v8500 = vld [vmem:[%s7 + $0x2b8] sm:$0xff]
  %v8501 = vld [vmem:[%s7 + $0x2c0] sm:$0xff]
  %v8502 = vld [vmem:[%s7 + $0x2c8] sm:$0xff]
  %v8503 = vld [vmem:[%s7 + $0x2d0] sm:$0xff]
  %v8504 = vld [vmem:[%s7 + $0x2d8] sm:$0xff]
  %v8505 = vld [vmem:[%s7 + $0x2e0] sm:$0xff]
  %v8506 = vld [vmem:[%s7 + $0x2e8] sm:$0xff]
  %v8507 = vld [vmem:[%s7 + $0x2f0] sm:$0xff]
  %v8508 = vld [vmem:[%s7 + $0x2f8] sm:$0xff]
  %v8509 = vld [vmem:[%s7 + $0x300] sm:$0xff]
  %v8510 = vld [vmem:[%s7 + $0x308] sm:$0xff]
  %v8511 = vld [vmem:[%s7 + $0x310] sm:$0xff]
  %v8512 = vld [vmem:[%s7 + $0x318] sm:$0xff]
  %v8513 = vld [vmem:[%s7 + $0x320] sm:$0xff]
  %v8514 = vld [vmem:[%s7 + $0x328] sm:$0xff]
  %v8515 = vld [vmem:[%s7 + $0x330] sm:$0xff]
  %v8516 = vld [vmem:[%s7 + $0x338] sm:$0xff]
  %v8517 = vld [vmem:[%s7 + $0x340] sm:$0xff]
  %v8518 = vld [vmem:[%s7 + $0x348] sm:$0xff]
  %v8519 = vld [vmem:[%s7 + $0x350] sm:$0xff]
  %v8520 = vld [vmem:[%s7 + $0x358] sm:$0xff]
  %v8521 = vld [vmem:[%s7 + $0x360] sm:$0xff]
  %v8522 = vld [vmem:[%s7 + $0x368] sm:$0xff]
  %v8523 = vld [vmem:[%s7 + $0x370] sm:$0xff]
  %v8524 = vld [vmem:[%s7 + $0x378] sm:$0xff]
  %v8525 = vld [vmem:[%s7 + $0x380] sm:$0xff]
  %v8526 = vld [vmem:[%s7 + $0x388] sm:$0xff]
  %v8527 = vld [vmem:[%s7 + $0x390] sm:$0xff]
  %v8528 = vld [vmem:[%s7 + $0x398] sm:$0xff]
  %v8529 = vld [vmem:[%s7 + $0x3a0] sm:$0xff]
  %v8530 = vld [vmem:[%s7 + $0x3a8] sm:$0xff]
  %v8531 = vld [vmem:[%s7 + $0x3b0] sm:$0xff]
  %v8532 = vld [vmem:[%s7 + $0x3b8] sm:$0xff]
  %v8533 = vld [vmem:[%s7 + $0x3c0] sm:$0xff]
  %v8534 = vld [vmem:[%s7 + $0x3c8] sm:$0xff]
  %v8535 = vld [vmem:[%s7 + $0x3d0] sm:$0xff]
  %v8536 = vld [vmem:[%s7 + $0x3d8] sm:$0xff]
  %v8537 = vld [vmem:[%s7 + $0x3e0] sm:$0xff]
  %v8538 = vld [vmem:[%s7 + $0x3e8] sm:$0xff]
  %v8539 = vld [vmem:[%s7 + $0x3f0] sm:$0xff]
  %v8540 = vld [vmem:[%s7 + $0x3f8] sm:$0xff]
  %v8541 = vld [vmem:[%s7 + $0x400] sm:$0xff]
  %v8542 = vld [vmem:[%s7 + $0x408] sm:$0xff]
  %v8543 = vld [vmem:[%s7 + $0x410] sm:$0xff]
  %v8544 = vld [vmem:[%s7 + $0x418] sm:$0xff]
  %v8545 = vld [vmem:[%s7 + $0x420] sm:$0xff]
  %v8546 = vld [vmem:[%s7 + $0x428] sm:$0xff]
  %v8547 = vld [vmem:[%s7 + $0x430] sm:$0xff]
  %v8548 = vld [vmem:[%s7 + $0x438] sm:$0xff]
  %v8549 = vld [vmem:[%s7 + $0x440] sm:$0xff]
  %v8550 = vld [vmem:[%s7 + $0x448] sm:$0xff]
  %v8551 = vld [vmem:[%s7 + $0x450] sm:$0xff]
  %v8552 = vld [vmem:[%s7 + $0x458] sm:$0xff]
  %v8553 = vld [vmem:[%s7 + $0x460] sm:$0xff]
  %v8554 = vld [vmem:[%s7 + $0x468] sm:$0xff]
  %v8555 = vld [vmem:[%s7 + $0x470] sm:$0xff]
  %v8556 = vld [vmem:[%s7 + $0x478] sm:$0xff]
  %v8557 = vld [vmem:[%s7 + $0x480] sm:$0xff]
  %v8558 = vld [vmem:[%s7 + $0x488] sm:$0xff]
  %v8559 = vld [vmem:[%s7 + $0x490] sm:$0xff]
  %v8560 = vld [vmem:[%s7 + $0x498] sm:$0xff]
  %v8561 = vld [vmem:[%s7 + $0x4a0] sm:$0xff]
  %v8562 = vld [vmem:[%s7 + $0x4a8] sm:$0xff]
  %v8563 = vld [vmem:[%s7 + $0x4b0] sm:$0xff]
  %v8564 = vld [vmem:[%s7 + $0x4b8] sm:$0xff]
  %v8565 = vld [vmem:[%s7 + $0x4c0] sm:$0xff]
  %v8566 = vld [vmem:[%s7 + $0x4c8] sm:$0xff]
  %v8567 = vld [vmem:[%s7 + $0x4d0] sm:$0xff]
  %v8568 = vld [vmem:[%s7 + $0x4d8] sm:$0xff]
  %v8569 = vld [vmem:[%s7 + $0x4e0] sm:$0xff]
  %v8570 = vld [vmem:[%s7 + $0x4e8] sm:$0xff]
  %v8571 = vld [vmem:[%s7 + $0x4f0] sm:$0xff]
  %v8572 = vld [vmem:[%s7 + $0x4f8] sm:$0xff]
  %v8573 = vld [vmem:[%s7 + $0x500] sm:$0xff]
  %v8574 = vld [vmem:[%s7 + $0x508] sm:$0xff]
  %v8575 = vld [vmem:[%s7 + $0x510] sm:$0xff]
  %v8576 = vld [vmem:[%s7 + $0x518] sm:$0xff]
  %v8577 = vld [vmem:[%s7 + $0x520] sm:$0xff]
  %v8578 = vld [vmem:[%s7 + $0x528] sm:$0xff]
  %v8579 = vld [vmem:[%s7 + $0x530] sm:$0xff]
  %v8580 = vld [vmem:[%s7 + $0x538] sm:$0xff]
  %v8581 = vld [vmem:[%s7 + $0x540] sm:$0xff]
  %v8582 = vld [vmem:[%s7 + $0x548] sm:$0xff]
  %v8583 = vld [vmem:[%s7 + $0x550] sm:$0xff]
  %v8584 = vld [vmem:[%s7 + $0x558] sm:$0xff]
  %v8585 = vld [vmem:[%s7 + $0x560] sm:$0xff]
  %v8586 = vld [vmem:[%s7 + $0x568] sm:$0xff]
  %v8587 = vld [vmem:[%s7 + $0x570] sm:$0xff]
  %v8588 = vld [vmem:[%s7 + $0x578] sm:$0xff]
  %v8589 = vld [vmem:[%s7 + $0x580] sm:$0xff]
  %v8590 = vld [vmem:[%s7 + $0x588] sm:$0xff]
  %v8591 = vld [vmem:[%s7 + $0x590] sm:$0xff]
  %v8592 = vld [vmem:[%s7 + $0x598] sm:$0xff]
  %v8593 = vld [vmem:[%s7 + $0x5a0] sm:$0xff]
  %v8594 = vld [vmem:[%s7 + $0x5a8] sm:$0xff]
  %v8595 = vld [vmem:[%s7 + $0x5b0] sm:$0xff]
  %v8596 = vld [vmem:[%s7 + $0x5b8] sm:$0xff]
  %v8597 = vld [vmem:[%s7 + $0x5c0] sm:$0xff]
  %v8598 = vld [vmem:[%s7 + $0x5c8] sm:$0xff]
  %v8599 = vld [vmem:[%s7 + $0x5d0] sm:$0xff]
  %v8600 = vld [vmem:[%s7 + $0x5d8] sm:$0xff]
  %v8601 = vld [vmem:[%s7 + $0x5e0] sm:$0xff]
  %v8602 = vld [vmem:[%s7 + $0x5e8] sm:$0xff]
  %v8603 = vld [vmem:[%s7 + $0x5f0] sm:$0xff]
  %v8604 = vld [vmem:[%s7 + $0x5f8] sm:$0xff]
  %v8605 = vld [vmem:[%s7 + $0x600] sm:$0xff]
  %v8606 = vld [vmem:[%s7 + $0x608] sm:$0xff]
  %v8607 = vld [vmem:[%s7 + $0x610] sm:$0xff]
  %v8608 = vld [vmem:[%s7 + $0x618] sm:$0xff]
  %v8609 = vld [vmem:[%s7 + $0x620] sm:$0xff]
  %v8610 = vld [vmem:[%s7 + $0x628] sm:$0xff]
  %v8611 = vld [vmem:[%s7 + $0x630] sm:$0xff]
  %v8612 = vld [vmem:[%s7 + $0x638] sm:$0xff]
  %v8613 = vld [vmem:[%s7 + $0x640] sm:$0xff]
  %v8614 = vld [vmem:[%s7 + $0x648] sm:$0xff]
  %v8615 = vld [vmem:[%s7 + $0x650] sm:$0xff]
  %v8616 = vld [vmem:[%s7 + $0x658] sm:$0xff]
  %v8617 = vld [vmem:[%s7 + $0x660] sm:$0xff]
  %v8618 = vld [vmem:[%s7 + $0x668] sm:$0xff]
  %v8619 = vld [vmem:[%s7 + $0x670] sm:$0xff]
  %v8620 = vld [vmem:[%s7 + $0x678] sm:$0xff]
  %v8621 = vld [vmem:[%s7 + $0x680] sm:$0xff]
  %v8622 = vld [vmem:[%s7 + $0x688] sm:$0xff]
  %v8623 = vld [vmem:[%s7 + $0x690] sm:$0xff]
  %v8624 = vld [vmem:[%s7 + $0x698] sm:$0xff]
  %v8625 = vld [vmem:[%s7 + $0x6a0] sm:$0xff]
  %v8626 = vld [vmem:[%s7 + $0x6a8] sm:$0xff]
  %v8627 = vld [vmem:[%s7 + $0x6b0] sm:$0xff]
  %v8628 = vld [vmem:[%s7 + $0x6b8] sm:$0xff]
  %v8629 = vld [vmem:[%s7 + $0x6c0] sm:$0xff]
  %v8630 = vld [vmem:[%s7 + $0x6c8] sm:$0xff]
  %v8631 = vld [vmem:[%s7 + $0x6d0] sm:$0xff]
  %v8632 = vld [vmem:[%s7 + $0x6d8] sm:$0xff]
  %v8633 = vld [vmem:[%s7 + $0x6e0] sm:$0xff]
  %v8634 = vld [vmem:[%s7 + $0x6e8] sm:$0xff]
  %v8635 = vld [vmem:[%s7 + $0x6f0] sm:$0xff]
  %v8636 = vld [vmem:[%s7 + $0x6f8] sm:$0xff]
  %v8637 = vld [vmem:[%s7 + $0x700] sm:$0xff]
  %v8638 = vld [vmem:[%s7 + $0x708] sm:$0xff]
  %v8639 = vld [vmem:[%s7 + $0x710] sm:$0xff]
  %v8640 = vld [vmem:[%s7 + $0x718] sm:$0xff]
  %v8641 = vld [vmem:[%s7 + $0x720] sm:$0xff]
  %v8642 = vld [vmem:[%s7 + $0x728] sm:$0xff]
  %v8643 = vld [vmem:[%s7 + $0x730] sm:$0xff]
  %v8644 = vld [vmem:[%s7 + $0x738] sm:$0xff]
  %v8645 = vld [vmem:[%s7 + $0x740] sm:$0xff]
  %v8646 = vld [vmem:[%s7 + $0x748] sm:$0xff]
  %v8647 = vld [vmem:[%s7 + $0x750] sm:$0xff]
  %v8648 = vld [vmem:[%s7 + $0x758] sm:$0xff]
  %v8649 = vld [vmem:[%s7 + $0x760] sm:$0xff]
  %v8650 = vld [vmem:[%s7 + $0x768] sm:$0xff]
  %v8651 = vld [vmem:[%s7 + $0x770] sm:$0xff]
  %v8652 = vld [vmem:[%s7 + $0x778] sm:$0xff]
  %v8653 = vld [vmem:[%s7 + $0x780] sm:$0xff]
  %v8654 = vld [vmem:[%s7 + $0x788] sm:$0xff]
  %v8655 = vld [vmem:[%s7 + $0x790] sm:$0xff]
  %v8656 = vld [vmem:[%s7 + $0x798] sm:$0xff]
  %v8657 = vld [vmem:[%s7 + $0x7a0] sm:$0xff]
  %v8658 = vld [vmem:[%s7 + $0x7a8] sm:$0xff]
  %v8659 = vld [vmem:[%s7 + $0x7b0] sm:$0xff]
  %v8660 = vld [vmem:[%s7 + $0x7b8] sm:$0xff]
  %v8661 = vld [vmem:[%s7 + $0x7c0] sm:$0xff]
  %v8662 = vld [vmem:[%s7 + $0x7c8] sm:$0xff]
  %v8663 = vld [vmem:[%s7 + $0x7d0] sm:$0xff]
  %v8664 = vld [vmem:[%s7 + $0x7d8] sm:$0xff]
  %v8665 = vld [vmem:[%s7 + $0x7e0] sm:$0xff]
  %v8666 = vld [vmem:[%s7 + $0x7e8] sm:$0xff]
  %v8667 = vld [vmem:[%s7 + $0x7f0] sm:$0xff]
  %v8668 = vld [vmem:[%s7 + $0x7f8] sm:$0xff]
  %8669 = vmatprep.subr.mxu0 %v8414
  %8670 = vmatpush1.msra.mxu0 %v8413
  %8671 = vmatprep.subr.mxu0 %v8422
  %8672 = vmatpush1.msra.mxu0 %v8421
  %8673 = vmatprep.subr.mxu0 %v8430
  %8674 = vmatpush1.msra.mxu0 %v8429
  %8675 = vmatprep.subr.mxu0 %v8438
  %8676 = vmatpush1.msra.mxu0 %v8437
  %8677 = vmatprep.subr.mxu0 %v8446
  %8678 = vmatpush1.msra.mxu0 %v8445
  %8679 = vmatprep.subr.mxu0 %v8454
  %8680 = vmatpush1.msra.mxu0 %v8453
  %8681 = vmatprep.subr.mxu0 %v8462
  %8682 = vmatpush1.msra.mxu0 %v8461
  %8683 = vmatprep.subr.mxu0 %v8470
  %8684 = vmatpush1.msra.mxu0 %v8469
  %8685 = vmatprep.subr.mxu0 %v8478
  %8686 = vmatpush1.msra.mxu0 %v8477
  %8687 = vmatprep.subr.mxu0 %v8486
  %8688 = vmatpush1.msra.mxu0 %v8485
  %8689 = vmatprep.subr.mxu0 %v8494
  %8690 = vmatpush1.msra.mxu0 %v8493
  %8691 = vmatprep.subr.mxu0 %v8502
  %8692 = vmatpush1.msra.mxu0 %v8501
  %8693 = vmatprep.subr.mxu0 %v8510
  %8694 = vmatpush1.msra.mxu0 %v8509
  %8695 = vmatprep.subr.mxu0 %v8518
  %8696 = vmatpush1.msra.mxu0 %v8517
  %8697 = vmatprep.subr.mxu0 %v8526
  %8698 = vmatpush1.msra.mxu0 %v8525
  %8699 = vmatprep.subr.mxu0 %v8534
  %8700 = vmatpush1.msra.mxu0 %v8533
  %8701 = vmatprep.subr.mxu0 %v8542
  %8702 = vmatpush1.msra.mxu0 %v8541
  %8703 = vmatprep.subr.mxu0 %v8550
  %8704 = vmatpush1.msra.mxu0 %v8549
  %8705 = vmatprep.subr.mxu0 %v8558
  %8706 = vmatpush1.msra.mxu0 %v8557
  %8707 = vmatprep.subr.mxu0 %v8566
  %8708 = vmatpush1.msra.mxu0 %v8565
  %8709 = vmatprep.subr.mxu0 %v8574
  %8710 = vmatpush1.msra.mxu0 %v8573
  %8711 = vmatprep.subr.mxu0 %v8582
  %8712 = vmatpush1.msra.mxu0 %v8581
  %8713 = vmatprep.subr.mxu0 %v8590
  %8714 = vmatpush1.msra.mxu0 %v8589
  %8715 = vmatprep.subr.mxu0 %v8598
  %8716 = vmatpush1.msra.mxu0 %v8597
  %8717 = vmatprep.subr.mxu0 %v8606
  %8718 = vmatpush1.msra.mxu0 %v8605
  %8719 = vmatprep.subr.mxu0 %v8614
  %8720 = vmatpush1.msra.mxu0 %v8613
  %8721 = vmatprep.subr.mxu0 %v8622
  %8722 = vmatpush1.msra.mxu0 %v8621
  %8723 = vmatprep.subr.mxu0 %v8630
  %8724 = vmatpush1.msra.mxu0 %v8629
  %8725 = vmatprep.subr.mxu0 %v8638
  %8726 = vmatpush1.msra.mxu0 %v8637
  %8727 = vmatprep.subr.mxu0 %v8646
  %8728 = vmatpush1.msra.mxu0 %v8645
  %8729 = vmatprep.subr.mxu0 %v8654
  %8730 = vmatpush1.msra.mxu0 %v8653
  %8731 = vmatprep.subr.mxu0 %v8662
  %8732 = vmatpush1.msra.mxu0 %v8661
  %8733 = vmatprep.mubr.f32.mxu0 0.0
  %8734 = vmatmul.mubr.f32.gmra.mrb[0].mxu0 0.0
  %v8735 = vpop.f32.mrb[0].mxu0
  %v8736 = vadd.f32 0.0, %v8735
  %v8737 = vpop.f32.mrb[0].mxu0
  %v8738 = vadd.f32 0.0, %v8737
  %8739 = vdwg.mxu0
  %8740 = vmatprep.subr.mxu0 %v8416
  %8741 = vmatpush1.msra.mxu0 %v8415
  %8742 = vmatprep.subr.mxu0 %v8424
  %8743 = vmatpush1.msra.mxu0 %v8423
  %8744 = vmatprep.subr.mxu0 %v8432
  %8745 = vmatpush1.msra.mxu0 %v8431
  %8746 = vmatprep.subr.mxu0 %v8440
  %8747 = vmatpush1.msra.mxu0 %v8439
  %8748 = vmatprep.subr.mxu0 %v8448
  %8749 = vmatpush1.msra.mxu0 %v8447
  %8750 = vmatprep.subr.mxu0 %v8456
  %8751 = vmatpush1.msra.mxu0 %v8455
  %8752 = vmatprep.subr.mxu0 %v8464
  %8753 = vmatpush1.msra.mxu0 %v8463
  %8754 = vmatprep.subr.mxu0 %v8472
  %8755 = vmatpush1.msra.mxu0 %v8471
  %8756 = vmatprep.subr.mxu0 %v8480
  %8757 = vmatpush1.msra.mxu0 %v8479
  %8758 = vmatprep.subr.mxu0 %v8488
  %8759 = vmatpush1.msra.mxu0 %v8487
  %8760 = vmatprep.subr.mxu0 %v8496
  %8761 = vmatpush1.msra.mxu0 %v8495
  %8762 = vmatprep.subr.mxu0 %v8504
  %8763 = vmatpush1.msra.mxu0 %v8503
  %8764 = vmatprep.subr.mxu0 %v8512
  %8765 = vmatpush1.msra.mxu0 %v8511
  %8766 = vmatprep.subr.mxu0 %v8520
  %8767 = vmatpush1.msra.mxu0 %v8519
  %8768 = vmatprep.subr.mxu0 %v8528
  %8769 = vmatpush1.msra.mxu0 %v8527
  %8770 = vmatprep.subr.mxu0 %v8536
  %8771 = vmatpush1.msra.mxu0 %v8535
  %8772 = vmatprep.subr.mxu0 %v8544
  %8773 = vmatpush1.msra.mxu0 %v8543
  %8774 = vmatprep.subr.mxu0 %v8552
  %8775 = vmatpush1.msra.mxu0 %v8551
  %8776 = vmatprep.subr.mxu0 %v8560
  %8777 = vmatpush1.msra.mxu0 %v8559
  %8778 = vmatprep.subr.mxu0 %v8568
  %8779 = vmatpush1.msra.mxu0 %v8567
  %8780 = vmatprep.subr.mxu0 %v8576
  %8781 = vmatpush1.msra.mxu0 %v8575
  %8782 = vmatprep.subr.mxu0 %v8584
  %8783 = vmatpush1.msra.mxu0 %v8583
  %8784 = vmatprep.subr.mxu0 %v8592
  %8785 = vmatpush1.msra.mxu0 %v8591
  %8786 = vmatprep.subr.mxu0 %v8600
  %8787 = vmatpush1.msra.mxu0 %v8599
  %8788 = vmatprep.subr.mxu0 %v8608
  %8789 = vmatpush1.msra.mxu0 %v8607
  %8790 = vmatprep.subr.mxu0 %v8616
  %8791 = vmatpush1.msra.mxu0 %v8615
  %8792 = vmatprep.subr.mxu0 %v8624
  %8793 = vmatpush1.msra.mxu0 %v8623
  %8794 = vmatprep.subr.mxu0 %v8632
  %8795 = vmatpush1.msra.mxu0 %v8631
  %8796 = vmatprep.subr.mxu0 %v8640
  %8797 = vmatpush1.msra.mxu0 %v8639
  %8798 = vmatprep.subr.mxu0 %v8648
  %8799 = vmatpush1.msra.mxu0 %v8647
  %8800 = vmatprep.subr.mxu0 %v8656
  %8801 = vmatpush1.msra.mxu0 %v8655
  %8802 = vmatprep.subr.mxu0 %v8664
  %8803 = vmatpush1.msra.mxu0 %v8663
  %8804 = vmatprep.mubr.f32.mxu0 0.0
  %8805 = vmatmul.mubr.f32.gmra.mrb[0].mxu0 0.0
  %v8806 = vpop.f32.mrb[0].mxu0
  %v8807 = vadd.f32 0.0, %v8806
  %v8808 = vpop.f32.mrb[0].mxu0
  %v8809 = vadd.f32 0.0, %v8808
  %8810 = vdwg.mxu0
  %8811 = vmatprep.subr.mxu0 %v8418
  %8812 = vmatpush1.msra.mxu0 %v8417
  %8813 = vmatprep.subr.mxu0 %v8426
  %8814 = vmatpush1.msra.mxu0 %v8425
  %8815 = vmatprep.subr.mxu0 %v8434
  %8816 = vmatpush1.msra.mxu0 %v8433
  %8817 = vmatprep.subr.mxu0 %v8442
  %8818 = vmatpush1.msra.mxu0 %v8441
  %8819 = vmatprep.subr.mxu0 %v8450
  %8820 = vmatpush1.msra.mxu0 %v8449
  %8821 = vmatprep.subr.mxu0 %v8458
  %8822 = vmatpush1.msra.mxu0 %v8457
  %8823 = vmatprep.subr.mxu0 %v8466
  %8824 = vmatpush1.msra.mxu0 %v8465
  %8825 = vmatprep.subr.mxu0 %v8474
  %8826 = vmatpush1.msra.mxu0 %v8473
  %8827 = vmatprep.subr.mxu0 %v8482
  %8828 = vmatpush1.msra.mxu0 %v8481
  %8829 = vmatprep.subr.mxu0 %v8490
  %8830 = vmatpush1.msra.mxu0 %v8489
  %8831 = vmatprep.subr.mxu0 %v8498
  %8832 = vmatpush1.msra.mxu0 %v8497
  %8833 = vmatprep.subr.mxu0 %v8506
  %8834 = vmatpush1.msra.mxu0 %v8505
  %8835 = vmatprep.subr.mxu0 %v8514
  %8836 = vmatpush1.msra.mxu0 %v8513
  %8837 = vmatprep.subr.mxu0 %v8522
  %8838 = vmatpush1.msra.mxu0 %v8521
  %8839 = vmatprep.subr.mxu0 %v8530
  %8840 = vmatpush1.msra.mxu0 %v8529
  %8841 = vmatprep.subr.mxu0 %v8538
  %8842 = vmatpush1.msra.mxu0 %v8537
  %8843 = vmatprep.subr.mxu0 %v8546
  %8844 = vmatpush1.msra.mxu0 %v8545
  %8845 = vmatprep.subr.mxu0 %v8554
  %8846 = vmatpush1.msra.mxu0 %v8553
  %8847 = vmatprep.subr.mxu0 %v8562
  %8848 = vmatpush1.msra.mxu0 %v8561
  %8849 = vmatprep.subr.mxu0 %v8570
  %8850 = vmatpush1.msra.mxu0 %v8569
  %8851 = vmatprep.subr.mxu0 %v8578
  %8852 = vmatpush1.msra.mxu0 %v8577
  %8853 = vmatprep.subr.mxu0 %v8586
  %8854 = vmatpush1.msra.mxu0 %v8585
  %8855 = vmatprep.subr.mxu0 %v8594
  %8856 = vmatpush1.msra.mxu0 %v8593
  %8857 = vmatprep.subr.mxu0 %v8602
  %8858 = vmatpush1.msra.mxu0 %v8601
  %8859 = vmatprep.subr.mxu0 %v8610
  %8860 = vmatpush1.msra.mxu0 %v8609
  %8861 = vmatprep.subr.mxu0 %v8618
  %8862 = vmatpush1.msra.mxu0 %v8617
  %8863 = vmatprep.subr.mxu0 %v8626
  %8864 = vmatpush1.msra.mxu0 %v8625
  %8865 = vmatprep.subr.mxu0 %v8634
  %8866 = vmatpush1.msra.mxu0 %v8633
  %8867 = vmatprep.subr.mxu0 %v8642
  %8868 = vmatpush1.msra.mxu0 %v8641
  %8869 = vmatprep.subr.mxu0 %v8650
  %8870 = vmatpush1.msra.mxu0 %v8649
  %8871 = vmatprep.subr.mxu0 %v8658
  %8872 = vmatpush1.msra.mxu0 %v8657
  %8873 = vmatprep.subr.mxu0 %v8666
  %8874 = vmatpush1.msra.mxu0 %v8665
  %8875 = vmatprep.mubr.f32.mxu0 0.0
  %8876 = vmatmul.mubr.f32.gmra.mrb[0].mxu0 0.0
  %v8877 = vpop.f32.mrb[0].mxu0
  %v8878 = vadd.f32 0.0, %v8877
  %v8879 = vpop.f32.mrb[0].mxu0
  %v8880 = vadd.f32 0.0, %v8879
  %8881 = vdwg.mxu0
  %8882 = vmatprep.subr.mxu0 %v8420
  %8883 = vmatpush1.msra.mxu0 %v8419
  %8884 = vmatprep.subr.mxu0 %v8428
  %8885 = vmatpush1.msra.mxu0 %v8427
  %8886 = vmatprep.subr.mxu0 %v8436
  %8887 = vmatpush1.msra.mxu0 %v8435
  %8888 = vmatprep.subr.mxu0 %v8444
  %8889 = vmatpush1.msra.mxu0 %v8443
  %8890 = vmatprep.subr.mxu0 %v8452
  %8891 = vmatpush1.msra.mxu0 %v8451
  %8892 = vmatprep.subr.mxu0 %v8460
  %8893 = vmatpush1.msra.mxu0 %v8459
  %8894 = vmatprep.subr.mxu0 %v8468
  %8895 = vmatpush1.msra.mxu0 %v8467
  %8896 = vmatprep.subr.mxu0 %v8476
  %8897 = vmatpush1.msra.mxu0 %v8475
  %8898 = vmatprep.subr.mxu0 %v8484
  %8899 = vmatpush1.msra.mxu0 %v8483
  %8900 = vmatprep.subr.mxu0 %v8492
  %8901 = vmatpush1.msra.mxu0 %v8491
  %8902 = vmatprep.subr.mxu0 %v8500
  %8903 = vmatpush1.msra.mxu0 %v8499
  %8904 = vmatprep.subr.mxu0 %v8508
  %8905 = vmatpush1.msra.mxu0 %v8507
  %8906 = vmatprep.subr.mxu0 %v8516
  %8907 = vmatpush1.msra.mxu0 %v8515
  %8908 = vmatprep.subr.mxu0 %v8524
  %8909 = vmatpush1.msra.mxu0 %v8523
  %8910 = vmatprep.subr.mxu0 %v8532
  %8911 = vmatpush1.msra.mxu0 %v8531
  %8912 = vmatprep.subr.mxu0 %v8540
  %8913 = vmatpush1.msra.mxu0 %v8539
  %8914 = vmatprep.subr.mxu0 %v8548
  %8915 = vmatpush1.msra.mxu0 %v8547
  %8916 = vmatprep.subr.mxu0 %v8556
  %8917 = vmatpush1.msra.mxu0 %v8555
  %8918 = vmatprep.subr.mxu0 %v8564
  %8919 = vmatpush1.msra.mxu0 %v8563
  %8920 = vmatprep.subr.mxu0 %v8572
  %8921 = vmatpush1.msra.mxu0 %v8571
  %8922 = vmatprep.subr.mxu0 %v8580
  %8923 = vmatpush1.msra.mxu0 %v8579
  %8924 = vmatprep.subr.mxu0 %v8588
  %8925 = vmatpush1.msra.mxu0 %v8587
  %8926 = vmatprep.subr.mxu0 %v8596
  %8927 = vmatpush1.msra.mxu0 %v8595
  %8928 = vmatprep.subr.mxu0 %v8604
  %8929 = vmatpush1.msra.mxu0 %v8603
  %8930 = vmatprep.subr.mxu0 %v8612
  %8931 = vmatpush1.msra.mxu0 %v8611
  %8932 = vmatprep.subr.mxu0 %v8620
  %8933 = vmatpush1.msra.mxu0 %v8619
  %8934 = vmatprep.subr.mxu0 %v8628
  %8935 = vmatpush1.msra.mxu0 %v8627
  %8936 = vmatprep.subr.mxu0 %v8636
  %8937 = vmatpush1.msra.mxu0 %v8635
  %8938 = vmatprep.subr.mxu0 %v8644
  %8939 = vmatpush1.msra.mxu0 %v8643
  %8940 = vmatprep.subr.mxu0 %v8652
  %8941 = vmatpush1.msra.mxu0 %v8651
  %8942 = vmatprep.subr.mxu0 %v8660
  %8943 = vmatpush1.msra.mxu0 %v8659
  %8944 = vmatprep.subr.mxu0 %v8668
  %8945 = vmatpush1.msra.mxu0 %v8667
  %8946 = vmatprep.mubr.f32.mxu0 0.0
  %8947 = vmatmul.mubr.f32.gmra.mrb[0].mxu0 0.0
  %v8948 = vpop.f32.mrb[0].mxu0
  %v8949 = vadd.f32 0.0, %v8948
  %v8950 = vpop.f32.mrb[0].mxu0
  %v8951 = vadd.f32 0.0, %v8950
  %8952 = vdwg.mxu0
  %v8953 = vadd.f32 %v8147, %v8736
  %v8954 = vadd.f32 %v8149, %v8738
  %v8955 = vadd.f32 %v8233, %v8807
  %v8956 = vadd.f32 %v8235, %v8809
  %v8957 = vadd.f32 %v8319, %v8878
  %v8958 = vadd.f32 %v8321, %v8880
  %v8959 = vadd.f32 %v8405, %v8949
  %v8960 = vadd.f32 %v8407, %v8951
  %v8961 = vxor.u32 %v8953, 2147483648
  %v8962 = vxor.u32 %v8954, 2147483648
  %v8963 = vmul.f32 %v8961, 1.442695
  %v8964 = vpow.pop %v8963
  %v8965 = vmul.f32 %v8962, 1.442695
  %v8966 = vpow.pop %v8965
  %v8967 = vadd.f32 %v8964, 1.0
  %v8968 = vadd.f32 %v8966, 1.0
  %v8969 = vrcp.pop %v8967
  %v8970 = vmul.f32 1.0, %v8969
  %v8971 = vrcp.pop %v8968
  %v8972 = vmul.f32 1.0, %v8971
  %v8973 = vxor.u32 %v8955, 2147483648
  %v8974 = vxor.u32 %v8956, 2147483648
  %v8975 = vmul.f32 %v8973, 1.442695
  %v8976 = vpow.pop %v8975
  %v8977 = vmul.f32 %v8974, 1.442695
  %v8978 = vpow.pop %v8977
  %v8979 = vadd.f32 %v8976, 1.0
  %v8980 = vadd.f32 %v8978, 1.0
  %v8981 = vrcp.pop %v8979
  %v8982 = vmul.f32 1.0, %v8981
  %v8983 = vrcp.pop %v8980
  %v8984 = vmul.f32 1.0, %v8983
  %v8985 = vtanh.pop %v8957
  %v8986 = vtanh.pop %v8958
  %v8987 = vxor.u32 %v8959, 2147483648
  %v8988 = vxor.u32 %v8960, 2147483648
  %v8989 = vmul.f32 %v8987, 1.442695
  %v8990 = vpow.pop %v8989
  %v8991 = vmul.f32 %v8988, 1.442695
  %v8992 = vpow.pop %v8991
  %v8993 = vadd.f32 %v8990, 1.0
  %v8994 = vadd.f32 %v8992, 1.0
  %v8995 = vrcp.pop %v8993
  %v8996 = vmul.f32 1.0, %v8995
  %v8997 = vrcp.pop %v8994
  %v8998 = vmul.f32 1.0, %v8997
  %v8999 = vmul.f32 %v8982, 0.0
  %v9000 = vmul.f32 %v8984, 0.0
  %v9001 = vmul.f32 %v8970, %v8985
  %v9002 = vmul.f32 %v8972, %v8986
  %v9003 = vadd.f32 %v8999, %v9001
  %v9004 = vadd.f32 %v9000, %v9002
  %v9005 = vtanh.pop %v9003
  %v9006 = vtanh.pop %v9004
  %v9007 = vmul.f32 %v8996, %v9005
  %v9008 = vmul.f32 %v8998, %v9006
  %9009 = vmatprep.subr.mxu0 %v8414
  %9010 = vmatpush1.msra.mxu0 %v8413
  %9011 = vmatprep.subr.mxu0 %v8422
  %9012 = vmatpush1.msra.mxu0 %v8421
  %9013 = vmatprep.subr.mxu0 %v8430
  %9014 = vmatpush1.msra.mxu0 %v8429
  %9015 = vmatprep.subr.mxu0 %v8438
  %9016 = vmatpush1.msra.mxu0 %v8437
  %9017 = vmatprep.subr.mxu0 %v8446
  %9018 = vmatpush1.msra.mxu0 %v8445
  %9019 = vmatprep.subr.mxu0 %v8454
  %9020 = vmatpush1.msra.mxu0 %v8453
  %9021 = vmatprep.subr.mxu0 %v8462
  %9022 = vmatpush1.msra.mxu0 %v8461
  %9023 = vmatprep.subr.mxu0 %v8470
  %9024 = vmatpush1.msra.mxu0 %v8469
  %9025 = vmatprep.subr.mxu0 %v8478
  %9026 = vmatpush1.msra.mxu0 %v8477
  %9027 = vmatprep.subr.mxu0 %v8486
  %9028 = vmatpush1.msra.mxu0 %v8485
  %9029 = vmatprep.subr.mxu0 %v8494
  %9030 = vmatpush1.msra.mxu0 %v8493
  %9031 = vmatprep.subr.mxu0 %v8502
  %9032 = vmatpush1.msra.mxu0 %v8501
  %9033 = vmatprep.subr.mxu0 %v8510
  %9034 = vmatpush1.msra.mxu0 %v8509
  %9035 = vmatprep.subr.mxu0 %v8518
  %9036 = vmatpush1.msra.mxu0 %v8517
  %9037 = vmatprep.subr.mxu0 %v8526
  %9038 = vmatpush1.msra.mxu0 %v8525
  %9039 = vmatprep.subr.mxu0 %v8534
  %9040 = vmatpush1.msra.mxu0 %v8533
  %9041 = vmatprep.subr.mxu0 %v8542
  %9042 = vmatpush1.msra.mxu0 %v8541
  %9043 = vmatprep.subr.mxu0 %v8550
  %9044 = vmatpush1.msra.mxu0 %v8549
  %9045 = vmatprep.subr.mxu0 %v8558
  %9046 = vmatpush1.msra.mxu0 %v8557
  %9047 = vmatprep.subr.mxu0 %v8566
  %9048 = vmatpush1.msra.mxu0 %v8565
  %9049 = vmatprep.subr.mxu0 %v8574
  %9050 = vmatpush1.msra.mxu0 %v8573
  %9051 = vmatprep.subr.mxu0 %v8582
  %9052 = vmatpush1.msra.mxu0 %v8581
  %9053 = vmatprep.subr.mxu0 %v8590
  %9054 = vmatpush1.msra.mxu0 %v8589
  %9055 = vmatprep.subr.mxu0 %v8598
  %9056 = vmatpush1.msra.mxu0 %v8597
  %9057 = vmatprep.subr.mxu0 %v8606
  %9058 = vmatpush1.msra.mxu0 %v8605
  %9059 = vmatprep.subr.mxu0 %v8614
  %9060 = vmatpush1.msra.mxu0 %v8613
  %9061 = vmatprep.subr.mxu0 %v8622
  %9062 = vmatpush1.msra.mxu0 %v8621
  %9063 = vmatprep.subr.mxu0 %v8630
  %9064 = vmatpush1.msra.mxu0 %v8629
  %9065 = vmatprep.subr.mxu0 %v8638
  %9066 = vmatpush1.msra.mxu0 %v8637
  %9067 = vmatprep.subr.mxu0 %v8646
  %9068 = vmatpush1.msra.mxu0 %v8645
  %9069 = vmatprep.subr.mxu0 %v8654
  %9070 = vmatpush1.msra.mxu0 %v8653
  %9071 = vmatprep.subr.mxu0 %v8662
  %9072 = vmatpush1.msra.mxu0 %v8661
  %9073 = vmatprep.mubr.f32.mxu0 %v9008
  %9074 = vmatmul.mubr.f32.gmra.mrb[0].mxu0 %v9007
  %v9075 = vpop.f32.mrb[0].mxu0
  %v9076 = vadd.f32 0.0, %v9075
  %v9077 = vpop.f32.mrb[0].mxu0
  %v9078 = vadd.f32 0.0, %v9077
  %9079 = vdwg.mxu0
  %9080 = vmatprep.subr.mxu0 %v8416
  %9081 = vmatpush1.msra.mxu0 %v8415
  %9082 = vmatprep.subr.mxu0 %v8424
  %9083 = vmatpush1.msra.mxu0 %v8423
  %9084 = vmatprep.subr.mxu0 %v8432
  %9085 = vmatpush1.msra.mxu0 %v8431
  %9086 = vmatprep.subr.mxu0 %v8440
  %9087 = vmatpush1.msra.mxu0 %v8439
  %9088 = vmatprep.subr.mxu0 %v8448
  %9089 = vmatpush1.msra.mxu0 %v8447
  %9090 = vmatprep.subr.mxu0 %v8456
  %9091 = vmatpush1.msra.mxu0 %v8455
  %9092 = vmatprep.subr.mxu0 %v8464
  %9093 = vmatpush1.msra.mxu0 %v8463
  %9094 = vmatprep.subr.mxu0 %v8472
  %9095 = vmatpush1.msra.mxu0 %v8471
  %9096 = vmatprep.subr.mxu0 %v8480
  %9097 = vmatpush1.msra.mxu0 %v8479
  %9098 = vmatprep.subr.mxu0 %v8488
  %9099 = vmatpush1.msra.mxu0 %v8487
  %9100 = vmatprep.subr.mxu0 %v8496
  %9101 = vmatpush1.msra.mxu0 %v8495
  %9102 = vmatprep.subr.mxu0 %v8504
  %9103 = vmatpush1.msra.mxu0 %v8503
  %9104 = vmatprep.subr.mxu0 %v8512
  %9105 = vmatpush1.msra.mxu0 %v8511
  %9106 = vmatprep.subr.mxu0 %v8520
  %9107 = vmatpush1.msra.mxu0 %v8519
  %9108 = vmatprep.subr.mxu0 %v8528
  %9109 = vmatpush1.msra.mxu0 %v8527
  %9110 = vmatprep.subr.mxu0 %v8536
  %9111 = vmatpush1.msra.mxu0 %v8535
  %9112 = vmatprep.subr.mxu0 %v8544
  %9113 = vmatpush1.msra.mxu0 %v8543
  %9114 = vmatprep.subr.mxu0 %v8552
  %9115 = vmatpush1.msra.mxu0 %v8551
  %9116 = vmatprep.subr.mxu0 %v8560
  %9117 = vmatpush1.msra.mxu0 %v8559
  %9118 = vmatprep.subr.mxu0 %v8568
  %9119 = vmatpush1.msra.mxu0 %v8567
  %9120 = vmatprep.subr.mxu0 %v8576
  %9121 = vmatpush1.msra.mxu0 %v8575
  %9122 = vmatprep.subr.mxu0 %v8584
  %9123 = vmatpush1.msra.mxu0 %v8583
  %9124 = vmatprep.subr.mxu0 %v8592
  %9125 = vmatpush1.msra.mxu0 %v8591
  %9126 = vmatprep.subr.mxu0 %v8600
  %9127 = vmatpush1.msra.mxu0 %v8599
  %9128 = vmatprep.subr.mxu0 %v8608
  %9129 = vmatpush1.msra.mxu0 %v8607
  %9130 = vmatprep.subr.mxu0 %v8616
  %9131 = vmatpush1.msra.mxu0 %v8615
  %9132 = vmatprep.subr.mxu0 %v8624
  %9133 = vmatpush1.msra.mxu0 %v8623
  %9134 = vmatprep.subr.mxu0 %v8632
  %9135 = vmatpush1.msra.mxu0 %v8631
  %9136 = vmatprep.subr.mxu0 %v8640
  %9137 = vmatpush1.msra.mxu0 %v8639
  %9138 = vmatprep.subr.mxu0 %v8648
  %9139 = vmatpush1.msra.mxu0 %v8647
  %9140 = vmatprep.subr.mxu0 %v8656
  %9141 = vmatpush1.msra.mxu0 %v8655
  %9142 = vmatprep.subr.mxu0 %v8664
  %9143 = vmatpush1.msra.mxu0 %v8663
  %9144 = vmatprep.mubr.f32.mxu0 %v9008
  %9145 = vmatmul.mubr.f32.gmra.mrb[0].mxu0 %v9007
  %v9146 = vpop.f32.mrb[0].mxu0
  %v9147 = vadd.f32 0.0, %v9146
  %v9148 = vpop.f32.mrb[0].mxu0
  %v9149 = vadd.f32 0.0, %v9148
  %9150 = vdwg.mxu0
  %9151 = vmatprep.subr.mxu0 %v8418
  %9152 = vmatpush1.msra.mxu0 %v8417
  %9153 = vmatprep.subr.mxu0 %v8426
  %9154 = vmatpush1.msra.mxu0 %v8425
  %9155 = vmatprep.subr.mxu0 %v8434
  %9156 = vmatpush1.msra.mxu0 %v8433
  %9157 = vmatprep.subr.mxu0 %v8442
  %9158 = vmatpush1.msra.mxu0 %v8441
  %9159 = vmatprep.subr.mxu0 %v8450
  %9160 = vmatpush1.msra.mxu0 %v8449
  %9161 = vmatprep.subr.mxu0 %v8458
  %9162 = vmatpush1.msra.mxu0 %v8457
  %9163 = vmatprep.subr.mxu0 %v8466
  %9164 = vmatpush1.msra.mxu0 %v8465
  %9165 = vmatprep.subr.mxu0 %v8474
  %9166 = vmatpush1.msra.mxu0 %v8473
  %9167 = vmatprep.subr.mxu0 %v8482
  %9168 = vmatpush1.msra.mxu0 %v8481
  %9169 = vmatprep.subr.mxu0 %v8490
  %9170 = vmatpush1.msra.mxu0 %v8489
  %9171 = vmatprep.subr.mxu0 %v8498
  %9172 = vmatpush1.msra.mxu0 %v8497
  %9173 = vmatprep.subr.mxu0 %v8506
  %9174 = vmatpush1.msra.mxu0 %v8505
  %9175 = vmatprep.subr.mxu0 %v8514
  %9176 = vmatpush1.msra.mxu0 %v8513
  %9177 = vmatprep.subr.mxu0 %v8522
  %9178 = vmatpush1.msra.mxu0 %v8521
  %9179 = vmatprep.subr.mxu0 %v8530
  %9180 = vmatpush1.msra.mxu0 %v8529
  %9181 = vmatprep.subr.mxu0 %v8538
  %9182 = vmatpush1.msra.mxu0 %v8537
  %9183 = vmatprep.subr.mxu0 %v8546
  %9184 = vmatpush1.msra.mxu0 %v8545
  %9185 = vmatprep.subr.mxu0 %v8554
  %9186 = vmatpush1.msra.mxu0 %v8553
  %9187 = vmatprep.subr.mxu0 %v8562
  %9188 = vmatpush1.msra.mxu0 %v8561
  %9189 = vmatprep.subr.mxu0 %v8570
  %9190 = vmatpush1.msra.mxu0 %v8569
  %9191 = vmatprep.subr.mxu0 %v8578
  %9192 = vmatpush1.msra.mxu0 %v8577
  %9193 = vmatprep.subr.mxu0 %v8586
  %9194 = vmatpush1.msra.mxu0 %v8585
  %9195 = vmatprep.subr.mxu0 %v8594
  %9196 = vmatpush1.msra.mxu0 %v8593
  %9197 = vmatprep.subr.mxu0 %v8602
  %9198 = vmatpush1.msra.mxu0 %v8601
  %9199 = vmatprep.subr.mxu0 %v8610
  %9200 = vmatpush1.msra.mxu0 %v8609
  %9201 = vmatprep.subr.mxu0 %v8618
  %9202 = vmatpush1.msra.mxu0 %v8617
  %9203 = vmatprep.subr.mxu0 %v8626
  %9204 = vmatpush1.msra.mxu0 %v8625
  %9205 = vmatprep.subr.mxu0 %v8634
  %9206 = vmatpush1.msra.mxu0 %v8633
  %9207 = vmatprep.subr.mxu0 %v8642
  %9208 = vmatpush1.msra.mxu0 %v8641
  %9209 = vmatprep.subr.mxu0 %v8650
  %9210 = vmatpush1.msra.mxu0 %v8649
  %9211 = vmatprep.subr.mxu0 %v8658
  %9212 = vmatpush1.msra.mxu0 %v8657
  %9213 = vmatprep.subr.mxu0 %v8666
  %9214 = vmatpush1.msra.mxu0 %v8665
  %9215 = vmatprep.mubr.f32.mxu0 %v9008
  %9216 = vmatmul.mubr.f32.gmra.mrb[0].mxu0 %v9007
  %v9217 = vpop.f32.mrb[0].mxu0
  %v9218 = vadd.f32 0.0, %v9217
  %v9219 = vpop.f32.mrb[0].mxu0
  %v9220 = vadd.f32 0.0, %v9219
  %9221 = vdwg.mxu0
  %9222 = vmatprep.subr.mxu0 %v8420
  %9223 = vmatpush1.msra.mxu0 %v8419
  %9224 = vmatprep.subr.mxu0 %v8428
  %9225 = vmatpush1.msra.mxu0 %v8427
  %9226 = vmatprep.subr.mxu0 %v8436
  %9227 = vmatpush1.msra.mxu0 %v8435
  %9228 = vmatprep.subr.mxu0 %v8444
  %9229 = vmatpush1.msra.mxu0 %v8443
  %9230 = vmatprep.subr.mxu0 %v8452
  %9231 = vmatpush1.msra.mxu0 %v8451
  %9232 = vmatprep.subr.mxu0 %v8460
  %9233 = vmatpush1.msra.mxu0 %v8459
  %9234 = vmatprep.subr.mxu0 %v8468
  %9235 = vmatpush1.msra.mxu0 %v8467
  %9236 = vmatprep.subr.mxu0 %v8476
  %9237 = vmatpush1.msra.mxu0 %v8475
  %9238 = vmatprep.subr.mxu0 %v8484
  %9239 = vmatpush1.msra.mxu0 %v8483
  %9240 = vmatprep.subr.mxu0 %v8492
  %9241 = vmatpush1.msra.mxu0 %v8491
  %9242 = vmatprep.subr.mxu0 %v8500
  %9243 = vmatpush1.msra.mxu0 %v8499
  %9244 = vmatprep.subr.mxu0 %v8508
  %9245 = vmatpush1.msra.mxu0 %v8507
  %9246 = vmatprep.subr.mxu0 %v8516
  %9247 = vmatpush1.msra.mxu0 %v8515
  %9248 = vmatprep.subr.mxu0 %v8524
  %9249 = vmatpush1.msra.mxu0 %v8523
  %9250 = vmatprep.subr.mxu0 %v8532
  %9251 = vmatpush1.msra.mxu0 %v8531
  %9252 = vmatprep.subr.mxu0 %v8540
  %9253 = vmatpush1.msra.mxu0 %v8539
  %9254 = vmatprep.subr.mxu0 %v8548
  %9255 = vmatpush1.msra.mxu0 %v8547
  %9256 = vmatprep.subr.mxu0 %v8556
  %9257 = vmatpush1.msra.mxu0 %v8555
  %9258 = vmatprep.subr.mxu0 %v8564
  %9259 = vmatpush1.msra.mxu0 %v8563
  %9260 = vmatprep.subr.mxu0 %v8572
  %9261 = vmatpush1.msra.mxu0 %v8571
  %9262 = vmatprep.subr.mxu0 %v8580
  %9263 = vmatpush1.msra.mxu0 %v8579
  %9264 = vmatprep.subr.mxu0 %v8588
  %9265 = vmatpush1.msra.mxu0 %v8587
  %9266 = vmatprep.subr.mxu0 %v8596
  %9267 = vmatpush1.msra.mxu0 %v8595
  %9268 = vmatprep.subr.mxu0 %v8604
  %9269 = vmatpush1.msra.mxu0 %v8603
  %9270 = vmatprep.subr.mxu0 %v8612
  %9271 = vmatpush1.msra.mxu0 %v8611
  %9272 = vmatprep.subr.mxu0 %v8620
  %9273 = vmatpush1.msra.mxu0 %v8619
  %9274 = vmatprep.subr.mxu0 %v8628
  %9275 = vmatpush1.msra.mxu0 %v8627
  %9276 = vmatprep.subr.mxu0 %v8636
  %9277 = vmatpush1.msra.mxu0 %v8635
  %9278 = vmatprep.subr.mxu0 %v8644
  %9279 = vmatpush1.msra.mxu0 %v8643
  %9280 = vmatprep.subr.mxu0 %v8652
  %9281 = vmatpush1.msra.mxu0 %v8651
  %9282 = vmatprep.subr.mxu0 %v8660
  %9283 = vmatpush1.msra.mxu0 %v8659
  %9284 = vmatprep.subr.mxu0 %v8668
  %9285 = vmatpush1.msra.mxu0 %v8667
  %9286 = vmatprep.mubr.f32.mxu0 %v9008
  %9287 = vmatmul.mubr.f32.gmra.mrb[0].mxu0 %v9007
  %v9288 = vpop.f32.mrb[0].mxu0
  %v9289 = vadd.f32 0.0, %v9288
  %v9290 = vpop.f32.mrb[0].mxu0
  %v9291 = vadd.f32 0.0, %v9290
  %9292 = vdwg.mxu0
  %v9301 = vrot.slane %v9076, 6
  %v9302 = vrot.slane %v9078, 6
  %v9303 = vrot.slane %v9147, 6
  %v9304 = vrot.slane %v9149, 6
  %v9305 = vrot.slane %v9218, 6
  %v9306 = vrot.slane %v9220, 6
  %v9307 = vrot.slane %v9289, 6
  %v9308 = vrot.slane %v9291, 6
  %v9317 = vadd.f32 %v8147, %v9301
  %v9318 = vadd.f32 %v8149, %v9302
  %v9319 = vadd.f32 %v8233, %v9303
  %v9320 = vadd.f32 %v8235, %v9304
  %v9321 = vadd.f32 %v8319, %v9305
  %v9322 = vadd.f32 %v8321, %v9306
  %v9323 = vadd.f32 %v8405, %v9307
  %v9324 = vadd.f32 %v8407, %v9308
  %v9325 = vxor.u32 %v9317, 2147483648
  %v9326 = vxor.u32 %v9318, 2147483648
  %v9327 = vmul.f32 %v9325, 1.442695
  %v9328 = vpow.pop %v9327
  %v9329 = vmul.f32 %v9326, 1.442695
  %v9330 = vpow.pop %v9329
  %v9331 = vadd.f32 %v9328, 1.0
  %v9332 = vadd.f32 %v9330, 1.0
  %v9333 = vrcp.pop %v9331
  %v9334 = vmul.f32 1.0, %v9333
  %v9335 = vrcp.pop %v9332
  %v9336 = vmul.f32 1.0, %v9335
  %v9337 = vxor.u32 %v9319, 2147483648
  %v9338 = vxor.u32 %v9320, 2147483648
  %v9339 = vmul.f32 %v9337, 1.442695
  %v9340 = vpow.pop %v9339
  %v9341 = vmul.f32 %v9338, 1.442695
  %v9342 = vpow.pop %v9341
  %v9343 = vadd.f32 %v9340, 1.0
  %v9344 = vadd.f32 %v9342, 1.0
  %v9345 = vrcp.pop %v9343
  %v9346 = vmul.f32 1.0, %v9345
  %v9347 = vrcp.pop %v9344
  %v9348 = vmul.f32 1.0, %v9347
  %v9349 = vtanh.pop %v9321
  %v9350 = vtanh.pop %v9322
  %v9351 = vxor.u32 %v9323, 2147483648
  %v9352 = vxor.u32 %v9324, 2147483648
  %v9353 = vmul.f32 %v9351, 1.442695
  %v9354 = vpow.pop %v9353
  %v9355 = vmul.f32 %v9352, 1.442695
  %v9356 = vpow.pop %v9355
  %v9357 = vadd.f32 %v9354, 1.0
  %v9358 = vadd.f32 %v9356, 1.0
  %v9359 = vrcp.pop %v9357
  %v9360 = vmul.f32 1.0, %v9359
  %v9361 = vrcp.pop %v9358
  %v9362 = vmul.f32 1.0, %v9361
  %v9365 = vrot.slane %v9003, 6
  %v9366 = vrot.slane %v9004, 6
  %v9369 = vmul.f32 %v9346, %v9365
  %v9370 = vmul.f32 %v9348, %v9366
  %v9371 = vmul.f32 %v9334, %v9349
  %v9372 = vmul.f32 %v9336, %v9350
  %v9373 = vadd.f32 %v9369, %v9371
  %v9374 = vadd.f32 %v9370, %v9372
  %v9375 = vtanh.pop %v9373
  %v9376 = vtanh.pop %v9374
  %v9377 = vmul.f32 %v9360, %v9375
  %v9378 = vmul.f32 %v9362, %v9376
  %v9381 = vrot.slane %v9377, 2
  %v9382 = vrot.slane %v9378, 2
  %9385 = vmatprep.subr.mxu0 %v8414
  %9386 = vmatpush1.msra.mxu0 %v8413
  %9387 = vmatprep.subr.mxu0 %v8422
  %9388 = vmatpush1.msra.mxu0 %v8421
  %9389 = vmatprep.subr.mxu0 %v8430
  %9390 = vmatpush1.msra.mxu0 %v8429
  %9391 = vmatprep.subr.mxu0 %v8438
  %9392 = vmatpush1.msra.mxu0 %v8437
  %9393 = vmatprep.subr.mxu0 %v8446
  %9394 = vmatpush1.msra.mxu0 %v8445
  %9395 = vmatprep.subr.mxu0 %v8454
  %9396 = vmatpush1.msra.mxu0 %v8453
  %9397 = vmatprep.subr.mxu0 %v8462
  %9398 = vmatpush1.msra.mxu0 %v8461
  %9399 = vmatprep.subr.mxu0 %v8470
  %9400 = vmatpush1.msra.mxu0 %v8469
  %9401 = vmatprep.subr.mxu0 %v8478
  %9402 = vmatpush1.msra.mxu0 %v8477
  %9403 = vmatprep.subr.mxu0 %v8486
  %9404 = vmatpush1.msra.mxu0 %v8485
  %9405 = vmatprep.subr.mxu0 %v8494
  %9406 = vmatpush1.msra.mxu0 %v8493
  %9407 = vmatprep.subr.mxu0 %v8502
  %9408 = vmatpush1.msra.mxu0 %v8501
  %9409 = vmatprep.subr.mxu0 %v8510
  %9410 = vmatpush1.msra.mxu0 %v8509
  %9411 = vmatprep.subr.mxu0 %v8518
  %9412 = vmatpush1.msra.mxu0 %v8517
  %9413 = vmatprep.subr.mxu0 %v8526
  %9414 = vmatpush1.msra.mxu0 %v8525
  %9415 = vmatprep.subr.mxu0 %v8534
  %9416 = vmatpush1.msra.mxu0 %v8533
  %9417 = vmatprep.subr.mxu0 %v8542
  %9418 = vmatpush1.msra.mxu0 %v8541
  %9419 = vmatprep.subr.mxu0 %v8550
  %9420 = vmatpush1.msra.mxu0 %v8549
  %9421 = vmatprep.subr.mxu0 %v8558
  %9422 = vmatpush1.msra.mxu0 %v8557
  %9423 = vmatprep.subr.mxu0 %v8566
  %9424 = vmatpush1.msra.mxu0 %v8565
  %9425 = vmatprep.subr.mxu0 %v8574
  %9426 = vmatpush1.msra.mxu0 %v8573
  %9427 = vmatprep.subr.mxu0 %v8582
  %9428 = vmatpush1.msra.mxu0 %v8581
  %9429 = vmatprep.subr.mxu0 %v8590
  %9430 = vmatpush1.msra.mxu0 %v8589
  %9431 = vmatprep.subr.mxu0 %v8598
  %9432 = vmatpush1.msra.mxu0 %v8597
  %9433 = vmatprep.subr.mxu0 %v8606
  %9434 = vmatpush1.msra.mxu0 %v8605
  %9435 = vmatprep.subr.mxu0 %v8614
  %9436 = vmatpush1.msra.mxu0 %v8613
  %9437 = vmatprep.subr.mxu0 %v8622
  %9438 = vmatpush1.msra.mxu0 %v8621
  %9439 = vmatprep.subr.mxu0 %v8630
  %9440 = vmatpush1.msra.mxu0 %v8629
  %9441 = vmatprep.subr.mxu0 %v8638
  %9442 = vmatpush1.msra.mxu0 %v8637
  %9443 = vmatprep.subr.mxu0 %v8646
  %9444 = vmatpush1.msra.mxu0 %v8645
  %9445 = vmatprep.subr.mxu0 %v8654
  %9446 = vmatpush1.msra.mxu0 %v8653
  %9447 = vmatprep.subr.mxu0 %v8662
  %9448 = vmatpush1.msra.mxu0 %v8661
  %9449 = vmatprep.mubr.f32.mxu0 %v9382
  %9450 = vmatmul.mubr.f32.gmra.mrb[0].mxu0 %v9381
  %v9451 = vpop.f32.mrb[0].mxu0
  %v9452 = vadd.f32 0.0, %v9451
  %v9453 = vpop.f32.mrb[0].mxu0
  %v9454 = vadd.f32 0.0, %v9453
  %9455 = vdwg.mxu0
  %9456 = vmatprep.subr.mxu0 %v8416
  %9457 = vmatpush1.msra.mxu0 %v8415
  %9458 = vmatprep.subr.mxu0 %v8424
  %9459 = vmatpush1.msra.mxu0 %v8423
  %9460 = vmatprep.subr.mxu0 %v8432
  %9461 = vmatpush1.msra.mxu0 %v8431
  %9462 = vmatprep.subr.mxu0 %v8440
  %9463 = vmatpush1.msra.mxu0 %v8439
  %9464 = vmatprep.subr.mxu0 %v8448
  %9465 = vmatpush1.msra.mxu0 %v8447
  %9466 = vmatprep.subr.mxu0 %v8456
  %9467 = vmatpush1.msra.mxu0 %v8455
  %9468 = vmatprep.subr.mxu0 %v8464
  %9469 = vmatpush1.msra.mxu0 %v8463
  %9470 = vmatprep.subr.mxu0 %v8472
  %9471 = vmatpush1.msra.mxu0 %v8471
  %9472 = vmatprep.subr.mxu0 %v8480
  %9473 = vmatpush1.msra.mxu0 %v8479
  %9474 = vmatprep.subr.mxu0 %v8488
  %9475 = vmatpush1.msra.mxu0 %v8487
  %9476 = vmatprep.subr.mxu0 %v8496
  %9477 = vmatpush1.msra.mxu0 %v8495
  %9478 = vmatprep.subr.mxu0 %v8504
  %9479 = vmatpush1.msra.mxu0 %v8503
  %9480 = vmatprep.subr.mxu0 %v8512
  %9481 = vmatpush1.msra.mxu0 %v8511
  %9482 = vmatprep.subr.mxu0 %v8520
  %9483 = vmatpush1.msra.mxu0 %v8519
  %9484 = vmatprep.subr.mxu0 %v8528
  %9485 = vmatpush1.msra.mxu0 %v8527
  %9486 = vmatprep.subr.mxu0 %v8536
  %9487 = vmatpush1.msra.mxu0 %v8535
  %9488 = vmatprep.subr.mxu0 %v8544
  %9489 = vmatpush1.msra.mxu0 %v8543
  %9490 = vmatprep.subr.mxu0 %v8552
  %9491 = vmatpush1.msra.mxu0 %v8551
  %9492 = vmatprep.subr.mxu0 %v8560
  %9493 = vmatpush1.msra.mxu0 %v8559
  %9494 = vmatprep.subr.mxu0 %v8568
  %9495 = vmatpush1.msra.mxu0 %v8567
  %9496 = vmatprep.subr.mxu0 %v8576
  %9497 = vmatpush1.msra.mxu0 %v8575
  %9498 = vmatprep.subr.mxu0 %v8584
  %9499 = vmatpush1.msra.mxu0 %v8583
  %9500 = vmatprep.subr.mxu0 %v8592
  %9501 = vmatpush1.msra.mxu0 %v8591
  %9502 = vmatprep.subr.mxu0 %v8600
  %9503 = vmatpush1.msra.mxu0 %v8599
  %9504 = vmatprep.subr.mxu0 %v8608
  %9505 = vmatpush1.msra.mxu0 %v8607
  %9506 = vmatprep.subr.mxu0 %v8616
  %9507 = vmatpush1.msra.mxu0 %v8615
  %9508 = vmatprep.subr.mxu0 %v8624
  %9509 = vmatpush1.msra.mxu0 %v8623
  %9510 = vmatprep.subr.mxu0 %v8632
  %9511 = vmatpush1.msra.mxu0 %v8631
  %9512 = vmatprep.subr.mxu0 %v8640
  %9513 = vmatpush1.msra.mxu0 %v8639
  %9514 = vmatprep.subr.mxu0 %v8648
  %9515 = vmatpush1.msra.mxu0 %v8647
  %9516 = vmatprep.subr.mxu0 %v8656
  %9517 = vmatpush1.msra.mxu0 %v8655
  %9518 = vmatprep.subr.mxu0 %v8664
  %9519 = vmatpush1.msra.mxu0 %v8663
  %9520 = vmatprep.mubr.f32.mxu0 %v9382
  %9521 = vmatmul.mubr.f32.gmra.mrb[0].mxu0 %v9381
  %v9522 = vpop.f32.mrb[0].mxu0
  %v9523 = vadd.f32 0.0, %v9522
  %v9524 = vpop.f32.mrb[0].mxu0
  %v9525 = vadd.f32 0.0, %v9524
  %9526 = vdwg.mxu0
  %9527 = vmatprep.subr.mxu0 %v8418
  %9528 = vmatpush1.msra.mxu0 %v8417
  %9529 = vmatprep.subr.mxu0 %v8426
  %9530 = vmatpush1.msra.mxu0 %v8425
  %9531 = vmatprep.subr.mxu0 %v8434
  %9532 = vmatpush1.msra.mxu0 %v8433
  %9533 = vmatprep.subr.mxu0 %v8442
  %9534 = vmatpush1.msra.mxu0 %v8441
  %9535 = vmatprep.subr.mxu0 %v8450
  %9536 = vmatpush1.msra.mxu0 %v8449
  %9537 = vmatprep.subr.mxu0 %v8458
  %9538 = vmatpush1.msra.mxu0 %v8457
  %9539 = vmatprep.subr.mxu0 %v8466
  %9540 = vmatpush1.msra.mxu0 %v8465
  %9541 = vmatprep.subr.mxu0 %v8474
  %9542 = vmatpush1.msra.mxu0 %v8473
  %9543 = vmatprep.subr.mxu0 %v8482
  %9544 = vmatpush1.msra.mxu0 %v8481
  %9545 = vmatprep.subr.mxu0 %v8490
  %9546 = vmatpush1.msra.mxu0 %v8489
  %9547 = vmatprep.subr.mxu0 %v8498
  %9548 = vmatpush1.msra.mxu0 %v8497
  %9549 = vmatprep.subr.mxu0 %v8506
  %9550 = vmatpush1.msra.mxu0 %v8505
  %9551 = vmatprep.subr.mxu0 %v8514
  %9552 = vmatpush1.msra.mxu0 %v8513
  %9553 = vmatprep.subr.mxu0 %v8522
  %9554 = vmatpush1.msra.mxu0 %v8521
  %9555 = vmatprep.subr.mxu0 %v8530
  %9556 = vmatpush1.msra.mxu0 %v8529
  %9557 = vmatprep.subr.mxu0 %v8538
  %9558 = vmatpush1.msra.mxu0 %v8537
  %9559 = vmatprep.subr.mxu0 %v8546
  %9560 = vmatpush1.msra.mxu0 %v8545
  %9561 = vmatprep.subr.mxu0 %v8554
  %9562 = vmatpush1.msra.mxu0 %v8553
  %9563 = vmatprep.subr.mxu0 %v8562
  %9564 = vmatpush1.msra.mxu0 %v8561
  %9565 = vmatprep.subr.mxu0 %v8570
  %9566 = vmatpush1.msra.mxu0 %v8569
  %9567 = vmatprep.subr.mxu0 %v8578
  %9568 = vmatpush1.msra.mxu0 %v8577
  %9569 = vmatprep.subr.mxu0 %v8586
  %9570 = vmatpush1.msra.mxu0 %v8585
  %9571 = vmatprep.subr.mxu0 %v8594
  %9572 = vmatpush1.msra.mxu0 %v8593
  %9573 = vmatprep.subr.mxu0 %v8602
  %9574 = vmatpush1.msra.mxu0 %v8601
  %9575 = vmatprep.subr.mxu0 %v8610
  %9576 = vmatpush1.msra.mxu0 %v8609
  %9577 = vmatprep.subr.mxu0 %v8618
  %9578 = vmatpush1.msra.mxu0 %v8617
  %9579 = vmatprep.subr.mxu0 %v8626
  %9580 = vmatpush1.msra.mxu0 %v8625
  %9581 = vmatprep.subr.mxu0 %v8634
  %9582 = vmatpush1.msra.mxu0 %v8633
  %9583 = vmatprep.subr.mxu0 %v8642
  %9584 = vmatpush1.msra.mxu0 %v8641
  %9585 = vmatprep.subr.mxu0 %v8650
  %9586 = vmatpush1.msra.mxu0 %v8649
  %9587 = vmatprep.subr.mxu0 %v8658
  %9588 = vmatpush1.msra.mxu0 %v8657
  %9589 = vmatprep.subr.mxu0 %v8666
  %9590 = vmatpush1.msra.mxu0 %v8665
  %9591 = vmatprep.mubr.f32.mxu0 %v9382
  %9592 = vmatmul.mubr.f32.gmra.mrb[0].mxu0 %v9381
  %v9593 = vpop.f32.mrb[0].mxu0
  %v9594 = vadd.f32 0.0, %v9593
  %v9595 = vpop.f32.mrb[0].mxu0
  %v9596 = vadd.f32 0.0, %v9595
  %9597 = vdwg.mxu0
  %9598 = vmatprep.subr.mxu0 %v8420
  %9599 = vmatpush1.msra.mxu0 %v8419
  %9600 = vmatprep.subr.mxu0 %v8428
  %9601 = vmatpush1.msra.mxu0 %v8427
  %9602 = vmatprep.subr.mxu0 %v8436
  %9603 = vmatpush1.msra.mxu0 %v8435
  %9604 = vmatprep.subr.mxu0 %v8444
  %9605 = vmatpush1.msra.mxu0 %v8443
  %9606 = vmatprep.subr.mxu0 %v8452
  %9607 = vmatpush1.msra.mxu0 %v8451
  %9608 = vmatprep.subr.mxu0 %v8460
  %9609 = vmatpush1.msra.mxu0 %v8459
  %9610 = vmatprep.subr.mxu0 %v8468
  %9611 = vmatpush1.msra.mxu0 %v8467
  %9612 = vmatprep.subr.mxu0 %v8476
  %9613 = vmatpush1.msra.mxu0 %v8475
  %9614 = vmatprep.subr.mxu0 %v8484
  %9615 = vmatpush1.msra.mxu0 %v8483
  %9616 = vmatprep.subr.mxu0 %v8492
  %9617 = vmatpush1.msra.mxu0 %v8491
  %9618 = vmatprep.subr.mxu0 %v8500
  %9619 = vmatpush1.msra.mxu0 %v8499
  %9620 = vmatprep.subr.mxu0 %v8508
  %9621 = vmatpush1.msra.mxu0 %v8507
  %9622 = vmatprep.subr.mxu0 %v8516
  %9623 = vmatpush1.msra.mxu0 %v8515
  %9624 = vmatprep.subr.mxu0 %v8524
  %9625 = vmatpush1.msra.mxu0 %v8523
  %9626 = vmatprep.subr.mxu0 %v8532
  %9627 = vmatpush1.msra.mxu0 %v8531
  %9628 = vmatprep.subr.mxu0 %v8540
  %9629 = vmatpush1.msra.mxu0 %v8539
  %9630 = vmatprep.subr.mxu0 %v8548
  %9631 = vmatpush1.msra.mxu0 %v8547
  %9632 = vmatprep.subr.mxu0 %v8556
  %9633 = vmatpush1.msra.mxu0 %v8555
  %9634 = vmatprep.subr.mxu0 %v8564
  %9635 = vmatpush1.msra.mxu0 %v8563
  %9636 = vmatprep.subr.mxu0 %v8572
  %9637 = vmatpush1.msra.mxu0 %v8571
  %9638 = vmatprep.subr.mxu0 %v8580
  %9639 = vmatpush1.msra.mxu0 %v8579
  %9640 = vmatprep.subr.mxu0 %v8588
  %9641 = vmatpush1.msra.mxu0 %v8587
  %9642 = vmatprep.subr.mxu0 %v8596
  %9643 = vmatpush1.msra.mxu0 %v8595
  %9644 = vmatprep.subr.mxu0 %v8604
  %9645 = vmatpush1.msra.mxu0 %v8603
  %9646 = vmatprep.subr.mxu0 %v8612
  %9647 = vmatpush1.msra.mxu0 %v8611
  %9648 = vmatprep.subr.mxu0 %v8620
  %9649 = vmatpush1.msra.mxu0 %v8619
  %9650 = vmatprep.subr.mxu0 %v8628
  %9651 = vmatpush1.msra.mxu0 %v8627
  %9652 = vmatprep.subr.mxu0 %v8636
  %9653 = vmatpush1.msra.mxu0 %v8635
  %9654 = vmatprep.subr.mxu0 %v8644
  %9655 = vmatpush1.msra.mxu0 %v8643
  %9656 = vmatprep.subr.mxu0 %v8652
  %9657 = vmatpush1.msra.mxu0 %v8651
  %9658 = vmatprep.subr.mxu0 %v8660
  %9659 = vmatpush1.msra.mxu0 %v8659
  %9660 = vmatprep.subr.mxu0 %v8668
  %9661 = vmatpush1.msra.mxu0 %v8667
  %9662 = vmatprep.mubr.f32.mxu0 %v9382
  %9663 = vmatmul.mubr.f32.gmra.mrb[0].mxu0 %v9381
  %v9664 = vpop.f32.mrb[0].mxu0
  %v9665 = vadd.f32 0.0, %v9664
  %v9666 = vpop.f32.mrb[0].mxu0
  %v9667 = vadd.f32 0.0, %v9666
  %9668 = vdwg.mxu0
  %v9677 = vrot.slane %v9452, 4
  %v9678 = vrot.slane %v9454, 4
  %v9679 = vrot.slane %v9523, 4
  %v9680 = vrot.slane %v9525, 4
  %v9681 = vrot.slane %v9594, 4
  %v9682 = vrot.slane %v9596, 4
  %v9683 = vrot.slane %v9665, 4
  %v9684 = vrot.slane %v9667, 4
  %v9693 = vadd.f32 %v8147, %v9677
  %v9694 = vadd.f32 %v8149, %v9678
  %v9695 = vadd.f32 %v8233, %v9679
  %v9696 = vadd.f32 %v8235, %v9680
  %v9697 = vadd.f32 %v8319, %v9681
  %v9698 = vadd.f32 %v8321, %v9682
  %v9699 = vadd.f32 %v8405, %v9683
  %v9700 = vadd.f32 %v8407, %v9684
  %v9701 = vxor.u32 %v9693, 2147483648
  %v9702 = vxor.u32 %v9694, 2147483648
  %v9703 = vmul.f32 %v9701, 1.442695
  %v9704 = vpow.pop %v9703
  %v9705 = vmul.f32 %v9702, 1.442695
  %v9706 = vpow.pop %v9705
  %v9707 = vadd.f32 %v9704, 1.0
  %v9708 = vadd.f32 %v9706, 1.0
  %v9709 = vrcp.pop %v9707
  %v9710 = vmul.f32 1.0, %v9709
  %v9711 = vrcp.pop %v9708
  %v9712 = vmul.f32 1.0, %v9711
  %v9713 = vxor.u32 %v9695, 2147483648
  %v9714 = vxor.u32 %v9696, 2147483648
  %v9715 = vmul.f32 %v9713, 1.442695
  %v9716 = vpow.pop %v9715
  %v9717 = vmul.f32 %v9714, 1.442695
  %v9718 = vpow.pop %v9717
  %v9719 = vadd.f32 %v9716, 1.0
  %v9720 = vadd.f32 %v9718, 1.0
  %v9721 = vrcp.pop %v9719
  %v9722 = vmul.f32 1.0, %v9721
  %v9723 = vrcp.pop %v9720
  %v9724 = vmul.f32 1.0, %v9723
  %v9725 = vtanh.pop %v9697
  %v9726 = vtanh.pop %v9698
  %v9727 = vxor.u32 %v9699, 2147483648
  %v9728 = vxor.u32 %v9700, 2147483648
  %v9729 = vmul.f32 %v9727, 1.442695
  %v9730 = vpow.pop %v9729
  %v9731 = vmul.f32 %v9728, 1.442695
  %v9732 = vpow.pop %v9731
  %v9733 = vadd.f32 %v9730, 1.0
  %v9734 = vadd.f32 %v9732, 1.0
  %v9735 = vrcp.pop %v9733
  %v9736 = vmul.f32 1.0, %v9735
  %v9737 = vrcp.pop %v9734
  %v9738 = vmul.f32 1.0, %v9737
  %v9741 = vrot.slane %v9373, 6
  %v9742 = vrot.slane %v9374, 6
  %v9745 = vmul.f32 %v9722, %v9741
  %v9746 = vmul.f32 %v9724, %v9742
  %v9747 = vmul.f32 %v9710, %v9725
  %v9748 = vmul.f32 %v9712, %v9726
  %v9749 = vadd.f32 %v9745, %v9747
  %v9750 = vadd.f32 %v9746, %v9748
  %v9751 = vtanh.pop %v9749
  %v9752 = vtanh.pop %v9750
  %v9753 = vmul.f32 %v9736, %v9751
  %v9754 = vmul.f32 %v9738, %v9752
  %v9757 = vrot.slane %v9753, 4
  %v9758 = vrot.slane %v9754, 4
  %9761 = vmatprep.subr.mxu0 %v8414
  %9762 = vmatpush1.msra.mxu0 %v8413
  %9763 = vmatprep.subr.mxu0 %v8422
  %9764 = vmatpush1.msra.mxu0 %v8421
  %9765 = vmatprep.subr.mxu0 %v8430
  %9766 = vmatpush1.msra.mxu0 %v8429
  %9767 = vmatprep.subr.mxu0 %v8438
  %9768 = vmatpush1.msra.mxu0 %v8437
  %9769 = vmatprep.subr.mxu0 %v8446
  %9770 = vmatpush1.msra.mxu0 %v8445
  %9771 = vmatprep.subr.mxu0 %v8454
  %9772 = vmatpush1.msra.mxu0 %v8453
  %9773 = vmatprep.subr.mxu0 %v8462
  %9774 = vmatpush1.msra.mxu0 %v8461
  %9775 = vmatprep.subr.mxu0 %v8470
  %9776 = vmatpush1.msra.mxu0 %v8469
  %9777 = vmatprep.subr.mxu0 %v8478
  %9778 = vmatpush1.msra.mxu0 %v8477
  %9779 = vmatprep.subr.mxu0 %v8486
  %9780 = vmatpush1.msra.mxu0 %v8485
  %9781 = vmatprep.subr.mxu0 %v8494
  %9782 = vmatpush1.msra.mxu0 %v8493
  %9783 = vmatprep.subr.mxu0 %v8502
  %9784 = vmatpush1.msra.mxu0 %v8501
  %9785 = vmatprep.subr.mxu0 %v8510
  %9786 = vmatpush1.msra.mxu0 %v8509
  %9787 = vmatprep.subr.mxu0 %v8518
  %9788 = vmatpush1.msra.mxu0 %v8517
  %9789 = vmatprep.subr.mxu0 %v8526
  %9790 = vmatpush1.msra.mxu0 %v8525
  %9791 = vmatprep.subr.mxu0 %v8534
  %9792 = vmatpush1.msra.mxu0 %v8533
  %9793 = vmatprep.subr.mxu0 %v8542
  %9794 = vmatpush1.msra.mxu0 %v8541
  %9795 = vmatprep.subr.mxu0 %v8550
  %9796 = vmatpush1.msra.mxu0 %v8549
  %9797 = vmatprep.subr.mxu0 %v8558
  %9798 = vmatpush1.msra.mxu0 %v8557
  %9799 = vmatprep.subr.mxu0 %v8566
  %9800 = vmatpush1.msra.mxu0 %v8565
  %9801 = vmatprep.subr.mxu0 %v8574
  %9802 = vmatpush1.msra.mxu0 %v8573
  %9803 = vmatprep.subr.mxu0 %v8582
  %9804 = vmatpush1.msra.mxu0 %v8581
  %9805 = vmatprep.subr.mxu0 %v8590
  %9806 = vmatpush1.msra.mxu0 %v8589
  %9807 = vmatprep.subr.mxu0 %v8598
  %9808 = vmatpush1.msra.mxu0 %v8597
  %9809 = vmatprep.subr.mxu0 %v8606
  %9810 = vmatpush1.msra.mxu0 %v8605
  %9811 = vmatprep.subr.mxu0 %v8614
  %9812 = vmatpush1.msra.mxu0 %v8613
  %9813 = vmatprep.subr.mxu0 %v8622
  %9814 = vmatpush1.msra.mxu0 %v8621
  %9815 = vmatprep.subr.mxu0 %v8630
  %9816 = vmatpush1.msra.mxu0 %v8629
  %9817 = vmatprep.subr.mxu0 %v8638
  %9818 = vmatpush1.msra.mxu0 %v8637
  %9819 = vmatprep.subr.mxu0 %v8646
  %9820 = vmatpush1.msra.mxu0 %v8645
  %9821 = vmatprep.subr.mxu0 %v8654
  %9822 = vmatpush1.msra.mxu0 %v8653
  %9823 = vmatprep.subr.mxu0 %v8662
  %9824 = vmatpush1.msra.mxu0 %v8661
  %9825 = vmatprep.mubr.f32.mxu0 %v9758
  %9826 = vmatmul.mubr.f32.gmra.mrb[0].mxu0 %v9757
  %v9827 = vpop.f32.mrb[0].mxu0
  %v9828 = vadd.f32 0.0, %v9827
  %v9829 = vpop.f32.mrb[0].mxu0
  %v9830 = vadd.f32 0.0, %v9829
  %9831 = vdwg.mxu0
  %9832 = vmatprep.subr.mxu0 %v8416
  %9833 = vmatpush1.msra.mxu0 %v8415
  %9834 = vmatprep.subr.mxu0 %v8424
  %9835 = vmatpush1.msra.mxu0 %v8423
  %9836 = vmatprep.subr.mxu0 %v8432
  %9837 = vmatpush1.msra.mxu0 %v8431
  %9838 = vmatprep.subr.mxu0 %v8440
  %9839 = vmatpush1.msra.mxu0 %v8439
  %9840 = vmatprep.subr.mxu0 %v8448
  %9841 = vmatpush1.msra.mxu0 %v8447
  %9842 = vmatprep.subr.mxu0 %v8456
  %9843 = vmatpush1.msra.mxu0 %v8455
  %9844 = vmatprep.subr.mxu0 %v8464
  %9845 = vmatpush1.msra.mxu0 %v8463
  %9846 = vmatprep.subr.mxu0 %v8472
  %9847 = vmatpush1.msra.mxu0 %v8471
  %9848 = vmatprep.subr.mxu0 %v8480
  %9849 = vmatpush1.msra.mxu0 %v8479
  %9850 = vmatprep.subr.mxu0 %v8488
  %9851 = vmatpush1.msra.mxu0 %v8487
  %9852 = vmatprep.subr.mxu0 %v8496
  %9853 = vmatpush1.msra.mxu0 %v8495
  %9854 = vmatprep.subr.mxu0 %v8504
  %9855 = vmatpush1.msra.mxu0 %v8503
  %9856 = vmatprep.subr.mxu0 %v8512
  %9857 = vmatpush1.msra.mxu0 %v8511
  %9858 = vmatprep.subr.mxu0 %v8520
  %9859 = vmatpush1.msra.mxu0 %v8519
  %9860 = vmatprep.subr.mxu0 %v8528
  %9861 = vmatpush1.msra.mxu0 %v8527
  %9862 = vmatprep.subr.mxu0 %v8536
  %9863 = vmatpush1.msra.mxu0 %v8535
  %9864 = vmatprep.subr.mxu0 %v8544
  %9865 = vmatpush1.msra.mxu0 %v8543
  %9866 = vmatprep.subr.mxu0 %v8552
  %9867 = vmatpush1.msra.mxu0 %v8551
  %9868 = vmatprep.subr.mxu0 %v8560
  %9869 = vmatpush1.msra.mxu0 %v8559
  %9870 = vmatprep.subr.mxu0 %v8568
  %9871 = vmatpush1.msra.mxu0 %v8567
  %9872 = vmatprep.subr.mxu0 %v8576
  %9873 = vmatpush1.msra.mxu0 %v8575
  %9874 = vmatprep.subr.mxu0 %v8584
  %9875 = vmatpush1.msra.mxu0 %v8583
  %9876 = vmatprep.subr.mxu0 %v8592
  %9877 = vmatpush1.msra.mxu0 %v8591
  %9878 = vmatprep.subr.mxu0 %v8600
  %9879 = vmatpush1.msra.mxu0 %v8599
  %9880 = vmatprep.subr.mxu0 %v8608
  %9881 = vmatpush1.msra.mxu0 %v8607
  %9882 = vmatprep.subr.mxu0 %v8616
  %9883 = vmatpush1.msra.mxu0 %v8615
  %9884 = vmatprep.subr.mxu0 %v8624
  %9885 = vmatpush1.msra.mxu0 %v8623
  %9886 = vmatprep.subr.mxu0 %v8632
  %9887 = vmatpush1.msra.mxu0 %v8631
  %9888 = vmatprep.subr.mxu0 %v8640
  %9889 = vmatpush1.msra.mxu0 %v8639
  %9890 = vmatprep.subr.mxu0 %v8648
  %9891 = vmatpush1.msra.mxu0 %v8647
  %9892 = vmatprep.subr.mxu0 %v8656
  %9893 = vmatpush1.msra.mxu0 %v8655
  %9894 = vmatprep.subr.mxu0 %v8664
  %9895 = vmatpush1.msra.mxu0 %v8663
  %9896 = vmatprep.mubr.f32.mxu0 %v9758
  %9897 = vmatmul.mubr.f32.gmra.mrb[0].mxu0 %v9757
  %v9898 = vpop.f32.mrb[0].mxu0
  %v9899 = vadd.f32 0.0, %v9898
  %v9900 = vpop.f32.mrb[0].mxu0
  %v9901 = vadd.f32 0.0, %v9900
  %9902 = vdwg.mxu0
  %9903 = vmatprep.subr.mxu0 %v8418
  %9904 = vmatpush1.msra.mxu0 %v8417
  %9905 = vmatprep.subr.mxu0 %v8426
  %9906 = vmatpush1.msra.mxu0 %v8425
  %9907 = vmatprep.subr.mxu0 %v8434
  %9908 = vmatpush1.msra.mxu0 %v8433
  %9909 = vmatprep.subr.mxu0 %v8442
  %9910 = vmatpush1.msra.mxu0 %v8441
  %9911 = vmatprep.subr.mxu0 %v8450
  %9912 = vmatpush1.msra.mxu0 %v8449
  %9913 = vmatprep.subr.mxu0 %v8458
  %9914 = vmatpush1.msra.mxu0 %v8457
  %9915 = vmatprep.subr.mxu0 %v8466
  %9916 = vmatpush1.msra.mxu0 %v8465
  %9917 = vmatprep.subr.mxu0 %v8474
  %9918 = vmatpush1.msra.mxu0 %v8473
  %9919 = vmatprep.subr.mxu0 %v8482
  %9920 = vmatpush1.msra.mxu0 %v8481
  %9921 = vmatprep.subr.mxu0 %v8490
  %9922 = vmatpush1.msra.mxu0 %v8489
  %9923 = vmatprep.subr.mxu0 %v8498
  %9924 = vmatpush1.msra.mxu0 %v8497
  %9925 = vmatprep.subr.mxu0 %v8506
  %9926 = vmatpush1.msra.mxu0 %v8505
  %9927 = vmatprep.subr.mxu0 %v8514
  %9928 = vmatpush1.msra.mxu0 %v8513
  %9929 = vmatprep.subr.mxu0 %v8522
  %9930 = vmatpush1.msra.mxu0 %v8521
  %9931 = vmatprep.subr.mxu0 %v8530
  %9932 = vmatpush1.msra.mxu0 %v8529
  %9933 = vmatprep.subr.mxu0 %v8538
  %9934 = vmatpush1.msra.mxu0 %v8537
  %9935 = vmatprep.subr.mxu0 %v8546
  %9936 = vmatpush1.msra.mxu0 %v8545
  %9937 = vmatprep.subr.mxu0 %v8554
  %9938 = vmatpush1.msra.mxu0 %v8553
  %9939 = vmatprep.subr.mxu0 %v8562
  %9940 = vmatpush1.msra.mxu0 %v8561
  %9941 = vmatprep.subr.mxu0 %v8570
  %9942 = vmatpush1.msra.mxu0 %v8569
  %9943 = vmatprep.subr.mxu0 %v8578
  %9944 = vmatpush1.msra.mxu0 %v8577
  %9945 = vmatprep.subr.mxu0 %v8586
  %9946 = vmatpush1.msra.mxu0 %v8585
  %9947 = vmatprep.subr.mxu0 %v8594
  %9948 = vmatpush1.msra.mxu0 %v8593
  %9949 = vmatprep.subr.mxu0 %v8602
  %9950 = vmatpush1.msra.mxu0 %v8601
  %9951 = vmatprep.subr.mxu0 %v8610
  %9952 = vmatpush1.msra.mxu0 %v8609
  %9953 = vmatprep.subr.mxu0 %v8618
  %9954 = vmatpush1.msra.mxu0 %v8617
  %9955 = vmatprep.subr.mxu0 %v8626
  %9956 = vmatpush1.msra.mxu0 %v8625
  %9957 = vmatprep.subr.mxu0 %v8634
  %9958 = vmatpush1.msra.mxu0 %v8633
  %9959 = vmatprep.subr.mxu0 %v8642
  %9960 = vmatpush1.msra.mxu0 %v8641
  %9961 = vmatprep.subr.mxu0 %v8650
  %9962 = vmatpush1.msra.mxu0 %v8649
  %9963 = vmatprep.subr.mxu0 %v8658
  %9964 = vmatpush1.msra.mxu0 %v8657
  %9965 = vmatprep.subr.mxu0 %v8666
  %9966 = vmatpush1.msra.mxu0 %v8665
  %9967 = vmatprep.mubr.f32.mxu0 %v9758
  %9968 = vmatmul.mubr.f32.gmra.mrb[0].mxu0 %v9757
  %v9969 = vpop.f32.mrb[0].mxu0
  %v9970 = vadd.f32 0.0, %v9969
  %v9971 = vpop.f32.mrb[0].mxu0
  %v9972 = vadd.f32 0.0, %v9971
  %9973 = vdwg.mxu0
  %9974 = vmatprep.subr.mxu0 %v8420
  %9975 = vmatpush1.msra.mxu0 %v8419
  %9976 = vmatprep.subr.mxu0 %v8428
  %9977 = vmatpush1.msra.mxu0 %v8427
  %9978 = vmatprep.subr.mxu0 %v8436
  %9979 = vmatpush1.msra.mxu0 %v8435
  %9980 = vmatprep.subr.mxu0 %v8444
  %9981 = vmatpush1.msra.mxu0 %v8443
  %9982 = vmatprep.subr.mxu0 %v8452
  %9983 = vmatpush1.msra.mxu0 %v8451
  %9984 = vmatprep.subr.mxu0 %v8460
  %9985 = vmatpush1.msra.mxu0 %v8459
  %9986 = vmatprep.subr.mxu0 %v8468
  %9987 = vmatpush1.msra.mxu0 %v8467
  %9988 = vmatprep.subr.mxu0 %v8476
  %9989 = vmatpush1.msra.mxu0 %v8475
  %9990 = vmatprep.subr.mxu0 %v8484
  %9991 = vmatpush1.msra.mxu0 %v8483
  %9992 = vmatprep.subr.mxu0 %v8492
  %9993 = vmatpush1.msra.mxu0 %v8491
  %9994 = vmatprep.subr.mxu0 %v8500
  %9995 = vmatpush1.msra.mxu0 %v8499
  %9996 = vmatprep.subr.mxu0 %v8508
  %9997 = vmatpush1.msra.mxu0 %v8507
  %9998 = vmatprep.subr.mxu0 %v8516
  %9999 = vmatpush1.msra.mxu0 %v8515
  %10000 = vmatprep.subr.mxu0 %v8524
  %10001 = vmatpush1.msra.mxu0 %v8523
  %10002 = vmatprep.subr.mxu0 %v8532
  %10003 = vmatpush1.msra.mxu0 %v8531
  %10004 = vmatprep.subr.mxu0 %v8540
  %10005 = vmatpush1.msra.mxu0 %v8539
  %10006 = vmatprep.subr.mxu0 %v8548
  %10007 = vmatpush1.msra.mxu0 %v8547
  %10008 = vmatprep.subr.mxu0 %v8556
  %10009 = vmatpush1.msra.mxu0 %v8555
  %10010 = vmatprep.subr.mxu0 %v8564
  %10011 = vmatpush1.msra.mxu0 %v8563
  %10012 = vmatprep.subr.mxu0 %v8572
  %10013 = vmatpush1.msra.mxu0 %v8571
  %10014 = vmatprep.subr.mxu0 %v8580
  %10015 = vmatpush1.msra.mxu0 %v8579
  %10016 = vmatprep.subr.mxu0 %v8588
  %10017 = vmatpush1.msra.mxu0 %v8587
  %10018 = vmatprep.subr.mxu0 %v8596
  %10019 = vmatpush1.msra.mxu0 %v8595
  %10020 = vmatprep.subr.mxu0 %v8604
  %10021 = vmatpush1.msra.mxu0 %v8603
  %10022 = vmatprep.subr.mxu0 %v8612
  %10023 = vmatpush1.msra.mxu0 %v8611
  %10024 = vmatprep.subr.mxu0 %v8620
  %10025 = vmatpush1.msra.mxu0 %v8619
  %10026 = vmatprep.subr.mxu0 %v8628
  %10027 = vmatpush1.msra.mxu0 %v8627
  %10028 = vmatprep.subr.mxu0 %v8636
  %10029 = vmatpush1.msra.mxu0 %v8635
  %10030 = vmatprep.subr.mxu0 %v8644
  %10031 = vmatpush1.msra.mxu0 %v8643
  %10032 = vmatprep.subr.mxu0 %v8652
  %10033 = vmatpush1.msra.mxu0 %v8651
  %10034 = vmatprep.subr.mxu0 %v8660
  %10035 = vmatpush1.msra.mxu0 %v8659
  %10036 = vmatprep.subr.mxu0 %v8668
  %10037 = vmatpush1.msra.mxu0 %v8667
  %10038 = vmatprep.mubr.f32.mxu0 %v9758
  %10039 = vmatmul.mubr.f32.gmra.mrb[0].mxu0 %v9757
  %v10040 = vpop.f32.mrb[0].mxu0
  %v10041 = vadd.f32 0.0, %v10040
  %v10042 = vpop.f32.mrb[0].mxu0
  %v10043 = vadd.f32 0.0, %v10042
  %10044 = vdwg.mxu0
  %v10053 = vrot.slane %v9828, 2
  %v10054 = vrot.slane %v9830, 2
  %v10055 = vrot.slane %v9899, 2
  %v10056 = vrot.slane %v9901, 2
  %v10057 = vrot.slane %v9970, 2
  %v10058 = vrot.slane %v9972, 2
  %v10059 = vrot.slane %v10041, 2
  %v10060 = vrot.slane %v10043, 2
  %v10069 = vadd.f32 %v8147, %v10053
  %v10070 = vadd.f32 %v8149, %v10054
  %v10071 = vadd.f32 %v8233, %v10055
  %v10072 = vadd.f32 %v8235, %v10056
  %v10073 = vadd.f32 %v8319, %v10057
  %v10074 = vadd.f32 %v8321, %v10058
  %v10075 = vadd.f32 %v8405, %v10059
  %v10076 = vadd.f32 %v8407, %v10060
  %v10077 = vxor.u32 %v10069, 2147483648
  %v10078 = vxor.u32 %v10070, 2147483648
  %v10079 = vmul.f32 %v10077, 1.442695
  %v10080 = vpow.pop %v10079
  %v10081 = vmul.f32 %v10078, 1.442695
  %v10082 = vpow.pop %v10081
  %v10083 = vadd.f32 %v10080, 1.0
  %v10084 = vadd.f32 %v10082, 1.0
  %v10085 = vrcp.pop %v10083
  %v10086 = vmul.f32 1.0, %v10085
  %v10087 = vrcp.pop %v10084
  %v10088 = vmul.f32 1.0, %v10087
  %v10089 = vxor.u32 %v10071, 2147483648
  %v10090 = vxor.u32 %v10072, 2147483648
  %v10091 = vmul.f32 %v10089, 1.442695
  %v10092 = vpow.pop %v10091
  %v10093 = vmul.f32 %v10090, 1.442695
  %v10094 = vpow.pop %v10093
  %v10095 = vadd.f32 %v10092, 1.0
  %v10096 = vadd.f32 %v10094, 1.0
  %v10097 = vrcp.pop %v10095
  %v10098 = vmul.f32 1.0, %v10097
  %v10099 = vrcp.pop %v10096
  %v10100 = vmul.f32 1.0, %v10099
  %v10101 = vtanh.pop %v10073
  %v10102 = vtanh.pop %v10074
  %v10103 = vxor.u32 %v10075, 2147483648
  %v10104 = vxor.u32 %v10076, 2147483648
  %v10105 = vmul.f32 %v10103, 1.442695
  %v10106 = vpow.pop %v10105
  %v10107 = vmul.f32 %v10104, 1.442695
  %v10108 = vpow.pop %v10107
  %v10109 = vadd.f32 %v10106, 1.0
  %v10110 = vadd.f32 %v10108, 1.0
  %v10111 = vrcp.pop %v10109
  %v10112 = vmul.f32 1.0, %v10111
  %v10113 = vrcp.pop %v10110
  %v10114 = vmul.f32 1.0, %v10113
  %v10117 = vrot.slane %v9749, 6
  %v10118 = vrot.slane %v9750, 6
  %v10121 = vmul.f32 %v10098, %v10117
  %v10122 = vmul.f32 %v10100, %v10118
  %v10123 = vmul.f32 %v10086, %v10101
  %v10124 = vmul.f32 %v10088, %v10102
  %v10125 = vadd.f32 %v10121, %v10123
  %v10126 = vadd.f32 %v10122, %v10124
  %v10127 = vtanh.pop %v10125
  %v10128 = vtanh.pop %v10126
  %v10129 = vmul.f32 %v10112, %v10127
  %v10130 = vmul.f32 %v10114, %v10128
  %v10133 = vrot.slane %v10129, 6
  %v10134 = vrot.slane %v10130, 6
  %10137 = vmatprep.subr.mxu0 %v8414
  %10138 = vmatpush1.msra.mxu0 %v8413
  %10139 = vmatprep.subr.mxu0 %v8422
  %10140 = vmatpush1.msra.mxu0 %v8421
  %10141 = vmatprep.subr.mxu0 %v8430
  %10142 = vmatpush1.msra.mxu0 %v8429
  %10143 = vmatprep.subr.mxu0 %v8438
  %10144 = vmatpush1.msra.mxu0 %v8437
  %10145 = vmatprep.subr.mxu0 %v8446
  %10146 = vmatpush1.msra.mxu0 %v8445
  %10147 = vmatprep.subr.mxu0 %v8454
  %10148 = vmatpush1.msra.mxu0 %v8453
  %10149 = vmatprep.subr.mxu0 %v8462
  %10150 = vmatpush1.msra.mxu0 %v8461
  %10151 = vmatprep.subr.mxu0 %v8470
  %10152 = vmatpush1.msra.mxu0 %v8469
  %10153 = vmatprep.subr.mxu0 %v8478
  %10154 = vmatpush1.msra.mxu0 %v8477
  %10155 = vmatprep.subr.mxu0 %v8486
  %10156 = vmatpush1.msra.mxu0 %v8485
  %10157 = vmatprep.subr.mxu0 %v8494
  %10158 = vmatpush1.msra.mxu0 %v8493
  %10159 = vmatprep.subr.mxu0 %v8502
  %10160 = vmatpush1.msra.mxu0 %v8501
  %10161 = vmatprep.subr.mxu0 %v8510
  %10162 = vmatpush1.msra.mxu0 %v8509
  %10163 = vmatprep.subr.mxu0 %v8518
  %10164 = vmatpush1.msra.mxu0 %v8517
  %10165 = vmatprep.subr.mxu0 %v8526
  %10166 = vmatpush1.msra.mxu0 %v8525
  %10167 = vmatprep.subr.mxu0 %v8534
  %10168 = vmatpush1.msra.mxu0 %v8533
  %10169 = vmatprep.subr.mxu0 %v8542
  %10170 = vmatpush1.msra.mxu0 %v8541
  %10171 = vmatprep.subr.mxu0 %v8550
  %10172 = vmatpush1.msra.mxu0 %v8549
  %10173 = vmatprep.subr.mxu0 %v8558
  %10174 = vmatpush1.msra.mxu0 %v8557
  %10175 = vmatprep.subr.mxu0 %v8566
  %10176 = vmatpush1.msra.mxu0 %v8565
  %10177 = vmatprep.subr.mxu0 %v8574
  %10178 = vmatpush1.msra.mxu0 %v8573
  %10179 = vmatprep.subr.mxu0 %v8582
  %10180 = vmatpush1.msra.mxu0 %v8581
  %10181 = vmatprep.subr.mxu0 %v8590
  %10182 = vmatpush1.msra.mxu0 %v8589
  %10183 = vmatprep.subr.mxu0 %v8598
  %10184 = vmatpush1.msra.mxu0 %v8597
  %10185 = vmatprep.subr.mxu0 %v8606
  %10186 = vmatpush1.msra.mxu0 %v8605
  %10187 = vmatprep.subr.mxu0 %v8614
  %10188 = vmatpush1.msra.mxu0 %v8613
  %10189 = vmatprep.subr.mxu0 %v8622
  %10190 = vmatpush1.msra.mxu0 %v8621
  %10191 = vmatprep.subr.mxu0 %v8630
  %10192 = vmatpush1.msra.mxu0 %v8629
  %10193 = vmatprep.subr.mxu0 %v8638
  %10194 = vmatpush1.msra.mxu0 %v8637
  %10195 = vmatprep.subr.mxu0 %v8646
  %10196 = vmatpush1.msra.mxu0 %v8645
  %10197 = vmatprep.subr.mxu0 %v8654
  %10198 = vmatpush1.msra.mxu0 %v8653
  %10199 = vmatprep.subr.mxu0 %v8662
  %10200 = vmatpush1.msra.mxu0 %v8661
  %10201 = vmatprep.mubr.f32.mxu0 %v10134
  %10202 = vmatmul.mubr.f32.gmra.mrb[0].mxu0 %v10133
  %v10203 = vpop.f32.mrb[0].mxu0
  %v10204 = vadd.f32 0.0, %v10203
  %v10205 = vpop.f32.mrb[0].mxu0
  %v10206 = vadd.f32 0.0, %v10205
  %10207 = vdwg.mxu0
  %10208 = vmatprep.subr.mxu0 %v8416
  %10209 = vmatpush1.msra.mxu0 %v8415
  %10210 = vmatprep.subr.mxu0 %v8424
  %10211 = vmatpush1.msra.mxu0 %v8423
  %10212 = vmatprep.subr.mxu0 %v8432
  %10213 = vmatpush1.msra.mxu0 %v8431
  %10214 = vmatprep.subr.mxu0 %v8440
  %10215 = vmatpush1.msra.mxu0 %v8439
  %10216 = vmatprep.subr.mxu0 %v8448
  %10217 = vmatpush1.msra.mxu0 %v8447
  %10218 = vmatprep.subr.mxu0 %v8456
  %10219 = vmatpush1.msra.mxu0 %v8455
  %10220 = vmatprep.subr.mxu0 %v8464
  %10221 = vmatpush1.msra.mxu0 %v8463
  %10222 = vmatprep.subr.mxu0 %v8472
  %10223 = vmatpush1.msra.mxu0 %v8471
  %10224 = vmatprep.subr.mxu0 %v8480
  %10225 = vmatpush1.msra.mxu0 %v8479
  %10226 = vmatprep.subr.mxu0 %v8488
  %10227 = vmatpush1.msra.mxu0 %v8487
  %10228 = vmatprep.subr.mxu0 %v8496
  %10229 = vmatpush1.msra.mxu0 %v8495
  %10230 = vmatprep.subr.mxu0 %v8504
  %10231 = vmatpush1.msra.mxu0 %v8503
  %10232 = vmatprep.subr.mxu0 %v8512
  %10233 = vmatpush1.msra.mxu0 %v8511
  %10234 = vmatprep.subr.mxu0 %v8520
  %10235 = vmatpush1.msra.mxu0 %v8519
  %10236 = vmatprep.subr.mxu0 %v8528
  %10237 = vmatpush1.msra.mxu0 %v8527
  %10238 = vmatprep.subr.mxu0 %v8536
  %10239 = vmatpush1.msra.mxu0 %v8535
  %10240 = vmatprep.subr.mxu0 %v8544
  %10241 = vmatpush1.msra.mxu0 %v8543
  %10242 = vmatprep.subr.mxu0 %v8552
  %10243 = vmatpush1.msra.mxu0 %v8551
  %10244 = vmatprep.subr.mxu0 %v8560
  %10245 = vmatpush1.msra.mxu0 %v8559
  %10246 = vmatprep.subr.mxu0 %v8568
  %10247 = vmatpush1.msra.mxu0 %v8567
  %10248 = vmatprep.subr.mxu0 %v8576
  %10249 = vmatpush1.msra.mxu0 %v8575
  %10250 = vmatprep.subr.mxu0 %v8584
  %10251 = vmatpush1.msra.mxu0 %v8583
  %10252 = vmatprep.subr.mxu0 %v8592
  %10253 = vmatpush1.msra.mxu0 %v8591
  %10254 = vmatprep.subr.mxu0 %v8600
  %10255 = vmatpush1.msra.mxu0 %v8599
  %10256 = vmatprep.subr.mxu0 %v8608
  %10257 = vmatpush1.msra.mxu0 %v8607
  %10258 = vmatprep.subr.mxu0 %v8616
  %10259 = vmatpush1.msra.mxu0 %v8615
  %10260 = vmatprep.subr.mxu0 %v8624
  %10261 = vmatpush1.msra.mxu0 %v8623
  %10262 = vmatprep.subr.mxu0 %v8632
  %10263 = vmatpush1.msra.mxu0 %v8631
  %10264 = vmatprep.subr.mxu0 %v8640
  %10265 = vmatpush1.msra.mxu0 %v8639
  %10266 = vmatprep.subr.mxu0 %v8648
  %10267 = vmatpush1.msra.mxu0 %v8647
  %10268 = vmatprep.subr.mxu0 %v8656
  %10269 = vmatpush1.msra.mxu0 %v8655
  %10270 = vmatprep.subr.mxu0 %v8664
  %10271 = vmatpush1.msra.mxu0 %v8663
  %10272 = vmatprep.mubr.f32.mxu0 %v10134
  %10273 = vmatmul.mubr.f32.gmra.mrb[0].mxu0 %v10133
  %v10274 = vpop.f32.mrb[0].mxu0
  %v10275 = vadd.f32 0.0, %v10274
  %v10276 = vpop.f32.mrb[0].mxu0
  %v10277 = vadd.f32 0.0, %v10276
  %10278 = vdwg.mxu0
  %10279 = vmatprep.subr.mxu0 %v8418
  %10280 = vmatpush1.msra.mxu0 %v8417
  %10281 = vmatprep.subr.mxu0 %v8426
  %10282 = vmatpush1.msra.mxu0 %v8425
  %10283 = vmatprep.subr.mxu0 %v8434
  %10284 = vmatpush1.msra.mxu0 %v8433
  %10285 = vmatprep.subr.mxu0 %v8442
  %10286 = vmatpush1.msra.mxu0 %v8441
  %10287 = vmatprep.subr.mxu0 %v8450
  %10288 = vmatpush1.msra.mxu0 %v8449
  %10289 = vmatprep.subr.mxu0 %v8458
  %10290 = vmatpush1.msra.mxu0 %v8457
  %10291 = vmatprep.subr.mxu0 %v8466
  %10292 = vmatpush1.msra.mxu0 %v8465
  %10293 = vmatprep.subr.mxu0 %v8474
  %10294 = vmatpush1.msra.mxu0 %v8473
  %10295 = vmatprep.subr.mxu0 %v8482
  %10296 = vmatpush1.msra.mxu0 %v8481
  %10297 = vmatprep.subr.mxu0 %v8490
  %10298 = vmatpush1.msra.mxu0 %v8489
  %10299 = vmatprep.subr.mxu0 %v8498
  %10300 = vmatpush1.msra.mxu0 %v8497
  %10301 = vmatprep.subr.mxu0 %v8506
  %10302 = vmatpush1.msra.mxu0 %v8505
  %10303 = vmatprep.subr.mxu0 %v8514
  %10304 = vmatpush1.msra.mxu0 %v8513
  %10305 = vmatprep.subr.mxu0 %v8522
  %10306 = vmatpush1.msra.mxu0 %v8521
  %10307 = vmatprep.subr.mxu0 %v8530
  %10308 = vmatpush1.msra.mxu0 %v8529
  %10309 = vmatprep.subr.mxu0 %v8538
  %10310 = vmatpush1.msra.mxu0 %v8537
  %10311 = vmatprep.subr.mxu0 %v8546
  %10312 = vmatpush1.msra.mxu0 %v8545
  %10313 = vmatprep.subr.mxu0 %v8554
  %10314 = vmatpush1.msra.mxu0 %v8553
  %10315 = vmatprep.subr.mxu0 %v8562
  %10316 = vmatpush1.msra.mxu0 %v8561
  %10317 = vmatprep.subr.mxu0 %v8570
  %10318 = vmatpush1.msra.mxu0 %v8569
  %10319 = vmatprep.subr.mxu0 %v8578
  %10320 = vmatpush1.msra.mxu0 %v8577
  %10321 = vmatprep.subr.mxu0 %v8586
  %10322 = vmatpush1.msra.mxu0 %v8585
  %10323 = vmatprep.subr.mxu0 %v8594
  %10324 = vmatpush1.msra.mxu0 %v8593
  %10325 = vmatprep.subr.mxu0 %v8602
  %10326 = vmatpush1.msra.mxu0 %v8601
  %10327 = vmatprep.subr.mxu0 %v8610
  %10328 = vmatpush1.msra.mxu0 %v8609
  %10329 = vmatprep.subr.mxu0 %v8618
  %10330 = vmatpush1.msra.mxu0 %v8617
  %10331 = vmatprep.subr.mxu0 %v8626
  %10332 = vmatpush1.msra.mxu0 %v8625
  %10333 = vmatprep.subr.mxu0 %v8634
  %10334 = vmatpush1.msra.mxu0 %v8633
  %10335 = vmatprep.subr.mxu0 %v8642
  %10336 = vmatpush1.msra.mxu0 %v8641
  %10337 = vmatprep.subr.mxu0 %v8650
  %10338 = vmatpush1.msra.mxu0 %v8649
  %10339 = vmatprep.subr.mxu0 %v8658
  %10340 = vmatpush1.msra.mxu0 %v8657
  %10341 = vmatprep.subr.mxu0 %v8666
  %10342 = vmatpush1.msra.mxu0 %v8665
  %10343 = vmatprep.mubr.f32.mxu0 %v10134
  %10344 = vmatmul.mubr.f32.gmra.mrb[0].mxu0 %v10133
  %v10345 = vpop.f32.mrb[0].mxu0
  %v10346 = vadd.f32 0.0, %v10345
  %v10347 = vpop.f32.mrb[0].mxu0
  %v10348 = vadd.f32 0.0, %v10347
  %10349 = vdwg.mxu0
  %10350 = vmatprep.subr.mxu0 %v8420
  %10351 = vmatpush1.msra.mxu0 %v8419
  %10352 = vmatprep.subr.mxu0 %v8428
  %10353 = vmatpush1.msra.mxu0 %v8427
  %10354 = vmatprep.subr.mxu0 %v8436
  %10355 = vmatpush1.msra.mxu0 %v8435
  %10356 = vmatprep.subr.mxu0 %v8444
  %10357 = vmatpush1.msra.mxu0 %v8443
  %10358 = vmatprep.subr.mxu0 %v8452
  %10359 = vmatpush1.msra.mxu0 %v8451
  %10360 = vmatprep.subr.mxu0 %v8460
  %10361 = vmatpush1.msra.mxu0 %v8459
  %10362 = vmatprep.subr.mxu0 %v8468
  %10363 = vmatpush1.msra.mxu0 %v8467
  %10364 = vmatprep.subr.mxu0 %v8476
  %10365 = vmatpush1.msra.mxu0 %v8475
  %10366 = vmatprep.subr.mxu0 %v8484
  %10367 = vmatpush1.msra.mxu0 %v8483
  %10368 = vmatprep.subr.mxu0 %v8492
  %10369 = vmatpush1.msra.mxu0 %v8491
  %10370 = vmatprep.subr.mxu0 %v8500
  %10371 = vmatpush1.msra.mxu0 %v8499
  %10372 = vmatprep.subr.mxu0 %v8508
  %10373 = vmatpush1.msra.mxu0 %v8507
  %10374 = vmatprep.subr.mxu0 %v8516
  %10375 = vmatpush1.msra.mxu0 %v8515
  %10376 = vmatprep.subr.mxu0 %v8524
  %10377 = vmatpush1.msra.mxu0 %v8523
  %10378 = vmatprep.subr.mxu0 %v8532
  %10379 = vmatpush1.msra.mxu0 %v8531
  %10380 = vmatprep.subr.mxu0 %v8540
  %10381 = vmatpush1.msra.mxu0 %v8539
  %10382 = vmatprep.subr.mxu0 %v8548
  %10383 = vmatpush1.msra.mxu0 %v8547
  %10384 = vmatprep.subr.mxu0 %v8556
  %10385 = vmatpush1.msra.mxu0 %v8555
  %10386 = vmatprep.subr.mxu0 %v8564
  %10387 = vmatpush1.msra.mxu0 %v8563
  %10388 = vmatprep.subr.mxu0 %v8572
  %10389 = vmatpush1.msra.mxu0 %v8571
  %10390 = vmatprep.subr.mxu0 %v8580
  %10391 = vmatpush1.msra.mxu0 %v8579
  %10392 = vmatprep.subr.mxu0 %v8588
  %10393 = vmatpush1.msra.mxu0 %v8587
  %10394 = vmatprep.subr.mxu0 %v8596
  %10395 = vmatpush1.msra.mxu0 %v8595
  %10396 = vmatprep.subr.mxu0 %v8604
  %10397 = vmatpush1.msra.mxu0 %v8603
  %10398 = vmatprep.subr.mxu0 %v8612
  %10399 = vmatpush1.msra.mxu0 %v8611
  %10400 = vmatprep.subr.mxu0 %v8620
  %10401 = vmatpush1.msra.mxu0 %v8619
  %10402 = vmatprep.subr.mxu0 %v8628
  %10403 = vmatpush1.msra.mxu0 %v8627
  %10404 = vmatprep.subr.mxu0 %v8636
  %10405 = vmatpush1.msra.mxu0 %v8635
  %10406 = vmatprep.subr.mxu0 %v8644
  %10407 = vmatpush1.msra.mxu0 %v8643
  %10408 = vmatprep.subr.mxu0 %v8652
  %10409 = vmatpush1.msra.mxu0 %v8651
  %10410 = vmatprep.subr.mxu0 %v8660
  %10411 = vmatpush1.msra.mxu0 %v8659
  %10412 = vmatprep.subr.mxu0 %v8668
  %10413 = vmatpush1.msra.mxu0 %v8667
  %10414 = vmatprep.mubr.f32.mxu0 %v10134
  %10415 = vmatmul.mubr.f32.gmra.mrb[0].mxu0 %v10133
  %v10416 = vpop.f32.mrb[0].mxu0
  %v10417 = vadd.f32 0.0, %v10416
  %v10418 = vpop.f32.mrb[0].mxu0
  %v10419 = vadd.f32 0.0, %v10418
  %10420 = vdwg.mxu0
  %v10421 = vadd.f32 %v8151, %v10204
  %v10422 = vadd.f32 %v8153, %v10206
  %v10423 = vadd.f32 %v8237, %v10275
  %v10424 = vadd.f32 %v8239, %v10277
  %v10425 = vadd.f32 %v8323, %v10346
  %v10426 = vadd.f32 %v8325, %v10348
  %v10427 = vadd.f32 %v8409, %v10417
  %v10428 = vadd.f32 %v8411, %v10419
  %v10429 = vxor.u32 %v10421, 2147483648
  %v10430 = vxor.u32 %v10422, 2147483648
  %v10431 = vmul.f32 %v10429, 1.442695
  %v10432 = vpow.pop %v10431
  %v10433 = vmul.f32 %v10430, 1.442695
  %v10434 = vpow.pop %v10433
  %v10435 = vadd.f32 %v10432, 1.0
  %v10436 = vadd.f32 %v10434, 1.0
  %v10437 = vrcp.pop %v10435
  %v10438 = vmul.f32 1.0, %v10437
  %v10439 = vrcp.pop %v10436
  %v10440 = vmul.f32 1.0, %v10439
  %v10441 = vxor.u32 %v10423, 2147483648
  %v10442 = vxor.u32 %v10424, 2147483648
  %v10443 = vmul.f32 %v10441, 1.442695
  %v10444 = vpow.pop %v10443
  %v10445 = vmul.f32 %v10442, 1.442695
  %v10446 = vpow.pop %v10445
  %v10447 = vadd.f32 %v10444, 1.0
  %v10448 = vadd.f32 %v10446, 1.0
  %v10449 = vrcp.pop %v10447
  %v10450 = vmul.f32 1.0, %v10449
  %v10451 = vrcp.pop %v10448
  %v10452 = vmul.f32 1.0, %v10451
  %v10453 = vtanh.pop %v10425
  %v10454 = vtanh.pop %v10426
  %v10455 = vxor.u32 %v10427, 2147483648
  %v10456 = vxor.u32 %v10428, 2147483648
  %v10457 = vmul.f32 %v10455, 1.442695
  %v10458 = vpow.pop %v10457
  %v10459 = vmul.f32 %v10456, 1.442695
  %v10460 = vpow.pop %v10459
  %v10461 = vadd.f32 %v10458, 1.0
  %v10462 = vadd.f32 %v10460, 1.0
  %v10463 = vrcp.pop %v10461
  %v10464 = vmul.f32 1.0, %v10463
  %v10465 = vrcp.pop %v10462
  %v10466 = vmul.f32 1.0, %v10465
  %v10469 = vrot.slane %v10125, 6
  %v10470 = vrot.slane %v10126, 6
  %v10473 = vmul.f32 %v10450, %v10469
  %v10474 = vmul.f32 %v10452, %v10470
  %v10475 = vmul.f32 %v10438, %v10453
  %v10476 = vmul.f32 %v10440, %v10454
  %v10477 = vadd.f32 %v10473, %v10475
  %v10478 = vadd.f32 %v10474, %v10476
  %v10479 = vtanh.pop %v10477
  %v10480 = vtanh.pop %v10478
  %v10481 = vmul.f32 %v10464, %v10479
  %v10482 = vmul.f32 %v10466, %v10480
  %10483 = vmatprep.subr.mxu0 %v8414
  %10484 = vmatpush1.msra.mxu0 %v8413
  %10485 = vmatprep.subr.mxu0 %v8422
  %10486 = vmatpush1.msra.mxu0 %v8421
  %10487 = vmatprep.subr.mxu0 %v8430
  %10488 = vmatpush1.msra.mxu0 %v8429
  %10489 = vmatprep.subr.mxu0 %v8438
  %10490 = vmatpush1.msra.mxu0 %v8437
  %10491 = vmatprep.subr.mxu0 %v8446
  %10492 = vmatpush1.msra.mxu0 %v8445
  %10493 = vmatprep.subr.mxu0 %v8454
  %10494 = vmatpush1.msra.mxu0 %v8453
  %10495 = vmatprep.subr.mxu0 %v8462
  %10496 = vmatpush1.msra.mxu0 %v8461
  %10497 = vmatprep.subr.mxu0 %v8470
  %10498 = vmatpush1.msra.mxu0 %v8469
  %10499 = vmatprep.subr.mxu0 %v8478
  %10500 = vmatpush1.msra.mxu0 %v8477
  %10501 = vmatprep.subr.mxu0 %v8486
  %10502 = vmatpush1.msra.mxu0 %v8485
  %10503 = vmatprep.subr.mxu0 %v8494
  %10504 = vmatpush1.msra.mxu0 %v8493
  %10505 = vmatprep.subr.mxu0 %v8502
  %10506 = vmatpush1.msra.mxu0 %v8501
  %10507 = vmatprep.subr.mxu0 %v8510
  %10508 = vmatpush1.msra.mxu0 %v8509
  %10509 = vmatprep.subr.mxu0 %v8518
  %10510 = vmatpush1.msra.mxu0 %v8517
  %10511 = vmatprep.subr.mxu0 %v8526
  %10512 = vmatpush1.msra.mxu0 %v8525
  %10513 = vmatprep.subr.mxu0 %v8534
  %10514 = vmatpush1.msra.mxu0 %v8533
  %10515 = vmatprep.subr.mxu0 %v8542
  %10516 = vmatpush1.msra.mxu0 %v8541
  %10517 = vmatprep.subr.mxu0 %v8550
  %10518 = vmatpush1.msra.mxu0 %v8549
  %10519 = vmatprep.subr.mxu0 %v8558
  %10520 = vmatpush1.msra.mxu0 %v8557
  %10521 = vmatprep.subr.mxu0 %v8566
  %10522 = vmatpush1.msra.mxu0 %v8565
  %10523 = vmatprep.subr.mxu0 %v8574
  %10524 = vmatpush1.msra.mxu0 %v8573
  %10525 = vmatprep.subr.mxu0 %v8582
  %10526 = vmatpush1.msra.mxu0 %v8581
  %10527 = vmatprep.subr.mxu0 %v8590
  %10528 = vmatpush1.msra.mxu0 %v8589
  %10529 = vmatprep.subr.mxu0 %v8598
  %10530 = vmatpush1.msra.mxu0 %v8597
  %10531 = vmatprep.subr.mxu0 %v8606
  %10532 = vmatpush1.msra.mxu0 %v8605
  %10533 = vmatprep.subr.mxu0 %v8614
  %10534 = vmatpush1.msra.mxu0 %v8613
  %10535 = vmatprep.subr.mxu0 %v8622
  %10536 = vmatpush1.msra.mxu0 %v8621
  %10537 = vmatprep.subr.mxu0 %v8630
  %10538 = vmatpush1.msra.mxu0 %v8629
  %10539 = vmatprep.subr.mxu0 %v8638
  %10540 = vmatpush1.msra.mxu0 %v8637
  %10541 = vmatprep.subr.mxu0 %v8646
  %10542 = vmatpush1.msra.mxu0 %v8645
  %10543 = vmatprep.subr.mxu0 %v8654
  %10544 = vmatpush1.msra.mxu0 %v8653
  %10545 = vmatprep.subr.mxu0 %v8662
  %10546 = vmatpush1.msra.mxu0 %v8661
  %10547 = vmatprep.mubr.f32.mxu0 %v10482
  %10548 = vmatmul.mubr.f32.gmra.mrb[0].mxu0 %v10481
  %v10549 = vpop.f32.mrb[0].mxu0
  %v10550 = vadd.f32 0.0, %v10549
  %v10551 = vpop.f32.mrb[0].mxu0
  %v10552 = vadd.f32 0.0, %v10551
  %10553 = vdwg.mxu0
  %10554 = vmatprep.subr.mxu0 %v8416
  %10555 = vmatpush1.msra.mxu0 %v8415
  %10556 = vmatprep.subr.mxu0 %v8424
  %10557 = vmatpush1.msra.mxu0 %v8423
  %10558 = vmatprep.subr.mxu0 %v8432
  %10559 = vmatpush1.msra.mxu0 %v8431
  %10560 = vmatprep.subr.mxu0 %v8440
  %10561 = vmatpush1.msra.mxu0 %v8439
  %10562 = vmatprep.subr.mxu0 %v8448
  %10563 = vmatpush1.msra.mxu0 %v8447
  %10564 = vmatprep.subr.mxu0 %v8456
  %10565 = vmatpush1.msra.mxu0 %v8455
  %10566 = vmatprep.subr.mxu0 %v8464
  %10567 = vmatpush1.msra.mxu0 %v8463
  %10568 = vmatprep.subr.mxu0 %v8472
  %10569 = vmatpush1.msra.mxu0 %v8471
  %10570 = vmatprep.subr.mxu0 %v8480
  %10571 = vmatpush1.msra.mxu0 %v8479
  %10572 = vmatprep.subr.mxu0 %v8488
  %10573 = vmatpush1.msra.mxu0 %v8487
  %10574 = vmatprep.subr.mxu0 %v8496
  %10575 = vmatpush1.msra.mxu0 %v8495
  %10576 = vmatprep.subr.mxu0 %v8504
  %10577 = vmatpush1.msra.mxu0 %v8503
  %10578 = vmatprep.subr.mxu0 %v8512
  %10579 = vmatpush1.msra.mxu0 %v8511
  %10580 = vmatprep.subr.mxu0 %v8520
  %10581 = vmatpush1.msra.mxu0 %v8519
  %10582 = vmatprep.subr.mxu0 %v8528
  %10583 = vmatpush1.msra.mxu0 %v8527
  %10584 = vmatprep.subr.mxu0 %v8536
  %10585 = vmatpush1.msra.mxu0 %v8535
  %10586 = vmatprep.subr.mxu0 %v8544
  %10587 = vmatpush1.msra.mxu0 %v8543
  %10588 = vmatprep.subr.mxu0 %v8552
  %10589 = vmatpush1.msra.mxu0 %v8551
  %10590 = vmatprep.subr.mxu0 %v8560
  %10591 = vmatpush1.msra.mxu0 %v8559
  %10592 = vmatprep.subr.mxu0 %v8568
  %10593 = vmatpush1.msra.mxu0 %v8567
  %10594 = vmatprep.subr.mxu0 %v8576
  %10595 = vmatpush1.msra.mxu0 %v8575
  %10596 = vmatprep.subr.mxu0 %v8584
  %10597 = vmatpush1.msra.mxu0 %v8583
  %10598 = vmatprep.subr.mxu0 %v8592
  %10599 = vmatpush1.msra.mxu0 %v8591
  %10600 = vmatprep.subr.mxu0 %v8600
  %10601 = vmatpush1.msra.mxu0 %v8599
  %10602 = vmatprep.subr.mxu0 %v8608
  %10603 = vmatpush1.msra.mxu0 %v8607
  %10604 = vmatprep.subr.mxu0 %v8616
  %10605 = vmatpush1.msra.mxu0 %v8615
  %10606 = vmatprep.subr.mxu0 %v8624
  %10607 = vmatpush1.msra.mxu0 %v8623
  %10608 = vmatprep.subr.mxu0 %v8632
  %10609 = vmatpush1.msra.mxu0 %v8631
  %10610 = vmatprep.subr.mxu0 %v8640
  %10611 = vmatpush1.msra.mxu0 %v8639
  %10612 = vmatprep.subr.mxu0 %v8648
  %10613 = vmatpush1.msra.mxu0 %v8647
  %10614 = vmatprep.subr.mxu0 %v8656
  %10615 = vmatpush1.msra.mxu0 %v8655
  %10616 = vmatprep.subr.mxu0 %v8664
  %10617 = vmatpush1.msra.mxu0 %v8663
  %10618 = vmatprep.mubr.f32.mxu0 %v10482
  %10619 = vmatmul.mubr.f32.gmra.mrb[0].mxu0 %v10481
  %v10620 = vpop.f32.mrb[0].mxu0
  %v10621 = vadd.f32 0.0, %v10620
  %v10622 = vpop.f32.mrb[0].mxu0
  %v10623 = vadd.f32 0.0, %v10622
  %10624 = vdwg.mxu0
  %10625 = vmatprep.subr.mxu0 %v8418
  %10626 = vmatpush1.msra.mxu0 %v8417
  %10627 = vmatprep.subr.mxu0 %v8426
  %10628 = vmatpush1.msra.mxu0 %v8425
  %10629 = vmatprep.subr.mxu0 %v8434
  %10630 = vmatpush1.msra.mxu0 %v8433
  %10631 = vmatprep.subr.mxu0 %v8442
  %10632 = vmatpush1.msra.mxu0 %v8441
  %10633 = vmatprep.subr.mxu0 %v8450
  %10634 = vmatpush1.msra.mxu0 %v8449
  %10635 = vmatprep.subr.mxu0 %v8458
  %10636 = vmatpush1.msra.mxu0 %v8457
  %10637 = vmatprep.subr.mxu0 %v8466
  %10638 = vmatpush1.msra.mxu0 %v8465
  %10639 = vmatprep.subr.mxu0 %v8474
  %10640 = vmatpush1.msra.mxu0 %v8473
  %10641 = vmatprep.subr.mxu0 %v8482
  %10642 = vmatpush1.msra.mxu0 %v8481
  %10643 = vmatprep.subr.mxu0 %v8490
  %10644 = vmatpush1.msra.mxu0 %v8489
  %10645 = vmatprep.subr.mxu0 %v8498
  %10646 = vmatpush1.msra.mxu0 %v8497
  %10647 = vmatprep.subr.mxu0 %v8506
  %10648 = vmatpush1.msra.mxu0 %v8505
  %10649 = vmatprep.subr.mxu0 %v8514
  %10650 = vmatpush1.msra.mxu0 %v8513
  %10651 = vmatprep.subr.mxu0 %v8522
  %10652 = vmatpush1.msra.mxu0 %v8521
  %10653 = vmatprep.subr.mxu0 %v8530
  %10654 = vmatpush1.msra.mxu0 %v8529
  %10655 = vmatprep.subr.mxu0 %v8538
  %10656 = vmatpush1.msra.mxu0 %v8537
  %10657 = vmatprep.subr.mxu0 %v8546
  %10658 = vmatpush1.msra.mxu0 %v8545
  %10659 = vmatprep.subr.mxu0 %v8554
  %10660 = vmatpush1.msra.mxu0 %v8553
  %10661 = vmatprep.subr.mxu0 %v8562
  %10662 = vmatpush1.msra.mxu0 %v8561
  %10663 = vmatprep.subr.mxu0 %v8570
  %10664 = vmatpush1.msra.mxu0 %v8569
  %10665 = vmatprep.subr.mxu0 %v8578
  %10666 = vmatpush1.msra.mxu0 %v8577
  %10667 = vmatprep.subr.mxu0 %v8586
  %10668 = vmatpush1.msra.mxu0 %v8585
  %10669 = vmatprep.subr.mxu0 %v8594
  %10670 = vmatpush1.msra.mxu0 %v8593
  %10671 = vmatprep.subr.mxu0 %v8602
  %10672 = vmatpush1.msra.mxu0 %v8601
  %10673 = vmatprep.subr.mxu0 %v8610
  %10674 = vmatpush1.msra.mxu0 %v8609
  %10675 = vmatprep.subr.mxu0 %v8618
  %10676 = vmatpush1.msra.mxu0 %v8617
  %10677 = vmatprep.subr.mxu0 %v8626
  %10678 = vmatpush1.msra.mxu0 %v8625
  %10679 = vmatprep.subr.mxu0 %v8634
  %10680 = vmatpush1.msra.mxu0 %v8633
  %10681 = vmatprep.subr.mxu0 %v8642
  %10682 = vmatpush1.msra.mxu0 %v8641
  %10683 = vmatprep.subr.mxu0 %v8650
  %10684 = vmatpush1.msra.mxu0 %v8649
  %10685 = vmatprep.subr.mxu0 %v8658
  %10686 = vmatpush1.msra.mxu0 %v8657
  %10687 = vmatprep.subr.mxu0 %v8666
  %10688 = vmatpush1.msra.mxu0 %v8665
  %10689 = vmatprep.mubr.f32.mxu0 %v10482
  %10690 = vmatmul.mubr.f32.gmra.mrb[0].mxu0 %v10481
  %v10691 = vpop.f32.mrb[0].mxu0
  %v10692 = vadd.f32 0.0, %v10691
  %v10693 = vpop.f32.mrb[0].mxu0
  %v10694 = vadd.f32 0.0, %v10693
  %10695 = vdwg.mxu0
  %10696 = vmatprep.subr.mxu0 %v8420
  %10697 = vmatpush1.msra.mxu0 %v8419
  %10698 = vmatprep.subr.mxu0 %v8428
  %10699 = vmatpush1.msra.mxu0 %v8427
  %10700 = vmatprep.subr.mxu0 %v8436
  %10701 = vmatpush1.msra.mxu0 %v8435
  %10702 = vmatprep.subr.mxu0 %v8444
  %10703 = vmatpush1.msra.mxu0 %v8443
  %10704 = vmatprep.subr.mxu0 %v8452
  %10705 = vmatpush1.msra.mxu0 %v8451
  %10706 = vmatprep.subr.mxu0 %v8460
  %10707 = vmatpush1.msra.mxu0 %v8459
  %10708 = vmatprep.subr.mxu0 %v8468
  %10709 = vmatpush1.msra.mxu0 %v8467
  %10710 = vmatprep.subr.mxu0 %v8476
  %10711 = vmatpush1.msra.mxu0 %v8475
  %10712 = vmatprep.subr.mxu0 %v8484
  %10713 = vmatpush1.msra.mxu0 %v8483
  %10714 = vmatprep.subr.mxu0 %v8492
  %10715 = vmatpush1.msra.mxu0 %v8491
  %10716 = vmatprep.subr.mxu0 %v8500
  %10717 = vmatpush1.msra.mxu0 %v8499
  %10718 = vmatprep.subr.mxu0 %v8508
  %10719 = vmatpush1.msra.mxu0 %v8507
  %10720 = vmatprep.subr.mxu0 %v8516
  %10721 = vmatpush1.msra.mxu0 %v8515
  %10722 = vmatprep.subr.mxu0 %v8524
  %10723 = vmatpush1.msra.mxu0 %v8523
  %10724 = vmatprep.subr.mxu0 %v8532
  %10725 = vmatpush1.msra.mxu0 %v8531
  %10726 = vmatprep.subr.mxu0 %v8540
  %10727 = vmatpush1.msra.mxu0 %v8539
  %10728 = vmatprep.subr.mxu0 %v8548
  %10729 = vmatpush1.msra.mxu0 %v8547
  %10730 = vmatprep.subr.mxu0 %v8556
  %10731 = vmatpush1.msra.mxu0 %v8555
  %10732 = vmatprep.subr.mxu0 %v8564
  %10733 = vmatpush1.msra.mxu0 %v8563
  %10734 = vmatprep.subr.mxu0 %v8572
  %10735 = vmatpush1.msra.mxu0 %v8571
  %10736 = vmatprep.subr.mxu0 %v8580
  %10737 = vmatpush1.msra.mxu0 %v8579
  %10738 = vmatprep.subr.mxu0 %v8588
  %10739 = vmatpush1.msra.mxu0 %v8587
  %10740 = vmatprep.subr.mxu0 %v8596
  %10741 = vmatpush1.msra.mxu0 %v8595
  %10742 = vmatprep.subr.mxu0 %v8604
  %10743 = vmatpush1.msra.mxu0 %v8603
  %10744 = vmatprep.subr.mxu0 %v8612
  %10745 = vmatpush1.msra.mxu0 %v8611
  %10746 = vmatprep.subr.mxu0 %v8620
  %10747 = vmatpush1.msra.mxu0 %v8619
  %10748 = vmatprep.subr.mxu0 %v8628
  %10749 = vmatpush1.msra.mxu0 %v8627
  %10750 = vmatprep.subr.mxu0 %v8636
  %10751 = vmatpush1.msra.mxu0 %v8635
  %10752 = vmatprep.subr.mxu0 %v8644
  %10753 = vmatpush1.msra.mxu0 %v8643
  %10754 = vmatprep.subr.mxu0 %v8652
  %10755 = vmatpush1.msra.mxu0 %v8651
  %10756 = vmatprep.subr.mxu0 %v8660
  %10757 = vmatpush1.msra.mxu0 %v8659
  %10758 = vmatprep.subr.mxu0 %v8668
  %10759 = vmatpush1.msra.mxu0 %v8667
  %10760 = vmatprep.mubr.f32.mxu0 %v10482
  %10761 = vmatmul.mubr.f32.gmra.mrb[0].mxu0 %v10481
  %v10762 = vpop.f32.mrb[0].mxu0
  %v10763 = vadd.f32 0.0, %v10762
  %v10764 = vpop.f32.mrb[0].mxu0
  %v10765 = vadd.f32 0.0, %v10764
  %10766 = vdwg.mxu0
  %v10775 = vrot.slane %v10550, 6
  %v10776 = vrot.slane %v10552, 6
  %v10777 = vrot.slane %v10621, 6
  %v10778 = vrot.slane %v10623, 6
  %v10779 = vrot.slane %v10692, 6
  %v10780 = vrot.slane %v10694, 6
  %v10781 = vrot.slane %v10763, 6
  %v10782 = vrot.slane %v10765, 6
  %v10791 = vadd.f32 %v8151, %v10775
  %v10792 = vadd.f32 %v8153, %v10776
  %v10793 = vadd.f32 %v8237, %v10777
  %v10794 = vadd.f32 %v8239, %v10778
  %v10795 = vadd.f32 %v8323, %v10779
  %v10796 = vadd.f32 %v8325, %v10780
  %v10797 = vadd.f32 %v8409, %v10781
  %v10798 = vadd.f32 %v8411, %v10782
  %v10799 = vxor.u32 %v10791, 2147483648
  %v10800 = vxor.u32 %v10792, 2147483648
  %v10801 = vmul.f32 %v10799, 1.442695
  %v10802 = vpow.pop %v10801
  %v10803 = vmul.f32 %v10800, 1.442695
  %v10804 = vpow.pop %v10803
  %v10805 = vadd.f32 %v10802, 1.0
  %v10806 = vadd.f32 %v10804, 1.0
  %v10807 = vrcp.pop %v10805
  %v10808 = vmul.f32 1.0, %v10807
  %v10809 = vrcp.pop %v10806
  %v10810 = vmul.f32 1.0, %v10809
  %v10811 = vxor.u32 %v10793, 2147483648
  %v10812 = vxor.u32 %v10794, 2147483648
  %v10813 = vmul.f32 %v10811, 1.442695
  %v10814 = vpow.pop %v10813
  %v10815 = vmul.f32 %v10812, 1.442695
  %v10816 = vpow.pop %v10815
  %v10817 = vadd.f32 %v10814, 1.0
  %v10818 = vadd.f32 %v10816, 1.0
  %v10819 = vrcp.pop %v10817
  %v10820 = vmul.f32 1.0, %v10819
  %v10821 = vrcp.pop %v10818
  %v10822 = vmul.f32 1.0, %v10821
  %v10823 = vtanh.pop %v10795
  %v10824 = vtanh.pop %v10796
  %v10825 = vxor.u32 %v10797, 2147483648
  %v10826 = vxor.u32 %v10798, 2147483648
  %v10827 = vmul.f32 %v10825, 1.442695
  %v10828 = vpow.pop %v10827
  %v10829 = vmul.f32 %v10826, 1.442695
  %v10830 = vpow.pop %v10829
  %v10831 = vadd.f32 %v10828, 1.0
  %v10832 = vadd.f32 %v10830, 1.0
  %v10833 = vrcp.pop %v10831
  %v10834 = vmul.f32 1.0, %v10833
  %v10835 = vrcp.pop %v10832
  %v10836 = vmul.f32 1.0, %v10835
  %v10839 = vrot.slane %v10477, 6
  %v10840 = vrot.slane %v10478, 6
  %v10843 = vmul.f32 %v10820, %v10839
  %v10844 = vmul.f32 %v10822, %v10840
  %v10845 = vmul.f32 %v10808, %v10823
  %v10846 = vmul.f32 %v10810, %v10824
  %v10847 = vadd.f32 %v10843, %v10845
  %v10848 = vadd.f32 %v10844, %v10846
  %v10849 = vtanh.pop %v10847
  %v10850 = vtanh.pop %v10848
  %v10851 = vmul.f32 %v10834, %v10849
  %v10852 = vmul.f32 %v10836, %v10850
  %v10855 = vrot.slane %v10851, 2
  %v10856 = vrot.slane %v10852, 2
  %10859 = vmatprep.subr.mxu0 %v8414
  %10860 = vmatpush1.msra.mxu0 %v8413
  %10861 = vmatprep.subr.mxu0 %v8422
  %10862 = vmatpush1.msra.mxu0 %v8421
  %10863 = vmatprep.subr.mxu0 %v8430
  %10864 = vmatpush1.msra.mxu0 %v8429
  %10865 = vmatprep.subr.mxu0 %v8438
  %10866 = vmatpush1.msra.mxu0 %v8437
  %10867 = vmatprep.subr.mxu0 %v8446
  %10868 = vmatpush1.msra.mxu0 %v8445
  %10869 = vmatprep.subr.mxu0 %v8454
  %10870 = vmatpush1.msra.mxu0 %v8453
  %10871 = vmatprep.subr.mxu0 %v8462
  %10872 = vmatpush1.msra.mxu0 %v8461
  %10873 = vmatprep.subr.mxu0 %v8470
  %10874 = vmatpush1.msra.mxu0 %v8469
  %10875 = vmatprep.subr.mxu0 %v8478
  %10876 = vmatpush1.msra.mxu0 %v8477
  %10877 = vmatprep.subr.mxu0 %v8486
  %10878 = vmatpush1.msra.mxu0 %v8485
  %10879 = vmatprep.subr.mxu0 %v8494
  %10880 = vmatpush1.msra.mxu0 %v8493
  %10881 = vmatprep.subr.mxu0 %v8502
  %10882 = vmatpush1.msra.mxu0 %v8501
  %10883 = vmatprep.subr.mxu0 %v8510
  %10884 = vmatpush1.msra.mxu0 %v8509
  %10885 = vmatprep.subr.mxu0 %v8518
  %10886 = vmatpush1.msra.mxu0 %v8517
  %10887 = vmatprep.subr.mxu0 %v8526
  %10888 = vmatpush1.msra.mxu0 %v8525
  %10889 = vmatprep.subr.mxu0 %v8534
  %10890 = vmatpush1.msra.mxu0 %v8533
  %10891 = vmatprep.subr.mxu0 %v8542
  %10892 = vmatpush1.msra.mxu0 %v8541
  %10893 = vmatprep.subr.mxu0 %v8550
  %10894 = vmatpush1.msra.mxu0 %v8549
  %10895 = vmatprep.subr.mxu0 %v8558
  %10896 = vmatpush1.msra.mxu0 %v8557
  %10897 = vmatprep.subr.mxu0 %v8566
  %10898 = vmatpush1.msra.mxu0 %v8565
  %10899 = vmatprep.subr.mxu0 %v8574
  %10900 = vmatpush1.msra.mxu0 %v8573
  %10901 = vmatprep.subr.mxu0 %v8582
  %10902 = vmatpush1.msra.mxu0 %v8581
  %10903 = vmatprep.subr.mxu0 %v8590
  %10904 = vmatpush1.msra.mxu0 %v8589
  %10905 = vmatprep.subr.mxu0 %v8598
  %10906 = vmatpush1.msra.mxu0 %v8597
  %10907 = vmatprep.subr.mxu0 %v8606
  %10908 = vmatpush1.msra.mxu0 %v8605
  %10909 = vmatprep.subr.mxu0 %v8614
  %10910 = vmatpush1.msra.mxu0 %v8613
  %10911 = vmatprep.subr.mxu0 %v8622
  %10912 = vmatpush1.msra.mxu0 %v8621
  %10913 = vmatprep.subr.mxu0 %v8630
  %10914 = vmatpush1.msra.mxu0 %v8629
  %10915 = vmatprep.subr.mxu0 %v8638
  %10916 = vmatpush1.msra.mxu0 %v8637
  %10917 = vmatprep.subr.mxu0 %v8646
  %10918 = vmatpush1.msra.mxu0 %v8645
  %10919 = vmatprep.subr.mxu0 %v8654
  %10920 = vmatpush1.msra.mxu0 %v8653
  %10921 = vmatprep.subr.mxu0 %v8662
  %10922 = vmatpush1.msra.mxu0 %v8661
  %10923 = vmatprep.mubr.f32.mxu0 %v10856
  %10924 = vmatmul.mubr.f32.gmra.mrb[0].mxu0 %v10855
  %v10925 = vpop.f32.mrb[0].mxu0
  %v10926 = vadd.f32 0.0, %v10925
  %v10927 = vpop.f32.mrb[0].mxu0
  %v10928 = vadd.f32 0.0, %v10927
  %10929 = vdwg.mxu0
  %10930 = vmatprep.subr.mxu0 %v8416
  %10931 = vmatpush1.msra.mxu0 %v8415
  %10932 = vmatprep.subr.mxu0 %v8424
  %10933 = vmatpush1.msra.mxu0 %v8423
  %10934 = vmatprep.subr.mxu0 %v8432
  %10935 = vmatpush1.msra.mxu0 %v8431
  %10936 = vmatprep.subr.mxu0 %v8440
  %10937 = vmatpush1.msra.mxu0 %v8439
  %10938 = vmatprep.subr.mxu0 %v8448
  %10939 = vmatpush1.msra.mxu0 %v8447
  %10940 = vmatprep.subr.mxu0 %v8456
  %10941 = vmatpush1.msra.mxu0 %v8455
  %10942 = vmatprep.subr.mxu0 %v8464
  %10943 = vmatpush1.msra.mxu0 %v8463
  %10944 = vmatprep.subr.mxu0 %v8472
  %10945 = vmatpush1.msra.mxu0 %v8471
  %10946 = vmatprep.subr.mxu0 %v8480
  %10947 = vmatpush1.msra.mxu0 %v8479
  %10948 = vmatprep.subr.mxu0 %v8488
  %10949 = vmatpush1.msra.mxu0 %v8487
  %10950 = vmatprep.subr.mxu0 %v8496
  %10951 = vmatpush1.msra.mxu0 %v8495
  %10952 = vmatprep.subr.mxu0 %v8504
  %10953 = vmatpush1.msra.mxu0 %v8503
  %10954 = vmatprep.subr.mxu0 %v8512
  %10955 = vmatpush1.msra.mxu0 %v8511
  %10956 = vmatprep.subr.mxu0 %v8520
  %10957 = vmatpush1.msra.mxu0 %v8519
  %10958 = vmatprep.subr.mxu0 %v8528
  %10959 = vmatpush1.msra.mxu0 %v8527
  %10960 = vmatprep.subr.mxu0 %v8536
  %10961 = vmatpush1.msra.mxu0 %v8535
  %10962 = vmatprep.subr.mxu0 %v8544
  %10963 = vmatpush1.msra.mxu0 %v8543
  %10964 = vmatprep.subr.mxu0 %v8552
  %10965 = vmatpush1.msra.mxu0 %v8551
  %10966 = vmatprep.subr.mxu0 %v8560
  %10967 = vmatpush1.msra.mxu0 %v8559
  %10968 = vmatprep.subr.mxu0 %v8568
  %10969 = vmatpush1.msra.mxu0 %v8567
  %10970 = vmatprep.subr.mxu0 %v8576
  %10971 = vmatpush1.msra.mxu0 %v8575
  %10972 = vmatprep.subr.mxu0 %v8584
  %10973 = vmatpush1.msra.mxu0 %v8583
  %10974 = vmatprep.subr.mxu0 %v8592
  %10975 = vmatpush1.msra.mxu0 %v8591
  %10976 = vmatprep.subr.mxu0 %v8600
  %10977 = vmatpush1.msra.mxu0 %v8599
  %10978 = vmatprep.subr.mxu0 %v8608
  %10979 = vmatpush1.msra.mxu0 %v8607
  %10980 = vmatprep.subr.mxu0 %v8616
  %10981 = vmatpush1.msra.mxu0 %v8615
  %10982 = vmatprep.subr.mxu0 %v8624
  %10983 = vmatpush1.msra.mxu0 %v8623
  %10984 = vmatprep.subr.mxu0 %v8632
  %10985 = vmatpush1.msra.mxu0 %v8631
  %10986 = vmatprep.subr.mxu0 %v8640
  %10987 = vmatpush1.msra.mxu0 %v8639
  %10988 = vmatprep.subr.mxu0 %v8648
  %10989 = vmatpush1.msra.mxu0 %v8647
  %10990 = vmatprep.subr.mxu0 %v8656
  %10991 = vmatpush1.msra.mxu0 %v8655
  %10992 = vmatprep.subr.mxu0 %v8664
  %10993 = vmatpush1.msra.mxu0 %v8663
  %10994 = vmatprep.mubr.f32.mxu0 %v10856
  %10995 = vmatmul.mubr.f32.gmra.mrb[0].mxu0 %v10855
  %v10996 = vpop.f32.mrb[0].mxu0
  %v10997 = vadd.f32 0.0, %v10996
  %v10998 = vpop.f32.mrb[0].mxu0
  %v10999 = vadd.f32 0.0, %v10998
  %11000 = vdwg.mxu0
  %11001 = vmatprep.subr.mxu0 %v8418
  %11002 = vmatpush1.msra.mxu0 %v8417
  %11003 = vmatprep.subr.mxu0 %v8426
  %11004 = vmatpush1.msra.mxu0 %v8425
  %11005 = vmatprep.subr.mxu0 %v8434
  %11006 = vmatpush1.msra.mxu0 %v8433
  %11007 = vmatprep.subr.mxu0 %v8442
  %11008 = vmatpush1.msra.mxu0 %v8441
  %11009 = vmatprep.subr.mxu0 %v8450
  %11010 = vmatpush1.msra.mxu0 %v8449
  %11011 = vmatprep.subr.mxu0 %v8458
  %11012 = vmatpush1.msra.mxu0 %v8457
  %11013 = vmatprep.subr.mxu0 %v8466
  %11014 = vmatpush1.msra.mxu0 %v8465
  %11015 = vmatprep.subr.mxu0 %v8474
  %11016 = vmatpush1.msra.mxu0 %v8473
  %11017 = vmatprep.subr.mxu0 %v8482
  %11018 = vmatpush1.msra.mxu0 %v8481
  %11019 = vmatprep.subr.mxu0 %v8490
  %11020 = vmatpush1.msra.mxu0 %v8489
  %11021 = vmatprep.subr.mxu0 %v8498
  %11022 = vmatpush1.msra.mxu0 %v8497
  %11023 = vmatprep.subr.mxu0 %v8506
  %11024 = vmatpush1.msra.mxu0 %v8505
  %11025 = vmatprep.subr.mxu0 %v8514
  %11026 = vmatpush1.msra.mxu0 %v8513
  %11027 = vmatprep.subr.mxu0 %v8522
  %11028 = vmatpush1.msra.mxu0 %v8521
  %11029 = vmatprep.subr.mxu0 %v8530
  %11030 = vmatpush1.msra.mxu0 %v8529
  %11031 = vmatprep.subr.mxu0 %v8538
  %11032 = vmatpush1.msra.mxu0 %v8537
  %11033 = vmatprep.subr.mxu0 %v8546
  %11034 = vmatpush1.msra.mxu0 %v8545
  %11035 = vmatprep.subr.mxu0 %v8554
  %11036 = vmatpush1.msra.mxu0 %v8553
  %11037 = vmatprep.subr.mxu0 %v8562
  %11038 = vmatpush1.msra.mxu0 %v8561
  %11039 = vmatprep.subr.mxu0 %v8570
  %11040 = vmatpush1.msra.mxu0 %v8569
  %11041 = vmatprep.subr.mxu0 %v8578
  %11042 = vmatpush1.msra.mxu0 %v8577
  %11043 = vmatprep.subr.mxu0 %v8586
  %11044 = vmatpush1.msra.mxu0 %v8585
  %11045 = vmatprep.subr.mxu0 %v8594
  %11046 = vmatpush1.msra.mxu0 %v8593
  %11047 = vmatprep.subr.mxu0 %v8602
  %11048 = vmatpush1.msra.mxu0 %v8601
  %11049 = vmatprep.subr.mxu0 %v8610
  %11050 = vmatpush1.msra.mxu0 %v8609
  %11051 = vmatprep.subr.mxu0 %v8618
  %11052 = vmatpush1.msra.mxu0 %v8617
  %11053 = vmatprep.subr.mxu0 %v8626
  %11054 = vmatpush1.msra.mxu0 %v8625
  %11055 = vmatprep.subr.mxu0 %v8634
  %11056 = vmatpush1.msra.mxu0 %v8633
  %11057 = vmatprep.subr.mxu0 %v8642
  %11058 = vmatpush1.msra.mxu0 %v8641
  %11059 = vmatprep.subr.mxu0 %v8650
  %11060 = vmatpush1.msra.mxu0 %v8649
  %11061 = vmatprep.subr.mxu0 %v8658
  %11062 = vmatpush1.msra.mxu0 %v8657
  %11063 = vmatprep.subr.mxu0 %v8666
  %11064 = vmatpush1.msra.mxu0 %v8665
  %11065 = vmatprep.mubr.f32.mxu0 %v10856
  %11066 = vmatmul.mubr.f32.gmra.mrb[0].mxu0 %v10855
  %v11067 = vpop.f32.mrb[0].mxu0
  %v11068 = vadd.f32 0.0, %v11067
  %v11069 = vpop.f32.mrb[0].mxu0
  %v11070 = vadd.f32 0.0, %v11069
  %11071 = vdwg.mxu0
  %11072 = vmatprep.subr.mxu0 %v8420
  %11073 = vmatpush1.msra.mxu0 %v8419
  %11074 = vmatprep.subr.mxu0 %v8428
  %11075 = vmatpush1.msra.mxu0 %v8427
  %11076 = vmatprep.subr.mxu0 %v8436
  %11077 = vmatpush1.msra.mxu0 %v8435
  %11078 = vmatprep.subr.mxu0 %v8444
  %11079 = vmatpush1.msra.mxu0 %v8443
  %11080 = vmatprep.subr.mxu0 %v8452
  %11081 = vmatpush1.msra.mxu0 %v8451
  %11082 = vmatprep.subr.mxu0 %v8460
  %11083 = vmatpush1.msra.mxu0 %v8459
  %11084 = vmatprep.subr.mxu0 %v8468
  %11085 = vmatpush1.msra.mxu0 %v8467
  %11086 = vmatprep.subr.mxu0 %v8476
  %11087 = vmatpush1.msra.mxu0 %v8475
  %11088 = vmatprep.subr.mxu0 %v8484
  %11089 = vmatpush1.msra.mxu0 %v8483
  %11090 = vmatprep.subr.mxu0 %v8492
  %11091 = vmatpush1.msra.mxu0 %v8491
  %11092 = vmatprep.subr.mxu0 %v8500
  %11093 = vmatpush1.msra.mxu0 %v8499
  %11094 = vmatprep.subr.mxu0 %v8508
  %11095 = vmatpush1.msra.mxu0 %v8507
  %11096 = vmatprep.subr.mxu0 %v8516
  %11097 = vmatpush1.msra.mxu0 %v8515
  %11098 = vmatprep.subr.mxu0 %v8524
  %11099 = vmatpush1.msra.mxu0 %v8523
  %11100 = vmatprep.subr.mxu0 %v8532
  %11101 = vmatpush1.msra.mxu0 %v8531
  %11102 = vmatprep.subr.mxu0 %v8540
  %11103 = vmatpush1.msra.mxu0 %v8539
  %11104 = vmatprep.subr.mxu0 %v8548
  %11105 = vmatpush1.msra.mxu0 %v8547
  %11106 = vmatprep.subr.mxu0 %v8556
  %11107 = vmatpush1.msra.mxu0 %v8555
  %11108 = vmatprep.subr.mxu0 %v8564
  %11109 = vmatpush1.msra.mxu0 %v8563
  %11110 = vmatprep.subr.mxu0 %v8572
  %11111 = vmatpush1.msra.mxu0 %v8571
  %11112 = vmatprep.subr.mxu0 %v8580
  %11113 = vmatpush1.msra.mxu0 %v8579
  %11114 = vmatprep.subr.mxu0 %v8588
  %11115 = vmatpush1.msra.mxu0 %v8587
  %11116 = vmatprep.subr.mxu0 %v8596
  %11117 = vmatpush1.msra.mxu0 %v8595
  %11118 = vmatprep.subr.mxu0 %v8604
  %11119 = vmatpush1.msra.mxu0 %v8603
  %11120 = vmatprep.subr.mxu0 %v8612
  %11121 = vmatpush1.msra.mxu0 %v8611
  %11122 = vmatprep.subr.mxu0 %v8620
  %11123 = vmatpush1.msra.mxu0 %v8619
  %11124 = vmatprep.subr.mxu0 %v8628
  %11125 = vmatpush1.msra.mxu0 %v8627
  %11126 = vmatprep.subr.mxu0 %v8636
  %11127 = vmatpush1.msra.mxu0 %v8635
  %11128 = vmatprep.subr.mxu0 %v8644
  %11129 = vmatpush1.msra.mxu0 %v8643
  %11130 = vmatprep.subr.mxu0 %v8652
  %11131 = vmatpush1.msra.mxu0 %v8651
  %11132 = vmatprep.subr.mxu0 %v8660
  %11133 = vmatpush1.msra.mxu0 %v8659
  %11134 = vmatprep.subr.mxu0 %v8668
  %11135 = vmatpush1.msra.mxu0 %v8667
  %11136 = vmatprep.mubr.f32.mxu0 %v10856
  %11137 = vmatmul.mubr.f32.gmra.mrb[0].mxu0 %v10855
  %v11138 = vpop.f32.mrb[0].mxu0
  %v11139 = vadd.f32 0.0, %v11138
  %v11140 = vpop.f32.mrb[0].mxu0
  %v11141 = vadd.f32 0.0, %v11140
  %11142 = vdwg.mxu0
  %v11151 = vrot.slane %v10926, 4
  %v11152 = vrot.slane %v10928, 4
  %v11153 = vrot.slane %v10997, 4
  %v11154 = vrot.slane %v10999, 4
  %v11155 = vrot.slane %v11068, 4
  %v11156 = vrot.slane %v11070, 4
  %v11157 = vrot.slane %v11139, 4
  %v11158 = vrot.slane %v11141, 4
  %v11167 = vadd.f32 %v8151, %v11151
  %v11168 = vadd.f32 %v8153, %v11152
  %v11169 = vadd.f32 %v8237, %v11153
  %v11170 = vadd.f32 %v8239, %v11154
  %v11171 = vadd.f32 %v8323, %v11155
  %v11172 = vadd.f32 %v8325, %v11156
  %v11173 = vadd.f32 %v8409, %v11157
  %v11174 = vadd.f32 %v8411, %v11158
  %v11175 = vxor.u32 %v11167, 2147483648
  %v11176 = vxor.u32 %v11168, 2147483648
  %v11177 = vmul.f32 %v11175, 1.442695
  %v11178 = vpow.pop %v11177
  %v11179 = vmul.f32 %v11176, 1.442695
  %v11180 = vpow.pop %v11179
  %v11181 = vadd.f32 %v11178, 1.0
  %v11182 = vadd.f32 %v11180, 1.0
  %v11183 = vrcp.pop %v11181
  %v11184 = vmul.f32 1.0, %v11183
  %v11185 = vrcp.pop %v11182
  %v11186 = vmul.f32 1.0, %v11185
  %v11187 = vxor.u32 %v11169, 2147483648
  %v11188 = vxor.u32 %v11170, 2147483648
  %v11189 = vmul.f32 %v11187, 1.442695
  %v11190 = vpow.pop %v11189
  %v11191 = vmul.f32 %v11188, 1.442695
  %v11192 = vpow.pop %v11191
  %v11193 = vadd.f32 %v11190, 1.0
  %v11194 = vadd.f32 %v11192, 1.0
  %v11195 = vrcp.pop %v11193
  %v11196 = vmul.f32 1.0, %v11195
  %v11197 = vrcp.pop %v11194
  %v11198 = vmul.f32 1.0, %v11197
  %v11199 = vtanh.pop %v11171
  %v11200 = vtanh.pop %v11172
  %v11201 = vxor.u32 %v11173, 2147483648
  %v11202 = vxor.u32 %v11174, 2147483648
  %v11203 = vmul.f32 %v11201, 1.442695
  %v11204 = vpow.pop %v11203
  %v11205 = vmul.f32 %v11202, 1.442695
  %v11206 = vpow.pop %v11205
  %v11207 = vadd.f32 %v11204, 1.0
  %v11208 = vadd.f32 %v11206, 1.0
  %v11209 = vrcp.pop %v11207
  %v11210 = vmul.f32 1.0, %v11209
  %v11211 = vrcp.pop %v11208
  %v11212 = vmul.f32 1.0, %v11211
  %v11215 = vrot.slane %v10847, 6
  %v11216 = vrot.slane %v10848, 6
  %v11219 = vmul.f32 %v11196, %v11215
  %v11220 = vmul.f32 %v11198, %v11216
  %v11221 = vmul.f32 %v11184, %v11199
  %v11222 = vmul.f32 %v11186, %v11200
  %v11223 = vadd.f32 %v11219, %v11221
  %v11224 = vadd.f32 %v11220, %v11222
  %v11225 = vtanh.pop %v11223
  %v11226 = vtanh.pop %v11224
  %v11227 = vmul.f32 %v11210, %v11225
  %v11228 = vmul.f32 %v11212, %v11226
  %v11231 = vrot.slane %v11227, 4
  %v11232 = vrot.slane %v11228, 4
  %11235 = vmatprep.subr.mxu0 %v8414
  %11236 = vmatpush1.msra.mxu0 %v8413
  %11237 = vmatprep.subr.mxu0 %v8422
  %11238 = vmatpush1.msra.mxu0 %v8421
  %11239 = vmatprep.subr.mxu0 %v8430
  %11240 = vmatpush1.msra.mxu0 %v8429
  %11241 = vmatprep.subr.mxu0 %v8438
  %11242 = vmatpush1.msra.mxu0 %v8437
  %11243 = vmatprep.subr.mxu0 %v8446
  %11244 = vmatpush1.msra.mxu0 %v8445
  %11245 = vmatprep.subr.mxu0 %v8454
  %11246 = vmatpush1.msra.mxu0 %v8453
  %11247 = vmatprep.subr.mxu0 %v8462
  %11248 = vmatpush1.msra.mxu0 %v8461
  %11249 = vmatprep.subr.mxu0 %v8470
  %11250 = vmatpush1.msra.mxu0 %v8469
  %11251 = vmatprep.subr.mxu0 %v8478
  %11252 = vmatpush1.msra.mxu0 %v8477
  %11253 = vmatprep.subr.mxu0 %v8486
  %11254 = vmatpush1.msra.mxu0 %v8485
  %11255 = vmatprep.subr.mxu0 %v8494
  %11256 = vmatpush1.msra.mxu0 %v8493
  %11257 = vmatprep.subr.mxu0 %v8502
  %11258 = vmatpush1.msra.mxu0 %v8501
  %11259 = vmatprep.subr.mxu0 %v8510
  %11260 = vmatpush1.msra.mxu0 %v8509
  %11261 = vmatprep.subr.mxu0 %v8518
  %11262 = vmatpush1.msra.mxu0 %v8517
  %11263 = vmatprep.subr.mxu0 %v8526
  %11264 = vmatpush1.msra.mxu0 %v8525
  %11265 = vmatprep.subr.mxu0 %v8534
  %11266 = vmatpush1.msra.mxu0 %v8533
  %11267 = vmatprep.subr.mxu0 %v8542
  %11268 = vmatpush1.msra.mxu0 %v8541
  %11269 = vmatprep.subr.mxu0 %v8550
  %11270 = vmatpush1.msra.mxu0 %v8549
  %11271 = vmatprep.subr.mxu0 %v8558
  %11272 = vmatpush1.msra.mxu0 %v8557
  %11273 = vmatprep.subr.mxu0 %v8566
  %11274 = vmatpush1.msra.mxu0 %v8565
  %11275 = vmatprep.subr.mxu0 %v8574
  %11276 = vmatpush1.msra.mxu0 %v8573
  %11277 = vmatprep.subr.mxu0 %v8582
  %11278 = vmatpush1.msra.mxu0 %v8581
  %11279 = vmatprep.subr.mxu0 %v8590
  %11280 = vmatpush1.msra.mxu0 %v8589
  %11281 = vmatprep.subr.mxu0 %v8598
  %11282 = vmatpush1.msra.mxu0 %v8597
  %11283 = vmatprep.subr.mxu0 %v8606
  %11284 = vmatpush1.msra.mxu0 %v8605
  %11285 = vmatprep.subr.mxu0 %v8614
  %11286 = vmatpush1.msra.mxu0 %v8613
  %11287 = vmatprep.subr.mxu0 %v8622
  %11288 = vmatpush1.msra.mxu0 %v8621
  %11289 = vmatprep.subr.mxu0 %v8630
  %11290 = vmatpush1.msra.mxu0 %v8629
  %11291 = vmatprep.subr.mxu0 %v8638
  %11292 = vmatpush1.msra.mxu0 %v8637
  %11293 = vmatprep.subr.mxu0 %v8646
  %11294 = vmatpush1.msra.mxu0 %v8645
  %11295 = vmatprep.subr.mxu0 %v8654
  %11296 = vmatpush1.msra.mxu0 %v8653
  %11297 = vmatprep.subr.mxu0 %v8662
  %11298 = vmatpush1.msra.mxu0 %v8661
  %11299 = vmatprep.mubr.f32.mxu0 %v11232
  %11300 = vmatmul.mubr.f32.gmra.mrb[0].mxu0 %v11231
  %v11301 = vpop.f32.mrb[0].mxu0
  %v11302 = vadd.f32 0.0, %v11301
  %v11303 = vpop.f32.mrb[0].mxu0
  %v11304 = vadd.f32 0.0, %v11303
  %11305 = vdwg.mxu0
  %11306 = vmatprep.subr.mxu0 %v8416
  %11307 = vmatpush1.msra.mxu0 %v8415
  %11308 = vmatprep.subr.mxu0 %v8424
  %11309 = vmatpush1.msra.mxu0 %v8423
  %11310 = vmatprep.subr.mxu0 %v8432
  %11311 = vmatpush1.msra.mxu0 %v8431
  %11312 = vmatprep.subr.mxu0 %v8440
  %11313 = vmatpush1.msra.mxu0 %v8439
  %11314 = vmatprep.subr.mxu0 %v8448
  %11315 = vmatpush1.msra.mxu0 %v8447
  %11316 = vmatprep.subr.mxu0 %v8456
  %11317 = vmatpush1.msra.mxu0 %v8455
  %11318 = vmatprep.subr.mxu0 %v8464
  %11319 = vmatpush1.msra.mxu0 %v8463
  %11320 = vmatprep.subr.mxu0 %v8472
  %11321 = vmatpush1.msra.mxu0 %v8471
  %11322 = vmatprep.subr.mxu0 %v8480
  %11323 = vmatpush1.msra.mxu0 %v8479
  %11324 = vmatprep.subr.mxu0 %v8488
  %11325 = vmatpush1.msra.mxu0 %v8487
  %11326 = vmatprep.subr.mxu0 %v8496
  %11327 = vmatpush1.msra.mxu0 %v8495
  %11328 = vmatprep.subr.mxu0 %v8504
  %11329 = vmatpush1.msra.mxu0 %v8503
  %11330 = vmatprep.subr.mxu0 %v8512
  %11331 = vmatpush1.msra.mxu0 %v8511
  %11332 = vmatprep.subr.mxu0 %v8520
  %11333 = vmatpush1.msra.mxu0 %v8519
  %11334 = vmatprep.subr.mxu0 %v8528
  %11335 = vmatpush1.msra.mxu0 %v8527
  %11336 = vmatprep.subr.mxu0 %v8536
  %11337 = vmatpush1.msra.mxu0 %v8535
  %11338 = vmatprep.subr.mxu0 %v8544
  %11339 = vmatpush1.msra.mxu0 %v8543
  %11340 = vmatprep.subr.mxu0 %v8552
  %11341 = vmatpush1.msra.mxu0 %v8551
  %11342 = vmatprep.subr.mxu0 %v8560
  %11343 = vmatpush1.msra.mxu0 %v8559
  %11344 = vmatprep.subr.mxu0 %v8568
  %11345 = vmatpush1.msra.mxu0 %v8567
  %11346 = vmatprep.subr.mxu0 %v8576
  %11347 = vmatpush1.msra.mxu0 %v8575
  %11348 = vmatprep.subr.mxu0 %v8584
  %11349 = vmatpush1.msra.mxu0 %v8583
  %11350 = vmatprep.subr.mxu0 %v8592
  %11351 = vmatpush1.msra.mxu0 %v8591
  %11352 = vmatprep.subr.mxu0 %v8600
  %11353 = vmatpush1.msra.mxu0 %v8599
  %11354 = vmatprep.subr.mxu0 %v8608
  %11355 = vmatpush1.msra.mxu0 %v8607
  %11356 = vmatprep.subr.mxu0 %v8616
  %11357 = vmatpush1.msra.mxu0 %v8615
  %11358 = vmatprep.subr.mxu0 %v8624
  %11359 = vmatpush1.msra.mxu0 %v8623
  %11360 = vmatprep.subr.mxu0 %v8632
  %11361 = vmatpush1.msra.mxu0 %v8631
  %11362 = vmatprep.subr.mxu0 %v8640
  %11363 = vmatpush1.msra.mxu0 %v8639
  %11364 = vmatprep.subr.mxu0 %v8648
  %11365 = vmatpush1.msra.mxu0 %v8647
  %11366 = vmatprep.subr.mxu0 %v8656
  %11367 = vmatpush1.msra.mxu0 %v8655
  %11368 = vmatprep.subr.mxu0 %v8664
  %11369 = vmatpush1.msra.mxu0 %v8663
  %11370 = vmatprep.mubr.f32.mxu0 %v11232
  %11371 = vmatmul.mubr.f32.gmra.mrb[0].mxu0 %v11231
  %v11372 = vpop.f32.mrb[0].mxu0
  %v11373 = vadd.f32 0.0, %v11372
  %v11374 = vpop.f32.mrb[0].mxu0
  %v11375 = vadd.f32 0.0, %v11374
  %11376 = vdwg.mxu0
  %11377 = vmatprep.subr.mxu0 %v8418
  %11378 = vmatpush1.msra.mxu0 %v8417
  %11379 = vmatprep.subr.mxu0 %v8426
  %11380 = vmatpush1.msra.mxu0 %v8425
  %11381 = vmatprep.subr.mxu0 %v8434
  %11382 = vmatpush1.msra.mxu0 %v8433
  %11383 = vmatprep.subr.mxu0 %v8442
  %11384 = vmatpush1.msra.mxu0 %v8441
  %11385 = vmatprep.subr.mxu0 %v8450
  %11386 = vmatpush1.msra.mxu0 %v8449
  %11387 = vmatprep.subr.mxu0 %v8458
  %11388 = vmatpush1.msra.mxu0 %v8457
  %11389 = vmatprep.subr.mxu0 %v8466
  %11390 = vmatpush1.msra.mxu0 %v8465
  %11391 = vmatprep.subr.mxu0 %v8474
  %11392 = vmatpush1.msra.mxu0 %v8473
  %11393 = vmatprep.subr.mxu0 %v8482
  %11394 = vmatpush1.msra.mxu0 %v8481
  %11395 = vmatprep.subr.mxu0 %v8490
  %11396 = vmatpush1.msra.mxu0 %v8489
  %11397 = vmatprep.subr.mxu0 %v8498
  %11398 = vmatpush1.msra.mxu0 %v8497
  %11399 = vmatprep.subr.mxu0 %v8506
  %11400 = vmatpush1.msra.mxu0 %v8505
  %11401 = vmatprep.subr.mxu0 %v8514
  %11402 = vmatpush1.msra.mxu0 %v8513
  %11403 = vmatprep.subr.mxu0 %v8522
  %11404 = vmatpush1.msra.mxu0 %v8521
  %11405 = vmatprep.subr.mxu0 %v8530
  %11406 = vmatpush1.msra.mxu0 %v8529
  %11407 = vmatprep.subr.mxu0 %v8538
  %11408 = vmatpush1.msra.mxu0 %v8537
  %11409 = vmatprep.subr.mxu0 %v8546
  %11410 = vmatpush1.msra.mxu0 %v8545
  %11411 = vmatprep.subr.mxu0 %v8554
  %11412 = vmatpush1.msra.mxu0 %v8553
  %11413 = vmatprep.subr.mxu0 %v8562
  %11414 = vmatpush1.msra.mxu0 %v8561
  %11415 = vmatprep.subr.mxu0 %v8570
  %11416 = vmatpush1.msra.mxu0 %v8569
  %11417 = vmatprep.subr.mxu0 %v8578
  %11418 = vmatpush1.msra.mxu0 %v8577
  %11419 = vmatprep.subr.mxu0 %v8586
  %11420 = vmatpush1.msra.mxu0 %v8585
  %11421 = vmatprep.subr.mxu0 %v8594
  %11422 = vmatpush1.msra.mxu0 %v8593
  %11423 = vmatprep.subr.mxu0 %v8602
  %11424 = vmatpush1.msra.mxu0 %v8601
  %11425 = vmatprep.subr.mxu0 %v8610
  %11426 = vmatpush1.msra.mxu0 %v8609
  %11427 = vmatprep.subr.mxu0 %v8618
  %11428 = vmatpush1.msra.mxu0 %v8617
  %11429 = vmatprep.subr.mxu0 %v8626
  %11430 = vmatpush1.msra.mxu0 %v8625
  %11431 = vmatprep.subr.mxu0 %v8634
  %11432 = vmatpush1.msra.mxu0 %v8633
  %11433 = vmatprep.subr.mxu0 %v8642
  %11434 = vmatpush1.msra.mxu0 %v8641
  %11435 = vmatprep.subr.mxu0 %v8650
  %11436 = vmatpush1.msra.mxu0 %v8649
  %11437 = vmatprep.subr.mxu0 %v8658
  %11438 = vmatpush1.msra.mxu0 %v8657
  %11439 = vmatprep.subr.mxu0 %v8666
  %11440 = vmatpush1.msra.mxu0 %v8665
  %11441 = vmatprep.mubr.f32.mxu0 %v11232
  %11442 = vmatmul.mubr.f32.gmra.mrb[0].mxu0 %v11231
  %v11443 = vpop.f32.mrb[0].mxu0
  %v11444 = vadd.f32 0.0, %v11443
  %v11445 = vpop.f32.mrb[0].mxu0
  %v11446 = vadd.f32 0.0, %v11445
  %11447 = vdwg.mxu0
  %11448 = vmatprep.subr.mxu0 %v8420
  %11449 = vmatpush1.msra.mxu0 %v8419
  %11450 = vmatprep.subr.mxu0 %v8428
  %11451 = vmatpush1.msra.mxu0 %v8427
  %11452 = vmatprep.subr.mxu0 %v8436
  %11453 = vmatpush1.msra.mxu0 %v8435
  %11454 = vmatprep.subr.mxu0 %v8444
  %11455 = vmatpush1.msra.mxu0 %v8443
  %11456 = vmatprep.subr.mxu0 %v8452
  %11457 = vmatpush1.msra.mxu0 %v8451
  %11458 = vmatprep.subr.mxu0 %v8460
  %11459 = vmatpush1.msra.mxu0 %v8459
  %11460 = vmatprep.subr.mxu0 %v8468
  %11461 = vmatpush1.msra.mxu0 %v8467
  %11462 = vmatprep.subr.mxu0 %v8476
  %11463 = vmatpush1.msra.mxu0 %v8475
  %11464 = vmatprep.subr.mxu0 %v8484
  %11465 = vmatpush1.msra.mxu0 %v8483
  %11466 = vmatprep.subr.mxu0 %v8492
  %11467 = vmatpush1.msra.mxu0 %v8491
  %11468 = vmatprep.subr.mxu0 %v8500
  %11469 = vmatpush1.msra.mxu0 %v8499
  %11470 = vmatprep.subr.mxu0 %v8508
  %11471 = vmatpush1.msra.mxu0 %v8507
  %11472 = vmatprep.subr.mxu0 %v8516
  %11473 = vmatpush1.msra.mxu0 %v8515
  %11474 = vmatprep.subr.mxu0 %v8524
  %11475 = vmatpush1.msra.mxu0 %v8523
  %11476 = vmatprep.subr.mxu0 %v8532
  %11477 = vmatpush1.msra.mxu0 %v8531
  %11478 = vmatprep.subr.mxu0 %v8540
  %11479 = vmatpush1.msra.mxu0 %v8539
  %11480 = vmatprep.subr.mxu0 %v8548
  %11481 = vmatpush1.msra.mxu0 %v8547
  %11482 = vmatprep.subr.mxu0 %v8556
  %11483 = vmatpush1.msra.mxu0 %v8555
  %11484 = vmatprep.subr.mxu0 %v8564
  %11485 = vmatpush1.msra.mxu0 %v8563
  %11486 = vmatprep.subr.mxu0 %v8572
  %11487 = vmatpush1.msra.mxu0 %v8571
  %11488 = vmatprep.subr.mxu0 %v8580
  %11489 = vmatpush1.msra.mxu0 %v8579
  %11490 = vmatprep.subr.mxu0 %v8588
  %11491 = vmatpush1.msra.mxu0 %v8587
  %11492 = vmatprep.subr.mxu0 %v8596
  %11493 = vmatpush1.msra.mxu0 %v8595
  %11494 = vmatprep.subr.mxu0 %v8604
  %11495 = vmatpush1.msra.mxu0 %v8603
  %11496 = vmatprep.subr.mxu0 %v8612
  %11497 = vmatpush1.msra.mxu0 %v8611
  %11498 = vmatprep.subr.mxu0 %v8620
  %11499 = vmatpush1.msra.mxu0 %v8619
  %11500 = vmatprep.subr.mxu0 %v8628
  %11501 = vmatpush1.msra.mxu0 %v8627
  %11502 = vmatprep.subr.mxu0 %v8636
  %11503 = vmatpush1.msra.mxu0 %v8635
  %11504 = vmatprep.subr.mxu0 %v8644
  %11505 = vmatpush1.msra.mxu0 %v8643
  %11506 = vmatprep.subr.mxu0 %v8652
  %11507 = vmatpush1.msra.mxu0 %v8651
  %11508 = vmatprep.subr.mxu0 %v8660
  %11509 = vmatpush1.msra.mxu0 %v8659
  %11510 = vmatprep.subr.mxu0 %v8668
  %11511 = vmatpush1.msra.mxu0 %v8667
  %11512 = vmatprep.mubr.f32.mxu0 %v11232
  %11513 = vmatmul.mubr.f32.gmra.mrb[0].mxu0 %v11231
  %v11514 = vpop.f32.mrb[0].mxu0
  %v11515 = vadd.f32 0.0, %v11514
  %v11516 = vpop.f32.mrb[0].mxu0
  %v11517 = vadd.f32 0.0, %v11516
  %11518 = vdwg.mxu0
  %v11527 = vrot.slane %v11302, 2
  %v11528 = vrot.slane %v11304, 2
  %v11529 = vrot.slane %v11373, 2
  %v11530 = vrot.slane %v11375, 2
  %v11531 = vrot.slane %v11444, 2
  %v11532 = vrot.slane %v11446, 2
  %v11533 = vrot.slane %v11515, 2
  %v11534 = vrot.slane %v11517, 2
  %v11543 = vadd.f32 %v8151, %v11527
  %v11544 = vadd.f32 %v8153, %v11528
  %v11545 = vadd.f32 %v8237, %v11529
  %v11546 = vadd.f32 %v8239, %v11530
  %v11547 = vadd.f32 %v8323, %v11531
  %v11548 = vadd.f32 %v8325, %v11532
  %v11549 = vadd.f32 %v8409, %v11533
  %v11550 = vadd.f32 %v8411, %v11534
  %v11551 = vxor.u32 %v11543, 2147483648
  %v11552 = vxor.u32 %v11544, 2147483648
  %v11553 = vmul.f32 %v11551, 1.442695
  %v11554 = vpow.pop %v11553
  %v11555 = vmul.f32 %v11552, 1.442695
  %v11556 = vpow.pop %v11555
  %v11557 = vadd.f32 %v11554, 1.0
  %v11558 = vadd.f32 %v11556, 1.0
  %v11559 = vrcp.pop %v11557
  %v11560 = vmul.f32 1.0, %v11559
  %v11561 = vrcp.pop %v11558
  %v11562 = vmul.f32 1.0, %v11561
  %v11563 = vxor.u32 %v11545, 2147483648
  %v11564 = vxor.u32 %v11546, 2147483648
  %v11565 = vmul.f32 %v11563, 1.442695
  %v11566 = vpow.pop %v11565
  %v11567 = vmul.f32 %v11564, 1.442695
  %v11568 = vpow.pop %v11567
  %v11569 = vadd.f32 %v11566, 1.0
  %v11570 = vadd.f32 %v11568, 1.0
  %v11571 = vrcp.pop %v11569
  %v11572 = vmul.f32 1.0, %v11571
  %v11573 = vrcp.pop %v11570
  %v11574 = vmul.f32 1.0, %v11573
  %v11575 = vtanh.pop %v11547
  %v11576 = vtanh.pop %v11548
  %v11577 = vxor.u32 %v11549, 2147483648
  %v11578 = vxor.u32 %v11550, 2147483648
  %v11579 = vmul.f32 %v11577, 1.442695
  %v11580 = vpow.pop %v11579
  %v11581 = vmul.f32 %v11578, 1.442695
  %v11582 = vpow.pop %v11581
  %v11583 = vadd.f32 %v11580, 1.0
  %v11584 = vadd.f32 %v11582, 1.0
  %v11585 = vrcp.pop %v11583
  %v11586 = vmul.f32 1.0, %v11585
  %v11587 = vrcp.pop %v11584
  %v11588 = vmul.f32 1.0, %v11587
  %v11591 = vrot.slane %v11223, 6
  %v11592 = vrot.slane %v11224, 6
  %v11595 = vmul.f32 %v11572, %v11591
  %v11596 = vmul.f32 %v11574, %v11592
  %v11597 = vmul.f32 %v11560, %v11575
  %v11598 = vmul.f32 %v11562, %v11576
  %v11599 = vadd.f32 %v11595, %v11597
  %v11600 = vadd.f32 %v11596, %v11598
  %v11601 = vtanh.pop %v11599
  %v11602 = vtanh.pop %v11600
  %v11603 = vmul.f32 %v11586, %v11601
  %v11604 = vmul.f32 %v11588, %v11602
  %v11605 = vld [vmem:[%s9] sm:$0xff]
  %v11606 = vld [vmem:[%s9 + $0x8] sm:$0xff]
  %v11607 = vld [vmem:[%s9 + $0x10] sm:$0xff]
  %v11608 = vld [vmem:[%s9 + $0x18] sm:$0xff]
  %v11609 = vld [vmem:[%s9 + $0x20] sm:$0xff]
  %v11610 = vld [vmem:[%s9 + $0x28] sm:$0xff]
  %v11611 = vld [vmem:[%s9 + $0x30] sm:$0xff]
  %v11612 = vld [vmem:[%s9 + $0x38] sm:$0xff]
  %v11613 = vld [vmem:[%s9 + $0x40] sm:$0xff]
  %v11614 = vld [vmem:[%s9 + $0x48] sm:$0xff]
  %v11615 = vld [vmem:[%s9 + $0x50] sm:$0xff]
  %v11616 = vld [vmem:[%s9 + $0x58] sm:$0xff]
  %v11617 = vld [vmem:[%s9 + $0x60] sm:$0xff]
  %v11618 = vld [vmem:[%s9 + $0x68] sm:$0xff]
  %v11619 = vld [vmem:[%s9 + $0x70] sm:$0xff]
  %v11620 = vld [vmem:[%s9 + $0x78] sm:$0xff]
  %v11621 = vld [vmem:[%s9 + $0x80] sm:$0xff]
  %v11622 = vld [vmem:[%s9 + $0x88] sm:$0xff]
  %v11623 = vld [vmem:[%s9 + $0x90] sm:$0xff]
  %v11624 = vld [vmem:[%s9 + $0x98] sm:$0xff]
  %v11625 = vld [vmem:[%s9 + $0xa0] sm:$0xff]
  %v11626 = vld [vmem:[%s9 + $0xa8] sm:$0xff]
  %v11627 = vld [vmem:[%s9 + $0xb0] sm:$0xff]
  %v11628 = vld [vmem:[%s9 + $0xb8] sm:$0xff]
  %v11629 = vld [vmem:[%s9 + $0xc0] sm:$0xff]
  %v11630 = vld [vmem:[%s9 + $0xc8] sm:$0xff]
  %v11631 = vld [vmem:[%s9 + $0xd0] sm:$0xff]
  %v11632 = vld [vmem:[%s9 + $0xd8] sm:$0xff]
  %v11633 = vld [vmem:[%s9 + $0xe0] sm:$0xff]
  %v11634 = vld [vmem:[%s9 + $0xe8] sm:$0xff]
  %v11635 = vld [vmem:[%s9 + $0xf0] sm:$0xff]
  %v11636 = vld [vmem:[%s9 + $0xf8] sm:$0xff]
  %v11637 = vld [vmem:[%s10] sm:$0x1]
  %v11639 = vlaneseq
  %v11640 = vshrl.u32 %v11639, 7
  %v11641 = vsub.s32 0, %v11640
  %v11642 = vrot.slane %v11637, %v11641
  %v11646 = vrot.slane %v11603, 6
  %v11647 = vrot.slane %v11604, 6
  %11650 = vmatprep.subr.mxu0 0.0
  %11651 = vmatpush1.msra.mxu0 %v11605
  %11652 = vmatprep.subr.mxu0 0.0
  %11653 = vmatpush1.msra.mxu0 %v11606
  %11654 = vmatprep.subr.mxu0 0.0
  %11655 = vmatpush1.msra.mxu0 %v11607
  %11656 = vmatprep.subr.mxu0 0.0
  %11657 = vmatpush1.msra.mxu0 %v11608
  %11658 = vmatprep.subr.mxu0 0.0
  %11659 = vmatpush1.msra.mxu0 %v11609
  %11660 = vmatprep.subr.mxu0 0.0
  %11661 = vmatpush1.msra.mxu0 %v11610
  %11662 = vmatprep.subr.mxu0 0.0
  %11663 = vmatpush1.msra.mxu0 %v11611
  %11664 = vmatprep.subr.mxu0 0.0
  %11665 = vmatpush1.msra.mxu0 %v11612
  %11666 = vmatprep.subr.mxu0 0.0
  %11667 = vmatpush1.msra.mxu0 %v11613
  %11668 = vmatprep.subr.mxu0 0.0
  %11669 = vmatpush1.msra.mxu0 %v11614
  %11670 = vmatprep.subr.mxu0 0.0
  %11671 = vmatpush1.msra.mxu0 %v11615
  %11672 = vmatprep.subr.mxu0 0.0
  %11673 = vmatpush1.msra.mxu0 %v11616
  %11674 = vmatprep.subr.mxu0 0.0
  %11675 = vmatpush1.msra.mxu0 %v11617
  %11676 = vmatprep.subr.mxu0 0.0
  %11677 = vmatpush1.msra.mxu0 %v11618
  %11678 = vmatprep.subr.mxu0 0.0
  %11679 = vmatpush1.msra.mxu0 %v11619
  %11680 = vmatprep.subr.mxu0 0.0
  %11681 = vmatpush1.msra.mxu0 %v11620
  %11682 = vmatprep.subr.mxu0 0.0
  %11683 = vmatpush1.msra.mxu0 %v11621
  %11684 = vmatprep.subr.mxu0 0.0
  %11685 = vmatpush1.msra.mxu0 %v11622
  %11686 = vmatprep.subr.mxu0 0.0
  %11687 = vmatpush1.msra.mxu0 %v11623
  %11688 = vmatprep.subr.mxu0 0.0
  %11689 = vmatpush1.msra.mxu0 %v11624
  %11690 = vmatprep.subr.mxu0 0.0
  %11691 = vmatpush1.msra.mxu0 %v11625
  %11692 = vmatprep.subr.mxu0 0.0
  %11693 = vmatpush1.msra.mxu0 %v11626
  %11694 = vmatprep.subr.mxu0 0.0
  %11695 = vmatpush1.msra.mxu0 %v11627
  %11696 = vmatprep.subr.mxu0 0.0
  %11697 = vmatpush1.msra.mxu0 %v11628
  %11698 = vmatprep.subr.mxu0 0.0
  %11699 = vmatpush1.msra.mxu0 %v11629
  %11700 = vmatprep.subr.mxu0 0.0
  %11701 = vmatpush1.msra.mxu0 %v11630
  %11702 = vmatprep.subr.mxu0 0.0
  %11703 = vmatpush1.msra.mxu0 %v11631
  %11704 = vmatprep.subr.mxu0 0.0
  %11705 = vmatpush1.msra.mxu0 %v11632
  %11706 = vmatprep.subr.mxu0 0.0
  %11707 = vmatpush1.msra.mxu0 %v11633
  %11708 = vmatprep.subr.mxu0 0.0
  %11709 = vmatpush1.msra.mxu0 %v11634
  %11710 = vmatprep.subr.mxu0 0.0
  %11711 = vmatpush1.msra.mxu0 %v11635
  %11712 = vmatprep.subr.mxu0 0.0
  %11713 = vmatpush1.msra.mxu0 %v11636
  %11714 = vmatprep.mubr.f32.mxu0 %v11647
  %11715 = vmatmul.mubr.f32.gmra.mrb[0].mxu0 %v11646
  %v11716 = vpop.f32.mrb[0].mxu0
  %v11717 = vadd.f32 %v11642, %v11716
  %v11718 = vpop.f32.mrb[0].mxu0
  %11719 = vdwg.mxu0
  %11720 = vst [vmem:[%s11] sm:$0x3] %v11717
  // Predicated region
  $region46: #{mos_forward.1} parent=0 // pred_check
    _
  $region47: #{mos_forward.1} parent=0 // pred_check_branch
    %11722 = sbr.rel (0) target = $region49
  $region48: #{mos_forward.1} parent=0 // pred_region
    _
  $region49: #{mos_forward.1} parent=0 // pred_fallthru
    _
  // Predicated region
  $region50: #{mos_forward.1} parent=0 // pred_check
    _
  $region51: #{mos_forward.1} parent=0 // pred_check_branch
    %11724 = sbr.rel (0) target = $region53
  $region52: #{mos_forward.1} parent=0 // pred_region
    _
  $region53: #{mos_forward.1} parent=0 // pred_fallthru
    _

</llo_original>
